<compile_context>
chip_gen: v7x
topology: tpu7x:2x2x1
jax: 0.10.0
libtpu: 0.0.40
codegen_flags: <defaults>
</compile_context>

<pallas_src>
import functools

import jax
import jax.numpy as jnp
from jax.experimental import pallas as pl
from jax.experimental.pallas import tpu as pltpu


# ----------------------------- Pallas kernels ------------------------------ #

def _conv_tap_kernel(a_ref, w_ref, sh_ref, o_ref, acc_ref, *, relu):
    """One depth-tap of the conv: acc += A_tap @ W_tap; fused epilogue at last tap."""
    t = pl.program_id(3)

    @pl.when(t == 0)
    def _():
        acc_ref[...] = jnp.zeros_like(acc_ref)

    acc_ref[...] += jnp.dot(a_ref[0, 0], w_ref[0],
                            preferred_element_type=jnp.float32)

    @pl.when(t == pl.num_programs(3) - 1)
    def _():
        y = acc_ref[...] + sh_ref[...]
        if relu:
            y = jnp.maximum(y, 0.0)
        o_ref[0, 0] = y.astype(o_ref.dtype)


def _conv_tap_res_kernel(a_ref, w_ref, sh_ref, r_ref, o_ref, acc_ref, *, relu):
    """Same as above but with a fused residual add in the epilogue."""
    t = pl.program_id(3)

    @pl.when(t == 0)
    def _():
        acc_ref[...] = jnp.zeros_like(acc_ref)

    acc_ref[...] += jnp.dot(a_ref[0, 0], w_ref[0],
                            preferred_element_type=jnp.float32)

    @pl.when(t == pl.num_programs(3) - 1)
    def _():
        y = acc_ref[...] + sh_ref[...] + r_ref[0, 0].astype(jnp.float32)
        if relu:
            y = jnp.maximum(y, 0.0)
        o_ref[0, 0] = y.astype(o_ref.dtype)


def _maxpool_kernel(x_ref, o_ref):
    # x: (8, TMP, C) stacked window taps -> max over taps
    o_ref[...] = jnp.max(x_ref[...], axis=0)


def _bn_relu_avgpool_kernel(x_ref, sc_ref, sh_ref, o_ref, acc_ref, *, S):
    # x: (N, TS, C); scale/shift: (1, 1, C); out: (N, C).  Reduction over the S grid axis.
    s = pl.program_id(0)

    @pl.when(s == 0)
    def _():
        acc_ref[...] = jnp.zeros_like(acc_ref)

    x = x_ref[...].astype(jnp.float32)
    y = jnp.maximum(x * sc_ref[...] + sh_ref[...], 0.0)
    ts = x.shape[1]
    row = jax.lax.broadcasted_iota(jnp.int32, (1, ts, 1), 1) + s * ts
    y = jnp.where(row < S, y, 0.0)          # mask padded rows of a partial block
    acc_ref[...] += jnp.sum(y, axis=1)

    @pl.when(s == pl.num_programs(0) - 1)
    def _():
        o_ref[...] = (acc_ref[...] * (1.0 / S)).astype(o_ref.dtype)


def _bn_relu_kernel(x_ref, sc_ref, sh_ref, o_ref):
    y = x_ref[...].astype(jnp.float32) * sc_ref[...] + sh_ref[...]
    o_ref[...] = jnp.maximum(y, 0.0).astype(o_ref.dtype)


# --------------------------- Pallas call wrappers --------------------------- #

def conv3d_bn_act(x, p, relu=True, residual=None, out_dtype=jnp.bfloat16):
    """Conv3d + folded BatchNorm3d (+ residual) (+ ReLU) as depth-tap MXU matmuls.

    x: (N, D, H, W, Cin) bf16.  p: dict with 'wt' (kd, kh*kw*Cin, Cout) bf16 (BN
    scale folded in), 'shift' (1, Cout) f32, and 'ksize'/'stride'/'pad' tuples.
    """
    kd, kh, kw = p["ksize"]
    sd, s_h, s_w = p["stride"]
    pd, ph, pw = p["pad"]
    w_taps = p["wt"]
    shift = p["shift"]
    Cout = w_taps.shape[-1]

    N, D, H, W, Cin = x.shape
    OD = (D + 2 * pd - kd) // sd + 1
    OH = (H + 2 * ph - kh) // s_h + 1
    OW = (W + 2 * pw - kw) // s_w + 1
    OHW = OH * OW
    Dp = D + 2 * pd

    xp = jnp.pad(x, ((0, 0), (pd, pd), (ph, ph), (pw, pw), (0, 0)))
    # H/W taps only, gathered per depth slice; depth taps stay virtual (grid axis).
    cols = [xp[:, :, dy:dy + s_h * OH:s_h, dx:dx + s_w * OW:s_w, :]
            for dy in range(kh) for dx in range(kw)]
    patches = jnp.concatenate(cols, axis=-1) if len(cols) > 1 else cols[0]
    K2 = kh * kw * Cin
    patches = patches.reshape(N, Dp, OHW, K2)

    TM = OHW if OHW <= 256 else 256
    nM = pl.cdiv(OHW, TM)

    in_specs = [
        # depth block index = element index (block size 1) = od*sd + tap
        pl.BlockSpec((1, 1, TM, K2), lambda n, od, m, t: (n, od * sd + t, m, 0)),
        pl.BlockSpec((1, K2, Cout), lambda n, od, m, t: (t, 0, 0)),
        pl.BlockSpec((1, Cout), lambda n, od, m, t: (0, 0)),
    ]
    args = [patches, w_taps, shift]
    if residual is not None:
        res = residual.reshape(N, OD, OHW, Cout)
        in_specs.append(pl.BlockSpec((1, 1, TM, Cout),
                                     lambda n, od, m, t: (n, od, m, 0)))
        args.append(res)
        kernel = functools.partial(_conv_tap_res_kernel, relu=relu)
    else:
        kernel = functools.partial(_conv_tap_kernel, relu=relu)

    out = pl.pallas_call(
        kernel,
        out_shape=jax.ShapeDtypeStruct((N, OD, OHW, Cout), out_dtype),
        grid=(N, OD, nM, kd),
        in_specs=in_specs,
        out_specs=pl.BlockSpec((1, 1, TM, Cout), lambda n, od, m, t: (n, od, m, 0)),
        scratch_shapes=[pltpu.VMEM((TM, Cout), jnp.float32)],
        compiler_params=pltpu.CompilerParams(
            dimension_semantics=("parallel", "parallel", "parallel", "arbitrary")),
    )(*args)
    return out.reshape(N, OD, OH, OW, Cout)


def maxpool3d_2x2x2(x):
    """MaxPool3d(kernel=2, stride=2): tiled Pallas max-reduction over 8 window taps."""
    N, D, H, W, C = x.shape
    OD, OH, OW = D // 2, H // 2, W // 2
    taps = [x[:, dz:dz + 2 * OD:2, dy:dy + 2 * OH:2, dx:dx + 2 * OW:2, :]
            for dz in range(2) for dy in range(2) for dx in range(2)]
    M = N * OD * OH * OW
    stacked = jnp.stack(taps, axis=0).reshape(8, M, C)
    TMP = M if M <= 1024 else 1024
    out = pl.pallas_call(
        _maxpool_kernel,
        out_shape=jax.ShapeDtypeStruct((M, C), x.dtype),
        grid=(pl.cdiv(M, TMP),),
        in_specs=[pl.BlockSpec((8, TMP, C), lambda i: (0, i, 0))],
        out_specs=pl.BlockSpec((TMP, C), lambda i: (i, 0)),
        compiler_params=pltpu.CompilerParams(dimension_semantics=("parallel",)),
    )(stacked)
    return out.reshape(N, OD, OH, OW, C)


def _final_bn(out, params, is_pooling):
    """Final BatchNorm + ReLU (+ global avg-pool) as tiled Pallas kernels."""
    N, D, H, W, C = out.shape
    S = D * H * W
    sc3 = params["bn_scale"]   # (1, 1, C) f32
    sh3 = params["bn_shift"]   # (1, 1, C) f32

    if is_pooling:
        xs = out.reshape(N, S, C)
        TS = S if S <= 2048 else 2048
        pooled = pl.pallas_call(
            functools.partial(_bn_relu_avgpool_kernel, S=S),
            out_shape=jax.ShapeDtypeStruct((N, C), jnp.float32),
            grid=(pl.cdiv(S, TS),),
            in_specs=[pl.BlockSpec((N, TS, C), lambda s: (0, s, 0)),
                      pl.BlockSpec((1, 1, C), lambda s: (0, 0, 0)),
                      pl.BlockSpec((1, 1, C), lambda s: (0, 0, 0))],
            out_specs=pl.BlockSpec((N, C), lambda s: (0, 0)),
            scratch_shapes=[pltpu.VMEM((N, C), jnp.float32)],
            compiler_params=pltpu.CompilerParams(dimension_semantics=("arbitrary",)),
        )(xs, sc3, sh3)
        return pooled  # matches out.view(B, -1) after full-extent avg_pool3d

    M = N * S
    xs = out.reshape(M, C)
    TMB = M if M <= 1024 else 1024
    y = pl.pallas_call(
        _bn_relu_kernel,
        out_shape=jax.ShapeDtypeStruct((M, C), jnp.float32),
        grid=(pl.cdiv(M, TMB),),
        in_specs=[pl.BlockSpec((TMB, C), lambda i: (i, 0)),
                  pl.BlockSpec((1, C), lambda i: (0, 0)),
                  pl.BlockSpec((1, C), lambda i: (0, 0))],
        out_specs=pl.BlockSpec((TMB, C), lambda i: (i, 0)),
        compiler_params=pltpu.CompilerParams(dimension_semantics=("parallel",)),
    )(xs, sc3.reshape(1, C), sh3.reshape(1, C))
    y = y.reshape(N, D, H, W, C)
    return jnp.transpose(y, (0, 4, 1, 2, 3))  # back to NCDHW


# --------------------------- parameter construction ------------------------ #

def _init_bn(key, c):
    k1, k2, k3, k4 = jax.random.split(key, 4)
    return dict(
        gamma=1.0 + 0.1 * jax.random.normal(k1, (c,), jnp.float32),
        beta=0.1 * jax.random.normal(k2, (c,), jnp.float32),
        mean=0.1 * jax.random.normal(k3, (c,), jnp.float32),
        var=1.0 + 0.1 * jax.random.uniform(k4, (c,), jnp.float32),
    )


def _init_conv_bn(key, ksize, stride, pad, cin, cout, bias=False):
    kw_, kb_, kbn = jax.random.split(key, 3)
    p = dict(w=0.05 * jax.random.normal(kw_, (*ksize, cin, cout), jnp.float32),
             ksize=ksize, stride=stride, pad=pad)
    p.update(_init_bn(kbn, cout))
    if bias:
        p["b"] = 0.1 * jax.random.normal(kb_, (cout,), jnp.float32)
    return p


def _fold_conv(p, eps=1e-5):
    """Fold eval-mode BN into the conv once: scale -> bf16 weight columns, shift kept f32,
    and pre-reshape weights to the (kd, kh*kw*Cin, Cout) tap layout used by the kernel."""
    kd, kh, kw = p["ksize"]
    w = p["w"]
    cin, cout = w.shape[3], w.shape[4]
    scale = p["gamma"] / jnp.sqrt(p["var"] + eps)
    bias = p.get("b", jnp.zeros((cout,), jnp.float32))
    shift = p["beta"] + (bias - p["mean"]) * scale
    w_f = (w * scale).reshape(kd, kh * kw * cin, cout).astype(jnp.bfloat16)
    return dict(wt=w_f, shift=shift.reshape(1, cout).astype(jnp.float32),
                ksize=p["ksize"], stride=p["stride"], pad=p["pad"])


def make_layer_cfg(num_layer, in_channel):
    """Mirrors the PyTorch make_layer channel/stride bookkeeping."""
    cfgs = []
    strides = [[2, 1], [1, 1]]
    in_c = in_channel
    for i in range(num_layer):
        for j, stride in enumerate(strides):
            is_first = (i == 0 and j == 0)
            out_c = in_c * 2 if j == 0 else in_c
            cfgs.append((in_c, out_c, list(stride), is_first))
            if not is_first:
                in_c = out_c
    return cfgs, in_c


def _init_block(key, in_c, out_c, stride, is_first):
    if is_first:
        out_c = in_c
        stride = [1, 1]
    s0, s1 = stride
    k1, k2, k3 = jax.random.split(key, 3)
    p = dict(
        conv1=_init_conv_bn(k1, (3, 3, 3), (s0,) * 3, (1, 1, 1), in_c, out_c),
        conv2=_init_conv_bn(k2, (3, 3, 3), (s1,) * 3, (1, 1, 1), out_c, out_c),
        proj=None,
    )
    if s0 != 1 or in_c != out_c:
        p["proj"] = _init_conv_bn(k3, (1, 1, 1), (s0,) * 3, (0, 0, 0), in_c, out_c)
    return p


def init_resnet3d_feature(key, num_layer):
    k1, kb = jax.random.split(key, 2)
    raw = dict(conv1=_init_conv_bn(k1, (7, 7, 7), (2, 2, 2), (3, 3, 3), 1, 64, bias=True))
    cfgs, final_c = make_layer_cfg(num_layer, 64)
    bkeys = jax.random.split(kb, len(cfgs) + 1)
    raw["blocks"] = [_init_block(bkeys[i], *cfgs[i]) for i in range(len(cfgs))]
    raw["bn"] = _init_bn(bkeys[-1], final_c)
    raw["output_dim"] = final_c
    return raw


def prepare_params(raw, eps=1e-5):
    """One-time parameter prep: fold BN into bf16 weights, pre-reshape for the kernels."""
    params = dict(conv1=_fold_conv(raw["conv1"], eps), output_dim=raw["output_dim"])
    params["blocks"] = [dict(conv1=_fold_conv(bp["conv1"], eps),
                             conv2=_fold_conv(bp["conv2"], eps),
                             proj=None if bp["proj"] is None else _fold_conv(bp["proj"], eps))
                        for bp in raw["blocks"]]
    bn = raw["bn"]
    c = bn["gamma"].shape[0]
    sc = bn["gamma"] / jnp.sqrt(bn["var"] + eps)
    params["bn_scale"] = sc.reshape(1, 1, c).astype(jnp.float32)
    params["bn_shift"] = (bn["beta"] - bn["mean"] * sc).reshape(1, 1, c).astype(jnp.float32)
    return params


# --------------------------------- forward --------------------------------- #

def _block_apply(x, bp):
    h = conv3d_bn_act(x, bp["conv1"], relu=True)
    res = x if bp["proj"] is None else conv3d_bn_act(x, bp["proj"], relu=False)
    # conv2 + BN + residual add + ReLU fused in a single Pallas epilogue
    return conv3d_bn_act(h, bp["conv2"], relu=True, residual=res)


def resnet3d_feature_forward(x_ncdhw, params, is_pooling=True):
    # NCDHW (PyTorch) -> NDHWC; bf16 activations, f32 accumulation inside kernels.
    x = jnp.transpose(x_ncdhw, (0, 2, 3, 4, 1)).astype(jnp.bfloat16)

    # conv1: Conv3d(1,64,7,stride=2,pad=3,bias) + BN + ReLU, then MaxPool3d(2)
    out = conv3d_bn_act(x, params["conv1"], relu=True)
    out = maxpool3d_2x2x2(out)

    # residual blocks
    for bp in params["blocks"]:
        out = _block_apply(out, bp)

    # final BN + ReLU (+ global average pool)
    return _final_bn(out, params, is_pooling)


# ----------------------------------- main ----------------------------------- #

if __name__ == "__main__":
    key = jax.random.PRNGKey(0)
    kx, kp = jax.random.split(key)

    # Small shapes consistent with the module: batch=2, Cin=1, 16^3 volume.
    N, D, H, W = 2, 16, 16, 16
    x = jax.random.normal(kx, (N, 1, D, H, W), jnp.float32)  # NCDHW like PyTorch

    num_layer = 2  # exercises is_first, identity, and strided/projection blocks
    raw = init_resnet3d_feature(kp, num_layer)
    params = prepare_params(raw)  # one-time BN fold + bf16 weight prep

    fwd = jax.jit(lambda xin: resnet3d_feature_forward(xin, params, is_pooling=True))
    out = fwd(x)
    out = jax.block_until_ready(out)

    assert out.shape == (N, params["output_dim"]), out.shape
    assert bool(jnp.all(jnp.isfinite(out)))
    print("KERNEL_OK")
</pallas_src>

<mosaic_0001>
module attributes {stable_mosaic.version = 11 : i64} {
  func.func @_conv_tap_kernel(%arg0: i32, %arg1: i32, %arg2: i32, %arg3: i32, %arg4: memref<1x1x64x49xbf16, #tpu.memory_space<vmem>>, %arg5: memref<1x49x64xbf16, #tpu.memory_space<vmem>>, %arg6: memref<1x64xf32, #tpu.memory_space<vmem>>, %arg7: memref<1x1x64x64xbf16, #tpu.memory_space<vmem>>, %arg8: memref<64x64xf32, #tpu.memory_space<vmem>>) attributes {dimension_semantics = [#tpu.dimension_semantics<parallel>, #tpu.dimension_semantics<parallel>, #tpu.dimension_semantics<parallel>, #tpu.dimension_semantics<arbitrary>], iteration_bounds = array<i64: 2, 8, 1, 7>, scalar_prefetch = 0 : i64, scratch_operands = 1 : i64, tpu.core_type = #tpu.core_type<tc>, window_params = [{transform_indices = @transform_0, window_bounds = array<i64: 1, 1, 64, 49>}, {transform_indices = @transform_1, window_bounds = array<i64: 1, 49, 64>}, {pipeline_mode = #tpu.pipeline_mode<synchronous>, transform_indices = @transform_2, window_bounds = array<i64: 1, 64>}, {transform_indices = @transform_3, window_bounds = array<i64: 1, 1, 64, 64>}]} {
    %c0_i32 = arith.constant 0 : i32
    %0 = arith.cmpi eq, %arg3, %c0_i32 : i32
    %1 = arith.extui %0 : i1 to i32
    %c0_i32_0 = arith.constant 0 : i32
    %2 = arith.cmpi ne, %1, %c0_i32_0 : i32
    scf.if %2 {
      %cst_12 = arith.constant 0.000000e+00 : f32
      %14 = vector.broadcast %cst_12 : f32 to vector<64x64xf32>
      %c0_13 = arith.constant 0 : index
      %c0_14 = arith.constant 0 : index
      %15 = vector.load %arg8[%c0_13, %c0_14] : memref<64x64xf32, #tpu.memory_space<vmem>>, vector<64x64xf32>
      tpu.vector_store %arg8[%c0_13, %c0_14], %14 {strides = array<i32>} : memref<64x64xf32, #tpu.memory_space<vmem>>, vector<64x64xf32>,
    } else {
    }
    %c0 = arith.constant 0 : index
    %c0_1 = arith.constant 0 : index
    %3 = vector.load %arg8[%c0, %c0_1] : memref<64x64xf32, #tpu.memory_space<vmem>>, vector<64x64xf32>
    %c0_2 = arith.constant 0 : index
    %c0_3 = arith.constant 0 : index
    %c0_4 = arith.constant 0 : index
    %c0_5 = arith.constant 0 : index
    %4 = vector.load %arg4[%c0_2, %c0_3, %c0_4, %c0_5] : memref<1x1x64x49xbf16, #tpu.memory_space<vmem>>, vector<1x1x64x49xbf16>
    %5 = vector.shape_cast %4 : vector<1x1x64x49xbf16> to vector<64x49xbf16>
    %c0_6 = arith.constant 0 : index
    %c0_7 = arith.constant 0 : index
    %c0_8 = arith.constant 0 : index
    %6 = vector.load %arg5[%c0_6, %c0_7, %c0_8] : memref<1x49x64xbf16, #tpu.memory_space<vmem>>, vector<1x49x64xbf16>
    %7 = vector.shape_cast %6 : vector<1x49x64xbf16> to vector<49x64xbf16>
    %cst = arith.constant dense<0.000000e+00> : vector<64x64xf32>
    %8 = tpu.matmul %5, %7, %cst {dimension_numbers = #tpu.dot_dimension_numbers<[1], [0], [0], [1], [0, 0, 1, 1], [], []>} : vector<64x49xbf16>, vector<49x64xbf16>, vector<64x64xf32> -> vector<64x64xf32>
    %9 = arith.addf %3, %8 : vector<64x64xf32>
    %c0_9 = arith.constant 0 : index
    %c0_10 = arith.constant 0 : index
    %10 = vector.load %arg8[%c0_9, %c0_10] : memref<64x64xf32, #tpu.memory_space<vmem>>, vector<64x64xf32>
    tpu.vector_store %arg8[%c0_9, %c0_10], %9 {strides = array<i32>} : memref<64x64xf32, #tpu.memory_space<vmem>>, vector<64x64xf32>,
    %c6_i32 = arith.constant 6 : i32
    %11 = arith.cmpi eq, %arg3, %c6_i32 : i32
    %12 = arith.extui %11 : i1 to i32
    %c0_i32_11 = arith.constant 0 : i32
    %13 = arith.cmpi ne, %12, %c0_i32_11 : i32
    scf.if %13 {
      %c0_12 = arith.constant 0 : index
      %c0_13 = arith.constant 0 : index
      %14 = vector.load %arg8[%c0_12, %c0_13] : memref<64x64xf32, #tpu.memory_space<vmem>>, vector<64x64xf32>
      %c0_14 = arith.constant 0 : index
      %c0_15 = arith.constant 0 : index
      %15 = vector.load %arg6[%c0_14, %c0_15] : memref<1x64xf32, #tpu.memory_space<vmem>>, vector<1x64xf32>
      %16 = vector.broadcast %15 : vector<1x64xf32> to vector<64x64xf32>
      %17 = arith.addf %14, %16 : vector<64x64xf32>
      %cst_16 = arith.constant 0.000000e+00 : f32
      %18 = vector.broadcast %cst_16 : f32 to vector<64x64xf32>
      %19 = arith.maximumf %17, %18 : vector<64x64xf32>
      %20 = arith.truncf %19 : vector<64x64xf32> to vector<64x64xbf16>
      %c0_17 = arith.constant 0 : index
      %c0_18 = arith.constant 0 : index
      %c0_19 = arith.constant 0 : index
      %c0_20 = arith.constant 0 : index
      %21 = vector.load %arg7[%c0_17, %c0_18, %c0_19, %c0_20] : memref<1x1x64x64xbf16, #tpu.memory_space<vmem>>, vector<1x1x64x64xbf16>
      %22 = vector.shape_cast %21 : vector<1x1x64x64xbf16> to vector<64x64xbf16>
      %23 = vector.shape_cast %20 : vector<64x64xbf16> to vector<1x1x64x64xbf16>
      tpu.vector_store %arg7[%c0_17, %c0_18, %c0_19, %c0_20], %23 {strides = array<i32>} : memref<1x1x64x64xbf16, #tpu.memory_space<vmem>>, vector<1x1x64x64xbf16>,
    } else {
    }
    return
  }
  func.func @transform_0(%arg0: i32, %arg1: i32, %arg2: i32, %arg3: i32) -> (i32, i32, i32, i32) {
    %c2_i32 = arith.constant 2 : i32
    %0 = arith.muli %arg1, %c2_i32 : i32
    %1 = arith.addi %0, %arg3 : i32
    %c0_i32 = arith.constant 0 : i32
    %c0_i32_0 = arith.constant 0 : i32
    return %arg0, %1, %arg2, %c0_i32 : i32, i32, i32, i32
  }
  func.func @transform_1(%arg0: i32, %arg1: i32, %arg2: i32, %arg3: i32) -> (i32, i32, i32) {
    %c0_i32 = arith.constant 0 : i32
    %c0_i32_0 = arith.constant 0 : i32
    %c0_i32_1 = arith.constant 0 : i32
    return %arg3, %c0_i32, %c0_i32_0 : i32, i32, i32
  }
  func.func @transform_2(%arg0: i32, %arg1: i32, %arg2: i32, %arg3: i32) -> (i32, i32) {
    %c0_i32 = arith.constant 0 : i32
    %c0_i32_0 = arith.constant 0 : i32
    %c0_i32_1 = arith.constant 0 : i32
    return %c0_i32, %c0_i32_0 : i32, i32
  }
  func.func @transform_3(%arg0: i32, %arg1: i32, %arg2: i32, %arg3: i32) -> (i32, i32, i32, i32) {
    %c0_i32 = arith.constant 0 : i32
    %c0_i32_0 = arith.constant 0 : i32
    return %arg0, %arg1, %arg2, %c0_i32 : i32, i32, i32, i32
  }
}

module attributes {stable_mosaic.version = 11 : i64} {
  func.func @_maxpool_kernel(%arg0: i32, %arg1: memref<8x128x64xbf16, #tpu.memory_space<vmem>>, %arg2: memref<128x64xbf16, #tpu.memory_space<vmem>>) attributes {dimension_semantics = [#tpu.dimension_semantics<parallel>], iteration_bounds = array<i64: 1>, scalar_prefetch = 0 : i64, scratch_operands = 0 : i64, tpu.core_type = #tpu.core_type<tc>, window_params = [{transform_indices = @transform_0, window_bounds = array<i64: 8, 128, 64>}, {transform_indices = @transform_1, window_bounds = array<i64: 128, 64>}]} {
    %c0 = arith.constant 0 : index
    %c0_0 = arith.constant 0 : index
    %c0_1 = arith.constant 0 : index
    %0 = vector.load %arg1[%c0, %c0_0, %c0_1] : memref<8x128x64xbf16, #tpu.memory_space<vmem>>, vector<8x128x64xbf16>
    %cst = arith.constant dense<0xFF80> : vector<128x64xbf16>
    %1 = vector.multi_reduction <maximumf>, %0, %cst [0] : vector<8x128x64xbf16> to vector<128x64xbf16>
    %c0_2 = arith.constant 0 : index
    %c0_3 = arith.constant 0 : index
    %2 = vector.load %arg2[%c0_2, %c0_3] : memref<128x64xbf16, #tpu.memory_space<vmem>>, vector<128x64xbf16>
    tpu.vector_store %arg2[%c0_2, %c0_3], %1 {strides = array<i32>} : memref<128x64xbf16, #tpu.memory_space<vmem>>, vector<128x64xbf16>,
    return
  }
  func.func @transform_0(%arg0: i32) -> (i32, i32, i32) {
    %c0_i32 = arith.constant 0 : i32
    %c0_i32_0 = arith.constant 0 : i32
    %c0_i32_1 = arith.constant 0 : i32
    return %c0_i32, %arg0, %c0_i32_0 : i32, i32, i32
  }
  func.func @transform_1(%arg0: i32) -> (i32, i32) {
    %c0_i32 = arith.constant 0 : i32
    %c0_i32_0 = arith.constant 0 : i32
    return %arg0, %c0_i32 : i32, i32
  }
}

module attributes {stable_mosaic.version = 11 : i64} {
  func.func @_conv_tap_kernel(%arg0: i32, %arg1: i32, %arg2: i32, %arg3: i32, %arg4: memref<1x1x16x576xbf16, #tpu.memory_space<vmem>>, %arg5: memref<1x576x64xbf16, #tpu.memory_space<vmem>>, %arg6: memref<1x64xf32, #tpu.memory_space<vmem>>, %arg7: memref<1x1x16x64xbf16, #tpu.memory_space<vmem>>, %arg8: memref<16x64xf32, #tpu.memory_space<vmem>>) attributes {dimension_semantics = [#tpu.dimension_semantics<parallel>, #tpu.dimension_semantics<parallel>, #tpu.dimension_semantics<parallel>, #tpu.dimension_semantics<arbitrary>], iteration_bounds = array<i64: 2, 4, 1, 3>, scalar_prefetch = 0 : i64, scratch_operands = 1 : i64, tpu.core_type = #tpu.core_type<tc>, window_params = [{transform_indices = @transform_0, window_bounds = array<i64: 1, 1, 16, 576>}, {transform_indices = @transform_1, window_bounds = array<i64: 1, 576, 64>}, {pipeline_mode = #tpu.pipeline_mode<synchronous>, transform_indices = @transform_2, window_bounds = array<i64: 1, 64>}, {transform_indices = @transform_3, window_bounds = array<i64: 1, 1, 16, 64>}]} {
    %c0_i32 = arith.constant 0 : i32
    %0 = arith.cmpi eq, %arg3, %c0_i32 : i32
    %1 = arith.extui %0 : i1 to i32
    %c0_i32_0 = arith.constant 0 : i32
    %2 = arith.cmpi ne, %1, %c0_i32_0 : i32
    scf.if %2 {
      %cst_12 = arith.constant 0.000000e+00 : f32
      %14 = vector.broadcast %cst_12 : f32 to vector<16x64xf32>
      %c0_13 = arith.constant 0 : index
      %c0_14 = arith.constant 0 : index
      %15 = vector.load %arg8[%c0_13, %c0_14] : memref<16x64xf32, #tpu.memory_space<vmem>>, vector<16x64xf32>
      tpu.vector_store %arg8[%c0_13, %c0_14], %14 {strides = array<i32>} : memref<16x64xf32, #tpu.memory_space<vmem>>, vector<16x64xf32>,
    } else {
    }
    %c0 = arith.constant 0 : index
    %c0_1 = arith.constant 0 : index
    %3 = vector.load %arg8[%c0, %c0_1] : memref<16x64xf32, #tpu.memory_space<vmem>>, vector<16x64xf32>
    %c0_2 = arith.constant 0 : index
    %c0_3 = arith.constant 0 : index
    %c0_4 = arith.constant 0 : index
    %c0_5 = arith.constant 0 : index
    %4 = vector.load %arg4[%c0_2, %c0_3, %c0_4, %c0_5] : memref<1x1x16x576xbf16, #tpu.memory_space<vmem>>, vector<1x1x16x576xbf16>
    %5 = vector.shape_cast %4 : vector<1x1x16x576xbf16> to vector<16x576xbf16>
    %c0_6 = arith.constant 0 : index
    %c0_7 = arith.constant 0 : index
    %c0_8 = arith.constant 0 : index
    %6 = vector.load %arg5[%c0_6, %c0_7, %c0_8] : memref<1x576x64xbf16, #tpu.memory_space<vmem>>, vector<1x576x64xbf16>
    %7 = vector.shape_cast %6 : vector<1x576x64xbf16> to vector<576x64xbf16>
    %cst = arith.constant dense<0.000000e+00> : vector<16x64xf32>
    %8 = tpu.matmul %5, %7, %cst {dimension_numbers = #tpu.dot_dimension_numbers<[1], [0], [0], [1], [0, 0, 1, 1], [], []>} : vector<16x576xbf16>, vector<576x64xbf16>, vector<16x64xf32> -> vector<16x64xf32>
    %9 = arith.addf %3, %8 : vector<16x64xf32>
    %c0_9 = arith.constant 0 : index
    %c0_10 = arith.constant 0 : index
    %10 = vector.load %arg8[%c0_9, %c0_10] : memref<16x64xf32, #tpu.memory_space<vmem>>, vector<16x64xf32>
    tpu.vector_store %arg8[%c0_9, %c0_10], %9 {strides = array<i32>} : memref<16x64xf32, #tpu.memory_space<vmem>>, vector<16x64xf32>,
    %c2_i32 = arith.constant 2 : i32
    %11 = arith.cmpi eq, %arg3, %c2_i32 : i32
    %12 = arith.extui %11 : i1 to i32
    %c0_i32_11 = arith.constant 0 : i32
    %13 = arith.cmpi ne, %12, %c0_i32_11 : i32
    scf.if %13 {
      %c0_12 = arith.constant 0 : index
      %c0_13 = arith.constant 0 : index
      %14 = vector.load %arg8[%c0_12, %c0_13] : memref<16x64xf32, #tpu.memory_space<vmem>>, vector<16x64xf32>
      %c0_14 = arith.constant 0 : index
      %c0_15 = arith.constant 0 : index
      %15 = vector.load %arg6[%c0_14, %c0_15] : memref<1x64xf32, #tpu.memory_space<vmem>>, vector<1x64xf32>
      %16 = vector.broadcast %15 : vector<1x64xf32> to vector<16x64xf32>
      %17 = arith.addf %14, %16 : vector<16x64xf32>
      %cst_16 = arith.constant 0.000000e+00 : f32
      %18 = vector.broadcast %cst_16 : f32 to vector<16x64xf32>
      %19 = arith.maximumf %17, %18 : vector<16x64xf32>
      %20 = arith.truncf %19 : vector<16x64xf32> to vector<16x64xbf16>
      %c0_17 = arith.constant 0 : index
      %c0_18 = arith.constant 0 : index
      %c0_19 = arith.constant 0 : index
      %c0_20 = arith.constant 0 : index
      %21 = vector.load %arg7[%c0_17, %c0_18, %c0_19, %c0_20] : memref<1x1x16x64xbf16, #tpu.memory_space<vmem>>, vector<1x1x16x64xbf16>
      %22 = vector.shape_cast %21 : vector<1x1x16x64xbf16> to vector<16x64xbf16>
      %23 = vector.shape_cast %20 : vector<16x64xbf16> to vector<1x1x16x64xbf16>
      tpu.vector_store %arg7[%c0_17, %c0_18, %c0_19, %c0_20], %23 {strides = array<i32>} : memref<1x1x16x64xbf16, #tpu.memory_space<vmem>>, vector<1x1x16x64xbf16>,
    } else {
    }
    return
  }
  func.func @transform_0(%arg0: i32, %arg1: i32, %arg2: i32, %arg3: i32) -> (i32, i32, i32, i32) {
    %c1_i32 = arith.constant 1 : i32
    %0 = arith.muli %arg1, %c1_i32 : i32
    %1 = arith.addi %0, %arg3 : i32
    %c0_i32 = arith.constant 0 : i32
    %c0_i32_0 = arith.constant 0 : i32
    return %arg0, %1, %arg2, %c0_i32 : i32, i32, i32, i32
  }
  func.func @transform_1(%arg0: i32, %arg1: i32, %arg2: i32, %arg3: i32) -> (i32, i32, i32) {
    %c0_i32 = arith.constant 0 : i32
    %c0_i32_0 = arith.constant 0 : i32
    %c0_i32_1 = arith.constant 0 : i32
    return %arg3, %c0_i32, %c0_i32_0 : i32, i32, i32
  }
  func.func @transform_2(%arg0: i32, %arg1: i32, %arg2: i32, %arg3: i32) -> (i32, i32) {
    %c0_i32 = arith.constant 0 : i32
    %c0_i32_0 = arith.constant 0 : i32
    %c0_i32_1 = arith.constant 0 : i32
    return %c0_i32, %c0_i32_0 : i32, i32
  }
  func.func @transform_3(%arg0: i32, %arg1: i32, %arg2: i32, %arg3: i32) -> (i32, i32, i32, i32) {
    %c0_i32 = arith.constant 0 : i32
    %c0_i32_0 = arith.constant 0 : i32
    return %arg0, %arg1, %arg2, %c0_i32 : i32, i32, i32, i32
  }
}

module attributes {stable_mosaic.version = 11 : i64} {
  func.func @_conv_tap_res_kernel(%arg0: i32, %arg1: i32, %arg2: i32, %arg3: i32, %arg4: memref<1x1x16x576xbf16, #tpu.memory_space<vmem>>, %arg5: memref<1x576x64xbf16, #tpu.memory_space<vmem>>, %arg6: memref<1x64xf32, #tpu.memory_space<vmem>>, %arg7: memref<1x1x16x64xbf16, #tpu.memory_space<vmem>>, %arg8: memref<1x1x16x64xbf16, #tpu.memory_space<vmem>>, %arg9: memref<16x64xf32, #tpu.memory_space<vmem>>) attributes {dimension_semantics = [#tpu.dimension_semantics<parallel>, #tpu.dimension_semantics<parallel>, #tpu.dimension_semantics<parallel>, #tpu.dimension_semantics<arbitrary>], iteration_bounds = array<i64: 2, 4, 1, 3>, scalar_prefetch = 0 : i64, scratch_operands = 1 : i64, tpu.core_type = #tpu.core_type<tc>, window_params = [{transform_indices = @transform_0, window_bounds = array<i64: 1, 1, 16, 576>}, {transform_indices = @transform_1, window_bounds = array<i64: 1, 576, 64>}, {pipeline_mode = #tpu.pipeline_mode<synchronous>, transform_indices = @transform_2, window_bounds = array<i64: 1, 64>}, {transform_indices = @transform_3, window_bounds = array<i64: 1, 1, 16, 64>}, {transform_indices = @transform_4, window_bounds = array<i64: 1, 1, 16, 64>}]} {
    %c0_i32 = arith.constant 0 : i32
    %0 = arith.cmpi eq, %arg3, %c0_i32 : i32
    %1 = arith.extui %0 : i1 to i32
    %c0_i32_0 = arith.constant 0 : i32
    %2 = arith.cmpi ne, %1, %c0_i32_0 : i32
    scf.if %2 {
      %cst_12 = arith.constant 0.000000e+00 : f32
      %14 = vector.broadcast %cst_12 : f32 to vector<16x64xf32>
      %c0_13 = arith.constant 0 : index
      %c0_14 = arith.constant 0 : index
      %15 = vector.load %arg9[%c0_13, %c0_14] : memref<16x64xf32, #tpu.memory_space<vmem>>, vector<16x64xf32>
      tpu.vector_store %arg9[%c0_13, %c0_14], %14 {strides = array<i32>} : memref<16x64xf32, #tpu.memory_space<vmem>>, vector<16x64xf32>,
    } else {
    }
    %c0 = arith.constant 0 : index
    %c0_1 = arith.constant 0 : index
    %3 = vector.load %arg9[%c0, %c0_1] : memref<16x64xf32, #tpu.memory_space<vmem>>, vector<16x64xf32>
    %c0_2 = arith.constant 0 : index
    %c0_3 = arith.constant 0 : index
    %c0_4 = arith.constant 0 : index
    %c0_5 = arith.constant 0 : index
    %4 = vector.load %arg4[%c0_2, %c0_3, %c0_4, %c0_5] : memref<1x1x16x576xbf16, #tpu.memory_space<vmem>>, vector<1x1x16x576xbf16>
    %5 = vector.shape_cast %4 : vector<1x1x16x576xbf16> to vector<16x576xbf16>
    %c0_6 = arith.constant 0 : index
    %c0_7 = arith.constant 0 : index
    %c0_8 = arith.constant 0 : index
    %6 = vector.load %arg5[%c0_6, %c0_7, %c0_8] : memref<1x576x64xbf16, #tpu.memory_space<vmem>>, vector<1x576x64xbf16>
    %7 = vector.shape_cast %6 : vector<1x576x64xbf16> to vector<576x64xbf16>
    %cst = arith.constant dense<0.000000e+00> : vector<16x64xf32>
    %8 = tpu.matmul %5, %7, %cst {dimension_numbers = #tpu.dot_dimension_numbers<[1], [0], [0], [1], [0, 0, 1, 1], [], []>} : vector<16x576xbf16>, vector<576x64xbf16>, vector<16x64xf32> -> vector<16x64xf32>
    %9 = arith.addf %3, %8 : vector<16x64xf32>
    %c0_9 = arith.constant 0 : index
    %c0_10 = arith.constant 0 : index
    %10 = vector.load %arg9[%c0_9, %c0_10] : memref<16x64xf32, #tpu.memory_space<vmem>>, vector<16x64xf32>
    tpu.vector_store %arg9[%c0_9, %c0_10], %9 {strides = array<i32>} : memref<16x64xf32, #tpu.memory_space<vmem>>, vector<16x64xf32>,
    %c2_i32 = arith.constant 2 : i32
    %11 = arith.cmpi eq, %arg3, %c2_i32 : i32
    %12 = arith.extui %11 : i1 to i32
    %c0_i32_11 = arith.constant 0 : i32
    %13 = arith.cmpi ne, %12, %c0_i32_11 : i32
    scf.if %13 {
      %c0_12 = arith.constant 0 : index
      %c0_13 = arith.constant 0 : index
      %14 = vector.load %arg9[%c0_12, %c0_13] : memref<16x64xf32, #tpu.memory_space<vmem>>, vector<16x64xf32>
      %c0_14 = arith.constant 0 : index
      %c0_15 = arith.constant 0 : index
      %15 = vector.load %arg6[%c0_14, %c0_15] : memref<1x64xf32, #tpu.memory_space<vmem>>, vector<1x64xf32>
      %16 = vector.broadcast %15 : vector<1x64xf32> to vector<16x64xf32>
      %17 = arith.addf %14, %16 : vector<16x64xf32>
      %c0_16 = arith.constant 0 : index
      %c0_17 = arith.constant 0 : index
      %c0_18 = arith.constant 0 : index
      %c0_19 = arith.constant 0 : index
      %18 = vector.load %arg7[%c0_16, %c0_17, %c0_18, %c0_19] : memref<1x1x16x64xbf16, #tpu.memory_space<vmem>>, vector<1x1x16x64xbf16>
      %19 = vector.shape_cast %18 : vector<1x1x16x64xbf16> to vector<16x64xbf16>
      %20 = arith.extf %19 : vector<16x64xbf16> to vector<16x64xf32>
      %21 = arith.addf %17, %20 : vector<16x64xf32>
      %cst_20 = arith.constant 0.000000e+00 : f32
      %22 = vector.broadcast %cst_20 : f32 to vector<16x64xf32>
      %23 = arith.maximumf %21, %22 : vector<16x64xf32>
      %24 = arith.truncf %23 : vector<16x64xf32> to vector<16x64xbf16>
      %c0_21 = arith.constant 0 : index
      %c0_22 = arith.constant 0 : index
      %c0_23 = arith.constant 0 : index
      %c0_24 = arith.constant 0 : index
      %25 = vector.load %arg8[%c0_21, %c0_22, %c0_23, %c0_24] : memref<1x1x16x64xbf16, #tpu.memory_space<vmem>>, vector<1x1x16x64xbf16>
      %26 = vector.shape_cast %25 : vector<1x1x16x64xbf16> to vector<16x64xbf16>
      %27 = vector.shape_cast %24 : vector<16x64xbf16> to vector<1x1x16x64xbf16>
      tpu.vector_store %arg8[%c0_21, %c0_22, %c0_23, %c0_24], %27 {strides = array<i32>} : memref<1x1x16x64xbf16, #tpu.memory_space<vmem>>, vector<1x1x16x64xbf16>,
    } else {
    }
    return
  }
  func.func @transform_0(%arg0: i32, %arg1: i32, %arg2: i32, %arg3: i32) -> (i32, i32, i32, i32) {
    %c1_i32 = arith.constant 1 : i32
    %0 = arith.muli %arg1, %c1_i32 : i32
    %1 = arith.addi %0, %arg3 : i32
    %c0_i32 = arith.constant 0 : i32
    %c0_i32_0 = arith.constant 0 : i32
    return %arg0, %1, %arg2, %c0_i32 : i32, i32, i32, i32
  }
  func.func @transform_1(%arg0: i32, %arg1: i32, %arg2: i32, %arg3: i32) -> (i32, i32, i32) {
    %c0_i32 = arith.constant 0 : i32
    %c0_i32_0 = arith.constant 0 : i32
    %c0_i32_1 = arith.constant 0 : i32
    return %arg3, %c0_i32, %c0_i32_0 : i32, i32, i32
  }
  func.func @transform_2(%arg0: i32, %arg1: i32, %arg2: i32, %arg3: i32) -> (i32, i32) {
    %c0_i32 = arith.constant 0 : i32
    %c0_i32_0 = arith.constant 0 : i32
    %c0_i32_1 = arith.constant 0 : i32
    return %c0_i32, %c0_i32_0 : i32, i32
  }
  func.func @transform_3(%arg0: i32, %arg1: i32, %arg2: i32, %arg3: i32) -> (i32, i32, i32, i32) {
    %c0_i32 = arith.constant 0 : i32
    %c0_i32_0 = arith.constant 0 : i32
    return %arg0, %arg1, %arg2, %c0_i32 : i32, i32, i32, i32
  }
  func.func @transform_4(%arg0: i32, %arg1: i32, %arg2: i32, %arg3: i32) -> (i32, i32, i32, i32) {
    %c0_i32 = arith.constant 0 : i32
    %c0_i32_0 = arith.constant 0 : i32
    return %arg0, %arg1, %arg2, %c0_i32 : i32, i32, i32, i32
  }
}

module attributes {stable_mosaic.version = 11 : i64} {
  func.func @_conv_tap_kernel(%arg0: i32, %arg1: i32, %arg2: i32, %arg3: i32, %arg4: memref<1x1x4x64xbf16, #tpu.memory_space<vmem>>, %arg5: memref<1x64x128xbf16, #tpu.memory_space<vmem>>, %arg6: memref<1x128xf32, #tpu.memory_space<vmem>>, %arg7: memref<1x1x4x128xbf16, #tpu.memory_space<vmem>>, %arg8: memref<4x128xf32, #tpu.memory_space<vmem>>) attributes {dimension_semantics = [#tpu.dimension_semantics<parallel>, #tpu.dimension_semantics<parallel>, #tpu.dimension_semantics<parallel>, #tpu.dimension_semantics<arbitrary>], iteration_bounds = array<i64: 2, 2, 1, 1>, scalar_prefetch = 0 : i64, scratch_operands = 1 : i64, tpu.core_type = #tpu.core_type<tc>, window_params = [{transform_indices = @transform_0, window_bounds = array<i64: 1, 1, 4, 64>}, {transform_indices = @transform_1, window_bounds = array<i64: 1, 64, 128>}, {pipeline_mode = #tpu.pipeline_mode<synchronous>, transform_indices = @transform_2, window_bounds = array<i64: 1, 128>}, {transform_indices = @transform_3, window_bounds = array<i64: 1, 1, 4, 128>}]} {
    %c0_i32 = arith.constant 0 : i32
    %0 = arith.cmpi eq, %arg3, %c0_i32 : i32
    %1 = arith.extui %0 : i1 to i32
    %c0_i32_0 = arith.constant 0 : i32
    %2 = arith.cmpi ne, %1, %c0_i32_0 : i32
    scf.if %2 {
      %cst_13 = arith.constant 0.000000e+00 : f32
      %14 = vector.broadcast %cst_13 : f32 to vector<4x128xf32>
      %c0_14 = arith.constant 0 : index
      %c0_15 = arith.constant 0 : index
      %15 = vector.load %arg8[%c0_14, %c0_15] : memref<4x128xf32, #tpu.memory_space<vmem>>, vector<4x128xf32>
      tpu.vector_store %arg8[%c0_14, %c0_15], %14 {strides = array<i32>} : memref<4x128xf32, #tpu.memory_space<vmem>>, vector<4x128xf32>,
    } else {
    }
    %c0 = arith.constant 0 : index
    %c0_1 = arith.constant 0 : index
    %3 = vector.load %arg8[%c0, %c0_1] : memref<4x128xf32, #tpu.memory_space<vmem>>, vector<4x128xf32>
    %c0_2 = arith.constant 0 : index
    %c0_3 = arith.constant 0 : index
    %c0_4 = arith.constant 0 : index
    %c0_5 = arith.constant 0 : index
    %4 = vector.load %arg4[%c0_2, %c0_3, %c0_4, %c0_5] : memref<1x1x4x64xbf16, #tpu.memory_space<vmem>>, vector<1x1x4x64xbf16>
    %5 = vector.shape_cast %4 : vector<1x1x4x64xbf16> to vector<4x64xbf16>
    %c0_6 = arith.constant 0 : index
    %c0_7 = arith.constant 0 : index
    %c0_8 = arith.constant 0 : index
    %6 = vector.load %arg5[%c0_6, %c0_7, %c0_8] : memref<1x64x128xbf16, #tpu.memory_space<vmem>>, vector<1x64x128xbf16>
    %7 = vector.shape_cast %6 : vector<1x64x128xbf16> to vector<64x128xbf16>
    %cst = arith.constant dense<0.000000e+00> : vector<4x128xf32>
    %8 = tpu.matmul %5, %7, %cst {dimension_numbers = #tpu.dot_dimension_numbers<[1], [0], [0], [1], [0, 0, 1, 1], [], []>} : vector<4x64xbf16>, vector<64x128xbf16>, vector<4x128xf32> -> vector<4x128xf32>
    %9 = arith.addf %3, %8 : vector<4x128xf32>
    %c0_9 = arith.constant 0 : index
    %c0_10 = arith.constant 0 : index
    %10 = vector.load %arg8[%c0_9, %c0_10] : memref<4x128xf32, #tpu.memory_space<vmem>>, vector<4x128xf32>
    tpu.vector_store %arg8[%c0_9, %c0_10], %9 {strides = array<i32>} : memref<4x128xf32, #tpu.memory_space<vmem>>, vector<4x128xf32>,
    %c0_i32_11 = arith.constant 0 : i32
    %11 = arith.cmpi eq, %arg3, %c0_i32_11 : i32
    %12 = arith.extui %11 : i1 to i32
    %c0_i32_12 = arith.constant 0 : i32
    %13 = arith.cmpi ne, %12, %c0_i32_12 : i32
    scf.if %13 {
      %c0_13 = arith.constant 0 : index
      %c0_14 = arith.constant 0 : index
      %14 = vector.load %arg8[%c0_13, %c0_14] : memref<4x128xf32, #tpu.memory_space<vmem>>, vector<4x128xf32>
      %c0_15 = arith.constant 0 : index
      %c0_16 = arith.constant 0 : index
      %15 = vector.load %arg6[%c0_15, %c0_16] : memref<1x128xf32, #tpu.memory_space<vmem>>, vector<1x128xf32>
      %16 = vector.broadcast %15 : vector<1x128xf32> to vector<4x128xf32>
      %17 = arith.addf %14, %16 : vector<4x128xf32>
      %18 = arith.truncf %17 : vector<4x128xf32> to vector<4x128xbf16>
      %c0_17 = arith.constant 0 : index
      %c0_18 = arith.constant 0 : index
      %c0_19 = arith.constant 0 : index
      %c0_20 = arith.constant 0 : index
      %19 = vector.load %arg7[%c0_17, %c0_18, %c0_19, %c0_20] : memref<1x1x4x128xbf16, #tpu.memory_space<vmem>>, vector<1x1x4x128xbf16>
      %20 = vector.shape_cast %19 : vector<1x1x4x128xbf16> to vector<4x128xbf16>
      %21 = vector.shape_cast %18 : vector<4x128xbf16> to vector<1x1x4x128xbf16>
      tpu.vector_store %arg7[%c0_17, %c0_18, %c0_19, %c0_20], %21 {strides = array<i32>} : memref<1x1x4x128xbf16, #tpu.memory_space<vmem>>, vector<1x1x4x128xbf16>,
    } else {
    }
    return
  }
  func.func @transform_0(%arg0: i32, %arg1: i32, %arg2: i32, %arg3: i32) -> (i32, i32, i32, i32) {
    %c2_i32 = arith.constant 2 : i32
    %0 = arith.muli %arg1, %c2_i32 : i32
    %1 = arith.addi %0, %arg3 : i32
    %c0_i32 = arith.constant 0 : i32
    %c0_i32_0 = arith.constant 0 : i32
    return %arg0, %1, %arg2, %c0_i32 : i32, i32, i32, i32
  }
  func.func @transform_1(%arg0: i32, %arg1: i32, %arg2: i32, %arg3: i32) -> (i32, i32, i32) {
    %c0_i32 = arith.constant 0 : i32
    %c0_i32_0 = arith.constant 0 : i32
    %c0_i32_1 = arith.constant 0 : i32
    return %arg3, %c0_i32, %c0_i32_0 : i32, i32, i32
  }
  func.func @transform_2(%arg0: i32, %arg1: i32, %arg2: i32, %arg3: i32) -> (i32, i32) {
    %c0_i32 = arith.constant 0 : i32
    %c0_i32_0 = arith.constant 0 : i32
    %c0_i32_1 = arith.constant 0 : i32
    return %c0_i32, %c0_i32_0 : i32, i32
  }
  func.func @transform_3(%arg0: i32, %arg1: i32, %arg2: i32, %arg3: i32) -> (i32, i32, i32, i32) {
    %c0_i32 = arith.constant 0 : i32
    %c0_i32_0 = arith.constant 0 : i32
    return %arg0, %arg1, %arg2, %c0_i32 : i32, i32, i32, i32
  }
}

module attributes {stable_mosaic.version = 11 : i64} {
  func.func @_conv_tap_kernel(%arg0: i32, %arg1: i32, %arg2: i32, %arg3: i32, %arg4: memref<1x1x4x576xbf16, #tpu.memory_space<vmem>>, %arg5: memref<1x576x128xbf16, #tpu.memory_space<vmem>>, %arg6: memref<1x128xf32, #tpu.memory_space<vmem>>, %arg7: memref<1x1x4x128xbf16, #tpu.memory_space<vmem>>, %arg8: memref<4x128xf32, #tpu.memory_space<vmem>>) attributes {dimension_semantics = [#tpu.dimension_semantics<parallel>, #tpu.dimension_semantics<parallel>, #tpu.dimension_semantics<parallel>, #tpu.dimension_semantics<arbitrary>], iteration_bounds = array<i64: 2, 2, 1, 3>, scalar_prefetch = 0 : i64, scratch_operands = 1 : i64, tpu.core_type = #tpu.core_type<tc>, window_params = [{transform_indices = @transform_0, window_bounds = array<i64: 1, 1, 4, 576>}, {transform_indices = @transform_1, window_bounds = array<i64: 1, 576, 128>}, {pipeline_mode = #tpu.pipeline_mode<synchronous>, transform_indices = @transform_2, window_bounds = array<i64: 1, 128>}, {transform_indices = @transform_3, window_bounds = array<i64: 1, 1, 4, 128>}]} {
    %c0_i32 = arith.constant 0 : i32
    %0 = arith.cmpi eq, %arg3, %c0_i32 : i32
    %1 = arith.extui %0 : i1 to i32
    %c0_i32_0 = arith.constant 0 : i32
    %2 = arith.cmpi ne, %1, %c0_i32_0 : i32
    scf.if %2 {
      %cst_12 = arith.constant 0.000000e+00 : f32
      %14 = vector.broadcast %cst_12 : f32 to vector<4x128xf32>
      %c0_13 = arith.constant 0 : index
      %c0_14 = arith.constant 0 : index
      %15 = vector.load %arg8[%c0_13, %c0_14] : memref<4x128xf32, #tpu.memory_space<vmem>>, vector<4x128xf32>
      tpu.vector_store %arg8[%c0_13, %c0_14], %14 {strides = array<i32>} : memref<4x128xf32, #tpu.memory_space<vmem>>, vector<4x128xf32>,
    } else {
    }
    %c0 = arith.constant 0 : index
    %c0_1 = arith.constant 0 : index
    %3 = vector.load %arg8[%c0, %c0_1] : memref<4x128xf32, #tpu.memory_space<vmem>>, vector<4x128xf32>
    %c0_2 = arith.constant 0 : index
    %c0_3 = arith.constant 0 : index
    %c0_4 = arith.constant 0 : index
    %c0_5 = arith.constant 0 : index
    %4 = vector.load %arg4[%c0_2, %c0_3, %c0_4, %c0_5] : memref<1x1x4x576xbf16, #tpu.memory_space<vmem>>, vector<1x1x4x576xbf16>
    %5 = vector.shape_cast %4 : vector<1x1x4x576xbf16> to vector<4x576xbf16>
    %c0_6 = arith.constant 0 : index
    %c0_7 = arith.constant 0 : index
    %c0_8 = arith.constant 0 : index
    %6 = vector.load %arg5[%c0_6, %c0_7, %c0_8] : memref<1x576x128xbf16, #tpu.memory_space<vmem>>, vector<1x576x128xbf16>
    %7 = vector.shape_cast %6 : vector<1x576x128xbf16> to vector<576x128xbf16>
    %cst = arith.constant dense<0.000000e+00> : vector<4x128xf32>
    %8 = tpu.matmul %5, %7, %cst {dimension_numbers = #tpu.dot_dimension_numbers<[1], [0], [0], [1], [0, 0, 1, 1], [], []>} : vector<4x576xbf16>, vector<576x128xbf16>, vector<4x128xf32> -> vector<4x128xf32>
    %9 = arith.addf %3, %8 : vector<4x128xf32>
    %c0_9 = arith.constant 0 : index
    %c0_10 = arith.constant 0 : index
    %10 = vector.load %arg8[%c0_9, %c0_10] : memref<4x128xf32, #tpu.memory_space<vmem>>, vector<4x128xf32>
    tpu.vector_store %arg8[%c0_9, %c0_10], %9 {strides = array<i32>} : memref<4x128xf32, #tpu.memory_space<vmem>>, vector<4x128xf32>,
    %c2_i32 = arith.constant 2 : i32
    %11 = arith.cmpi eq, %arg3, %c2_i32 : i32
    %12 = arith.extui %11 : i1 to i32
    %c0_i32_11 = arith.constant 0 : i32
    %13 = arith.cmpi ne, %12, %c0_i32_11 : i32
    scf.if %13 {
      %c0_12 = arith.constant 0 : index
      %c0_13 = arith.constant 0 : index
      %14 = vector.load %arg8[%c0_12, %c0_13] : memref<4x128xf32, #tpu.memory_space<vmem>>, vector<4x128xf32>
      %c0_14 = arith.constant 0 : index
      %c0_15 = arith.constant 0 : index
      %15 = vector.load %arg6[%c0_14, %c0_15] : memref<1x128xf32, #tpu.memory_space<vmem>>, vector<1x128xf32>
      %16 = vector.broadcast %15 : vector<1x128xf32> to vector<4x128xf32>
      %17 = arith.addf %14, %16 : vector<4x128xf32>
      %cst_16 = arith.constant 0.000000e+00 : f32
      %18 = vector.broadcast %cst_16 : f32 to vector<4x128xf32>
      %19 = arith.maximumf %17, %18 : vector<4x128xf32>
      %20 = arith.truncf %19 : vector<4x128xf32> to vector<4x128xbf16>
      %c0_17 = arith.constant 0 : index
      %c0_18 = arith.constant 0 : index
      %c0_19 = arith.constant 0 : index
      %c0_20 = arith.constant 0 : index
      %21 = vector.load %arg7[%c0_17, %c0_18, %c0_19, %c0_20] : memref<1x1x4x128xbf16, #tpu.memory_space<vmem>>, vector<1x1x4x128xbf16>
      %22 = vector.shape_cast %21 : vector<1x1x4x128xbf16> to vector<4x128xbf16>
      %23 = vector.shape_cast %20 : vector<4x128xbf16> to vector<1x1x4x128xbf16>
      tpu.vector_store %arg7[%c0_17, %c0_18, %c0_19, %c0_20], %23 {strides = array<i32>} : memref<1x1x4x128xbf16, #tpu.memory_space<vmem>>, vector<1x1x4x128xbf16>,
    } else {
    }
    return
  }
  func.func @transform_0(%arg0: i32, %arg1: i32, %arg2: i32, %arg3: i32) -> (i32, i32, i32, i32) {
    %c2_i32 = arith.constant 2 : i32
    %0 = arith.muli %arg1, %c2_i32 : i32
    %1 = arith.addi %0, %arg3 : i32
    %c0_i32 = arith.constant 0 : i32
    %c0_i32_0 = arith.constant 0 : i32
    return %arg0, %1, %arg2, %c0_i32 : i32, i32, i32, i32
  }
  func.func @transform_1(%arg0: i32, %arg1: i32, %arg2: i32, %arg3: i32) -> (i32, i32, i32) {
    %c0_i32 = arith.constant 0 : i32
    %c0_i32_0 = arith.constant 0 : i32
    %c0_i32_1 = arith.constant 0 : i32
    return %arg3, %c0_i32, %c0_i32_0 : i32, i32, i32
  }
  func.func @transform_2(%arg0: i32, %arg1: i32, %arg2: i32, %arg3: i32) -> (i32, i32) {
    %c0_i32 = arith.constant 0 : i32
    %c0_i32_0 = arith.constant 0 : i32
    %c0_i32_1 = arith.constant 0 : i32
    return %c0_i32, %c0_i32_0 : i32, i32
  }
  func.func @transform_3(%arg0: i32, %arg1: i32, %arg2: i32, %arg3: i32) -> (i32, i32, i32, i32) {
    %c0_i32 = arith.constant 0 : i32
    %c0_i32_0 = arith.constant 0 : i32
    return %arg0, %arg1, %arg2, %c0_i32 : i32, i32, i32, i32
  }
}

module attributes {stable_mosaic.version = 11 : i64} {
  func.func @_conv_tap_res_kernel(%arg0: i32, %arg1: i32, %arg2: i32, %arg3: i32, %arg4: memref<1x1x4x1152xbf16, #tpu.memory_space<vmem>>, %arg5: memref<1x1152x128xbf16, #tpu.memory_space<vmem>>, %arg6: memref<1x128xf32, #tpu.memory_space<vmem>>, %arg7: memref<1x1x4x128xbf16, #tpu.memory_space<vmem>>, %arg8: memref<1x1x4x128xbf16, #tpu.memory_space<vmem>>, %arg9: memref<4x128xf32, #tpu.memory_space<vmem>>) attributes {dimension_semantics = [#tpu.dimension_semantics<parallel>, #tpu.dimension_semantics<parallel>, #tpu.dimension_semantics<parallel>, #tpu.dimension_semantics<arbitrary>], iteration_bounds = array<i64: 2, 2, 1, 3>, scalar_prefetch = 0 : i64, scratch_operands = 1 : i64, tpu.core_type = #tpu.core_type<tc>, window_params = [{transform_indices = @transform_0, window_bounds = array<i64: 1, 1, 4, 1152>}, {transform_indices = @transform_1, window_bounds = array<i64: 1, 1152, 128>}, {pipeline_mode = #tpu.pipeline_mode<synchronous>, transform_indices = @transform_2, window_bounds = array<i64: 1, 128>}, {transform_indices = @transform_3, window_bounds = array<i64: 1, 1, 4, 128>}, {transform_indices = @transform_4, window_bounds = array<i64: 1, 1, 4, 128>}]} {
    %c0_i32 = arith.constant 0 : i32
    %0 = arith.cmpi eq, %arg3, %c0_i32 : i32
    %1 = arith.extui %0 : i1 to i32
    %c0_i32_0 = arith.constant 0 : i32
    %2 = arith.cmpi ne, %1, %c0_i32_0 : i32
    scf.if %2 {
      %cst_12 = arith.constant 0.000000e+00 : f32
      %14 = vector.broadcast %cst_12 : f32 to vector<4x128xf32>
      %c0_13 = arith.constant 0 : index
      %c0_14 = arith.constant 0 : index
      %15 = vector.load %arg9[%c0_13, %c0_14] : memref<4x128xf32, #tpu.memory_space<vmem>>, vector<4x128xf32>
      tpu.vector_store %arg9[%c0_13, %c0_14], %14 {strides = array<i32>} : memref<4x128xf32, #tpu.memory_space<vmem>>, vector<4x128xf32>,
    } else {
    }
    %c0 = arith.constant 0 : index
    %c0_1 = arith.constant 0 : index
    %3 = vector.load %arg9[%c0, %c0_1] : memref<4x128xf32, #tpu.memory_space<vmem>>, vector<4x128xf32>
    %c0_2 = arith.constant 0 : index
    %c0_3 = arith.constant 0 : index
    %c0_4 = arith.constant 0 : index
    %c0_5 = arith.constant 0 : index
    %4 = vector.load %arg4[%c0_2, %c0_3, %c0_4, %c0_5] : memref<1x1x4x1152xbf16, #tpu.memory_space<vmem>>, vector<1x1x4x1152xbf16>
    %5 = vector.shape_cast %4 : vector<1x1x4x1152xbf16> to vector<4x1152xbf16>
    %c0_6 = arith.constant 0 : index
    %c0_7 = arith.constant 0 : index
    %c0_8 = arith.constant 0 : index
    %6 = vector.load %arg5[%c0_6, %c0_7, %c0_8] : memref<1x1152x128xbf16, #tpu.memory_space<vmem>>, vector<1x1152x128xbf16>
    %7 = vector.shape_cast %6 : vector<1x1152x128xbf16> to vector<1152x128xbf16>
    %cst = arith.constant dense<0.000000e+00> : vector<4x128xf32>
    %8 = tpu.matmul %5, %7, %cst {dimension_numbers = #tpu.dot_dimension_numbers<[1], [0], [0], [1], [0, 0, 1, 1], [], []>} : vector<4x1152xbf16>, vector<1152x128xbf16>, vector<4x128xf32> -> vector<4x128xf32>
    %9 = arith.addf %3, %8 : vector<4x128xf32>
    %c0_9 = arith.constant 0 : index
    %c0_10 = arith.constant 0 : index
    %10 = vector.load %arg9[%c0_9, %c0_10] : memref<4x128xf32, #tpu.memory_space<vmem>>, vector<4x128xf32>
    tpu.vector_store %arg9[%c0_9, %c0_10], %9 {strides = array<i32>} : memref<4x128xf32, #tpu.memory_space<vmem>>, vector<4x128xf32>,
    %c2_i32 = arith.constant 2 : i32
    %11 = arith.cmpi eq, %arg3, %c2_i32 : i32
    %12 = arith.extui %11 : i1 to i32
    %c0_i32_11 = arith.constant 0 : i32
    %13 = arith.cmpi ne, %12, %c0_i32_11 : i32
    scf.if %13 {
      %c0_12 = arith.constant 0 : index
      %c0_13 = arith.constant 0 : index
      %14 = vector.load %arg9[%c0_12, %c0_13] : memref<4x128xf32, #tpu.memory_space<vmem>>, vector<4x128xf32>
      %c0_14 = arith.constant 0 : index
      %c0_15 = arith.constant 0 : index
      %15 = vector.load %arg6[%c0_14, %c0_15] : memref<1x128xf32, #tpu.memory_space<vmem>>, vector<1x128xf32>
      %16 = vector.broadcast %15 : vector<1x128xf32> to vector<4x128xf32>
      %17 = arith.addf %14, %16 : vector<4x128xf32>
      %c0_16 = arith.constant 0 : index
      %c0_17 = arith.constant 0 : index
      %c0_18 = arith.constant 0 : index
      %c0_19 = arith.constant 0 : index
      %18 = vector.load %arg7[%c0_16, %c0_17, %c0_18, %c0_19] : memref<1x1x4x128xbf16, #tpu.memory_space<vmem>>, vector<1x1x4x128xbf16>
      %19 = vector.shape_cast %18 : vector<1x1x4x128xbf16> to vector<4x128xbf16>
      %20 = arith.extf %19 : vector<4x128xbf16> to vector<4x128xf32>
      %21 = arith.addf %17, %20 : vector<4x128xf32>
      %cst_20 = arith.constant 0.000000e+00 : f32
      %22 = vector.broadcast %cst_20 : f32 to vector<4x128xf32>
      %23 = arith.maximumf %21, %22 : vector<4x128xf32>
      %24 = arith.truncf %23 : vector<4x128xf32> to vector<4x128xbf16>
      %c0_21 = arith.constant 0 : index
      %c0_22 = arith.constant 0 : index
      %c0_23 = arith.constant 0 : index
      %c0_24 = arith.constant 0 : index
      %25 = vector.load %arg8[%c0_21, %c0_22, %c0_23, %c0_24] : memref<1x1x4x128xbf16, #tpu.memory_space<vmem>>, vector<1x1x4x128xbf16>
      %26 = vector.shape_cast %25 : vector<1x1x4x128xbf16> to vector<4x128xbf16>
      %27 = vector.shape_cast %24 : vector<4x128xbf16> to vector<1x1x4x128xbf16>
      tpu.vector_store %arg8[%c0_21, %c0_22, %c0_23, %c0_24], %27 {strides = array<i32>} : memref<1x1x4x128xbf16, #tpu.memory_space<vmem>>, vector<1x1x4x128xbf16>,
    } else {
    }
    return
  }
  func.func @transform_0(%arg0: i32, %arg1: i32, %arg2: i32, %arg3: i32) -> (i32, i32, i32, i32) {
    %c1_i32 = arith.constant 1 : i32
    %0 = arith.muli %arg1, %c1_i32 : i32
    %1 = arith.addi %0, %arg3 : i32
    %c0_i32 = arith.constant 0 : i32
    %c0_i32_0 = arith.constant 0 : i32
    return %arg0, %1, %arg2, %c0_i32 : i32, i32, i32, i32
  }
  func.func @transform_1(%arg0: i32, %arg1: i32, %arg2: i32, %arg3: i32) -> (i32, i32, i32) {
    %c0_i32 = arith.constant 0 : i32
    %c0_i32_0 = arith.constant 0 : i32
    %c0_i32_1 = arith.constant 0 : i32
    return %arg3, %c0_i32, %c0_i32_0 : i32, i32, i32
  }
  func.func @transform_2(%arg0: i32, %arg1: i32, %arg2: i32, %arg3: i32) -> (i32, i32) {
    %c0_i32 = arith.constant 0 : i32
    %c0_i32_0 = arith.constant 0 : i32
    %c0_i32_1 = arith.constant 0 : i32
    return %c0_i32, %c0_i32_0 : i32, i32
  }
  func.func @transform_3(%arg0: i32, %arg1: i32, %arg2: i32, %arg3: i32) -> (i32, i32, i32, i32) {
    %c0_i32 = arith.constant 0 : i32
    %c0_i32_0 = arith.constant 0 : i32
    return %arg0, %arg1, %arg2, %c0_i32 : i32, i32, i32, i32
  }
  func.func @transform_4(%arg0: i32, %arg1: i32, %arg2: i32, %arg3: i32) -> (i32, i32, i32, i32) {
    %c0_i32 = arith.constant 0 : i32
    %c0_i32_0 = arith.constant 0 : i32
    return %arg0, %arg1, %arg2, %c0_i32 : i32, i32, i32, i32
  }
}

module attributes {stable_mosaic.version = 11 : i64} {
  func.func @_conv_tap_kernel(%arg0: i32, %arg1: i32, %arg2: i32, %arg3: i32, %arg4: memref<1x1x4x1152xbf16, #tpu.memory_space<vmem>>, %arg5: memref<1x1152x128xbf16, #tpu.memory_space<vmem>>, %arg6: memref<1x128xf32, #tpu.memory_space<vmem>>, %arg7: memref<1x1x4x128xbf16, #tpu.memory_space<vmem>>, %arg8: memref<4x128xf32, #tpu.memory_space<vmem>>) attributes {dimension_semantics = [#tpu.dimension_semantics<parallel>, #tpu.dimension_semantics<parallel>, #tpu.dimension_semantics<parallel>, #tpu.dimension_semantics<arbitrary>], iteration_bounds = array<i64: 2, 2, 1, 3>, scalar_prefetch = 0 : i64, scratch_operands = 1 : i64, tpu.core_type = #tpu.core_type<tc>, window_params = [{transform_indices = @transform_0, window_bounds = array<i64: 1, 1, 4, 1152>}, {transform_indices = @transform_1, window_bounds = array<i64: 1, 1152, 128>}, {pipeline_mode = #tpu.pipeline_mode<synchronous>, transform_indices = @transform_2, window_bounds = array<i64: 1, 128>}, {transform_indices = @transform_3, window_bounds = array<i64: 1, 1, 4, 128>}]} {
    %c0_i32 = arith.constant 0 : i32
    %0 = arith.cmpi eq, %arg3, %c0_i32 : i32
    %1 = arith.extui %0 : i1 to i32
    %c0_i32_0 = arith.constant 0 : i32
    %2 = arith.cmpi ne, %1, %c0_i32_0 : i32
    scf.if %2 {
      %cst_12 = arith.constant 0.000000e+00 : f32
      %14 = vector.broadcast %cst_12 : f32 to vector<4x128xf32>
      %c0_13 = arith.constant 0 : index
      %c0_14 = arith.constant 0 : index
      %15 = vector.load %arg8[%c0_13, %c0_14] : memref<4x128xf32, #tpu.memory_space<vmem>>, vector<4x128xf32>
      tpu.vector_store %arg8[%c0_13, %c0_14], %14 {strides = array<i32>} : memref<4x128xf32, #tpu.memory_space<vmem>>, vector<4x128xf32>,
    } else {
    }
    %c0 = arith.constant 0 : index
    %c0_1 = arith.constant 0 : index
    %3 = vector.load %arg8[%c0, %c0_1] : memref<4x128xf32, #tpu.memory_space<vmem>>, vector<4x128xf32>
    %c0_2 = arith.constant 0 : index
    %c0_3 = arith.constant 0 : index
    %c0_4 = arith.constant 0 : index
    %c0_5 = arith.constant 0 : index
    %4 = vector.load %arg4[%c0_2, %c0_3, %c0_4, %c0_5] : memref<1x1x4x1152xbf16, #tpu.memory_space<vmem>>, vector<1x1x4x1152xbf16>
    %5 = vector.shape_cast %4 : vector<1x1x4x1152xbf16> to vector<4x1152xbf16>
    %c0_6 = arith.constant 0 : index
    %c0_7 = arith.constant 0 : index
    %c0_8 = arith.constant 0 : index
    %6 = vector.load %arg5[%c0_6, %c0_7, %c0_8] : memref<1x1152x128xbf16, #tpu.memory_space<vmem>>, vector<1x1152x128xbf16>
    %7 = vector.shape_cast %6 : vector<1x1152x128xbf16> to vector<1152x128xbf16>
    %cst = arith.constant dense<0.000000e+00> : vector<4x128xf32>
    %8 = tpu.matmul %5, %7, %cst {dimension_numbers = #tpu.dot_dimension_numbers<[1], [0], [0], [1], [0, 0, 1, 1], [], []>} : vector<4x1152xbf16>, vector<1152x128xbf16>, vector<4x128xf32> -> vector<4x128xf32>
    %9 = arith.addf %3, %8 : vector<4x128xf32>
    %c0_9 = arith.constant 0 : index
    %c0_10 = arith.constant 0 : index
    %10 = vector.load %arg8[%c0_9, %c0_10] : memref<4x128xf32, #tpu.memory_space<vmem>>, vector<4x128xf32>
    tpu.vector_store %arg8[%c0_9, %c0_10], %9 {strides = array<i32>} : memref<4x128xf32, #tpu.memory_space<vmem>>, vector<4x128xf32>,
    %c2_i32 = arith.constant 2 : i32
    %11 = arith.cmpi eq, %arg3, %c2_i32 : i32
    %12 = arith.extui %11 : i1 to i32
    %c0_i32_11 = arith.constant 0 : i32
    %13 = arith.cmpi ne, %12, %c0_i32_11 : i32
    scf.if %13 {
      %c0_12 = arith.constant 0 : index
      %c0_13 = arith.constant 0 : index
      %14 = vector.load %arg8[%c0_12, %c0_13] : memref<4x128xf32, #tpu.memory_space<vmem>>, vector<4x128xf32>
      %c0_14 = arith.constant 0 : index
      %c0_15 = arith.constant 0 : index
      %15 = vector.load %arg6[%c0_14, %c0_15] : memref<1x128xf32, #tpu.memory_space<vmem>>, vector<1x128xf32>
      %16 = vector.broadcast %15 : vector<1x128xf32> to vector<4x128xf32>
      %17 = arith.addf %14, %16 : vector<4x128xf32>
      %cst_16 = arith.constant 0.000000e+00 : f32
      %18 = vector.broadcast %cst_16 : f32 to vector<4x128xf32>
      %19 = arith.maximumf %17, %18 : vector<4x128xf32>
      %20 = arith.truncf %19 : vector<4x128xf32> to vector<4x128xbf16>
      %c0_17 = arith.constant 0 : index
      %c0_18 = arith.constant 0 : index
      %c0_19 = arith.constant 0 : index
      %c0_20 = arith.constant 0 : index
      %21 = vector.load %arg7[%c0_17, %c0_18, %c0_19, %c0_20] : memref<1x1x4x128xbf16, #tpu.memory_space<vmem>>, vector<1x1x4x128xbf16>
      %22 = vector.shape_cast %21 : vector<1x1x4x128xbf16> to vector<4x128xbf16>
      %23 = vector.shape_cast %20 : vector<4x128xbf16> to vector<1x1x4x128xbf16>
      tpu.vector_store %arg7[%c0_17, %c0_18, %c0_19, %c0_20], %23 {strides = array<i32>} : memref<1x1x4x128xbf16, #tpu.memory_space<vmem>>, vector<1x1x4x128xbf16>,
    } else {
    }
    return
  }
  func.func @transform_0(%arg0: i32, %arg1: i32, %arg2: i32, %arg3: i32) -> (i32, i32, i32, i32) {
    %c1_i32 = arith.constant 1 : i32
    %0 = arith.muli %arg1, %c1_i32 : i32
    %1 = arith.addi %0, %arg3 : i32
    %c0_i32 = arith.constant 0 : i32
    %c0_i32_0 = arith.constant 0 : i32
    return %arg0, %1, %arg2, %c0_i32 : i32, i32, i32, i32
  }
  func.func @transform_1(%arg0: i32, %arg1: i32, %arg2: i32, %arg3: i32) -> (i32, i32, i32) {
    %c0_i32 = arith.constant 0 : i32
    %c0_i32_0 = arith.constant 0 : i32
    %c0_i32_1 = arith.constant 0 : i32
    return %arg3, %c0_i32, %c0_i32_0 : i32, i32, i32
  }
  func.func @transform_2(%arg0: i32, %arg1: i32, %arg2: i32, %arg3: i32) -> (i32, i32) {
    %c0_i32 = arith.constant 0 : i32
    %c0_i32_0 = arith.constant 0 : i32
    %c0_i32_1 = arith.constant 0 : i32
    return %c0_i32, %c0_i32_0 : i32, i32
  }
  func.func @transform_3(%arg0: i32, %arg1: i32, %arg2: i32, %arg3: i32) -> (i32, i32, i32, i32) {
    %c0_i32 = arith.constant 0 : i32
    %c0_i32_0 = arith.constant 0 : i32
    return %arg0, %arg1, %arg2, %c0_i32 : i32, i32, i32, i32
  }
}

module attributes {stable_mosaic.version = 11 : i64} {
  func.func @_bn_relu_avgpool_kernel(%arg0: i32, %arg1: memref<2x8x128xbf16, #tpu.memory_space<vmem>>, %arg2: memref<1x1x128xf32, #tpu.memory_space<vmem>>, %arg3: memref<1x1x128xf32, #tpu.memory_space<vmem>>, %arg4: memref<2x128xf32, #tpu.memory_space<vmem>>, %arg5: memref<2x128xf32, #tpu.memory_space<vmem>>) attributes {dimension_semantics = [#tpu.dimension_semantics<arbitrary>], iteration_bounds = array<i64: 1>, scalar_prefetch = 0 : i64, scratch_operands = 1 : i64, tpu.core_type = #tpu.core_type<tc>, window_params = [{transform_indices = @transform_0, window_bounds = array<i64: 2, 8, 128>}, {pipeline_mode = #tpu.pipeline_mode<synchronous>, transform_indices = @transform_1, window_bounds = array<i64: 1, 1, 128>}, {pipeline_mode = #tpu.pipeline_mode<synchronous>, transform_indices = @transform_2, window_bounds = array<i64: 1, 1, 128>}, {pipeline_mode = #tpu.pipeline_mode<synchronous>, transform_indices = @transform_3, window_bounds = array<i64: 2, 128>}]} {
    %c0_i32 = arith.constant 0 : i32
    %0 = arith.cmpi eq, %arg0, %c0_i32 : i32
    %1 = arith.extui %0 : i1 to i32
    %c0_i32_0 = arith.constant 0 : i32
    %2 = arith.cmpi ne, %1, %c0_i32_0 : i32
    scf.if %2 {
      %cst_18 = arith.constant 0.000000e+00 : f32
      %30 = vector.broadcast %cst_18 : f32 to vector<2x128xf32>
      %c0_19 = arith.constant 0 : index
      %c0_20 = arith.constant 0 : index
      %31 = vector.load %arg5[%c0_19, %c0_20] : memref<2x128xf32, #tpu.memory_space<vmem>>, vector<2x128xf32>
      tpu.vector_store %arg5[%c0_19, %c0_20], %30 {strides = array<i32>} : memref<2x128xf32, #tpu.memory_space<vmem>>, vector<2x128xf32>,
    } else {
    }
    %c0 = arith.constant 0 : index
    %c0_1 = arith.constant 0 : index
    %c0_2 = arith.constant 0 : index
    %3 = vector.load %arg1[%c0, %c0_1, %c0_2] : memref<2x8x128xbf16, #tpu.memory_space<vmem>>, vector<2x8x128xbf16>
    %4 = arith.extf %3 : vector<2x8x128xbf16> to vector<2x8x128xf32>
    %c0_3 = arith.constant 0 : index
    %c0_4 = arith.constant 0 : index
    %c0_5 = arith.constant 0 : index
    %5 = vector.load %arg2[%c0_3, %c0_4, %c0_5] : memref<1x1x128xf32, #tpu.memory_space<vmem>>, vector<1x1x128xf32>
    %6 = vector.broadcast %5 : vector<1x1x128xf32> to vector<2x8x128xf32>
    %7 = arith.mulf %4, %6 : vector<2x8x128xf32>
    %c0_6 = arith.constant 0 : index
    %c0_7 = arith.constant 0 : index
    %c0_8 = arith.constant 0 : index
    %8 = vector.load %arg3[%c0_6, %c0_7, %c0_8] : memref<1x1x128xf32, #tpu.memory_space<vmem>>, vector<1x1x128xf32>
    %9 = vector.broadcast %8 : vector<1x1x128xf32> to vector<2x8x128xf32>
    %10 = arith.addf %7, %9 : vector<2x8x128xf32>
    %cst = arith.constant 0.000000e+00 : f32
    %11 = vector.broadcast %cst : f32 to vector<2x8x128xf32>
    %12 = arith.maximumf %10, %11 : vector<2x8x128xf32>
    %13 = tpu.iota {dimensions = array<i32: 1>} : vector<1x8x1xi32>
    %c8_i32 = arith.constant 8 : i32
    %14 = arith.muli %arg0, %c8_i32 : i32
    %15 = vector.broadcast %14 : i32 to vector<1x8x1xi32>
    %16 = arith.addi %13, %15 : vector<1x8x1xi32>
    %c8_i32_9 = arith.constant 8 : i32
    %17 = vector.broadcast %c8_i32_9 : i32 to vector<1x8x1xi32>
    %18 = arith.cmpi slt, %16, %17 : vector<1x8x1xi32>
    %cst_10 = arith.constant 0.000000e+00 : f32
    %19 = vector.shape_cast %18 : vector<1x8x1xi1> to vector<1x8x1xi1>
    %20 = vector.broadcast %19 : vector<1x8x1xi1> to vector<2x8x128xi1>
    %21 = vector.broadcast %cst_10 : f32 to vector<2x8x128xf32>
    %22 = arith.select %20, %12, %21 : vector<2x8x128xi1>, vector<2x8x128xf32>
    %c0_11 = arith.constant 0 : index
    %c0_12 = arith.constant 0 : index
    %23 = vector.load %arg5[%c0_11, %c0_12] : memref<2x128xf32, #tpu.memory_space<vmem>>, vector<2x128xf32>
    %cst_13 = arith.constant dense<0.000000e+00> : vector<2x128xf32>
    %24 = vector.multi_reduction <add>, %22, %cst_13 [1] : vector<2x8x128xf32> to vector<2x128xf32>
    %25 = arith.addf %23, %24 : vector<2x128xf32>
    %c0_14 = arith.constant 0 : index
    %c0_15 = arith.constant 0 : index
    %26 = vector.load %arg5[%c0_14, %c0_15] : memref<2x128xf32, #tpu.memory_space<vmem>>, vector<2x128xf32>
    tpu.vector_store %arg5[%c0_14, %c0_15], %25 {strides = array<i32>} : memref<2x128xf32, #tpu.memory_space<vmem>>, vector<2x128xf32>,
    %c0_i32_16 = arith.constant 0 : i32
    %27 = arith.cmpi eq, %arg0, %c0_i32_16 : i32
    %28 = arith.extui %27 : i1 to i32
    %c0_i32_17 = arith.constant 0 : i32
    %29 = arith.cmpi ne, %28, %c0_i32_17 : i32
    scf.if %29 {
      %c0_18 = arith.constant 0 : index
      %c0_19 = arith.constant 0 : index
      %30 = vector.load %arg5[%c0_18, %c0_19] : memref<2x128xf32, #tpu.memory_space<vmem>>, vector<2x128xf32>
      %cst_20 = arith.constant 1.250000e-01 : f32
      %31 = vector.broadcast %cst_20 : f32 to vector<2x128xf32>
      %32 = arith.mulf %30, %31 : vector<2x128xf32>
      %c0_21 = arith.constant 0 : index
      %c0_22 = arith.constant 0 : index
      %33 = vector.load %arg4[%c0_21, %c0_22] : memref<2x128xf32, #tpu.memory_space<vmem>>, vector<2x128xf32>
      tpu.vector_store %arg4[%c0_21, %c0_22], %32 {strides = array<i32>} : memref<2x128xf32, #tpu.memory_space<vmem>>, vector<2x128xf32>,
    } else {
    }
    return
  }
  func.func @transform_0(%arg0: i32) -> (i32, i32, i32) {
    %c0_i32 = arith.constant 0 : i32
    %c0_i32_0 = arith.constant 0 : i32
    %c0_i32_1 = arith.constant 0 : i32
    return %c0_i32, %arg0, %c0_i32_0 : i32, i32, i32
  }
  func.func @transform_1(%arg0: i32) -> (i32, i32, i32) {
    %c0_i32 = arith.constant 0 : i32
    %c0_i32_0 = arith.constant 0 : i32
    %c0_i32_1 = arith.constant 0 : i32
    %c0_i32_2 = arith.constant 0 : i32
    return %c0_i32, %c0_i32_0, %c0_i32_1 : i32, i32, i32
  }
  func.func @transform_2(%arg0: i32) -> (i32, i32, i32) {
    %c0_i32 = arith.constant 0 : i32
    %c0_i32_0 = arith.constant 0 : i32
    %c0_i32_1 = arith.constant 0 : i32
    %c0_i32_2 = arith.constant 0 : i32
    return %c0_i32, %c0_i32_0, %c0_i32_1 : i32, i32, i32
  }
  func.func @transform_3(%arg0: i32) -> (i32, i32) {
    %c0_i32 = arith.constant 0 : i32
    %c0_i32_0 = arith.constant 0 : i32
    %c0_i32_1 = arith.constant 0 : i32
    return %c0_i32, %c0_i32_0 : i32, i32
  }
}

</mosaic_0001>

<llo_original>
// kernel: _lambda_.12
$region0: #{_lambda_.12}
  #allocation0 [shape = 'u32[]', space=smem, size = 0x4, offset = 0x4, fixed_abs, tag = 'smem constant byte address 0x4 - core index']
  #allocation1 [shape = 'u32[144,128]{1,0:T(1,128)}', space=vmem, size = 0x12000, scoped, tag = 'internal scratch']
  #allocation2 [shape = 'f32[64,64]{1,0:T(8,128)}', space=vmem, size = 0x8000, scoped, tag = 'scratch operand']
  %s0 = inlined_call_operand.hbm [shape: bf16[2,22,64,49], index: 0, kind: input, shape index: {}]
  %s1 = inlined_call_operand.vmem [shape: bf16[7,49,64], index: 1, kind: input, shape index: {}]
  %s2 = inlined_call_operand.vmem [shape: f32[1,64], index: 2, kind: input, shape index: {}]
  %s3 = inlined_call_operand.vmem [shape: bf16[2,8,64,64], index: 3, kind: output, shape index: {}]
  %s4 = sld [smem:[#allocation0]]
  $region57: #{_lambda_.12} parent=0
    _
  %s6 = ssub.s32 1, %s4
  %s7 = scalar_select 0, %s6, %s4
  $region1: #{_lambda_.12} parent=0
    #allocation3 [shape = 'u8[32768]{0}', space=vmem, size = 0x8000, scoped, tag = 'input window, operand 0']
    #allocation4 [shape = 's32[2]{0}', space=sflag, size = 0x8, scoped, tag = 'scoped memory for _lambda_.12']
    %8 = vsyncpa [#allocation4], 0
    %s9 = scalar_lea.sflag [#allocation4], 1
    %10 = vsyncpa %s9, 0
    loop: start=0, step=1, limit=114
    $region2: #{_lambda_.12} parent=1 // loop_pre_header
      _
    $region3: #{_lambda_.12} parent=1 // loop_header
      %s12 = sphi 0, %s16
      %p13 = scmp.ge.s32.totalorder %s12, 114
      %s19 = sphi 0, %s45
      %s20 = sphi 0, %s41
      %s21 = sphi 0, %s37
      %s22 = sphi 0, %s33
      %s23 = sphi 0, %s19
      %s24 = sphi 0, %s20
      %s25 = sphi 0, %s21
      %s26 = sphi 0, %s22
      %s27 = sphi 0, %s23
      %s28 = sphi 0, %s24
      %s29 = sphi 0, %s25
      %s30 = sphi 0, %s26
      %s56 = sphi 0, %s58
      %s59 = sphi 0, %s56
      %s60 = sphi 0, %s59
      %s76 = sphi 0, %s60
      %s82 = sphi 0, %s84
      %s85 = sphi 0, %s82
      %s86 = sphi 0, %s85
      %s102 = sphi 0, %s86
      %s106 = sphi 0, %s106
      %s108 = sphi 0, %s106
      %s109 = sphi 0, %s108
      %s123 = sphi 0, %s109
      %s133 = sphi 0, %s135
      %s136 = sphi 0, %s133
      %s137 = sphi 0, %s136
      %s153 = sphi 0, %s137
    $region4: #{_lambda_.12} parent=1 // loop_header_branch
      %15 = sbr.rel (%p13) target = $region8
    $region5: #{_lambda_.12} parent=1 // loop_body
      %s17 = ssub.s32 %s12, 1
      %s18 = ssub.s32 %s12, 2
      %s31 = sadd.s32 1, %s22
      %p32 = scmp.ge.s32.totalorder %s31, 7
      %s33 = scalar_select %p32, 0, %s31
      %s34 = sadd.s32 1, %s21
      %s35 = scalar_select %p32, %s34, %s21
      %p36 = scmp.ge.s32.totalorder %s35, 1
      %s37 = scalar_select %p36, 0, %s35
      %s38 = sadd.s32 1, %s20
      %s39 = scalar_select %p36, %s38, %s20
      %p40 = scmp.ge.s32.totalorder %s39, 8
      %s41 = scalar_select %p40, 0, %s39
      %s42 = sadd.s32 1, %s19
      %s43 = scalar_select %p40, %s42, %s19
      %p44 = scmp.ge.s32.totalorder %s43, 2
      %s45 = scalar_select %p44, 0, %s43
      %s46 = smul.u32 %s20, 2
      %s47 = sadd.s32 %s46, %s22
      %s48 = smul.u32 %s41, 2
      %s49 = sadd.s32 %s48, %s33
      %s50 = ssub.s32 %s19, %s45
      %s51 = ssub.s32 %s47, %s49
      %s52 = sor.u32 %s50, %s51
      %s53 = ssub.s32 %s21, %s37
      %s54 = sor.u32 %s52, %s53
      %p55 = scmp.eq.s32.totalorder %s54, 0
      %s57 = sadd.s32 %s56, 1
      %s58 = scalar_select %p55, %s56, %s57
      %p61 = pneg %p55
      %p62 = scmp.eq.s32.totalorder %s12, 111
      %p63 = por %p61, %p62
      %p64 = scmp.ne.s32.totalorder %s56, %s59
      %p65 = scmp.eq.s32.totalorder %s12, 0
      %p66 = por %p64, %p65
      %p67 = scmp.ne.s32.totalorder %s56, %s59
      %p68 = scmp.eq.s32.totalorder %s17, 111
      %p69 = por %p67, %p68
      %p70 = scmp.ne.s32.totalorder %s59, %s60
      %p71 = scmp.eq.s32.totalorder %s17, 0
      %p72 = por %p70, %p71
      %p73 = scmp.ne.s32.totalorder %s59, %s60
      %p74 = scmp.eq.s32.totalorder %s18, 111
      %p75 = por %p73, %p74
      %p77 = scmp.ne.s32.totalorder %s60, %s76
      %p78 = scmp.eq.s32.totalorder %s18, 0
      %p79 = por %p77, %p78
      %s80 = ssub.s32 %s22, %s33
      %p81 = scmp.eq.s32.totalorder %s80, 0
      %s83 = sadd.s32 %s82, 1
      %s84 = scalar_select %p81, %s82, %s83
      %p87 = pneg %p81
      %p88 = scmp.eq.s32.totalorder %s12, 111
      %p89 = por %p87, %p88
      %p90 = scmp.ne.s32.totalorder %s82, %s85
      %p91 = scmp.eq.s32.totalorder %s12, 0
      %p92 = por %p90, %p91
      %p93 = scmp.ne.s32.totalorder %s82, %s85
      %p94 = scmp.eq.s32.totalorder %s17, 111
      %p95 = por %p93, %p94
      %p96 = scmp.ne.s32.totalorder %s85, %s86
      %p97 = scmp.eq.s32.totalorder %s17, 0
      %p98 = por %p96, %p97
      %p99 = scmp.ne.s32.totalorder %s85, %s86
      %p100 = scmp.eq.s32.totalorder %s18, 111
      %p101 = por %p99, %p100
      %p103 = scmp.ne.s32.totalorder %s86, %s102
      %p104 = scmp.eq.s32.totalorder %s18, 0
      %p105 = por %p103, %p104
      %s107 = sadd.s32 %s106, 1
      %p110 = scmp.eq.s32.totalorder %s12, 111
      %p111 = scmp.ne.s32.totalorder %s106, %s108
      %p112 = scmp.eq.s32.totalorder %s12, 0
      %p113 = por %p111, %p112
      %p114 = scmp.ne.s32.totalorder %s106, %s108
      %p115 = scmp.eq.s32.totalorder %s17, 111
      %p116 = por %p114, %p115
      %p117 = scmp.ne.s32.totalorder %s108, %s109
      %p118 = scmp.eq.s32.totalorder %s17, 0
      %p119 = por %p117, %p118
      %p120 = scmp.ne.s32.totalorder %s108, %s109
      %p121 = scmp.eq.s32.totalorder %s18, 111
      %p122 = por %p120, %p121
      %p124 = scmp.ne.s32.totalorder %s109, %s123
      %p125 = scmp.eq.s32.totalorder %s18, 0
      %p126 = por %p124, %p125
      %s127 = ssub.s32 %s19, %s45
      %s128 = ssub.s32 %s20, %s41
      %s129 = sor.u32 %s127, %s128
      %s130 = ssub.s32 %s21, %s37
      %s131 = sor.u32 %s129, %s130
      %p132 = scmp.eq.s32.totalorder %s131, 0
      %s134 = sadd.s32 %s133, 1
      %s135 = scalar_select %p132, %s133, %s134
      %p138 = pneg %p132
      %p139 = scmp.eq.s32.totalorder %s12, 111
      %p140 = por %p138, %p139
      %p141 = scmp.ne.s32.totalorder %s133, %s136
      %p142 = scmp.eq.s32.totalorder %s12, 0
      %p143 = por %p141, %p142
      %p144 = scmp.ne.s32.totalorder %s133, %s136
      %p145 = scmp.eq.s32.totalorder %s17, 111
      %p146 = por %p144, %p145
      %p147 = scmp.ne.s32.totalorder %s136, %s137
      %p148 = scmp.eq.s32.totalorder %s17, 0
      %p149 = por %p147, %p148
      %p150 = scmp.ne.s32.totalorder %s136, %s137
      %p151 = scmp.eq.s32.totalorder %s18, 111
      %p152 = por %p150, %p151
      %p154 = scmp.ne.s32.totalorder %s137, %s153
      %p155 = scmp.eq.s32.totalorder %s18, 0
      %p156 = por %p154, %p155
      %p157 = scmp.le.s32.totalorder 1, %s12
      %p158 = scmp.lt.s32.totalorder %s12, 113
      %p159 = pnand %p157, %p158
      %p160 = pneg %p159
      // Predicated region
      $region9: #{_lambda_.12} parent=5 // pred_check
        _
      $region10: #{_lambda_.12} parent=5 // pred_check_branch
        %162 = sbr.rel (%p159) target = $region12
      $region11: #{_lambda_.12} parent=5 // pred_region
        %s163 = ssub.s32 %s12, 1
        // Predicated region
        $region13: #{_lambda_.12} parent=11 // pred_check
          %p164 = pneg %p119
        $region14: #{_lambda_.12} parent=11 // pred_check_branch
          %166 = sbr.rel (%p164) target = $region16
        $region15: #{_lambda_.12} parent=11 // pred_region
          _
        $region16: #{_lambda_.12} parent=11 // pred_fallthru
          _
      $region12: #{_lambda_.12} parent=5 // pred_fallthru
        _
      %p167 = scmp.lt.s32.totalorder %s12, 112
      // Predicated region
      $region17: #{_lambda_.12} parent=5 // pred_check
        %p168 = pneg %p167
      $region18: #{_lambda_.12} parent=5 // pred_check_branch
        %170 = sbr.rel (%p168) target = $region20
      $region19: #{_lambda_.12} parent=5 // pred_region
        // Predicated region
        $region21: #{_lambda_.12} parent=19 // pred_check
          %p171 = pneg %p66
        $region22: #{_lambda_.12} parent=19 // pred_check_branch
          %173 = sbr.rel (%p171) target = $region24
        $region23: #{_lambda_.12} parent=19 // pred_region
          %s174 = sand.u32 %s56, 1
          %s175 = scalar_lea.sflag [#allocation4], %s174
          %s176 = sand.u32 %s56, 1
          %s177 = smul.addr %s176, 32
          %s178 = scalar_lea.vmem [#allocation3], %s177
          %s179 = smul.u32 %s20, 2
          %s180 = sadd.s32 %s179, %s22
          %s181 = smul.u32 8, %s21
          %s183 = ssub.s32 512, 512
          %184 = vsyncadd %s175, %s183
          %s185 = smul.addr %s180, 8
          %s186 = sadd.s32 %s181, %s185
          %s187 = smul.addr %s19, 176
          %s188 = sadd.s32 %s186, %s187
          %s189 = smul.addr %s188, 64
          %s190 = scalar_lea.hbm %s0, %s189
          %s191 = sshll.u32 %s178, 4
          %s192 = int_to_ptr.vmem [resolvable:$true] %s191
          %197 = dma.hbm_to_vmem [thread:$0]  %s190, 512, %s192, %s175, 64, 64, 4
        $region24: #{_lambda_.12} parent=19 // pred_fallthru
          _
        // Predicated region
        $region25: #{_lambda_.12} parent=19 // pred_check
          %p198 = pneg %p92
        $region26: #{_lambda_.12} parent=19 // pred_check_branch
          %200 = sbr.rel (%p198) target = $region28
        $region27: #{_lambda_.12} parent=19 // pred_region
          %p201 = scmp.lt.s32.totalorder %s22, 6
          %s202 = scalar_select %p201, %s22, 6
          %s203 = smul.addr %s202, 7
          %s204 = smul.addr %s203, 4
          %s205 = scalar_lea.vmem %s1, %s204
        $region28: #{_lambda_.12} parent=19 // pred_fallthru
          _
      $region20: #{_lambda_.12} parent=5 // pred_fallthru
        _
      %p206 = scmp.le.s32.totalorder 1, %s12
      %p207 = scmp.lt.s32.totalorder %s12, 113
      %p208 = pnand %p206, %p207
      %p209 = pneg %p208
      // Predicated region
      $region29: #{_lambda_.12} parent=5 // pred_check
        _
      $region30: #{_lambda_.12} parent=5 // pred_check_branch
        %211 = sbr.rel (%p208) target = $region32
      $region31: #{_lambda_.12} parent=5 // pred_region
        %s212 = ssub.s32 %s12, 1
        %s213 = sand.u32 %s59, 1
        %s214 = scalar_lea.sflag [#allocation4], %s213
        %s215 = sand.u32 %s59, 1
        %s216 = smul.addr %s215, 32
        %s217 = scalar_lea.vmem [#allocation3], %s216
        // Predicated region
        $region33: #{_lambda_.12} parent=31 // pred_check
          %p218 = pneg %p72
        $region34: #{_lambda_.12} parent=31 // pred_check_branch
          %220 = sbr.rel (%p218) target = $region36
        $region35: #{_lambda_.12} parent=31 // pred_region
          %221 = dma.done %s214, 512
        $region36: #{_lambda_.12} parent=31 // pred_fallthru
          _
        %s222 = sand.u32 %s59, 1
        %s223 = scalar_lea.sflag [#allocation4], %s222
        %s224 = sand.u32 %s59, 1
        %s225 = smul.addr %s224, 32
        %s226 = scalar_lea.vmem [#allocation3], %s225
        %p227 = pneg %p72
        %p228 = pneg %p69
        %p229 = scmp.lt.s32.totalorder %s26, 6
        %s230 = scalar_select %p229, %s26, 6
        %s231 = smul.addr %s230, 7
        %s232 = smul.addr %s231, 4
        %s233 = scalar_lea.vmem %s1, %s232
        %p234 = pneg %p98
        %p235 = pneg %p95
        %p236 = pneg %p119
        %p237 = pneg %p116
        %p238 = pneg %p149
        %p239 = pneg %p146
        %s240 = smul.u32 8, %s25
        %p241 = scmp.lt.s32.totalorder %s23, 1
        %s242 = scalar_select %p241, %s23, 1
        %p243 = scmp.lt.s32.totalorder %s24, 7
        %s244 = scalar_select %p243, %s24, 7
        %p245 = scmp.lt.s32.totalorder %s240, 7
        %s246 = scalar_select %p245, %s240, 7
        %s247 = smul.addr %s244, 8
        %s248 = sadd.s32 %s246, %s247
        %s249 = smul.addr %s242, 64
        %s250 = sadd.s32 %s248, %s249
        %s251 = smul.addr %s250, 4
        %s252 = scalar_lea.vmem %s3, %s251
        %s253 = smul.u32 %s24, 2
        %s254 = sadd.s32 %s253, %s26
        %s255 = smul.u32 8, %s25
        %p256 = scmp.lt.s32.totalorder %s26, 6
        %s257 = scalar_select %p256, %s26, 6
        %s258 = smul.addr %s257, 7
        %s259 = smul.addr %s258, 4
        %s260 = scalar_lea.vmem %s1, %s259
        %s261 = smul.u32 8, %s25
        %p262 = scmp.lt.s32.totalorder %s23, 1
        %s263 = scalar_select %p262, %s23, 1
        %p264 = scmp.lt.s32.totalorder %s24, 7
        %s265 = scalar_select %p264, %s24, 7
        %p266 = scmp.lt.s32.totalorder %s261, 7
        %s267 = scalar_select %p266, %s261, 7
        %s268 = smul.addr %s265, 8
        %s269 = sadd.s32 %s267, %s268
        %s270 = smul.addr %s263, 64
        %s271 = sadd.s32 %s269, %s270
        %s272 = smul.addr %s271, 4
        %s273 = scalar_lea.vmem %s3, %s272
        %s274 = smul.u32 8, %s25
        %p276 = scmp.eq.s32.totalorder %s26, 0
        // Predicated region
        $region37: #{_lambda_.12} parent=31 // pred_check
          %p277 = pneg %p276
        $region38: #{_lambda_.12} parent=31 // pred_check_branch
          %279 = sbr.rel (%p277) target = $region40
        $region39: #{_lambda_.12} parent=31 // pred_region
          %vm280 = vcmask 523264
          %281 = vst.msk [vmem:[#allocation2] sm:$0xff] %vm280, 0.0
          %282 = vst.msk [vmem:[#allocation2 + $0x8] sm:$0xff] %vm280, 0.0
          %283 = vst.msk [vmem:[#allocation2 + $0x10] sm:$0xff] %vm280, 0.0
          %284 = vst.msk [vmem:[#allocation2 + $0x18] sm:$0xff] %vm280, 0.0
          %285 = vst.msk [vmem:[#allocation2 + $0x20] sm:$0xff] %vm280, 0.0
          %286 = vst.msk [vmem:[#allocation2 + $0x28] sm:$0xff] %vm280, 0.0
          %287 = vst.msk [vmem:[#allocation2 + $0x30] sm:$0xff] %vm280, 0.0
          %288 = vst.msk [vmem:[#allocation2 + $0x38] sm:$0xff] %vm280, 0.0
        $region40: #{_lambda_.12} parent=31 // pred_fallthru
          _
        %v289 = vld [vmem:[#allocation2] sm:$0xff]
        %v290 = vld [vmem:[#allocation2 + $0x8] sm:$0xff]
        %v291 = vld [vmem:[#allocation2 + $0x10] sm:$0xff]
        %v292 = vld [vmem:[#allocation2 + $0x18] sm:$0xff]
        %v293 = vld [vmem:[#allocation2 + $0x20] sm:$0xff]
        %v294 = vld [vmem:[#allocation2 + $0x28] sm:$0xff]
        %v295 = vld [vmem:[#allocation2 + $0x30] sm:$0xff]
        %v296 = vld [vmem:[#allocation2 + $0x38] sm:$0xff]
        %v297 = vld [vmem:[%s217] sm:$0xf]
        %v298 = vld [vmem:[%s217 + $0x4] sm:$0xf]
        %v299 = vld [vmem:[%s217 + $0x8] sm:$0xf]
        %v300 = vld [vmem:[%s217 + $0xc] sm:$0xf]
        %v301 = vld [vmem:[%s217 + $0x10] sm:$0xf]
        %v302 = vld [vmem:[%s217 + $0x14] sm:$0xf]
        %v303 = vld [vmem:[%s217 + $0x18] sm:$0xf]
        %v304 = vld [vmem:[%s217 + $0x1c] sm:$0xf]
        %v305 = vld [vmem:[%s260] sm:$0xf]
        %v306 = vld [vmem:[%s260 + $0x4] sm:$0xf]
        %v307 = vld [vmem:[%s260 + $0x8] sm:$0xf]
        %v308 = vld [vmem:[%s260 + $0xc] sm:$0xf]
        %v309 = vld [vmem:[%s260 + $0x10] sm:$0xf]
        %v310 = vld [vmem:[%s260 + $0x14] sm:$0xf]
        %v311 = vld [vmem:[%s260 + $0x18] sm:$0x1]
        %v320 = vunpack.c.l.b16 %v297
        %v321 = vunpack.c.l.b16 %v298
        %v322 = vunpack.c.l.b16 %v299
        %v323 = vunpack.c.l.b16 %v300
        %v324 = vunpack.c.l.b16 %v301
        %v325 = vunpack.c.l.b16 %v302
        %v326 = vunpack.c.l.b16 %v303
        %v327 = vunpack.c.l.b16 %v304
        %v328 = vpack.c.b16 %v321, %v320
        %v329 = vpack.c.b16 %v323, %v322
        %v330 = vpack.c.b16 %v325, %v324
        %v331 = vpack.c.b16 %v327, %v326
        %v339 = vunpack.c.l.b16 %v305
        %v340 = vunpack.c.l.b16 %v306
        %v341 = vunpack.c.l.b16 %v307
        %v342 = vunpack.c.l.b16 %v308
        %v343 = vunpack.c.l.b16 %v309
        %v344 = vunpack.c.l.b16 %v310
        %v345 = vunpack.c.l.b16 %v311
        %v346 = vpack.c.b16 %v340, %v339
        %v347 = vpack.c.b16 %v342, %v341
        %v348 = vpack.c.b16 %v344, %v343
        %v349 = vpack.c.b16 %v345, %v345
        %vm353 = vcmask 400384
        %v355 = vsel %vm353, %v328, 0
        %v358 = vsel %vm353, %v329, 0
        %v361 = vsel %vm353, %v330, 0
        %v364 = vsel %vm353, %v331, 0
        %vm366 = vcmask 1040384
        %v367 = vsel 0, 4294967295, 65535
        %v368 = vsel %vm366, %v367, 0
        %v370 = vand.u32 %v349, %v368
        %372 = vmatprep.subr.bf16.mxu0 0
        %373 = vmatpush1.bf16.msra.mxu0 %v346
        %374 = vmatprep.subr.bf16.mxu0 0
        %375 = vmatpush1.bf16.msra.mxu0 %v347
        %376 = vmatprep.subr.bf16.mxu0 0
        %377 = vmatpush1.bf16.msra.mxu0 %v348
        %378 = vmatprep.subr.bf16.mxu0 0
        %379 = vmatpush1.bf16.msra.mxu0 %v370
        %380 = vmatprep.subr.bf16.mxu0 0
        %381 = vmatpush1.bf16.msra.mxu0 0
        %382 = vmatprep.subr.bf16.mxu0 0
        %383 = vmatpush1.bf16.msra.mxu0 0
        %384 = vmatprep.subr.bf16.mxu0 0
        %385 = vmatpush1.bf16.msra.mxu0 0
        %386 = vmatprep.subr.bf16.mxu0 0
        %387 = vmatpush1.bf16.msra.mxu0 0
        %388 = vmatprep.subr.bf16.mxu0 0
        %389 = vmatpush1.bf16.msra.mxu0 0
        %390 = vmatprep.subr.bf16.mxu0 0
        %391 = vmatpush1.bf16.msra.mxu0 0
        %392 = vmatprep.subr.bf16.mxu0 0
        %393 = vmatpush1.bf16.msra.mxu0 0
        %394 = vmatprep.subr.bf16.mxu0 0
        %395 = vmatpush1.bf16.msra.mxu0 0
        %396 = vmatprep.subr.bf16.mxu0 0
        %397 = vmatpush1.bf16.msra.mxu0 0
        %398 = vmatprep.subr.bf16.mxu0 0
        %399 = vmatpush1.bf16.msra.mxu0 0
        %400 = vmatprep.subr.bf16.mxu0 0
        %401 = vmatpush1.bf16.msra.mxu0 0
        %402 = vmatprep.subr.bf16.mxu0 0
        %403 = vmatpush1.bf16.msra.mxu0 0
        %404 = vmatprep.mubr.bf16.mxu0 0
        %405 = vmatmul.mubr.bf16.gmra.mrb[0].mxu0 %v355
        %v406 = vpop.f32.mrb[0].mxu0
        %v407 = vadd.f32 0.0, %v406
        %v408 = vpop.f32.mrb[0].mxu0
        %v409 = vpop.f32.mrb[0].mxu0
        %v410 = vadd.f32 0.0, %v409
        %v411 = vpop.f32.mrb[0].mxu0
        %412 = vmatprep.mubr.bf16.mxu0 0
        %413 = vmatmul.mubr.bf16.gmra.mrb[0].mxu0 %v358
        %v414 = vpop.f32.mrb[0].mxu0
        %v415 = vadd.f32 0.0, %v414
        %v416 = vpop.f32.mrb[0].mxu0
        %v417 = vpop.f32.mrb[0].mxu0
        %v418 = vadd.f32 0.0, %v417
        %v419 = vpop.f32.mrb[0].mxu0
        %420 = vmatprep.mubr.bf16.mxu0 0
        %421 = vmatmul.mubr.bf16.gmra.mrb[0].mxu0 %v361
        %v422 = vpop.f32.mrb[0].mxu0
        %v423 = vadd.f32 0.0, %v422
        %v424 = vpop.f32.mrb[0].mxu0
        %v425 = vpop.f32.mrb[0].mxu0
        %v426 = vadd.f32 0.0, %v425
        %v427 = vpop.f32.mrb[0].mxu0
        %428 = vmatprep.mubr.bf16.mxu0 0
        %429 = vmatmul.mubr.bf16.gmra.mrb[0].mxu0 %v364
        %v430 = vpop.f32.mrb[0].mxu0
        %v431 = vadd.f32 0.0, %v430
        %v432 = vpop.f32.mrb[0].mxu0
        %v433 = vpop.f32.mrb[0].mxu0
        %v434 = vadd.f32 0.0, %v433
        %v435 = vpop.f32.mrb[0].mxu0
        %436 = vdwg.mxu0
        %v437 = vadd.f32 %v289, %v407
        %v438 = vadd.f32 %v290, %v410
        %v439 = vadd.f32 %v291, %v415
        %v440 = vadd.f32 %v292, %v418
        %v441 = vadd.f32 %v293, %v423
        %v442 = vadd.f32 %v294, %v426
        %v443 = vadd.f32 %v295, %v431
        %v444 = vadd.f32 %v296, %v434
        %vm445 = vcmask 523264
        %446 = vst.msk [vmem:[#allocation2] sm:$0xff] %vm445, %v437
        %447 = vst.msk [vmem:[#allocation2 + $0x8] sm:$0xff] %vm445, %v438
        %448 = vst.msk [vmem:[#allocation2 + $0x10] sm:$0xff] %vm445, %v439
        %449 = vst.msk [vmem:[#allocation2 + $0x18] sm:$0xff] %vm445, %v440
        %450 = vst.msk [vmem:[#allocation2 + $0x20] sm:$0xff] %vm445, %v441
        %451 = vst.msk [vmem:[#allocation2 + $0x28] sm:$0xff] %vm445, %v442
        %452 = vst.msk [vmem:[#allocation2 + $0x30] sm:$0xff] %vm445, %v443
        %453 = vst.msk [vmem:[#allocation2 + $0x38] sm:$0xff] %vm445, %v444
        %p454 = scmp.eq.s32.totalorder %s26, 6
        // Predicated region
        $region41: #{_lambda_.12} parent=31 // pred_check
          %p455 = pneg %p454
        $region42: #{_lambda_.12} parent=31 // pred_check_branch
          %457 = sbr.rel (%p455) target = $region44
        $region43: #{_lambda_.12} parent=31 // pred_region
          %v458 = vld [vmem:[#allocation2] sm:$0xff]
          %v459 = vld [vmem:[#allocation2 + $0x8] sm:$0xff]
          %v460 = vld [vmem:[#allocation2 + $0x10] sm:$0xff]
          %v461 = vld [vmem:[#allocation2 + $0x18] sm:$0xff]
          %v462 = vld [vmem:[#allocation2 + $0x20] sm:$0xff]
          %v463 = vld [vmem:[#allocation2 + $0x28] sm:$0xff]
          %v464 = vld [vmem:[#allocation2 + $0x30] sm:$0xff]
          %v465 = vld [vmem:[#allocation2 + $0x38] sm:$0xff]
          %v466 = vld [vmem:[%s2] sm:$0x1]
          %v468 = vlaneseq
          %v469 = vshrl.u32 %v468, 7
          %v470 = vsub.s32 0, %v469
          %v471 = vrot.slane %v466, %v470
          %v473 = vadd.f32 %v458, %v471
          %v474 = vadd.f32 %v459, %v471
          %v475 = vadd.f32 %v460, %v471
          %v476 = vadd.f32 %v461, %v471
          %v477 = vadd.f32 %v462, %v471
          %v478 = vadd.f32 %v463, %v471
          %v479 = vadd.f32 %v464, %v471
          %v480 = vadd.f32 %v465, %v471
          %v481 = vmax.f32 %v473, 0.0
          %v482 = vmax.f32 %v474, 0.0
          %v483 = vmax.f32 %v475, 0.0
          %v484 = vmax.f32 %v476, 0.0
          %v485 = vmax.f32 %v477, 0.0
          %v486 = vmax.f32 %v478, 0.0
          %v487 = vmax.f32 %v479, 0.0
          %v488 = vmax.f32 %v480, 0.0
          %v489 = vpack.c.bf16 %v482, %v481
          %v490 = vpack.c.bf16 %v484, %v483
          %v491 = vpack.c.bf16 %v486, %v485
          %v492 = vpack.c.bf16 %v488, %v487
          %v497 = vunpack.c.l.b16 %v489
          %v498 = vunpack.c.h.b16 %v489
          %v499 = vunpack.c.l.b16 %v490
          %v500 = vunpack.c.h.b16 %v490
          %v501 = vunpack.c.l.b16 %v491
          %v502 = vunpack.c.h.b16 %v491
          %v503 = vunpack.c.l.b16 %v492
          %v504 = vunpack.c.h.b16 %v492
          %v505 = vpack.c.b16 %v497, %v497
          %v506 = vpack.c.b16 %v498, %v498
          %v507 = vpack.c.b16 %v499, %v499
          %v508 = vpack.c.b16 %v500, %v500
          %v509 = vpack.c.b16 %v501, %v501
          %v510 = vpack.c.b16 %v502, %v502
          %v511 = vpack.c.b16 %v503, %v503
          %v512 = vpack.c.b16 %v504, %v504
          %vm521 = vcmask 519168
          %522 = vst.msk [vmem:[%s273] sm:$0xf] %vm521, %v505
          %523 = vst.msk [vmem:[%s273 + $0x4] sm:$0xf] %vm521, %v506
          %524 = vst.msk [vmem:[%s273 + $0x8] sm:$0xf] %vm521, %v507
          %525 = vst.msk [vmem:[%s273 + $0xc] sm:$0xf] %vm521, %v508
          %526 = vst.msk [vmem:[%s273 + $0x10] sm:$0xf] %vm521, %v509
          %527 = vst.msk [vmem:[%s273 + $0x14] sm:$0xf] %vm521, %v510
          %528 = vst.msk [vmem:[%s273 + $0x18] sm:$0xf] %vm521, %v511
          %529 = vst.msk [vmem:[%s273 + $0x1c] sm:$0xf] %vm521, %v512
        $region44: #{_lambda_.12} parent=31 // pred_fallthru
          _
        %s530 = smul.u32 8, %s25
        %p531 = scmp.lt.s32.totalorder %s23, 1
        %s532 = scalar_select %p531, %s23, 1
        %p533 = scmp.lt.s32.totalorder %s24, 7
        %s534 = scalar_select %p533, %s24, 7
        %p535 = scmp.lt.s32.totalorder %s530, 7
        %s536 = scalar_select %p535, %s530, 7
        %s537 = smul.addr %s534, 8
        %s538 = sadd.s32 %s536, %s537
        %s539 = smul.addr %s532, 64
        %s540 = sadd.s32 %s538, %s539
        %s541 = smul.addr %s540, 4
        %s542 = scalar_lea.vmem %s3, %s541
        // Predicated region
        $region45: #{_lambda_.12} parent=31 // pred_check
          %p543 = pneg %p146
        $region46: #{_lambda_.12} parent=31 // pred_check_branch
          %545 = sbr.rel (%p543) target = $region48
        $region47: #{_lambda_.12} parent=31 // pred_region
          %s546 = smul.u32 8, %s25
        $region48: #{_lambda_.12} parent=31 // pred_fallthru
          _
      $region32: #{_lambda_.12} parent=5 // pred_fallthru
        _
      %p547 = scmp.le.s32.totalorder 2, %s12
      // Predicated region
      $region49: #{_lambda_.12} parent=5 // pred_check
        %p548 = pneg %p547
      $region50: #{_lambda_.12} parent=5 // pred_check_branch
        %550 = sbr.rel (%p548) target = $region52
      $region51: #{_lambda_.12} parent=5 // pred_region
        %s551 = ssub.s32 %s12, 2
        // Predicated region
        $region53: #{_lambda_.12} parent=51 // pred_check
          %p552 = pneg %p152
        $region54: #{_lambda_.12} parent=51 // pred_check_branch
          %554 = sbr.rel (%p552) target = $region56
        $region55: #{_lambda_.12} parent=51 // pred_region
          %s555 = smul.u32 8, %s29
          %p556 = scmp.lt.s32.totalorder %s27, 1
          %s557 = scalar_select %p556, %s27, 1
          %p558 = scmp.lt.s32.totalorder %s28, 7
          %s559 = scalar_select %p558, %s28, 7
          %p560 = scmp.lt.s32.totalorder %s555, 7
          %s561 = scalar_select %p560, %s555, 7
          %s562 = smul.addr %s559, 8
          %s563 = sadd.s32 %s561, %s562
          %s564 = smul.addr %s557, 64
          %s565 = sadd.s32 %s563, %s564
          %s566 = smul.addr %s565, 4
          %s567 = scalar_lea.vmem %s3, %s566
        $region56: #{_lambda_.12} parent=51 // pred_fallthru
          _
      $region52: #{_lambda_.12} parent=5 // pred_fallthru
        _
    $region6: #{_lambda_.12} parent=1 // loop_footer
      %s16 = sadd.s32 1, %s12
    $region7: #{_lambda_.12} parent=1 // loop_footer_branch
      %11 = sbr.rel target = $region3
    $region8: #{_lambda_.12} parent=1 // loop_exit
      _
    %568 = vsyncpa [#allocation4], 1
    %s569 = scalar_lea.sflag [#allocation4], 1
    %570 = vsyncpa %s569, 1

// kernel: _lambda_.13
$region0: #{_lambda_.13}
  #allocation0 [shape = 'u32[]', space=smem, size = 0x4, offset = 0x4, fixed_abs, tag = 'smem constant byte address 0x4 - core index']
  #allocation1 [shape = 'u32[144,128]{1,0:T(1,128)}', space=vmem, size = 0x12000, scoped, tag = 'internal scratch']
  %s0 = inlined_call_operand.vmem [shape: bf16[8,128,64], index: 0, kind: input, shape index: {}]
  %s1 = inlined_call_operand.vmem [shape: bf16[128,64], index: 1, kind: output, shape index: {}]
  %s2 = sld [smem:[#allocation0]]
  $region14: #{_lambda_.13} parent=0
    _
  %s4 = ssub.s32 1, %s2
  %s5 = scalar_select 0, %s4, %s2
  // Predicated region
  $region2: #{_lambda_.13} parent=0 // pred_check
    _
  $region3: #{_lambda_.13} parent=0 // pred_check_branch
    %7 = sbr.rel (0) target = $region5
  $region4: #{_lambda_.13} parent=0 // pred_region
    _
  $region5: #{_lambda_.13} parent=0 // pred_fallthru
    _
  %v9 = vld [vmem:[%s0] sm:$0xf]
  %v10 = vld [vmem:[%s0 + $0x4] sm:$0xf]
  %v11 = vld [vmem:[%s0 + $0x8] sm:$0xf]
  %v12 = vld [vmem:[%s0 + $0xc] sm:$0xf]
  %v13 = vld [vmem:[%s0 + $0x10] sm:$0xf]
  %v14 = vld [vmem:[%s0 + $0x14] sm:$0xf]
  %v15 = vld [vmem:[%s0 + $0x18] sm:$0xf]
  %v16 = vld [vmem:[%s0 + $0x1c] sm:$0xf]
  %v17 = vld [vmem:[%s0 + $0x20] sm:$0xf]
  %v18 = vld [vmem:[%s0 + $0x24] sm:$0xf]
  %v19 = vld [vmem:[%s0 + $0x28] sm:$0xf]
  %v20 = vld [vmem:[%s0 + $0x2c] sm:$0xf]
  %v21 = vld [vmem:[%s0 + $0x30] sm:$0xf]
  %v22 = vld [vmem:[%s0 + $0x34] sm:$0xf]
  %v23 = vld [vmem:[%s0 + $0x38] sm:$0xf]
  %v24 = vld [vmem:[%s0 + $0x3c] sm:$0xf]
  %v25 = vld [vmem:[%s0 + $0x40] sm:$0xf]
  %v26 = vld [vmem:[%s0 + $0x44] sm:$0xf]
  %v27 = vld [vmem:[%s0 + $0x48] sm:$0xf]
  %v28 = vld [vmem:[%s0 + $0x4c] sm:$0xf]
  %v29 = vld [vmem:[%s0 + $0x50] sm:$0xf]
  %v30 = vld [vmem:[%s0 + $0x54] sm:$0xf]
  %v31 = vld [vmem:[%s0 + $0x58] sm:$0xf]
  %v32 = vld [vmem:[%s0 + $0x5c] sm:$0xf]
  %v33 = vld [vmem:[%s0 + $0x60] sm:$0xf]
  %v34 = vld [vmem:[%s0 + $0x64] sm:$0xf]
  %v35 = vld [vmem:[%s0 + $0x68] sm:$0xf]
  %v36 = vld [vmem:[%s0 + $0x6c] sm:$0xf]
  %v37 = vld [vmem:[%s0 + $0x70] sm:$0xf]
  %v38 = vld [vmem:[%s0 + $0x74] sm:$0xf]
  %v39 = vld [vmem:[%s0 + $0x78] sm:$0xf]
  %v40 = vld [vmem:[%s0 + $0x7c] sm:$0xf]
  %v41 = vld [vmem:[%s0 + $0x80] sm:$0xf]
  %v42 = vld [vmem:[%s0 + $0x84] sm:$0xf]
  %v43 = vld [vmem:[%s0 + $0x88] sm:$0xf]
  %v44 = vld [vmem:[%s0 + $0x8c] sm:$0xf]
  %v45 = vld [vmem:[%s0 + $0x90] sm:$0xf]
  %v46 = vld [vmem:[%s0 + $0x94] sm:$0xf]
  %v47 = vld [vmem:[%s0 + $0x98] sm:$0xf]
  %v48 = vld [vmem:[%s0 + $0x9c] sm:$0xf]
  %v49 = vld [vmem:[%s0 + $0xa0] sm:$0xf]
  %v50 = vld [vmem:[%s0 + $0xa4] sm:$0xf]
  %v51 = vld [vmem:[%s0 + $0xa8] sm:$0xf]
  %v52 = vld [vmem:[%s0 + $0xac] sm:$0xf]
  %v53 = vld [vmem:[%s0 + $0xb0] sm:$0xf]
  %v54 = vld [vmem:[%s0 + $0xb4] sm:$0xf]
  %v55 = vld [vmem:[%s0 + $0xb8] sm:$0xf]
  %v56 = vld [vmem:[%s0 + $0xbc] sm:$0xf]
  %v57 = vld [vmem:[%s0 + $0xc0] sm:$0xf]
  %v58 = vld [vmem:[%s0 + $0xc4] sm:$0xf]
  %v59 = vld [vmem:[%s0 + $0xc8] sm:$0xf]
  %v60 = vld [vmem:[%s0 + $0xcc] sm:$0xf]
  %v61 = vld [vmem:[%s0 + $0xd0] sm:$0xf]
  %v62 = vld [vmem:[%s0 + $0xd4] sm:$0xf]
  %v63 = vld [vmem:[%s0 + $0xd8] sm:$0xf]
  %v64 = vld [vmem:[%s0 + $0xdc] sm:$0xf]
  %v65 = vld [vmem:[%s0 + $0xe0] sm:$0xf]
  %v66 = vld [vmem:[%s0 + $0xe4] sm:$0xf]
  %v67 = vld [vmem:[%s0 + $0xe8] sm:$0xf]
  %v68 = vld [vmem:[%s0 + $0xec] sm:$0xf]
  %v69 = vld [vmem:[%s0 + $0xf0] sm:$0xf]
  %v70 = vld [vmem:[%s0 + $0xf4] sm:$0xf]
  %v71 = vld [vmem:[%s0 + $0xf8] sm:$0xf]
  %v72 = vld [vmem:[%s0 + $0xfc] sm:$0xf]
  %v73 = vld [vmem:[%s0 + $0x100] sm:$0xf]
  %v74 = vld [vmem:[%s0 + $0x104] sm:$0xf]
  %v75 = vld [vmem:[%s0 + $0x108] sm:$0xf]
  %v76 = vld [vmem:[%s0 + $0x10c] sm:$0xf]
  %v77 = vld [vmem:[%s0 + $0x110] sm:$0xf]
  %v78 = vld [vmem:[%s0 + $0x114] sm:$0xf]
  %v79 = vld [vmem:[%s0 + $0x118] sm:$0xf]
  %v80 = vld [vmem:[%s0 + $0x11c] sm:$0xf]
  %v81 = vld [vmem:[%s0 + $0x120] sm:$0xf]
  %v82 = vld [vmem:[%s0 + $0x124] sm:$0xf]
  %v83 = vld [vmem:[%s0 + $0x128] sm:$0xf]
  %v84 = vld [vmem:[%s0 + $0x12c] sm:$0xf]
  %v85 = vld [vmem:[%s0 + $0x130] sm:$0xf]
  %v86 = vld [vmem:[%s0 + $0x134] sm:$0xf]
  %v87 = vld [vmem:[%s0 + $0x138] sm:$0xf]
  %v88 = vld [vmem:[%s0 + $0x13c] sm:$0xf]
  %v89 = vld [vmem:[%s0 + $0x140] sm:$0xf]
  %v90 = vld [vmem:[%s0 + $0x144] sm:$0xf]
  %v91 = vld [vmem:[%s0 + $0x148] sm:$0xf]
  %v92 = vld [vmem:[%s0 + $0x14c] sm:$0xf]
  %v93 = vld [vmem:[%s0 + $0x150] sm:$0xf]
  %v94 = vld [vmem:[%s0 + $0x154] sm:$0xf]
  %v95 = vld [vmem:[%s0 + $0x158] sm:$0xf]
  %v96 = vld [vmem:[%s0 + $0x15c] sm:$0xf]
  %v97 = vld [vmem:[%s0 + $0x160] sm:$0xf]
  %v98 = vld [vmem:[%s0 + $0x164] sm:$0xf]
  %v99 = vld [vmem:[%s0 + $0x168] sm:$0xf]
  %v100 = vld [vmem:[%s0 + $0x16c] sm:$0xf]
  %v101 = vld [vmem:[%s0 + $0x170] sm:$0xf]
  %v102 = vld [vmem:[%s0 + $0x174] sm:$0xf]
  %v103 = vld [vmem:[%s0 + $0x178] sm:$0xf]
  %v104 = vld [vmem:[%s0 + $0x17c] sm:$0xf]
  %v105 = vld [vmem:[%s0 + $0x180] sm:$0xf]
  %v106 = vld [vmem:[%s0 + $0x184] sm:$0xf]
  %v107 = vld [vmem:[%s0 + $0x188] sm:$0xf]
  %v108 = vld [vmem:[%s0 + $0x18c] sm:$0xf]
  %v109 = vld [vmem:[%s0 + $0x190] sm:$0xf]
  %v110 = vld [vmem:[%s0 + $0x194] sm:$0xf]
  %v111 = vld [vmem:[%s0 + $0x198] sm:$0xf]
  %v112 = vld [vmem:[%s0 + $0x19c] sm:$0xf]
  %v113 = vld [vmem:[%s0 + $0x1a0] sm:$0xf]
  %v114 = vld [vmem:[%s0 + $0x1a4] sm:$0xf]
  %v115 = vld [vmem:[%s0 + $0x1a8] sm:$0xf]
  %v116 = vld [vmem:[%s0 + $0x1ac] sm:$0xf]
  %v117 = vld [vmem:[%s0 + $0x1b0] sm:$0xf]
  %v118 = vld [vmem:[%s0 + $0x1b4] sm:$0xf]
  %v119 = vld [vmem:[%s0 + $0x1b8] sm:$0xf]
  %v120 = vld [vmem:[%s0 + $0x1bc] sm:$0xf]
  %v121 = vld [vmem:[%s0 + $0x1c0] sm:$0xf]
  %v122 = vld [vmem:[%s0 + $0x1c4] sm:$0xf]
  %v123 = vld [vmem:[%s0 + $0x1c8] sm:$0xf]
  %v124 = vld [vmem:[%s0 + $0x1cc] sm:$0xf]
  %v125 = vld [vmem:[%s0 + $0x1d0] sm:$0xf]
  %v126 = vld [vmem:[%s0 + $0x1d4] sm:$0xf]
  %v127 = vld [vmem:[%s0 + $0x1d8] sm:$0xf]
  %v128 = vld [vmem:[%s0 + $0x1dc] sm:$0xf]
  %v129 = vld [vmem:[%s0 + $0x1e0] sm:$0xf]
  %v130 = vld [vmem:[%s0 + $0x1e4] sm:$0xf]
  %v131 = vld [vmem:[%s0 + $0x1e8] sm:$0xf]
  %v132 = vld [vmem:[%s0 + $0x1ec] sm:$0xf]
  %v133 = vld [vmem:[%s0 + $0x1f0] sm:$0xf]
  %v134 = vld [vmem:[%s0 + $0x1f4] sm:$0xf]
  %v135 = vld [vmem:[%s0 + $0x1f8] sm:$0xf]
  %v136 = vld [vmem:[%s0 + $0x1fc] sm:$0xf]
  %vm137 = vcmask 519168
  %v140 = vsel %vm137, %v9, 4286644096
  %v143 = vsel %vm137, %v25, 4286644096
  %v145 = vmax.bf16 %v140, %v143
  %v147 = vsel %vm137, %v41, 4286644096
  %v149 = vmax.bf16 %v145, %v147
  %v151 = vsel %vm137, %v57, 4286644096
  %v153 = vmax.bf16 %v149, %v151
  %v155 = vsel %vm137, %v73, 4286644096
  %v157 = vmax.bf16 %v153, %v155
  %v159 = vsel %vm137, %v89, 4286644096
  %v161 = vmax.bf16 %v157, %v159
  %v163 = vsel %vm137, %v105, 4286644096
  %v165 = vmax.bf16 %v161, %v163
  %v167 = vsel %vm137, %v121, 4286644096
  %v169 = vmax.bf16 %v165, %v167
  %v171 = vsel %vm137, %v10, 4286644096
  %v174 = vsel %vm137, %v26, 4286644096
  %v176 = vmax.bf16 %v171, %v174
  %v178 = vsel %vm137, %v42, 4286644096
  %v180 = vmax.bf16 %v176, %v178
  %v182 = vsel %vm137, %v58, 4286644096
  %v184 = vmax.bf16 %v180, %v182
  %v186 = vsel %vm137, %v74, 4286644096
  %v188 = vmax.bf16 %v184, %v186
  %v190 = vsel %vm137, %v90, 4286644096
  %v192 = vmax.bf16 %v188, %v190
  %v194 = vsel %vm137, %v106, 4286644096
  %v196 = vmax.bf16 %v192, %v194
  %v198 = vsel %vm137, %v122, 4286644096
  %v200 = vmax.bf16 %v196, %v198
  %v202 = vsel %vm137, %v11, 4286644096
  %v205 = vsel %vm137, %v27, 4286644096
  %v207 = vmax.bf16 %v202, %v205
  %v209 = vsel %vm137, %v43, 4286644096
  %v211 = vmax.bf16 %v207, %v209
  %v213 = vsel %vm137, %v59, 4286644096
  %v215 = vmax.bf16 %v211, %v213
  %v217 = vsel %vm137, %v75, 4286644096
  %v219 = vmax.bf16 %v215, %v217
  %v221 = vsel %vm137, %v91, 4286644096
  %v223 = vmax.bf16 %v219, %v221
  %v225 = vsel %vm137, %v107, 4286644096
  %v227 = vmax.bf16 %v223, %v225
  %v229 = vsel %vm137, %v123, 4286644096
  %v231 = vmax.bf16 %v227, %v229
  %v233 = vsel %vm137, %v12, 4286644096
  %v236 = vsel %vm137, %v28, 4286644096
  %v238 = vmax.bf16 %v233, %v236
  %v240 = vsel %vm137, %v44, 4286644096
  %v242 = vmax.bf16 %v238, %v240
  %v244 = vsel %vm137, %v60, 4286644096
  %v246 = vmax.bf16 %v242, %v244
  %v248 = vsel %vm137, %v76, 4286644096
  %v250 = vmax.bf16 %v246, %v248
  %v252 = vsel %vm137, %v92, 4286644096
  %v254 = vmax.bf16 %v250, %v252
  %v256 = vsel %vm137, %v108, 4286644096
  %v258 = vmax.bf16 %v254, %v256
  %v260 = vsel %vm137, %v124, 4286644096
  %v262 = vmax.bf16 %v258, %v260
  %v264 = vsel %vm137, %v13, 4286644096
  %v267 = vsel %vm137, %v29, 4286644096
  %v269 = vmax.bf16 %v264, %v267
  %v271 = vsel %vm137, %v45, 4286644096
  %v273 = vmax.bf16 %v269, %v271
  %v275 = vsel %vm137, %v61, 4286644096
  %v277 = vmax.bf16 %v273, %v275
  %v279 = vsel %vm137, %v77, 4286644096
  %v281 = vmax.bf16 %v277, %v279
  %v283 = vsel %vm137, %v93, 4286644096
  %v285 = vmax.bf16 %v281, %v283
  %v287 = vsel %vm137, %v109, 4286644096
  %v289 = vmax.bf16 %v285, %v287
  %v291 = vsel %vm137, %v125, 4286644096
  %v293 = vmax.bf16 %v289, %v291
  %v295 = vsel %vm137, %v14, 4286644096
  %v298 = vsel %vm137, %v30, 4286644096
  %v300 = vmax.bf16 %v295, %v298
  %v302 = vsel %vm137, %v46, 4286644096
  %v304 = vmax.bf16 %v300, %v302
  %v306 = vsel %vm137, %v62, 4286644096
  %v308 = vmax.bf16 %v304, %v306
  %v310 = vsel %vm137, %v78, 4286644096
  %v312 = vmax.bf16 %v308, %v310
  %v314 = vsel %vm137, %v94, 4286644096
  %v316 = vmax.bf16 %v312, %v314
  %v318 = vsel %vm137, %v110, 4286644096
  %v320 = vmax.bf16 %v316, %v318
  %v322 = vsel %vm137, %v126, 4286644096
  %v324 = vmax.bf16 %v320, %v322
  %v326 = vsel %vm137, %v15, 4286644096
  %v329 = vsel %vm137, %v31, 4286644096
  %v331 = vmax.bf16 %v326, %v329
  %v333 = vsel %vm137, %v47, 4286644096
  %v335 = vmax.bf16 %v331, %v333
  %v337 = vsel %vm137, %v63, 4286644096
  %v339 = vmax.bf16 %v335, %v337
  %v341 = vsel %vm137, %v79, 4286644096
  %v343 = vmax.bf16 %v339, %v341
  %v345 = vsel %vm137, %v95, 4286644096
  %v347 = vmax.bf16 %v343, %v345
  %v349 = vsel %vm137, %v111, 4286644096
  %v351 = vmax.bf16 %v347, %v349
  %v353 = vsel %vm137, %v127, 4286644096
  %v355 = vmax.bf16 %v351, %v353
  %v357 = vsel %vm137, %v16, 4286644096
  %v360 = vsel %vm137, %v32, 4286644096
  %v362 = vmax.bf16 %v357, %v360
  %v364 = vsel %vm137, %v48, 4286644096
  %v366 = vmax.bf16 %v362, %v364
  %v368 = vsel %vm137, %v64, 4286644096
  %v370 = vmax.bf16 %v366, %v368
  %v372 = vsel %vm137, %v80, 4286644096
  %v374 = vmax.bf16 %v370, %v372
  %v376 = vsel %vm137, %v96, 4286644096
  %v378 = vmax.bf16 %v374, %v376
  %v380 = vsel %vm137, %v112, 4286644096
  %v382 = vmax.bf16 %v378, %v380
  %v384 = vsel %vm137, %v128, 4286644096
  %v386 = vmax.bf16 %v382, %v384
  %v388 = vsel %vm137, %v17, 4286644096
  %v391 = vsel %vm137, %v33, 4286644096
  %v393 = vmax.bf16 %v388, %v391
  %v395 = vsel %vm137, %v49, 4286644096
  %v397 = vmax.bf16 %v393, %v395
  %v399 = vsel %vm137, %v65, 4286644096
  %v401 = vmax.bf16 %v397, %v399
  %v403 = vsel %vm137, %v81, 4286644096
  %v405 = vmax.bf16 %v401, %v403
  %v407 = vsel %vm137, %v97, 4286644096
  %v409 = vmax.bf16 %v405, %v407
  %v411 = vsel %vm137, %v113, 4286644096
  %v413 = vmax.bf16 %v409, %v411
  %v415 = vsel %vm137, %v129, 4286644096
  %v417 = vmax.bf16 %v413, %v415
  %v419 = vsel %vm137, %v18, 4286644096
  %v422 = vsel %vm137, %v34, 4286644096
  %v424 = vmax.bf16 %v419, %v422
  %v426 = vsel %vm137, %v50, 4286644096
  %v428 = vmax.bf16 %v424, %v426
  %v430 = vsel %vm137, %v66, 4286644096
  %v432 = vmax.bf16 %v428, %v430
  %v434 = vsel %vm137, %v82, 4286644096
  %v436 = vmax.bf16 %v432, %v434
  %v438 = vsel %vm137, %v98, 4286644096
  %v440 = vmax.bf16 %v436, %v438
  %v442 = vsel %vm137, %v114, 4286644096
  %v444 = vmax.bf16 %v440, %v442
  %v446 = vsel %vm137, %v130, 4286644096
  %v448 = vmax.bf16 %v444, %v446
  %v450 = vsel %vm137, %v19, 4286644096
  %v453 = vsel %vm137, %v35, 4286644096
  %v455 = vmax.bf16 %v450, %v453
  %v457 = vsel %vm137, %v51, 4286644096
  %v459 = vmax.bf16 %v455, %v457
  %v461 = vsel %vm137, %v67, 4286644096
  %v463 = vmax.bf16 %v459, %v461
  %v465 = vsel %vm137, %v83, 4286644096
  %v467 = vmax.bf16 %v463, %v465
  %v469 = vsel %vm137, %v99, 4286644096
  %v471 = vmax.bf16 %v467, %v469
  %v473 = vsel %vm137, %v115, 4286644096
  %v475 = vmax.bf16 %v471, %v473
  %v477 = vsel %vm137, %v131, 4286644096
  %v479 = vmax.bf16 %v475, %v477
  %v481 = vsel %vm137, %v20, 4286644096
  %v484 = vsel %vm137, %v36, 4286644096
  %v486 = vmax.bf16 %v481, %v484
  %v488 = vsel %vm137, %v52, 4286644096
  %v490 = vmax.bf16 %v486, %v488
  %v492 = vsel %vm137, %v68, 4286644096
  %v494 = vmax.bf16 %v490, %v492
  %v496 = vsel %vm137, %v84, 4286644096
  %v498 = vmax.bf16 %v494, %v496
  %v500 = vsel %vm137, %v100, 4286644096
  %v502 = vmax.bf16 %v498, %v500
  %v504 = vsel %vm137, %v116, 4286644096
  %v506 = vmax.bf16 %v502, %v504
  %v508 = vsel %vm137, %v132, 4286644096
  %v510 = vmax.bf16 %v506, %v508
  %v512 = vsel %vm137, %v21, 4286644096
  %v515 = vsel %vm137, %v37, 4286644096
  %v517 = vmax.bf16 %v512, %v515
  %v519 = vsel %vm137, %v53, 4286644096
  %v521 = vmax.bf16 %v517, %v519
  %v523 = vsel %vm137, %v69, 4286644096
  %v525 = vmax.bf16 %v521, %v523
  %v527 = vsel %vm137, %v85, 4286644096
  %v529 = vmax.bf16 %v525, %v527
  %v531 = vsel %vm137, %v101, 4286644096
  %v533 = vmax.bf16 %v529, %v531
  %v535 = vsel %vm137, %v117, 4286644096
  %v537 = vmax.bf16 %v533, %v535
  %v539 = vsel %vm137, %v133, 4286644096
  %v541 = vmax.bf16 %v537, %v539
  %v543 = vsel %vm137, %v22, 4286644096
  %v546 = vsel %vm137, %v38, 4286644096
  %v548 = vmax.bf16 %v543, %v546
  %v550 = vsel %vm137, %v54, 4286644096
  %v552 = vmax.bf16 %v548, %v550
  %v554 = vsel %vm137, %v70, 4286644096
  %v556 = vmax.bf16 %v552, %v554
  %v558 = vsel %vm137, %v86, 4286644096
  %v560 = vmax.bf16 %v556, %v558
  %v562 = vsel %vm137, %v102, 4286644096
  %v564 = vmax.bf16 %v560, %v562
  %v566 = vsel %vm137, %v118, 4286644096
  %v568 = vmax.bf16 %v564, %v566
  %v570 = vsel %vm137, %v134, 4286644096
  %v572 = vmax.bf16 %v568, %v570
  %v574 = vsel %vm137, %v23, 4286644096
  %v577 = vsel %vm137, %v39, 4286644096
  %v579 = vmax.bf16 %v574, %v577
  %v581 = vsel %vm137, %v55, 4286644096
  %v583 = vmax.bf16 %v579, %v581
  %v585 = vsel %vm137, %v71, 4286644096
  %v587 = vmax.bf16 %v583, %v585
  %v589 = vsel %vm137, %v87, 4286644096
  %v591 = vmax.bf16 %v587, %v589
  %v593 = vsel %vm137, %v103, 4286644096
  %v595 = vmax.bf16 %v591, %v593
  %v597 = vsel %vm137, %v119, 4286644096
  %v599 = vmax.bf16 %v595, %v597
  %v601 = vsel %vm137, %v135, 4286644096
  %v603 = vmax.bf16 %v599, %v601
  %v605 = vsel %vm137, %v24, 4286644096
  %v608 = vsel %vm137, %v40, 4286644096
  %v610 = vmax.bf16 %v605, %v608
  %v612 = vsel %vm137, %v56, 4286644096
  %v614 = vmax.bf16 %v610, %v612
  %v616 = vsel %vm137, %v72, 4286644096
  %v618 = vmax.bf16 %v614, %v616
  %v620 = vsel %vm137, %v88, 4286644096
  %v622 = vmax.bf16 %v618, %v620
  %v624 = vsel %vm137, %v104, 4286644096
  %v626 = vmax.bf16 %v622, %v624
  %v628 = vsel %vm137, %v120, 4286644096
  %v630 = vmax.bf16 %v626, %v628
  %v632 = vsel %vm137, %v136, 4286644096
  %v634 = vmax.bf16 %v630, %v632
  %635 = vst.msk [vmem:[%s1] sm:$0xf] %vm137, %v169
  %636 = vst.msk [vmem:[%s1 + $0x4] sm:$0xf] %vm137, %v200
  %637 = vst.msk [vmem:[%s1 + $0x8] sm:$0xf] %vm137, %v231
  %638 = vst.msk [vmem:[%s1 + $0xc] sm:$0xf] %vm137, %v262
  %639 = vst.msk [vmem:[%s1 + $0x10] sm:$0xf] %vm137, %v293
  %640 = vst.msk [vmem:[%s1 + $0x14] sm:$0xf] %vm137, %v324
  %641 = vst.msk [vmem:[%s1 + $0x18] sm:$0xf] %vm137, %v355
  %642 = vst.msk [vmem:[%s1 + $0x1c] sm:$0xf] %vm137, %v386
  %643 = vst.msk [vmem:[%s1 + $0x20] sm:$0xf] %vm137, %v417
  %644 = vst.msk [vmem:[%s1 + $0x24] sm:$0xf] %vm137, %v448
  %645 = vst.msk [vmem:[%s1 + $0x28] sm:$0xf] %vm137, %v479
  %646 = vst.msk [vmem:[%s1 + $0x2c] sm:$0xf] %vm137, %v510
  %647 = vst.msk [vmem:[%s1 + $0x30] sm:$0xf] %vm137, %v541
  %648 = vst.msk [vmem:[%s1 + $0x34] sm:$0xf] %vm137, %v572
  %649 = vst.msk [vmem:[%s1 + $0x38] sm:$0xf] %vm137, %v603
  %650 = vst.msk [vmem:[%s1 + $0x3c] sm:$0xf] %vm137, %v634
  // Predicated region
  $region6: #{_lambda_.13} parent=0 // pred_check
    _
  $region7: #{_lambda_.13} parent=0 // pred_check_branch
    %652 = sbr.rel (0) target = $region9
  $region8: #{_lambda_.13} parent=0 // pred_region
    _
  $region9: #{_lambda_.13} parent=0 // pred_fallthru
    _
  // Predicated region
  $region10: #{_lambda_.13} parent=0 // pred_check
    _
  $region11: #{_lambda_.13} parent=0 // pred_check_branch
    %654 = sbr.rel (0) target = $region13
  $region12: #{_lambda_.13} parent=0 // pred_region
    _
  $region13: #{_lambda_.13} parent=0 // pred_fallthru
    _

// kernel: _lambda_.14
$region0: #{_lambda_.14}
  #allocation0 [shape = 'u32[]', space=smem, size = 0x4, offset = 0x4, fixed_abs, tag = 'smem constant byte address 0x4 - core index']
  #allocation1 [shape = 'u32[144,128]{1,0:T(1,128)}', space=vmem, size = 0x12000, scoped, tag = 'internal scratch']
  #allocation2 [shape = 'f32[16,64]{1,0:T(8,128)}', space=vmem, size = 0x2000, scoped, tag = 'scratch operand']
  %s0 = inlined_call_operand.vmem [shape: bf16[2,6,16,576], index: 0, kind: input, shape index: {}]
  %s1 = inlined_call_operand.vmem [shape: bf16[3,576,64], index: 1, kind: input, shape index: {}]
  %s2 = inlined_call_operand.vmem [shape: f32[1,64], index: 2, kind: input, shape index: {}]
  %s3 = inlined_call_operand.vmem [shape: bf16[2,4,16,64], index: 3, kind: output, shape index: {}]
  %s4 = sld [smem:[#allocation0]]
  $region53: #{_lambda_.14} parent=0
    _
  %s6 = ssub.s32 1, %s4
  %s7 = scalar_select 0, %s6, %s4
  loop: start=0, step=1, limit=26
  $region2: #{_lambda_.14} parent=0 // loop_pre_header
    _
  $region3: #{_lambda_.14} parent=0 // loop_header
    %s9 = sphi 0, %s13
    %p10 = scmp.ge.s32.totalorder %s9, 26
    %s16 = sphi 0, %s42
    %s17 = sphi 0, %s38
    %s18 = sphi 0, %s34
    %s19 = sphi 0, %s30
    %s20 = sphi 0, %s16
    %s21 = sphi 0, %s17
    %s22 = sphi 0, %s18
    %s23 = sphi 0, %s19
    %s24 = sphi 0, %s20
    %s25 = sphi 0, %s21
    %s26 = sphi 0, %s22
    %s27 = sphi 0, %s23
    %s51 = sphi 0, %s53
    %s54 = sphi 0, %s51
    %s55 = sphi 0, %s54
    %s71 = sphi 0, %s55
    %s77 = sphi 0, %s79
    %s80 = sphi 0, %s77
    %s81 = sphi 0, %s80
    %s97 = sphi 0, %s81
    %s101 = sphi 0, %s101
    %s103 = sphi 0, %s101
    %s104 = sphi 0, %s103
    %s118 = sphi 0, %s104
    %s128 = sphi 0, %s130
    %s131 = sphi 0, %s128
    %s132 = sphi 0, %s131
    %s148 = sphi 0, %s132
  $region4: #{_lambda_.14} parent=0 // loop_header_branch
    %12 = sbr.rel (%p10) target = $region8
  $region5: #{_lambda_.14} parent=0 // loop_body
    %s14 = ssub.s32 %s9, 1
    %s15 = ssub.s32 %s9, 2
    %s28 = sadd.s32 1, %s19
    %p29 = scmp.ge.s32.totalorder %s28, 3
    %s30 = scalar_select %p29, 0, %s28
    %s31 = sadd.s32 1, %s18
    %s32 = scalar_select %p29, %s31, %s18
    %p33 = scmp.ge.s32.totalorder %s32, 1
    %s34 = scalar_select %p33, 0, %s32
    %s35 = sadd.s32 1, %s17
    %s36 = scalar_select %p33, %s35, %s17
    %p37 = scmp.ge.s32.totalorder %s36, 4
    %s38 = scalar_select %p37, 0, %s36
    %s39 = sadd.s32 1, %s16
    %s40 = scalar_select %p37, %s39, %s16
    %p41 = scmp.ge.s32.totalorder %s40, 2
    %s42 = scalar_select %p41, 0, %s40
    %s43 = sadd.s32 %s17, %s19
    %s44 = sadd.s32 %s38, %s30
    %s45 = ssub.s32 %s16, %s42
    %s46 = ssub.s32 %s43, %s44
    %s47 = sor.u32 %s45, %s46
    %s48 = ssub.s32 %s18, %s34
    %s49 = sor.u32 %s47, %s48
    %p50 = scmp.eq.s32.totalorder %s49, 0
    %s52 = sadd.s32 %s51, 1
    %s53 = scalar_select %p50, %s51, %s52
    %p56 = pneg %p50
    %p57 = scmp.eq.s32.totalorder %s9, 23
    %p58 = por %p56, %p57
    %p59 = scmp.ne.s32.totalorder %s51, %s54
    %p60 = scmp.eq.s32.totalorder %s9, 0
    %p61 = por %p59, %p60
    %p62 = scmp.ne.s32.totalorder %s51, %s54
    %p63 = scmp.eq.s32.totalorder %s14, 23
    %p64 = por %p62, %p63
    %p65 = scmp.ne.s32.totalorder %s54, %s55
    %p66 = scmp.eq.s32.totalorder %s14, 0
    %p67 = por %p65, %p66
    %p68 = scmp.ne.s32.totalorder %s54, %s55
    %p69 = scmp.eq.s32.totalorder %s15, 23
    %p70 = por %p68, %p69
    %p72 = scmp.ne.s32.totalorder %s55, %s71
    %p73 = scmp.eq.s32.totalorder %s15, 0
    %p74 = por %p72, %p73
    %s75 = ssub.s32 %s19, %s30
    %p76 = scmp.eq.s32.totalorder %s75, 0
    %s78 = sadd.s32 %s77, 1
    %s79 = scalar_select %p76, %s77, %s78
    %p82 = pneg %p76
    %p83 = scmp.eq.s32.totalorder %s9, 23
    %p84 = por %p82, %p83
    %p85 = scmp.ne.s32.totalorder %s77, %s80
    %p86 = scmp.eq.s32.totalorder %s9, 0
    %p87 = por %p85, %p86
    %p88 = scmp.ne.s32.totalorder %s77, %s80
    %p89 = scmp.eq.s32.totalorder %s14, 23
    %p90 = por %p88, %p89
    %p91 = scmp.ne.s32.totalorder %s80, %s81
    %p92 = scmp.eq.s32.totalorder %s14, 0
    %p93 = por %p91, %p92
    %p94 = scmp.ne.s32.totalorder %s80, %s81
    %p95 = scmp.eq.s32.totalorder %s15, 23
    %p96 = por %p94, %p95
    %p98 = scmp.ne.s32.totalorder %s81, %s97
    %p99 = scmp.eq.s32.totalorder %s15, 0
    %p100 = por %p98, %p99
    %s102 = sadd.s32 %s101, 1
    %p105 = scmp.eq.s32.totalorder %s9, 23
    %p106 = scmp.ne.s32.totalorder %s101, %s103
    %p107 = scmp.eq.s32.totalorder %s9, 0
    %p108 = por %p106, %p107
    %p109 = scmp.ne.s32.totalorder %s101, %s103
    %p110 = scmp.eq.s32.totalorder %s14, 23
    %p111 = por %p109, %p110
    %p112 = scmp.ne.s32.totalorder %s103, %s104
    %p113 = scmp.eq.s32.totalorder %s14, 0
    %p114 = por %p112, %p113
    %p115 = scmp.ne.s32.totalorder %s103, %s104
    %p116 = scmp.eq.s32.totalorder %s15, 23
    %p117 = por %p115, %p116
    %p119 = scmp.ne.s32.totalorder %s104, %s118
    %p120 = scmp.eq.s32.totalorder %s15, 0
    %p121 = por %p119, %p120
    %s122 = ssub.s32 %s16, %s42
    %s123 = ssub.s32 %s17, %s38
    %s124 = sor.u32 %s122, %s123
    %s125 = ssub.s32 %s18, %s34
    %s126 = sor.u32 %s124, %s125
    %p127 = scmp.eq.s32.totalorder %s126, 0
    %s129 = sadd.s32 %s128, 1
    %s130 = scalar_select %p127, %s128, %s129
    %p133 = pneg %p127
    %p134 = scmp.eq.s32.totalorder %s9, 23
    %p135 = por %p133, %p134
    %p136 = scmp.ne.s32.totalorder %s128, %s131
    %p137 = scmp.eq.s32.totalorder %s9, 0
    %p138 = por %p136, %p137
    %p139 = scmp.ne.s32.totalorder %s128, %s131
    %p140 = scmp.eq.s32.totalorder %s14, 23
    %p141 = por %p139, %p140
    %p142 = scmp.ne.s32.totalorder %s131, %s132
    %p143 = scmp.eq.s32.totalorder %s14, 0
    %p144 = por %p142, %p143
    %p145 = scmp.ne.s32.totalorder %s131, %s132
    %p146 = scmp.eq.s32.totalorder %s15, 23
    %p147 = por %p145, %p146
    %p149 = scmp.ne.s32.totalorder %s132, %s148
    %p150 = scmp.eq.s32.totalorder %s15, 0
    %p151 = por %p149, %p150
    %p152 = scmp.le.s32.totalorder 1, %s9
    %p153 = scmp.lt.s32.totalorder %s9, 25
    %p154 = pnand %p152, %p153
    %p155 = pneg %p154
    // Predicated region
    $region9: #{_lambda_.14} parent=5 // pred_check
      _
    $region10: #{_lambda_.14} parent=5 // pred_check_branch
      %157 = sbr.rel (%p154) target = $region12
    $region11: #{_lambda_.14} parent=5 // pred_region
      %s158 = ssub.s32 %s9, 1
      // Predicated region
      $region13: #{_lambda_.14} parent=11 // pred_check
        %p159 = pneg %p114
      $region14: #{_lambda_.14} parent=11 // pred_check_branch
        %161 = sbr.rel (%p159) target = $region16
      $region15: #{_lambda_.14} parent=11 // pred_region
        _
      $region16: #{_lambda_.14} parent=11 // pred_fallthru
        _
    $region12: #{_lambda_.14} parent=5 // pred_fallthru
      _
    %p162 = scmp.lt.s32.totalorder %s9, 24
    // Predicated region
    $region17: #{_lambda_.14} parent=5 // pred_check
      %p163 = pneg %p162
    $region18: #{_lambda_.14} parent=5 // pred_check_branch
      %165 = sbr.rel (%p163) target = $region20
    $region19: #{_lambda_.14} parent=5 // pred_region
      // Predicated region
      $region21: #{_lambda_.14} parent=19 // pred_check
        %p166 = pneg %p61
      $region22: #{_lambda_.14} parent=19 // pred_check_branch
        %168 = sbr.rel (%p166) target = $region24
      $region23: #{_lambda_.14} parent=19 // pred_region
        %s169 = sadd.s32 %s17, %s19
        %s170 = smul.u32 2, %s18
        %p171 = scmp.lt.s32.totalorder %s16, 1
        %s172 = scalar_select %p171, %s16, 1
        %p173 = scmp.lt.s32.totalorder %s169, 5
        %s174 = scalar_select %p173, %s169, 5
        %p175 = scmp.lt.s32.totalorder %s170, 1
        %s176 = scalar_select %p175, %s170, 1
        %s177 = smul.addr %s176, 5
        %s178 = smul.addr %s174, 10
        %s179 = sadd.s32 %s177, %s178
        %s180 = smul.addr %s172, 60
        %s181 = sadd.s32 %s179, %s180
        %s182 = smul.addr %s181, 4
        %s183 = scalar_lea.vmem %s0, %s182
        %s184 = sadd.s32 %s17, %s19
        %s185 = smul.u32 2, %s18
      $region24: #{_lambda_.14} parent=19 // pred_fallthru
        _
      // Predicated region
      $region25: #{_lambda_.14} parent=19 // pred_check
        %p186 = pneg %p87
      $region26: #{_lambda_.14} parent=19 // pred_check_branch
        %188 = sbr.rel (%p186) target = $region28
      $region27: #{_lambda_.14} parent=19 // pred_region
        %p189 = scmp.lt.s32.totalorder %s19, 2
        %s190 = scalar_select %p189, %s19, 2
        %s191 = smul.addr %s190, 72
        %s192 = smul.addr %s191, 4
        %s193 = scalar_lea.vmem %s1, %s192
      $region28: #{_lambda_.14} parent=19 // pred_fallthru
        _
    $region20: #{_lambda_.14} parent=5 // pred_fallthru
      _
    %p194 = scmp.le.s32.totalorder 1, %s9
    %p195 = scmp.lt.s32.totalorder %s9, 25
    %p196 = pnand %p194, %p195
    %p197 = pneg %p196
    // Predicated region
    $region29: #{_lambda_.14} parent=5 // pred_check
      _
    $region30: #{_lambda_.14} parent=5 // pred_check_branch
      %199 = sbr.rel (%p196) target = $region32
    $region31: #{_lambda_.14} parent=5 // pred_region
      %s200 = ssub.s32 %s9, 1
      %s201 = sadd.s32 %s21, %s23
      %s202 = smul.u32 2, %s22
      %p203 = scmp.lt.s32.totalorder %s20, 1
      %s204 = scalar_select %p203, %s20, 1
      %p205 = scmp.lt.s32.totalorder %s201, 5
      %s206 = scalar_select %p205, %s201, 5
      %p207 = scmp.lt.s32.totalorder %s202, 1
      %s208 = scalar_select %p207, %s202, 1
      %s209 = smul.addr %s208, 5
      %s210 = smul.addr %s206, 10
      %s211 = sadd.s32 %s209, %s210
      %s212 = smul.addr %s204, 60
      %s213 = sadd.s32 %s211, %s212
      %s214 = smul.addr %s213, 4
      %s215 = scalar_lea.vmem %s0, %s214
      %p216 = pneg %p67
      %p217 = pneg %p64
      %p218 = scmp.lt.s32.totalorder %s23, 2
      %s219 = scalar_select %p218, %s23, 2
      %s220 = smul.addr %s219, 72
      %s221 = smul.addr %s220, 4
      %s222 = scalar_lea.vmem %s1, %s221
      %p223 = pneg %p93
      %p224 = pneg %p90
      %p225 = pneg %p114
      %p226 = pneg %p111
      %p227 = pneg %p144
      %p228 = pneg %p141
      %s229 = smul.u32 2, %s22
      %p230 = scmp.lt.s32.totalorder %s20, 1
      %s231 = scalar_select %p230, %s20, 1
      %p232 = scmp.lt.s32.totalorder %s21, 3
      %s233 = scalar_select %p232, %s21, 3
      %p234 = scmp.lt.s32.totalorder %s229, 1
      %s235 = scalar_select %p234, %s229, 1
      %s236 = smul.addr %s233, 2
      %s237 = sadd.s32 %s235, %s236
      %s238 = smul.addr %s231, 8
      %s239 = sadd.s32 %s237, %s238
      %s240 = smul.addr %s239, 4
      %s241 = scalar_lea.vmem %s3, %s240
      %s242 = sadd.s32 %s21, %s23
      %s243 = smul.u32 2, %s22
      %p244 = scmp.lt.s32.totalorder %s20, 1
      %s245 = scalar_select %p244, %s20, 1
      %p246 = scmp.lt.s32.totalorder %s242, 5
      %s247 = scalar_select %p246, %s242, 5
      %p248 = scmp.lt.s32.totalorder %s243, 1
      %s249 = scalar_select %p248, %s243, 1
      %s250 = smul.addr %s249, 5
      %s251 = smul.addr %s247, 10
      %s252 = sadd.s32 %s250, %s251
      %s253 = smul.addr %s245, 60
      %s254 = sadd.s32 %s252, %s253
      %s255 = smul.addr %s254, 4
      %s256 = scalar_lea.vmem %s0, %s255
      %s257 = sadd.s32 %s21, %s23
      %s258 = smul.u32 2, %s22
      %p259 = scmp.lt.s32.totalorder %s23, 2
      %s260 = scalar_select %p259, %s23, 2
      %s261 = smul.addr %s260, 72
      %s262 = smul.addr %s261, 4
      %s263 = scalar_lea.vmem %s1, %s262
      %s264 = smul.u32 2, %s22
      %p265 = scmp.lt.s32.totalorder %s20, 1
      %s266 = scalar_select %p265, %s20, 1
      %p267 = scmp.lt.s32.totalorder %s21, 3
      %s268 = scalar_select %p267, %s21, 3
      %p269 = scmp.lt.s32.totalorder %s264, 1
      %s270 = scalar_select %p269, %s264, 1
      %s271 = smul.addr %s268, 2
      %s272 = sadd.s32 %s270, %s271
      %s273 = smul.addr %s266, 8
      %s274 = sadd.s32 %s272, %s273
      %s275 = smul.addr %s274, 4
      %s276 = scalar_lea.vmem %s3, %s275
      %s277 = smul.u32 2, %s22
      %p279 = scmp.eq.s32.totalorder %s23, 0
      // Predicated region
      $region33: #{_lambda_.14} parent=31 // pred_check
        %p280 = pneg %p279
      $region34: #{_lambda_.14} parent=31 // pred_check_branch
        %282 = sbr.rel (%p280) target = $region36
      $region35: #{_lambda_.14} parent=31 // pred_region
        %vm283 = vcmask 523264
        %284 = vst.msk [vmem:[#allocation2] sm:$0xff] %vm283, 0.0
        %285 = vst.msk [vmem:[#allocation2 + $0x8] sm:$0xff] %vm283, 0.0
      $region36: #{_lambda_.14} parent=31 // pred_fallthru
        _
      %v286 = vld [vmem:[#allocation2] sm:$0xff]
      %v287 = vld [vmem:[#allocation2 + $0x8] sm:$0xff]
      %v288 = vld [vmem:[%s256] sm:$0xff]
      %v289 = vld [vmem:[%s256 + $0x8] sm:$0xff]
      %v290 = vld [vmem:[%s256 + $0x10] sm:$0xf]
      %v291 = vld [vmem:[%s256 + $0x14] sm:$0xff]
      %v292 = vld [vmem:[%s256 + $0x1c] sm:$0xff]
      %v293 = vld [vmem:[%s256 + $0x24] sm:$0xf]
      %v294 = vld [vmem:[%s263] sm:$0xf]
      %v295 = vld [vmem:[%s263 + $0x4] sm:$0xf]
      %v296 = vld [vmem:[%s263 + $0x8] sm:$0xf]
      %v297 = vld [vmem:[%s263 + $0xc] sm:$0xf]
      %v298 = vld [vmem:[%s263 + $0x10] sm:$0xf]
      %v299 = vld [vmem:[%s263 + $0x14] sm:$0xf]
      %v300 = vld [vmem:[%s263 + $0x18] sm:$0xf]
      %v301 = vld [vmem:[%s263 + $0x1c] sm:$0xf]
      %v302 = vld [vmem:[%s263 + $0x20] sm:$0xf]
      %v303 = vld [vmem:[%s263 + $0x24] sm:$0xf]
      %v304 = vld [vmem:[%s263 + $0x28] sm:$0xf]
      %v305 = vld [vmem:[%s263 + $0x2c] sm:$0xf]
      %v306 = vld [vmem:[%s263 + $0x30] sm:$0xf]
      %v307 = vld [vmem:[%s263 + $0x34] sm:$0xf]
      %v308 = vld [vmem:[%s263 + $0x38] sm:$0xf]
      %v309 = vld [vmem:[%s263 + $0x3c] sm:$0xf]
      %v310 = vld [vmem:[%s263 + $0x40] sm:$0xf]
      %v311 = vld [vmem:[%s263 + $0x44] sm:$0xf]
      %v312 = vld [vmem:[%s263 + $0x48] sm:$0xf]
      %v313 = vld [vmem:[%s263 + $0x4c] sm:$0xf]
      %v314 = vld [vmem:[%s263 + $0x50] sm:$0xf]
      %v315 = vld [vmem:[%s263 + $0x54] sm:$0xf]
      %v316 = vld [vmem:[%s263 + $0x58] sm:$0xf]
      %v317 = vld [vmem:[%s263 + $0x5c] sm:$0xf]
      %v318 = vld [vmem:[%s263 + $0x60] sm:$0xf]
      %v319 = vld [vmem:[%s263 + $0x64] sm:$0xf]
      %v320 = vld [vmem:[%s263 + $0x68] sm:$0xf]
      %v321 = vld [vmem:[%s263 + $0x6c] sm:$0xf]
      %v322 = vld [vmem:[%s263 + $0x70] sm:$0xf]
      %v323 = vld [vmem:[%s263 + $0x74] sm:$0xf]
      %v324 = vld [vmem:[%s263 + $0x78] sm:$0xf]
      %v325 = vld [vmem:[%s263 + $0x7c] sm:$0xf]
      %v326 = vld [vmem:[%s263 + $0x80] sm:$0xf]
      %v327 = vld [vmem:[%s263 + $0x84] sm:$0xf]
      %v328 = vld [vmem:[%s263 + $0x88] sm:$0xf]
      %v329 = vld [vmem:[%s263 + $0x8c] sm:$0xf]
      %v330 = vld [vmem:[%s263 + $0x90] sm:$0xf]
      %v331 = vld [vmem:[%s263 + $0x94] sm:$0xf]
      %v332 = vld [vmem:[%s263 + $0x98] sm:$0xf]
      %v333 = vld [vmem:[%s263 + $0x9c] sm:$0xf]
      %v334 = vld [vmem:[%s263 + $0xa0] sm:$0xf]
      %v335 = vld [vmem:[%s263 + $0xa4] sm:$0xf]
      %v336 = vld [vmem:[%s263 + $0xa8] sm:$0xf]
      %v337 = vld [vmem:[%s263 + $0xac] sm:$0xf]
      %v338 = vld [vmem:[%s263 + $0xb0] sm:$0xf]
      %v339 = vld [vmem:[%s263 + $0xb4] sm:$0xf]
      %v340 = vld [vmem:[%s263 + $0xb8] sm:$0xf]
      %v341 = vld [vmem:[%s263 + $0xbc] sm:$0xf]
      %v342 = vld [vmem:[%s263 + $0xc0] sm:$0xf]
      %v343 = vld [vmem:[%s263 + $0xc4] sm:$0xf]
      %v344 = vld [vmem:[%s263 + $0xc8] sm:$0xf]
      %v345 = vld [vmem:[%s263 + $0xcc] sm:$0xf]
      %v346 = vld [vmem:[%s263 + $0xd0] sm:$0xf]
      %v347 = vld [vmem:[%s263 + $0xd4] sm:$0xf]
      %v348 = vld [vmem:[%s263 + $0xd8] sm:$0xf]
      %v349 = vld [vmem:[%s263 + $0xdc] sm:$0xf]
      %v350 = vld [vmem:[%s263 + $0xe0] sm:$0xf]
      %v351 = vld [vmem:[%s263 + $0xe4] sm:$0xf]
      %v352 = vld [vmem:[%s263 + $0xe8] sm:$0xf]
      %v353 = vld [vmem:[%s263 + $0xec] sm:$0xf]
      %v354 = vld [vmem:[%s263 + $0xf0] sm:$0xf]
      %v355 = vld [vmem:[%s263 + $0xf4] sm:$0xf]
      %v356 = vld [vmem:[%s263 + $0xf8] sm:$0xf]
      %v357 = vld [vmem:[%s263 + $0xfc] sm:$0xf]
      %v358 = vld [vmem:[%s263 + $0x100] sm:$0xf]
      %v359 = vld [vmem:[%s263 + $0x104] sm:$0xf]
      %v360 = vld [vmem:[%s263 + $0x108] sm:$0xf]
      %v361 = vld [vmem:[%s263 + $0x10c] sm:$0xf]
      %v362 = vld [vmem:[%s263 + $0x110] sm:$0xf]
      %v363 = vld [vmem:[%s263 + $0x114] sm:$0xf]
      %v364 = vld [vmem:[%s263 + $0x118] sm:$0xf]
      %v365 = vld [vmem:[%s263 + $0x11c] sm:$0xf]
      %v372 = vunpack.c.l.b16 %v288
      %v373 = vunpack.c.h.b16 %v288
      %v374 = vunpack.c.l.b16 %v289
      %v375 = vunpack.c.h.b16 %v289
      %v376 = vunpack.c.l.b16 %v290
      %v377 = vunpack.c.l.b16 %v291
      %v378 = vunpack.c.h.b16 %v291
      %v379 = vunpack.c.l.b16 %v292
      %v380 = vunpack.c.h.b16 %v292
      %v381 = vunpack.c.l.b16 %v293
      %v382 = vpack.c.b16 %v377, %v372
      %v383 = vpack.c.b16 %v378, %v373
      %v384 = vpack.c.b16 %v379, %v374
      %v385 = vpack.c.b16 %v380, %v375
      %v386 = vpack.c.b16 %v381, %v376
      %v463 = vunpack.c.l.b16 %v294
      %v464 = vunpack.c.l.b16 %v295
      %v465 = vunpack.c.l.b16 %v296
      %v466 = vunpack.c.l.b16 %v297
      %v467 = vunpack.c.l.b16 %v298
      %v468 = vunpack.c.l.b16 %v299
      %v469 = vunpack.c.l.b16 %v300
      %v470 = vunpack.c.l.b16 %v301
      %v471 = vunpack.c.l.b16 %v302
      %v472 = vunpack.c.l.b16 %v303
      %v473 = vunpack.c.l.b16 %v304
      %v474 = vunpack.c.l.b16 %v305
      %v475 = vunpack.c.l.b16 %v306
      %v476 = vunpack.c.l.b16 %v307
      %v477 = vunpack.c.l.b16 %v308
      %v478 = vunpack.c.l.b16 %v309
      %v479 = vunpack.c.l.b16 %v310
      %v480 = vunpack.c.l.b16 %v311
      %v481 = vunpack.c.l.b16 %v312
      %v482 = vunpack.c.l.b16 %v313
      %v483 = vunpack.c.l.b16 %v314
      %v484 = vunpack.c.l.b16 %v315
      %v485 = vunpack.c.l.b16 %v316
      %v486 = vunpack.c.l.b16 %v317
      %v487 = vunpack.c.l.b16 %v318
      %v488 = vunpack.c.l.b16 %v319
      %v489 = vunpack.c.l.b16 %v320
      %v490 = vunpack.c.l.b16 %v321
      %v491 = vunpack.c.l.b16 %v322
      %v492 = vunpack.c.l.b16 %v323
      %v493 = vunpack.c.l.b16 %v324
      %v494 = vunpack.c.l.b16 %v325
      %v495 = vunpack.c.l.b16 %v326
      %v496 = vunpack.c.l.b16 %v327
      %v497 = vunpack.c.l.b16 %v328
      %v498 = vunpack.c.l.b16 %v329
      %v499 = vunpack.c.l.b16 %v330
      %v500 = vunpack.c.l.b16 %v331
      %v501 = vunpack.c.l.b16 %v332
      %v502 = vunpack.c.l.b16 %v333
      %v503 = vunpack.c.l.b16 %v334
      %v504 = vunpack.c.l.b16 %v335
      %v505 = vunpack.c.l.b16 %v336
      %v506 = vunpack.c.l.b16 %v337
      %v507 = vunpack.c.l.b16 %v338
      %v508 = vunpack.c.l.b16 %v339
      %v509 = vunpack.c.l.b16 %v340
      %v510 = vunpack.c.l.b16 %v341
      %v511 = vunpack.c.l.b16 %v342
      %v512 = vunpack.c.l.b16 %v343
      %v513 = vunpack.c.l.b16 %v344
      %v514 = vunpack.c.l.b16 %v345
      %v515 = vunpack.c.l.b16 %v346
      %v516 = vunpack.c.l.b16 %v347
      %v517 = vunpack.c.l.b16 %v348
      %v518 = vunpack.c.l.b16 %v349
      %v519 = vunpack.c.l.b16 %v350
      %v520 = vunpack.c.l.b16 %v351
      %v521 = vunpack.c.l.b16 %v352
      %v522 = vunpack.c.l.b16 %v353
      %v523 = vunpack.c.l.b16 %v354
      %v524 = vunpack.c.l.b16 %v355
      %v525 = vunpack.c.l.b16 %v356
      %v526 = vunpack.c.l.b16 %v357
      %v527 = vunpack.c.l.b16 %v358
      %v528 = vunpack.c.l.b16 %v359
      %v529 = vunpack.c.l.b16 %v360
      %v530 = vunpack.c.l.b16 %v361
      %v531 = vunpack.c.l.b16 %v362
      %v532 = vunpack.c.l.b16 %v363
      %v533 = vunpack.c.l.b16 %v364
      %v534 = vunpack.c.l.b16 %v365
      %v535 = vpack.c.b16 %v464, %v463
      %v536 = vpack.c.b16 %v466, %v465
      %v537 = vpack.c.b16 %v468, %v467
      %v538 = vpack.c.b16 %v470, %v469
      %v539 = vpack.c.b16 %v472, %v471
      %v540 = vpack.c.b16 %v474, %v473
      %v541 = vpack.c.b16 %v476, %v475
      %v542 = vpack.c.b16 %v478, %v477
      %v543 = vpack.c.b16 %v480, %v479
      %v544 = vpack.c.b16 %v482, %v481
      %v545 = vpack.c.b16 %v484, %v483
      %v546 = vpack.c.b16 %v486, %v485
      %v547 = vpack.c.b16 %v488, %v487
      %v548 = vpack.c.b16 %v490, %v489
      %v549 = vpack.c.b16 %v492, %v491
      %v550 = vpack.c.b16 %v494, %v493
      %v551 = vpack.c.b16 %v496, %v495
      %v552 = vpack.c.b16 %v498, %v497
      %v553 = vpack.c.b16 %v500, %v499
      %v554 = vpack.c.b16 %v502, %v501
      %v555 = vpack.c.b16 %v504, %v503
      %v556 = vpack.c.b16 %v506, %v505
      %v557 = vpack.c.b16 %v508, %v507
      %v558 = vpack.c.b16 %v510, %v509
      %v559 = vpack.c.b16 %v512, %v511
      %v560 = vpack.c.b16 %v514, %v513
      %v561 = vpack.c.b16 %v516, %v515
      %v562 = vpack.c.b16 %v518, %v517
      %v563 = vpack.c.b16 %v520, %v519
      %v564 = vpack.c.b16 %v522, %v521
      %v565 = vpack.c.b16 %v524, %v523
      %v566 = vpack.c.b16 %v526, %v525
      %v567 = vpack.c.b16 %v528, %v527
      %v568 = vpack.c.b16 %v530, %v529
      %v569 = vpack.c.b16 %v532, %v531
      %v570 = vpack.c.b16 %v534, %v533
      %vm607 = vcmask 523264
      %v609 = vsel %vm607, %v386, 0
      %611 = vmatprep.subr.bf16.mxu0 0
      %612 = vmatpush1.bf16.msra.mxu0 %v535
      %613 = vmatprep.subr.bf16.mxu0 0
      %614 = vmatpush1.bf16.msra.mxu0 %v536
      %615 = vmatprep.subr.bf16.mxu0 0
      %616 = vmatpush1.bf16.msra.mxu0 %v537
      %617 = vmatprep.subr.bf16.mxu0 0
      %618 = vmatpush1.bf16.msra.mxu0 %v538
      %619 = vmatprep.subr.bf16.mxu0 0
      %620 = vmatpush1.bf16.msra.mxu0 %v539
      %621 = vmatprep.subr.bf16.mxu0 0
      %622 = vmatpush1.bf16.msra.mxu0 %v540
      %623 = vmatprep.subr.bf16.mxu0 0
      %624 = vmatpush1.bf16.msra.mxu0 %v541
      %625 = vmatprep.subr.bf16.mxu0 0
      %626 = vmatpush1.bf16.msra.mxu0 %v542
      %627 = vmatprep.subr.bf16.mxu0 0
      %628 = vmatpush1.bf16.msra.mxu0 %v543
      %629 = vmatprep.subr.bf16.mxu0 0
      %630 = vmatpush1.bf16.msra.mxu0 %v544
      %631 = vmatprep.subr.bf16.mxu0 0
      %632 = vmatpush1.bf16.msra.mxu0 %v545
      %633 = vmatprep.subr.bf16.mxu0 0
      %634 = vmatpush1.bf16.msra.mxu0 %v546
      %635 = vmatprep.subr.bf16.mxu0 0
      %636 = vmatpush1.bf16.msra.mxu0 %v547
      %637 = vmatprep.subr.bf16.mxu0 0
      %638 = vmatpush1.bf16.msra.mxu0 %v548
      %639 = vmatprep.subr.bf16.mxu0 0
      %640 = vmatpush1.bf16.msra.mxu0 %v549
      %641 = vmatprep.subr.bf16.mxu0 0
      %642 = vmatpush1.bf16.msra.mxu0 %v550
      %643 = vmatprep.mubr.bf16.mxu0 %v383
      %644 = vmatmul.mubr.bf16.gmra.mrb[0].mxu0 %v382
      %v645 = vpop.f32.mrb[0].mxu0
      %v646 = vadd.f32 0.0, %v645
      %v647 = vpop.f32.mrb[0].mxu0
      %v648 = vpop.f32.mrb[0].mxu0
      %v649 = vadd.f32 0.0, %v648
      %v650 = vpop.f32.mrb[0].mxu0
      %651 = vdwg.mxu0
      %652 = vmatprep.subr.bf16.mxu0 0
      %653 = vmatpush1.bf16.msra.mxu0 %v551
      %654 = vmatprep.subr.bf16.mxu0 0
      %655 = vmatpush1.bf16.msra.mxu0 %v552
      %656 = vmatprep.subr.bf16.mxu0 0
      %657 = vmatpush1.bf16.msra.mxu0 %v553
      %658 = vmatprep.subr.bf16.mxu0 0
      %659 = vmatpush1.bf16.msra.mxu0 %v554
      %660 = vmatprep.subr.bf16.mxu0 0
      %661 = vmatpush1.bf16.msra.mxu0 %v555
      %662 = vmatprep.subr.bf16.mxu0 0
      %663 = vmatpush1.bf16.msra.mxu0 %v556
      %664 = vmatprep.subr.bf16.mxu0 0
      %665 = vmatpush1.bf16.msra.mxu0 %v557
      %666 = vmatprep.subr.bf16.mxu0 0
      %667 = vmatpush1.bf16.msra.mxu0 %v558
      %668 = vmatprep.subr.bf16.mxu0 0
      %669 = vmatpush1.bf16.msra.mxu0 %v559
      %670 = vmatprep.subr.bf16.mxu0 0
      %671 = vmatpush1.bf16.msra.mxu0 %v560
      %672 = vmatprep.subr.bf16.mxu0 0
      %673 = vmatpush1.bf16.msra.mxu0 %v561
      %674 = vmatprep.subr.bf16.mxu0 0
      %675 = vmatpush1.bf16.msra.mxu0 %v562
      %676 = vmatprep.subr.bf16.mxu0 0
      %677 = vmatpush1.bf16.msra.mxu0 %v563
      %678 = vmatprep.subr.bf16.mxu0 0
      %679 = vmatpush1.bf16.msra.mxu0 %v564
      %680 = vmatprep.subr.bf16.mxu0 0
      %681 = vmatpush1.bf16.msra.mxu0 %v565
      %682 = vmatprep.subr.bf16.mxu0 0
      %683 = vmatpush1.bf16.msra.mxu0 %v566
      %684 = vmatprep.mubr.bf16.mxu0 %v385
      %685 = vmatmul.mubr.bf16.gmra.mrb[0].mxu0 %v384
      %v686 = vpop.f32.mrb[0].mxu0
      %v687 = vadd.f32 %v646, %v686
      %v688 = vpop.f32.mrb[0].mxu0
      %v689 = vpop.f32.mrb[0].mxu0
      %v690 = vadd.f32 %v649, %v689
      %v691 = vpop.f32.mrb[0].mxu0
      %692 = vdwg.mxu0
      %693 = vmatprep.subr.bf16.mxu0 0
      %694 = vmatpush1.bf16.msra.mxu0 %v567
      %695 = vmatprep.subr.bf16.mxu0 0
      %696 = vmatpush1.bf16.msra.mxu0 %v568
      %697 = vmatprep.subr.bf16.mxu0 0
      %698 = vmatpush1.bf16.msra.mxu0 %v569
      %699 = vmatprep.subr.bf16.mxu0 0
      %700 = vmatpush1.bf16.msra.mxu0 %v570
      %701 = vmatprep.subr.bf16.mxu0 0
      %702 = vmatpush1.bf16.msra.mxu0 0
      %703 = vmatprep.subr.bf16.mxu0 0
      %704 = vmatpush1.bf16.msra.mxu0 0
      %705 = vmatprep.subr.bf16.mxu0 0
      %706 = vmatpush1.bf16.msra.mxu0 0
      %707 = vmatprep.subr.bf16.mxu0 0
      %708 = vmatpush1.bf16.msra.mxu0 0
      %709 = vmatprep.subr.bf16.mxu0 0
      %710 = vmatpush1.bf16.msra.mxu0 0
      %711 = vmatprep.subr.bf16.mxu0 0
      %712 = vmatpush1.bf16.msra.mxu0 0
      %713 = vmatprep.subr.bf16.mxu0 0
      %714 = vmatpush1.bf16.msra.mxu0 0
      %715 = vmatprep.subr.bf16.mxu0 0
      %716 = vmatpush1.bf16.msra.mxu0 0
      %717 = vmatprep.subr.bf16.mxu0 0
      %718 = vmatpush1.bf16.msra.mxu0 0
      %719 = vmatprep.subr.bf16.mxu0 0
      %720 = vmatpush1.bf16.msra.mxu0 0
      %721 = vmatprep.subr.bf16.mxu0 0
      %722 = vmatpush1.bf16.msra.mxu0 0
      %723 = vmatprep.subr.bf16.mxu0 0
      %724 = vmatpush1.bf16.msra.mxu0 0
      %725 = vmatprep.mubr.bf16.mxu0 0
      %726 = vmatmul.mubr.bf16.gmra.mrb[0].mxu0 %v609
      %v727 = vpop.f32.mrb[0].mxu0
      %v728 = vadd.f32 %v687, %v727
      %v729 = vpop.f32.mrb[0].mxu0
      %v730 = vpop.f32.mrb[0].mxu0
      %v731 = vadd.f32 %v690, %v730
      %v732 = vpop.f32.mrb[0].mxu0
      %733 = vdwg.mxu0
      %v734 = vadd.f32 %v286, %v728
      %v735 = vadd.f32 %v287, %v731
      %736 = vst.msk [vmem:[#allocation2] sm:$0xff] %vm607, %v734
      %737 = vst.msk [vmem:[#allocation2 + $0x8] sm:$0xff] %vm607, %v735
      %p738 = scmp.eq.s32.totalorder %s23, 2
      // Predicated region
      $region37: #{_lambda_.14} parent=31 // pred_check
        %p739 = pneg %p738
      $region38: #{_lambda_.14} parent=31 // pred_check_branch
        %741 = sbr.rel (%p739) target = $region40
      $region39: #{_lambda_.14} parent=31 // pred_region
        %v742 = vld [vmem:[#allocation2] sm:$0xff]
        %v743 = vld [vmem:[#allocation2 + $0x8] sm:$0xff]
        %v744 = vld [vmem:[%s2] sm:$0x1]
        %v746 = vlaneseq
        %v747 = vshrl.u32 %v746, 7
        %v748 = vsub.s32 0, %v747
        %v749 = vrot.slane %v744, %v748
        %v751 = vadd.f32 %v742, %v749
        %v752 = vadd.f32 %v743, %v749
        %v753 = vmax.f32 %v751, 0.0
        %v754 = vmax.f32 %v752, 0.0
        %v755 = vpack.c.bf16 %v754, %v753
        %v757 = vunpack.c.l.b16 %v755
        %v758 = vunpack.c.h.b16 %v755
        %v759 = vpack.c.b16 %v757, %v757
        %v760 = vpack.c.b16 %v758, %v758
        %vm763 = vcmask 519168
        %764 = vst.msk [vmem:[%s276] sm:$0xf] %vm763, %v759
        %765 = vst.msk [vmem:[%s276 + $0x4] sm:$0xf] %vm763, %v760
      $region40: #{_lambda_.14} parent=31 // pred_fallthru
        _
      %s766 = smul.u32 2, %s22
      %p767 = scmp.lt.s32.totalorder %s20, 1
      %s768 = scalar_select %p767, %s20, 1
      %p769 = scmp.lt.s32.totalorder %s21, 3
      %s770 = scalar_select %p769, %s21, 3
      %p771 = scmp.lt.s32.totalorder %s766, 1
      %s772 = scalar_select %p771, %s766, 1
      %s773 = smul.addr %s770, 2
      %s774 = sadd.s32 %s772, %s773
      %s775 = smul.addr %s768, 8
      %s776 = sadd.s32 %s774, %s775
      %s777 = smul.addr %s776, 4
      %s778 = scalar_lea.vmem %s3, %s777
      // Predicated region
      $region41: #{_lambda_.14} parent=31 // pred_check
        %p779 = pneg %p141
      $region42: #{_lambda_.14} parent=31 // pred_check_branch
        %781 = sbr.rel (%p779) target = $region44
      $region43: #{_lambda_.14} parent=31 // pred_region
        %s782 = smul.u32 2, %s22
      $region44: #{_lambda_.14} parent=31 // pred_fallthru
        _
    $region32: #{_lambda_.14} parent=5 // pred_fallthru
      _
    %p783 = scmp.le.s32.totalorder 2, %s9
    // Predicated region
    $region45: #{_lambda_.14} parent=5 // pred_check
      %p784 = pneg %p783
    $region46: #{_lambda_.14} parent=5 // pred_check_branch
      %786 = sbr.rel (%p784) target = $region48
    $region47: #{_lambda_.14} parent=5 // pred_region
      %s787 = ssub.s32 %s9, 2
      // Predicated region
      $region49: #{_lambda_.14} parent=47 // pred_check
        %p788 = pneg %p147
      $region50: #{_lambda_.14} parent=47 // pred_check_branch
        %790 = sbr.rel (%p788) target = $region52
      $region51: #{_lambda_.14} parent=47 // pred_region
        %s791 = smul.u32 2, %s26
        %p792 = scmp.lt.s32.totalorder %s24, 1
        %s793 = scalar_select %p792, %s24, 1
        %p794 = scmp.lt.s32.totalorder %s25, 3
        %s795 = scalar_select %p794, %s25, 3
        %p796 = scmp.lt.s32.totalorder %s791, 1
        %s797 = scalar_select %p796, %s791, 1
        %s798 = smul.addr %s795, 2
        %s799 = sadd.s32 %s797, %s798
        %s800 = smul.addr %s793, 8
        %s801 = sadd.s32 %s799, %s800
        %s802 = smul.addr %s801, 4
        %s803 = scalar_lea.vmem %s3, %s802
      $region52: #{_lambda_.14} parent=47 // pred_fallthru
        _
    $region48: #{_lambda_.14} parent=5 // pred_fallthru
      _
  $region6: #{_lambda_.14} parent=0 // loop_footer
    %s13 = sadd.s32 1, %s9
  $region7: #{_lambda_.14} parent=0 // loop_footer_branch
    %8 = sbr.rel target = $region3
  $region8: #{_lambda_.14} parent=0 // loop_exit
    _

// kernel: _lambda_.15
$region0: #{_lambda_.15}
  #allocation0 [shape = 'u32[]', space=smem, size = 0x4, offset = 0x4, fixed_abs, tag = 'smem constant byte address 0x4 - core index']
  #allocation1 [shape = 'u32[144,128]{1,0:T(1,128)}', space=vmem, size = 0x12000, scoped, tag = 'internal scratch']
  #allocation2 [shape = 'f32[16,64]{1,0:T(8,128)}', space=vmem, size = 0x2000, scoped, tag = 'scratch operand']
  %s0 = inlined_call_operand.vmem [shape: bf16[2,6,16,576], index: 0, kind: input, shape index: {}]
  %s1 = inlined_call_operand.vmem [shape: bf16[3,576,64], index: 1, kind: input, shape index: {}]
  %s2 = inlined_call_operand.vmem [shape: f32[1,64], index: 2, kind: input, shape index: {}]
  %s3 = inlined_call_operand.vmem [shape: bf16[2,4,16,64], index: 3, kind: input, shape index: {}]
  %s4 = inlined_call_operand.vmem [shape: bf16[2,4,16,64], index: 4, kind: output, shape index: {}]
  %s5 = sld [smem:[#allocation0]]
  $region57: #{_lambda_.15} parent=0
    _
  %s7 = ssub.s32 1, %s5
  %s8 = scalar_select 0, %s7, %s5
  loop: start=0, step=1, limit=26
  $region2: #{_lambda_.15} parent=0 // loop_pre_header
    _
  $region3: #{_lambda_.15} parent=0 // loop_header
    %s10 = sphi 0, %s14
    %p11 = scmp.ge.s32.totalorder %s10, 26
    %s17 = sphi 0, %s43
    %s18 = sphi 0, %s39
    %s19 = sphi 0, %s35
    %s20 = sphi 0, %s31
    %s21 = sphi 0, %s17
    %s22 = sphi 0, %s18
    %s23 = sphi 0, %s19
    %s24 = sphi 0, %s20
    %s25 = sphi 0, %s21
    %s26 = sphi 0, %s22
    %s27 = sphi 0, %s23
    %s28 = sphi 0, %s24
    %s52 = sphi 0, %s54
    %s55 = sphi 0, %s52
    %s56 = sphi 0, %s55
    %s72 = sphi 0, %s56
    %s78 = sphi 0, %s80
    %s81 = sphi 0, %s78
    %s82 = sphi 0, %s81
    %s98 = sphi 0, %s82
    %s102 = sphi 0, %s102
    %s104 = sphi 0, %s102
    %s105 = sphi 0, %s104
    %s119 = sphi 0, %s105
    %s129 = sphi 0, %s131
    %s132 = sphi 0, %s129
    %s133 = sphi 0, %s132
    %s149 = sphi 0, %s133
    %s159 = sphi 0, %s161
    %s162 = sphi 0, %s159
    %s163 = sphi 0, %s162
    %s179 = sphi 0, %s163
  $region4: #{_lambda_.15} parent=0 // loop_header_branch
    %13 = sbr.rel (%p11) target = $region8
  $region5: #{_lambda_.15} parent=0 // loop_body
    %s15 = ssub.s32 %s10, 1
    %s16 = ssub.s32 %s10, 2
    %s29 = sadd.s32 1, %s20
    %p30 = scmp.ge.s32.totalorder %s29, 3
    %s31 = scalar_select %p30, 0, %s29
    %s32 = sadd.s32 1, %s19
    %s33 = scalar_select %p30, %s32, %s19
    %p34 = scmp.ge.s32.totalorder %s33, 1
    %s35 = scalar_select %p34, 0, %s33
    %s36 = sadd.s32 1, %s18
    %s37 = scalar_select %p34, %s36, %s18
    %p38 = scmp.ge.s32.totalorder %s37, 4
    %s39 = scalar_select %p38, 0, %s37
    %s40 = sadd.s32 1, %s17
    %s41 = scalar_select %p38, %s40, %s17
    %p42 = scmp.ge.s32.totalorder %s41, 2
    %s43 = scalar_select %p42, 0, %s41
    %s44 = sadd.s32 %s18, %s20
    %s45 = sadd.s32 %s39, %s31
    %s46 = ssub.s32 %s17, %s43
    %s47 = ssub.s32 %s44, %s45
    %s48 = sor.u32 %s46, %s47
    %s49 = ssub.s32 %s19, %s35
    %s50 = sor.u32 %s48, %s49
    %p51 = scmp.eq.s32.totalorder %s50, 0
    %s53 = sadd.s32 %s52, 1
    %s54 = scalar_select %p51, %s52, %s53
    %p57 = pneg %p51
    %p58 = scmp.eq.s32.totalorder %s10, 23
    %p59 = por %p57, %p58
    %p60 = scmp.ne.s32.totalorder %s52, %s55
    %p61 = scmp.eq.s32.totalorder %s10, 0
    %p62 = por %p60, %p61
    %p63 = scmp.ne.s32.totalorder %s52, %s55
    %p64 = scmp.eq.s32.totalorder %s15, 23
    %p65 = por %p63, %p64
    %p66 = scmp.ne.s32.totalorder %s55, %s56
    %p67 = scmp.eq.s32.totalorder %s15, 0
    %p68 = por %p66, %p67
    %p69 = scmp.ne.s32.totalorder %s55, %s56
    %p70 = scmp.eq.s32.totalorder %s16, 23
    %p71 = por %p69, %p70
    %p73 = scmp.ne.s32.totalorder %s56, %s72
    %p74 = scmp.eq.s32.totalorder %s16, 0
    %p75 = por %p73, %p74
    %s76 = ssub.s32 %s20, %s31
    %p77 = scmp.eq.s32.totalorder %s76, 0
    %s79 = sadd.s32 %s78, 1
    %s80 = scalar_select %p77, %s78, %s79
    %p83 = pneg %p77
    %p84 = scmp.eq.s32.totalorder %s10, 23
    %p85 = por %p83, %p84
    %p86 = scmp.ne.s32.totalorder %s78, %s81
    %p87 = scmp.eq.s32.totalorder %s10, 0
    %p88 = por %p86, %p87
    %p89 = scmp.ne.s32.totalorder %s78, %s81
    %p90 = scmp.eq.s32.totalorder %s15, 23
    %p91 = por %p89, %p90
    %p92 = scmp.ne.s32.totalorder %s81, %s82
    %p93 = scmp.eq.s32.totalorder %s15, 0
    %p94 = por %p92, %p93
    %p95 = scmp.ne.s32.totalorder %s81, %s82
    %p96 = scmp.eq.s32.totalorder %s16, 23
    %p97 = por %p95, %p96
    %p99 = scmp.ne.s32.totalorder %s82, %s98
    %p100 = scmp.eq.s32.totalorder %s16, 0
    %p101 = por %p99, %p100
    %s103 = sadd.s32 %s102, 1
    %p106 = scmp.eq.s32.totalorder %s10, 23
    %p107 = scmp.ne.s32.totalorder %s102, %s104
    %p108 = scmp.eq.s32.totalorder %s10, 0
    %p109 = por %p107, %p108
    %p110 = scmp.ne.s32.totalorder %s102, %s104
    %p111 = scmp.eq.s32.totalorder %s15, 23
    %p112 = por %p110, %p111
    %p113 = scmp.ne.s32.totalorder %s104, %s105
    %p114 = scmp.eq.s32.totalorder %s15, 0
    %p115 = por %p113, %p114
    %p116 = scmp.ne.s32.totalorder %s104, %s105
    %p117 = scmp.eq.s32.totalorder %s16, 23
    %p118 = por %p116, %p117
    %p120 = scmp.ne.s32.totalorder %s105, %s119
    %p121 = scmp.eq.s32.totalorder %s16, 0
    %p122 = por %p120, %p121
    %s123 = ssub.s32 %s17, %s43
    %s124 = ssub.s32 %s18, %s39
    %s125 = sor.u32 %s123, %s124
    %s126 = ssub.s32 %s19, %s35
    %s127 = sor.u32 %s125, %s126
    %p128 = scmp.eq.s32.totalorder %s127, 0
    %s130 = sadd.s32 %s129, 1
    %s131 = scalar_select %p128, %s129, %s130
    %p134 = pneg %p128
    %p135 = scmp.eq.s32.totalorder %s10, 23
    %p136 = por %p134, %p135
    %p137 = scmp.ne.s32.totalorder %s129, %s132
    %p138 = scmp.eq.s32.totalorder %s10, 0
    %p139 = por %p137, %p138
    %p140 = scmp.ne.s32.totalorder %s129, %s132
    %p141 = scmp.eq.s32.totalorder %s15, 23
    %p142 = por %p140, %p141
    %p143 = scmp.ne.s32.totalorder %s132, %s133
    %p144 = scmp.eq.s32.totalorder %s15, 0
    %p145 = por %p143, %p144
    %p146 = scmp.ne.s32.totalorder %s132, %s133
    %p147 = scmp.eq.s32.totalorder %s16, 23
    %p148 = por %p146, %p147
    %p150 = scmp.ne.s32.totalorder %s133, %s149
    %p151 = scmp.eq.s32.totalorder %s16, 0
    %p152 = por %p150, %p151
    %s153 = ssub.s32 %s17, %s43
    %s154 = ssub.s32 %s18, %s39
    %s155 = sor.u32 %s153, %s154
    %s156 = ssub.s32 %s19, %s35
    %s157 = sor.u32 %s155, %s156
    %p158 = scmp.eq.s32.totalorder %s157, 0
    %s160 = sadd.s32 %s159, 1
    %s161 = scalar_select %p158, %s159, %s160
    %p164 = pneg %p158
    %p165 = scmp.eq.s32.totalorder %s10, 23
    %p166 = por %p164, %p165
    %p167 = scmp.ne.s32.totalorder %s159, %s162
    %p168 = scmp.eq.s32.totalorder %s10, 0
    %p169 = por %p167, %p168
    %p170 = scmp.ne.s32.totalorder %s159, %s162
    %p171 = scmp.eq.s32.totalorder %s15, 23
    %p172 = por %p170, %p171
    %p173 = scmp.ne.s32.totalorder %s162, %s163
    %p174 = scmp.eq.s32.totalorder %s15, 0
    %p175 = por %p173, %p174
    %p176 = scmp.ne.s32.totalorder %s162, %s163
    %p177 = scmp.eq.s32.totalorder %s16, 23
    %p178 = por %p176, %p177
    %p180 = scmp.ne.s32.totalorder %s163, %s179
    %p181 = scmp.eq.s32.totalorder %s16, 0
    %p182 = por %p180, %p181
    %p183 = scmp.le.s32.totalorder 1, %s10
    %p184 = scmp.lt.s32.totalorder %s10, 25
    %p185 = pnand %p183, %p184
    %p186 = pneg %p185
    // Predicated region
    $region9: #{_lambda_.15} parent=5 // pred_check
      _
    $region10: #{_lambda_.15} parent=5 // pred_check_branch
      %188 = sbr.rel (%p185) target = $region12
    $region11: #{_lambda_.15} parent=5 // pred_region
      %s189 = ssub.s32 %s10, 1
      // Predicated region
      $region13: #{_lambda_.15} parent=11 // pred_check
        %p190 = pneg %p115
      $region14: #{_lambda_.15} parent=11 // pred_check_branch
        %192 = sbr.rel (%p190) target = $region16
      $region15: #{_lambda_.15} parent=11 // pred_region
        _
      $region16: #{_lambda_.15} parent=11 // pred_fallthru
        _
    $region12: #{_lambda_.15} parent=5 // pred_fallthru
      _
    %p193 = scmp.lt.s32.totalorder %s10, 24
    // Predicated region
    $region17: #{_lambda_.15} parent=5 // pred_check
      %p194 = pneg %p193
    $region18: #{_lambda_.15} parent=5 // pred_check_branch
      %196 = sbr.rel (%p194) target = $region20
    $region19: #{_lambda_.15} parent=5 // pred_region
      // Predicated region
      $region21: #{_lambda_.15} parent=19 // pred_check
        %p197 = pneg %p62
      $region22: #{_lambda_.15} parent=19 // pred_check_branch
        %199 = sbr.rel (%p197) target = $region24
      $region23: #{_lambda_.15} parent=19 // pred_region
        %s200 = sadd.s32 %s18, %s20
        %s201 = smul.u32 2, %s19
        %p202 = scmp.lt.s32.totalorder %s17, 1
        %s203 = scalar_select %p202, %s17, 1
        %p204 = scmp.lt.s32.totalorder %s200, 5
        %s205 = scalar_select %p204, %s200, 5
        %p206 = scmp.lt.s32.totalorder %s201, 1
        %s207 = scalar_select %p206, %s201, 1
        %s208 = smul.addr %s207, 5
        %s209 = smul.addr %s205, 10
        %s210 = sadd.s32 %s208, %s209
        %s211 = smul.addr %s203, 60
        %s212 = sadd.s32 %s210, %s211
        %s213 = smul.addr %s212, 4
        %s214 = scalar_lea.vmem %s0, %s213
        %s215 = sadd.s32 %s18, %s20
        %s216 = smul.u32 2, %s19
      $region24: #{_lambda_.15} parent=19 // pred_fallthru
        _
      // Predicated region
      $region25: #{_lambda_.15} parent=19 // pred_check
        %p217 = pneg %p88
      $region26: #{_lambda_.15} parent=19 // pred_check_branch
        %219 = sbr.rel (%p217) target = $region28
      $region27: #{_lambda_.15} parent=19 // pred_region
        %p220 = scmp.lt.s32.totalorder %s20, 2
        %s221 = scalar_select %p220, %s20, 2
        %s222 = smul.addr %s221, 72
        %s223 = smul.addr %s222, 4
        %s224 = scalar_lea.vmem %s1, %s223
      $region28: #{_lambda_.15} parent=19 // pred_fallthru
        _
      // Predicated region
      $region29: #{_lambda_.15} parent=19 // pred_check
        %p225 = pneg %p139
      $region30: #{_lambda_.15} parent=19 // pred_check_branch
        %227 = sbr.rel (%p225) target = $region32
      $region31: #{_lambda_.15} parent=19 // pred_region
        %s228 = smul.u32 2, %s19
        %p229 = scmp.lt.s32.totalorder %s17, 1
        %s230 = scalar_select %p229, %s17, 1
        %p231 = scmp.lt.s32.totalorder %s18, 3
        %s232 = scalar_select %p231, %s18, 3
        %p233 = scmp.lt.s32.totalorder %s228, 1
        %s234 = scalar_select %p233, %s228, 1
        %s235 = smul.addr %s232, 2
        %s236 = sadd.s32 %s234, %s235
        %s237 = smul.addr %s230, 8
        %s238 = sadd.s32 %s236, %s237
        %s239 = smul.addr %s238, 4
        %s240 = scalar_lea.vmem %s3, %s239
        %s241 = smul.u32 2, %s19
      $region32: #{_lambda_.15} parent=19 // pred_fallthru
        _
    $region20: #{_lambda_.15} parent=5 // pred_fallthru
      _
    %p242 = scmp.le.s32.totalorder 1, %s10
    %p243 = scmp.lt.s32.totalorder %s10, 25
    %p244 = pnand %p242, %p243
    %p245 = pneg %p244
    // Predicated region
    $region33: #{_lambda_.15} parent=5 // pred_check
      _
    $region34: #{_lambda_.15} parent=5 // pred_check_branch
      %247 = sbr.rel (%p244) target = $region36
    $region35: #{_lambda_.15} parent=5 // pred_region
      %s248 = ssub.s32 %s10, 1
      %s249 = sadd.s32 %s22, %s24
      %s250 = smul.u32 2, %s23
      %p251 = scmp.lt.s32.totalorder %s21, 1
      %s252 = scalar_select %p251, %s21, 1
      %p253 = scmp.lt.s32.totalorder %s249, 5
      %s254 = scalar_select %p253, %s249, 5
      %p255 = scmp.lt.s32.totalorder %s250, 1
      %s256 = scalar_select %p255, %s250, 1
      %s257 = smul.addr %s256, 5
      %s258 = smul.addr %s254, 10
      %s259 = sadd.s32 %s257, %s258
      %s260 = smul.addr %s252, 60
      %s261 = sadd.s32 %s259, %s260
      %s262 = smul.addr %s261, 4
      %s263 = scalar_lea.vmem %s0, %s262
      %p264 = pneg %p68
      %p265 = pneg %p65
      %p266 = scmp.lt.s32.totalorder %s24, 2
      %s267 = scalar_select %p266, %s24, 2
      %s268 = smul.addr %s267, 72
      %s269 = smul.addr %s268, 4
      %s270 = scalar_lea.vmem %s1, %s269
      %p271 = pneg %p94
      %p272 = pneg %p91
      %p273 = pneg %p115
      %p274 = pneg %p112
      %s275 = smul.u32 2, %s23
      %p276 = scmp.lt.s32.totalorder %s21, 1
      %s277 = scalar_select %p276, %s21, 1
      %p278 = scmp.lt.s32.totalorder %s22, 3
      %s279 = scalar_select %p278, %s22, 3
      %p280 = scmp.lt.s32.totalorder %s275, 1
      %s281 = scalar_select %p280, %s275, 1
      %s282 = smul.addr %s279, 2
      %s283 = sadd.s32 %s281, %s282
      %s284 = smul.addr %s277, 8
      %s285 = sadd.s32 %s283, %s284
      %s286 = smul.addr %s285, 4
      %s287 = scalar_lea.vmem %s3, %s286
      %p288 = pneg %p145
      %p289 = pneg %p142
      %p290 = pneg %p175
      %p291 = pneg %p172
      %s292 = smul.u32 2, %s23
      %p293 = scmp.lt.s32.totalorder %s21, 1
      %s294 = scalar_select %p293, %s21, 1
      %p295 = scmp.lt.s32.totalorder %s22, 3
      %s296 = scalar_select %p295, %s22, 3
      %p297 = scmp.lt.s32.totalorder %s292, 1
      %s298 = scalar_select %p297, %s292, 1
      %s299 = smul.addr %s296, 2
      %s300 = sadd.s32 %s298, %s299
      %s301 = smul.addr %s294, 8
      %s302 = sadd.s32 %s300, %s301
      %s303 = smul.addr %s302, 4
      %s304 = scalar_lea.vmem %s4, %s303
      %s305 = sadd.s32 %s22, %s24
      %s306 = smul.u32 2, %s23
      %p307 = scmp.lt.s32.totalorder %s21, 1
      %s308 = scalar_select %p307, %s21, 1
      %p309 = scmp.lt.s32.totalorder %s305, 5
      %s310 = scalar_select %p309, %s305, 5
      %p311 = scmp.lt.s32.totalorder %s306, 1
      %s312 = scalar_select %p311, %s306, 1
      %s313 = smul.addr %s312, 5
      %s314 = smul.addr %s310, 10
      %s315 = sadd.s32 %s313, %s314
      %s316 = smul.addr %s308, 60
      %s317 = sadd.s32 %s315, %s316
      %s318 = smul.addr %s317, 4
      %s319 = scalar_lea.vmem %s0, %s318
      %s320 = sadd.s32 %s22, %s24
      %s321 = smul.u32 2, %s23
      %p322 = scmp.lt.s32.totalorder %s24, 2
      %s323 = scalar_select %p322, %s24, 2
      %s324 = smul.addr %s323, 72
      %s325 = smul.addr %s324, 4
      %s326 = scalar_lea.vmem %s1, %s325
      %s327 = smul.u32 2, %s23
      %p328 = scmp.lt.s32.totalorder %s21, 1
      %s329 = scalar_select %p328, %s21, 1
      %p330 = scmp.lt.s32.totalorder %s22, 3
      %s331 = scalar_select %p330, %s22, 3
      %p332 = scmp.lt.s32.totalorder %s327, 1
      %s333 = scalar_select %p332, %s327, 1
      %s334 = smul.addr %s331, 2
      %s335 = sadd.s32 %s333, %s334
      %s336 = smul.addr %s329, 8
      %s337 = sadd.s32 %s335, %s336
      %s338 = smul.addr %s337, 4
      %s339 = scalar_lea.vmem %s3, %s338
      %s340 = smul.u32 2, %s23
      %s341 = smul.u32 2, %s23
      %p342 = scmp.lt.s32.totalorder %s21, 1
      %s343 = scalar_select %p342, %s21, 1
      %p344 = scmp.lt.s32.totalorder %s22, 3
      %s345 = scalar_select %p344, %s22, 3
      %p346 = scmp.lt.s32.totalorder %s341, 1
      %s347 = scalar_select %p346, %s341, 1
      %s348 = smul.addr %s345, 2
      %s349 = sadd.s32 %s347, %s348
      %s350 = smul.addr %s343, 8
      %s351 = sadd.s32 %s349, %s350
      %s352 = smul.addr %s351, 4
      %s353 = scalar_lea.vmem %s4, %s352
      %s354 = smul.u32 2, %s23
      %p356 = scmp.eq.s32.totalorder %s24, 0
      // Predicated region
      $region37: #{_lambda_.15} parent=35 // pred_check
        %p357 = pneg %p356
      $region38: #{_lambda_.15} parent=35 // pred_check_branch
        %359 = sbr.rel (%p357) target = $region40
      $region39: #{_lambda_.15} parent=35 // pred_region
        %vm360 = vcmask 523264
        %361 = vst.msk [vmem:[#allocation2] sm:$0xff] %vm360, 0.0
        %362 = vst.msk [vmem:[#allocation2 + $0x8] sm:$0xff] %vm360, 0.0
      $region40: #{_lambda_.15} parent=35 // pred_fallthru
        _
      %v363 = vld [vmem:[#allocation2] sm:$0xff]
      %v364 = vld [vmem:[#allocation2 + $0x8] sm:$0xff]
      %v365 = vld [vmem:[%s319] sm:$0xff]
      %v366 = vld [vmem:[%s319 + $0x8] sm:$0xff]
      %v367 = vld [vmem:[%s319 + $0x10] sm:$0xf]
      %v368 = vld [vmem:[%s319 + $0x14] sm:$0xff]
      %v369 = vld [vmem:[%s319 + $0x1c] sm:$0xff]
      %v370 = vld [vmem:[%s319 + $0x24] sm:$0xf]
      %v371 = vld [vmem:[%s326] sm:$0xf]
      %v372 = vld [vmem:[%s326 + $0x4] sm:$0xf]
      %v373 = vld [vmem:[%s326 + $0x8] sm:$0xf]
      %v374 = vld [vmem:[%s326 + $0xc] sm:$0xf]
      %v375 = vld [vmem:[%s326 + $0x10] sm:$0xf]
      %v376 = vld [vmem:[%s326 + $0x14] sm:$0xf]
      %v377 = vld [vmem:[%s326 + $0x18] sm:$0xf]
      %v378 = vld [vmem:[%s326 + $0x1c] sm:$0xf]
      %v379 = vld [vmem:[%s326 + $0x20] sm:$0xf]
      %v380 = vld [vmem:[%s326 + $0x24] sm:$0xf]
      %v381 = vld [vmem:[%s326 + $0x28] sm:$0xf]
      %v382 = vld [vmem:[%s326 + $0x2c] sm:$0xf]
      %v383 = vld [vmem:[%s326 + $0x30] sm:$0xf]
      %v384 = vld [vmem:[%s326 + $0x34] sm:$0xf]
      %v385 = vld [vmem:[%s326 + $0x38] sm:$0xf]
      %v386 = vld [vmem:[%s326 + $0x3c] sm:$0xf]
      %v387 = vld [vmem:[%s326 + $0x40] sm:$0xf]
      %v388 = vld [vmem:[%s326 + $0x44] sm:$0xf]
      %v389 = vld [vmem:[%s326 + $0x48] sm:$0xf]
      %v390 = vld [vmem:[%s326 + $0x4c] sm:$0xf]
      %v391 = vld [vmem:[%s326 + $0x50] sm:$0xf]
      %v392 = vld [vmem:[%s326 + $0x54] sm:$0xf]
      %v393 = vld [vmem:[%s326 + $0x58] sm:$0xf]
      %v394 = vld [vmem:[%s326 + $0x5c] sm:$0xf]
      %v395 = vld [vmem:[%s326 + $0x60] sm:$0xf]
      %v396 = vld [vmem:[%s326 + $0x64] sm:$0xf]
      %v397 = vld [vmem:[%s326 + $0x68] sm:$0xf]
      %v398 = vld [vmem:[%s326 + $0x6c] sm:$0xf]
      %v399 = vld [vmem:[%s326 + $0x70] sm:$0xf]
      %v400 = vld [vmem:[%s326 + $0x74] sm:$0xf]
      %v401 = vld [vmem:[%s326 + $0x78] sm:$0xf]
      %v402 = vld [vmem:[%s326 + $0x7c] sm:$0xf]
      %v403 = vld [vmem:[%s326 + $0x80] sm:$0xf]
      %v404 = vld [vmem:[%s326 + $0x84] sm:$0xf]
      %v405 = vld [vmem:[%s326 + $0x88] sm:$0xf]
      %v406 = vld [vmem:[%s326 + $0x8c] sm:$0xf]
      %v407 = vld [vmem:[%s326 + $0x90] sm:$0xf]
      %v408 = vld [vmem:[%s326 + $0x94] sm:$0xf]
      %v409 = vld [vmem:[%s326 + $0x98] sm:$0xf]
      %v410 = vld [vmem:[%s326 + $0x9c] sm:$0xf]
      %v411 = vld [vmem:[%s326 + $0xa0] sm:$0xf]
      %v412 = vld [vmem:[%s326 + $0xa4] sm:$0xf]
      %v413 = vld [vmem:[%s326 + $0xa8] sm:$0xf]
      %v414 = vld [vmem:[%s326 + $0xac] sm:$0xf]
      %v415 = vld [vmem:[%s326 + $0xb0] sm:$0xf]
      %v416 = vld [vmem:[%s326 + $0xb4] sm:$0xf]
      %v417 = vld [vmem:[%s326 + $0xb8] sm:$0xf]
      %v418 = vld [vmem:[%s326 + $0xbc] sm:$0xf]
      %v419 = vld [vmem:[%s326 + $0xc0] sm:$0xf]
      %v420 = vld [vmem:[%s326 + $0xc4] sm:$0xf]
      %v421 = vld [vmem:[%s326 + $0xc8] sm:$0xf]
      %v422 = vld [vmem:[%s326 + $0xcc] sm:$0xf]
      %v423 = vld [vmem:[%s326 + $0xd0] sm:$0xf]
      %v424 = vld [vmem:[%s326 + $0xd4] sm:$0xf]
      %v425 = vld [vmem:[%s326 + $0xd8] sm:$0xf]
      %v426 = vld [vmem:[%s326 + $0xdc] sm:$0xf]
      %v427 = vld [vmem:[%s326 + $0xe0] sm:$0xf]
      %v428 = vld [vmem:[%s326 + $0xe4] sm:$0xf]
      %v429 = vld [vmem:[%s326 + $0xe8] sm:$0xf]
      %v430 = vld [vmem:[%s326 + $0xec] sm:$0xf]
      %v431 = vld [vmem:[%s326 + $0xf0] sm:$0xf]
      %v432 = vld [vmem:[%s326 + $0xf4] sm:$0xf]
      %v433 = vld [vmem:[%s326 + $0xf8] sm:$0xf]
      %v434 = vld [vmem:[%s326 + $0xfc] sm:$0xf]
      %v435 = vld [vmem:[%s326 + $0x100] sm:$0xf]
      %v436 = vld [vmem:[%s326 + $0x104] sm:$0xf]
      %v437 = vld [vmem:[%s326 + $0x108] sm:$0xf]
      %v438 = vld [vmem:[%s326 + $0x10c] sm:$0xf]
      %v439 = vld [vmem:[%s326 + $0x110] sm:$0xf]
      %v440 = vld [vmem:[%s326 + $0x114] sm:$0xf]
      %v441 = vld [vmem:[%s326 + $0x118] sm:$0xf]
      %v442 = vld [vmem:[%s326 + $0x11c] sm:$0xf]
      %v449 = vunpack.c.l.b16 %v365
      %v450 = vunpack.c.h.b16 %v365
      %v451 = vunpack.c.l.b16 %v366
      %v452 = vunpack.c.h.b16 %v366
      %v453 = vunpack.c.l.b16 %v367
      %v454 = vunpack.c.l.b16 %v368
      %v455 = vunpack.c.h.b16 %v368
      %v456 = vunpack.c.l.b16 %v369
      %v457 = vunpack.c.h.b16 %v369
      %v458 = vunpack.c.l.b16 %v370
      %v459 = vpack.c.b16 %v454, %v449
      %v460 = vpack.c.b16 %v455, %v450
      %v461 = vpack.c.b16 %v456, %v451
      %v462 = vpack.c.b16 %v457, %v452
      %v463 = vpack.c.b16 %v458, %v453
      %v540 = vunpack.c.l.b16 %v371
      %v541 = vunpack.c.l.b16 %v372
      %v542 = vunpack.c.l.b16 %v373
      %v543 = vunpack.c.l.b16 %v374
      %v544 = vunpack.c.l.b16 %v375
      %v545 = vunpack.c.l.b16 %v376
      %v546 = vunpack.c.l.b16 %v377
      %v547 = vunpack.c.l.b16 %v378
      %v548 = vunpack.c.l.b16 %v379
      %v549 = vunpack.c.l.b16 %v380
      %v550 = vunpack.c.l.b16 %v381
      %v551 = vunpack.c.l.b16 %v382
      %v552 = vunpack.c.l.b16 %v383
      %v553 = vunpack.c.l.b16 %v384
      %v554 = vunpack.c.l.b16 %v385
      %v555 = vunpack.c.l.b16 %v386
      %v556 = vunpack.c.l.b16 %v387
      %v557 = vunpack.c.l.b16 %v388
      %v558 = vunpack.c.l.b16 %v389
      %v559 = vunpack.c.l.b16 %v390
      %v560 = vunpack.c.l.b16 %v391
      %v561 = vunpack.c.l.b16 %v392
      %v562 = vunpack.c.l.b16 %v393
      %v563 = vunpack.c.l.b16 %v394
      %v564 = vunpack.c.l.b16 %v395
      %v565 = vunpack.c.l.b16 %v396
      %v566 = vunpack.c.l.b16 %v397
      %v567 = vunpack.c.l.b16 %v398
      %v568 = vunpack.c.l.b16 %v399
      %v569 = vunpack.c.l.b16 %v400
      %v570 = vunpack.c.l.b16 %v401
      %v571 = vunpack.c.l.b16 %v402
      %v572 = vunpack.c.l.b16 %v403
      %v573 = vunpack.c.l.b16 %v404
      %v574 = vunpack.c.l.b16 %v405
      %v575 = vunpack.c.l.b16 %v406
      %v576 = vunpack.c.l.b16 %v407
      %v577 = vunpack.c.l.b16 %v408
      %v578 = vunpack.c.l.b16 %v409
      %v579 = vunpack.c.l.b16 %v410
      %v580 = vunpack.c.l.b16 %v411
      %v581 = vunpack.c.l.b16 %v412
      %v582 = vunpack.c.l.b16 %v413
      %v583 = vunpack.c.l.b16 %v414
      %v584 = vunpack.c.l.b16 %v415
      %v585 = vunpack.c.l.b16 %v416
      %v586 = vunpack.c.l.b16 %v417
      %v587 = vunpack.c.l.b16 %v418
      %v588 = vunpack.c.l.b16 %v419
      %v589 = vunpack.c.l.b16 %v420
      %v590 = vunpack.c.l.b16 %v421
      %v591 = vunpack.c.l.b16 %v422
      %v592 = vunpack.c.l.b16 %v423
      %v593 = vunpack.c.l.b16 %v424
      %v594 = vunpack.c.l.b16 %v425
      %v595 = vunpack.c.l.b16 %v426
      %v596 = vunpack.c.l.b16 %v427
      %v597 = vunpack.c.l.b16 %v428
      %v598 = vunpack.c.l.b16 %v429
      %v599 = vunpack.c.l.b16 %v430
      %v600 = vunpack.c.l.b16 %v431
      %v601 = vunpack.c.l.b16 %v432
      %v602 = vunpack.c.l.b16 %v433
      %v603 = vunpack.c.l.b16 %v434
      %v604 = vunpack.c.l.b16 %v435
      %v605 = vunpack.c.l.b16 %v436
      %v606 = vunpack.c.l.b16 %v437
      %v607 = vunpack.c.l.b16 %v438
      %v608 = vunpack.c.l.b16 %v439
      %v609 = vunpack.c.l.b16 %v440
      %v610 = vunpack.c.l.b16 %v441
      %v611 = vunpack.c.l.b16 %v442
      %v612 = vpack.c.b16 %v541, %v540
      %v613 = vpack.c.b16 %v543, %v542
      %v614 = vpack.c.b16 %v545, %v544
      %v615 = vpack.c.b16 %v547, %v546
      %v616 = vpack.c.b16 %v549, %v548
      %v617 = vpack.c.b16 %v551, %v550
      %v618 = vpack.c.b16 %v553, %v552
      %v619 = vpack.c.b16 %v555, %v554
      %v620 = vpack.c.b16 %v557, %v556
      %v621 = vpack.c.b16 %v559, %v558
      %v622 = vpack.c.b16 %v561, %v560
      %v623 = vpack.c.b16 %v563, %v562
      %v624 = vpack.c.b16 %v565, %v564
      %v625 = vpack.c.b16 %v567, %v566
      %v626 = vpack.c.b16 %v569, %v568
      %v627 = vpack.c.b16 %v571, %v570
      %v628 = vpack.c.b16 %v573, %v572
      %v629 = vpack.c.b16 %v575, %v574
      %v630 = vpack.c.b16 %v577, %v576
      %v631 = vpack.c.b16 %v579, %v578
      %v632 = vpack.c.b16 %v581, %v580
      %v633 = vpack.c.b16 %v583, %v582
      %v634 = vpack.c.b16 %v585, %v584
      %v635 = vpack.c.b16 %v587, %v586
      %v636 = vpack.c.b16 %v589, %v588
      %v637 = vpack.c.b16 %v591, %v590
      %v638 = vpack.c.b16 %v593, %v592
      %v639 = vpack.c.b16 %v595, %v594
      %v640 = vpack.c.b16 %v597, %v596
      %v641 = vpack.c.b16 %v599, %v598
      %v642 = vpack.c.b16 %v601, %v600
      %v643 = vpack.c.b16 %v603, %v602
      %v644 = vpack.c.b16 %v605, %v604
      %v645 = vpack.c.b16 %v607, %v606
      %v646 = vpack.c.b16 %v609, %v608
      %v647 = vpack.c.b16 %v611, %v610
      %vm684 = vcmask 523264
      %v686 = vsel %vm684, %v463, 0
      %688 = vmatprep.subr.bf16.mxu0 0
      %689 = vmatpush1.bf16.msra.mxu0 %v612
      %690 = vmatprep.subr.bf16.mxu0 0
      %691 = vmatpush1.bf16.msra.mxu0 %v613
      %692 = vmatprep.subr.bf16.mxu0 0
      %693 = vmatpush1.bf16.msra.mxu0 %v614
      %694 = vmatprep.subr.bf16.mxu0 0
      %695 = vmatpush1.bf16.msra.mxu0 %v615
      %696 = vmatprep.subr.bf16.mxu0 0
      %697 = vmatpush1.bf16.msra.mxu0 %v616
      %698 = vmatprep.subr.bf16.mxu0 0
      %699 = vmatpush1.bf16.msra.mxu0 %v617
      %700 = vmatprep.subr.bf16.mxu0 0
      %701 = vmatpush1.bf16.msra.mxu0 %v618
      %702 = vmatprep.subr.bf16.mxu0 0
      %703 = vmatpush1.bf16.msra.mxu0 %v619
      %704 = vmatprep.subr.bf16.mxu0 0
      %705 = vmatpush1.bf16.msra.mxu0 %v620
      %706 = vmatprep.subr.bf16.mxu0 0
      %707 = vmatpush1.bf16.msra.mxu0 %v621
      %708 = vmatprep.subr.bf16.mxu0 0
      %709 = vmatpush1.bf16.msra.mxu0 %v622
      %710 = vmatprep.subr.bf16.mxu0 0
      %711 = vmatpush1.bf16.msra.mxu0 %v623
      %712 = vmatprep.subr.bf16.mxu0 0
      %713 = vmatpush1.bf16.msra.mxu0 %v624
      %714 = vmatprep.subr.bf16.mxu0 0
      %715 = vmatpush1.bf16.msra.mxu0 %v625
      %716 = vmatprep.subr.bf16.mxu0 0
      %717 = vmatpush1.bf16.msra.mxu0 %v626
      %718 = vmatprep.subr.bf16.mxu0 0
      %719 = vmatpush1.bf16.msra.mxu0 %v627
      %720 = vmatprep.mubr.bf16.mxu0 %v460
      %721 = vmatmul.mubr.bf16.gmra.mrb[0].mxu0 %v459
      %v722 = vpop.f32.mrb[0].mxu0
      %v723 = vadd.f32 0.0, %v722
      %v724 = vpop.f32.mrb[0].mxu0
      %v725 = vpop.f32.mrb[0].mxu0
      %v726 = vadd.f32 0.0, %v725
      %v727 = vpop.f32.mrb[0].mxu0
      %728 = vdwg.mxu0
      %729 = vmatprep.subr.bf16.mxu0 0
      %730 = vmatpush1.bf16.msra.mxu0 %v628
      %731 = vmatprep.subr.bf16.mxu0 0
      %732 = vmatpush1.bf16.msra.mxu0 %v629
      %733 = vmatprep.subr.bf16.mxu0 0
      %734 = vmatpush1.bf16.msra.mxu0 %v630
      %735 = vmatprep.subr.bf16.mxu0 0
      %736 = vmatpush1.bf16.msra.mxu0 %v631
      %737 = vmatprep.subr.bf16.mxu0 0
      %738 = vmatpush1.bf16.msra.mxu0 %v632
      %739 = vmatprep.subr.bf16.mxu0 0
      %740 = vmatpush1.bf16.msra.mxu0 %v633
      %741 = vmatprep.subr.bf16.mxu0 0
      %742 = vmatpush1.bf16.msra.mxu0 %v634
      %743 = vmatprep.subr.bf16.mxu0 0
      %744 = vmatpush1.bf16.msra.mxu0 %v635
      %745 = vmatprep.subr.bf16.mxu0 0
      %746 = vmatpush1.bf16.msra.mxu0 %v636
      %747 = vmatprep.subr.bf16.mxu0 0
      %748 = vmatpush1.bf16.msra.mxu0 %v637
      %749 = vmatprep.subr.bf16.mxu0 0
      %750 = vmatpush1.bf16.msra.mxu0 %v638
      %751 = vmatprep.subr.bf16.mxu0 0
      %752 = vmatpush1.bf16.msra.mxu0 %v639
      %753 = vmatprep.subr.bf16.mxu0 0
      %754 = vmatpush1.bf16.msra.mxu0 %v640
      %755 = vmatprep.subr.bf16.mxu0 0
      %756 = vmatpush1.bf16.msra.mxu0 %v641
      %757 = vmatprep.subr.bf16.mxu0 0
      %758 = vmatpush1.bf16.msra.mxu0 %v642
      %759 = vmatprep.subr.bf16.mxu0 0
      %760 = vmatpush1.bf16.msra.mxu0 %v643
      %761 = vmatprep.mubr.bf16.mxu0 %v462
      %762 = vmatmul.mubr.bf16.gmra.mrb[0].mxu0 %v461
      %v763 = vpop.f32.mrb[0].mxu0
      %v764 = vadd.f32 %v723, %v763
      %v765 = vpop.f32.mrb[0].mxu0
      %v766 = vpop.f32.mrb[0].mxu0
      %v767 = vadd.f32 %v726, %v766
      %v768 = vpop.f32.mrb[0].mxu0
      %769 = vdwg.mxu0
      %770 = vmatprep.subr.bf16.mxu0 0
      %771 = vmatpush1.bf16.msra.mxu0 %v644
      %772 = vmatprep.subr.bf16.mxu0 0
      %773 = vmatpush1.bf16.msra.mxu0 %v645
      %774 = vmatprep.subr.bf16.mxu0 0
      %775 = vmatpush1.bf16.msra.mxu0 %v646
      %776 = vmatprep.subr.bf16.mxu0 0
      %777 = vmatpush1.bf16.msra.mxu0 %v647
      %778 = vmatprep.subr.bf16.mxu0 0
      %779 = vmatpush1.bf16.msra.mxu0 0
      %780 = vmatprep.subr.bf16.mxu0 0
      %781 = vmatpush1.bf16.msra.mxu0 0
      %782 = vmatprep.subr.bf16.mxu0 0
      %783 = vmatpush1.bf16.msra.mxu0 0
      %784 = vmatprep.subr.bf16.mxu0 0
      %785 = vmatpush1.bf16.msra.mxu0 0
      %786 = vmatprep.subr.bf16.mxu0 0
      %787 = vmatpush1.bf16.msra.mxu0 0
      %788 = vmatprep.subr.bf16.mxu0 0
      %789 = vmatpush1.bf16.msra.mxu0 0
      %790 = vmatprep.subr.bf16.mxu0 0
      %791 = vmatpush1.bf16.msra.mxu0 0
      %792 = vmatprep.subr.bf16.mxu0 0
      %793 = vmatpush1.bf16.msra.mxu0 0
      %794 = vmatprep.subr.bf16.mxu0 0
      %795 = vmatpush1.bf16.msra.mxu0 0
      %796 = vmatprep.subr.bf16.mxu0 0
      %797 = vmatpush1.bf16.msra.mxu0 0
      %798 = vmatprep.subr.bf16.mxu0 0
      %799 = vmatpush1.bf16.msra.mxu0 0
      %800 = vmatprep.subr.bf16.mxu0 0
      %801 = vmatpush1.bf16.msra.mxu0 0
      %802 = vmatprep.mubr.bf16.mxu0 0
      %803 = vmatmul.mubr.bf16.gmra.mrb[0].mxu0 %v686
      %v804 = vpop.f32.mrb[0].mxu0
      %v805 = vadd.f32 %v764, %v804
      %v806 = vpop.f32.mrb[0].mxu0
      %v807 = vpop.f32.mrb[0].mxu0
      %v808 = vadd.f32 %v767, %v807
      %v809 = vpop.f32.mrb[0].mxu0
      %810 = vdwg.mxu0
      %v811 = vadd.f32 %v363, %v805
      %v812 = vadd.f32 %v364, %v808
      %813 = vst.msk [vmem:[#allocation2] sm:$0xff] %vm684, %v811
      %814 = vst.msk [vmem:[#allocation2 + $0x8] sm:$0xff] %vm684, %v812
      %p815 = scmp.eq.s32.totalorder %s24, 2
      // Predicated region
      $region41: #{_lambda_.15} parent=35 // pred_check
        %p816 = pneg %p815
      $region42: #{_lambda_.15} parent=35 // pred_check_branch
        %818 = sbr.rel (%p816) target = $region44
      $region43: #{_lambda_.15} parent=35 // pred_region
        %v819 = vld [vmem:[#allocation2] sm:$0xff]
        %v820 = vld [vmem:[#allocation2 + $0x8] sm:$0xff]
        %v821 = vld [vmem:[%s2] sm:$0x1]
        %v823 = vlaneseq
        %v824 = vshrl.u32 %v823, 7
        %v825 = vsub.s32 0, %v824
        %v826 = vrot.slane %v821, %v825
        %v828 = vadd.f32 %v819, %v826
        %v829 = vadd.f32 %v820, %v826
        %v830 = vld [vmem:[%s339] sm:$0xf]
        %v831 = vld [vmem:[%s339 + $0x4] sm:$0xf]
        %v832 = vunpack.c.l.bf16 %v830
        %v833 = vunpack.c.l.bf16 %v831
        %v834 = vadd.f32 %v828, %v832
        %v835 = vadd.f32 %v829, %v833
        %v836 = vmax.f32 %v834, 0.0
        %v837 = vmax.f32 %v835, 0.0
        %v838 = vpack.c.bf16 %v837, %v836
        %v840 = vunpack.c.l.b16 %v838
        %v841 = vunpack.c.h.b16 %v838
        %v842 = vpack.c.b16 %v840, %v840
        %v843 = vpack.c.b16 %v841, %v841
        %vm846 = vcmask 519168
        %847 = vst.msk [vmem:[%s353] sm:$0xf] %vm846, %v842
        %848 = vst.msk [vmem:[%s353 + $0x4] sm:$0xf] %vm846, %v843
      $region44: #{_lambda_.15} parent=35 // pred_fallthru
        _
      %s849 = smul.u32 2, %s23
      %p850 = scmp.lt.s32.totalorder %s21, 1
      %s851 = scalar_select %p850, %s21, 1
      %p852 = scmp.lt.s32.totalorder %s22, 3
      %s853 = scalar_select %p852, %s22, 3
      %p854 = scmp.lt.s32.totalorder %s849, 1
      %s855 = scalar_select %p854, %s849, 1
      %s856 = smul.addr %s853, 2
      %s857 = sadd.s32 %s855, %s856
      %s858 = smul.addr %s851, 8
      %s859 = sadd.s32 %s857, %s858
      %s860 = smul.addr %s859, 4
      %s861 = scalar_lea.vmem %s4, %s860
      // Predicated region
      $region45: #{_lambda_.15} parent=35 // pred_check
        %p862 = pneg %p172
      $region46: #{_lambda_.15} parent=35 // pred_check_branch
        %864 = sbr.rel (%p862) target = $region48
      $region47: #{_lambda_.15} parent=35 // pred_region
        %s865 = smul.u32 2, %s23
      $region48: #{_lambda_.15} parent=35 // pred_fallthru
        _
    $region36: #{_lambda_.15} parent=5 // pred_fallthru
      _
    %p866 = scmp.le.s32.totalorder 2, %s10
    // Predicated region
    $region49: #{_lambda_.15} parent=5 // pred_check
      %p867 = pneg %p866
    $region50: #{_lambda_.15} parent=5 // pred_check_branch
      %869 = sbr.rel (%p867) target = $region52
    $region51: #{_lambda_.15} parent=5 // pred_region
      %s870 = ssub.s32 %s10, 2
      // Predicated region
      $region53: #{_lambda_.15} parent=51 // pred_check
        %p871 = pneg %p178
      $region54: #{_lambda_.15} parent=51 // pred_check_branch
        %873 = sbr.rel (%p871) target = $region56
      $region55: #{_lambda_.15} parent=51 // pred_region
        %s874 = smul.u32 2, %s27
        %p875 = scmp.lt.s32.totalorder %s25, 1
        %s876 = scalar_select %p875, %s25, 1
        %p877 = scmp.lt.s32.totalorder %s26, 3
        %s878 = scalar_select %p877, %s26, 3
        %p879 = scmp.lt.s32.totalorder %s874, 1
        %s880 = scalar_select %p879, %s874, 1
        %s881 = smul.addr %s878, 2
        %s882 = sadd.s32 %s880, %s881
        %s883 = smul.addr %s876, 8
        %s884 = sadd.s32 %s882, %s883
        %s885 = smul.addr %s884, 4
        %s886 = scalar_lea.vmem %s4, %s885
      $region56: #{_lambda_.15} parent=51 // pred_fallthru
        _
    $region52: #{_lambda_.15} parent=5 // pred_fallthru
      _
  $region6: #{_lambda_.15} parent=0 // loop_footer
    %s14 = sadd.s32 1, %s10
  $region7: #{_lambda_.15} parent=0 // loop_footer_branch
    %9 = sbr.rel target = $region3
  $region8: #{_lambda_.15} parent=0 // loop_exit
    _

// kernel: _lambda_.19
$region0: #{_lambda_.19}
  #allocation0 [shape = 'u32[]', space=smem, size = 0x4, offset = 0x4, fixed_abs, tag = 'smem constant byte address 0x4 - core index']
  #allocation1 [shape = 'u32[144,128]{1,0:T(1,128)}', space=vmem, size = 0x12000, scoped, tag = 'internal scratch']
  #allocation2 [shape = 'f32[4,128]{1,0:T(4,128)}', space=vmem, size = 0x800, scoped, tag = 'scratch operand']
  %s0 = inlined_call_operand.vmem [shape: bf16[2,4,4,64], index: 0, kind: input, shape index: {}]
  %s1 = inlined_call_operand.vmem [shape: bf16[1,64,128], index: 1, kind: input, shape index: {}]
  %s2 = inlined_call_operand.vmem [shape: f32[1,128], index: 2, kind: input, shape index: {}]
  %s3 = inlined_call_operand.vmem [shape: bf16[2,2,4,128], index: 3, kind: output, shape index: {}]
  %s4 = sld [smem:[#allocation0]]
  $region53: #{_lambda_.19} parent=0
    _
  %s6 = ssub.s32 1, %s4
  %s7 = scalar_select 0, %s6, %s4
  loop: start=0, step=1, limit=6
  $region2: #{_lambda_.19} parent=0 // loop_pre_header
    _
  $region3: #{_lambda_.19} parent=0 // loop_header
    %s9 = sphi 0, %s13
    %p10 = scmp.ge.s32.totalorder %s9, 6
    %s16 = sphi 0, %s42
    %s17 = sphi 0, %s38
    %s18 = sphi 0, %s34
    %s19 = sphi 0, %s30
    %s20 = sphi 0, %s16
    %s21 = sphi 0, %s17
    %s22 = sphi 0, %s18
    %s23 = sphi 0, %s19
    %s24 = sphi 0, %s20
    %s25 = sphi 0, %s21
    %s26 = sphi 0, %s22
    %s27 = sphi 0, %s23
    %s53 = sphi 0, %s55
    %s56 = sphi 0, %s53
    %s57 = sphi 0, %s56
    %s73 = sphi 0, %s57
    %s79 = sphi 0, %s81
    %s82 = sphi 0, %s79
    %s83 = sphi 0, %s82
    %s99 = sphi 0, %s83
    %s103 = sphi 0, %s103
    %s105 = sphi 0, %s103
    %s106 = sphi 0, %s105
    %s120 = sphi 0, %s106
    %s130 = sphi 0, %s132
    %s133 = sphi 0, %s130
    %s134 = sphi 0, %s133
    %s150 = sphi 0, %s134
  $region4: #{_lambda_.19} parent=0 // loop_header_branch
    %12 = sbr.rel (%p10) target = $region8
  $region5: #{_lambda_.19} parent=0 // loop_body
    %s14 = ssub.s32 %s9, 1
    %s15 = ssub.s32 %s9, 2
    %s28 = sadd.s32 1, %s19
    %p29 = scmp.ge.s32.totalorder %s28, 1
    %s30 = scalar_select %p29, 0, %s28
    %s31 = sadd.s32 1, %s18
    %s32 = scalar_select %p29, %s31, %s18
    %p33 = scmp.ge.s32.totalorder %s32, 1
    %s34 = scalar_select %p33, 0, %s32
    %s35 = sadd.s32 1, %s17
    %s36 = scalar_select %p33, %s35, %s17
    %p37 = scmp.ge.s32.totalorder %s36, 2
    %s38 = scalar_select %p37, 0, %s36
    %s39 = sadd.s32 1, %s16
    %s40 = scalar_select %p37, %s39, %s16
    %p41 = scmp.ge.s32.totalorder %s40, 2
    %s42 = scalar_select %p41, 0, %s40
    %s43 = smul.u32 %s17, 2
    %s44 = sadd.s32 %s43, %s19
    %s45 = smul.u32 %s38, 2
    %s46 = sadd.s32 %s45, %s30
    %s47 = ssub.s32 %s16, %s42
    %s48 = ssub.s32 %s44, %s46
    %s49 = sor.u32 %s47, %s48
    %s50 = ssub.s32 %s18, %s34
    %s51 = sor.u32 %s49, %s50
    %p52 = scmp.eq.s32.totalorder %s51, 0
    %s54 = sadd.s32 %s53, 1
    %s55 = scalar_select %p52, %s53, %s54
    %p58 = pneg %p52
    %p59 = scmp.eq.s32.totalorder %s9, 3
    %p60 = por %p58, %p59
    %p61 = scmp.ne.s32.totalorder %s53, %s56
    %p62 = scmp.eq.s32.totalorder %s9, 0
    %p63 = por %p61, %p62
    %p64 = scmp.ne.s32.totalorder %s53, %s56
    %p65 = scmp.eq.s32.totalorder %s14, 3
    %p66 = por %p64, %p65
    %p67 = scmp.ne.s32.totalorder %s56, %s57
    %p68 = scmp.eq.s32.totalorder %s14, 0
    %p69 = por %p67, %p68
    %p70 = scmp.ne.s32.totalorder %s56, %s57
    %p71 = scmp.eq.s32.totalorder %s15, 3
    %p72 = por %p70, %p71
    %p74 = scmp.ne.s32.totalorder %s57, %s73
    %p75 = scmp.eq.s32.totalorder %s15, 0
    %p76 = por %p74, %p75
    %s77 = ssub.s32 %s19, %s30
    %p78 = scmp.eq.s32.totalorder %s77, 0
    %s80 = sadd.s32 %s79, 1
    %s81 = scalar_select %p78, %s79, %s80
    %p84 = pneg %p78
    %p85 = scmp.eq.s32.totalorder %s9, 3
    %p86 = por %p84, %p85
    %p87 = scmp.ne.s32.totalorder %s79, %s82
    %p88 = scmp.eq.s32.totalorder %s9, 0
    %p89 = por %p87, %p88
    %p90 = scmp.ne.s32.totalorder %s79, %s82
    %p91 = scmp.eq.s32.totalorder %s14, 3
    %p92 = por %p90, %p91
    %p93 = scmp.ne.s32.totalorder %s82, %s83
    %p94 = scmp.eq.s32.totalorder %s14, 0
    %p95 = por %p93, %p94
    %p96 = scmp.ne.s32.totalorder %s82, %s83
    %p97 = scmp.eq.s32.totalorder %s15, 3
    %p98 = por %p96, %p97
    %p100 = scmp.ne.s32.totalorder %s83, %s99
    %p101 = scmp.eq.s32.totalorder %s15, 0
    %p102 = por %p100, %p101
    %s104 = sadd.s32 %s103, 1
    %p107 = scmp.eq.s32.totalorder %s9, 3
    %p108 = scmp.ne.s32.totalorder %s103, %s105
    %p109 = scmp.eq.s32.totalorder %s9, 0
    %p110 = por %p108, %p109
    %p111 = scmp.ne.s32.totalorder %s103, %s105
    %p112 = scmp.eq.s32.totalorder %s14, 3
    %p113 = por %p111, %p112
    %p114 = scmp.ne.s32.totalorder %s105, %s106
    %p115 = scmp.eq.s32.totalorder %s14, 0
    %p116 = por %p114, %p115
    %p117 = scmp.ne.s32.totalorder %s105, %s106
    %p118 = scmp.eq.s32.totalorder %s15, 3
    %p119 = por %p117, %p118
    %p121 = scmp.ne.s32.totalorder %s106, %s120
    %p122 = scmp.eq.s32.totalorder %s15, 0
    %p123 = por %p121, %p122
    %s124 = ssub.s32 %s16, %s42
    %s125 = ssub.s32 %s17, %s38
    %s126 = sor.u32 %s124, %s125
    %s127 = ssub.s32 %s18, %s34
    %s128 = sor.u32 %s126, %s127
    %p129 = scmp.eq.s32.totalorder %s128, 0
    %s131 = sadd.s32 %s130, 1
    %s132 = scalar_select %p129, %s130, %s131
    %p135 = pneg %p129
    %p136 = scmp.eq.s32.totalorder %s9, 3
    %p137 = por %p135, %p136
    %p138 = scmp.ne.s32.totalorder %s130, %s133
    %p139 = scmp.eq.s32.totalorder %s9, 0
    %p140 = por %p138, %p139
    %p141 = scmp.ne.s32.totalorder %s130, %s133
    %p142 = scmp.eq.s32.totalorder %s14, 3
    %p143 = por %p141, %p142
    %p144 = scmp.ne.s32.totalorder %s133, %s134
    %p145 = scmp.eq.s32.totalorder %s14, 0
    %p146 = por %p144, %p145
    %p147 = scmp.ne.s32.totalorder %s133, %s134
    %p148 = scmp.eq.s32.totalorder %s15, 3
    %p149 = por %p147, %p148
    %p151 = scmp.ne.s32.totalorder %s134, %s150
    %p152 = scmp.eq.s32.totalorder %s15, 0
    %p153 = por %p151, %p152
    %p154 = scmp.le.s32.totalorder 1, %s9
    %p155 = scmp.lt.s32.totalorder %s9, 5
    %p156 = pnand %p154, %p155
    %p157 = pneg %p156
    // Predicated region
    $region9: #{_lambda_.19} parent=5 // pred_check
      _
    $region10: #{_lambda_.19} parent=5 // pred_check_branch
      %159 = sbr.rel (%p156) target = $region12
    $region11: #{_lambda_.19} parent=5 // pred_region
      %s160 = ssub.s32 %s9, 1
      // Predicated region
      $region13: #{_lambda_.19} parent=11 // pred_check
        %p161 = pneg %p95
      $region14: #{_lambda_.19} parent=11 // pred_check_branch
        %163 = sbr.rel (%p161) target = $region16
      $region15: #{_lambda_.19} parent=11 // pred_region
        %p164 = scmp.lt.s32.totalorder %s23, 0
        %s165 = scalar_select %p164, %s23, 0
        %s166 = smul.addr %s165, 8
        %s167 = smul.addr %s166, 4
        %s168 = scalar_lea.vmem %s1, %s167
      $region16: #{_lambda_.19} parent=11 // pred_fallthru
        _
      // Predicated region
      $region17: #{_lambda_.19} parent=11 // pred_check
        %p169 = pneg %p116
      $region18: #{_lambda_.19} parent=11 // pred_check_branch
        %171 = sbr.rel (%p169) target = $region20
      $region19: #{_lambda_.19} parent=11 // pred_region
        _
      $region20: #{_lambda_.19} parent=11 // pred_fallthru
        _
    $region12: #{_lambda_.19} parent=5 // pred_fallthru
      _
    %p172 = scmp.lt.s32.totalorder %s9, 4
    // Predicated region
    $region21: #{_lambda_.19} parent=5 // pred_check
      %p173 = pneg %p172
    $region22: #{_lambda_.19} parent=5 // pred_check_branch
      %175 = sbr.rel (%p173) target = $region24
    $region23: #{_lambda_.19} parent=5 // pred_region
      // Predicated region
      $region25: #{_lambda_.19} parent=23 // pred_check
        %p176 = pneg %p63
      $region26: #{_lambda_.19} parent=23 // pred_check_branch
        %178 = sbr.rel (%p176) target = $region28
      $region27: #{_lambda_.19} parent=23 // pred_region
        %s179 = smul.u32 %s17, 2
        %s180 = sadd.s32 %s179, %s19
        %p181 = scmp.lt.s32.totalorder %s16, 1
        %s182 = scalar_select %p181, %s16, 1
        %p183 = scmp.lt.s32.totalorder %s180, 3
        %s184 = scalar_select %p183, %s180, 3
        %p185 = scmp.lt.s32.totalorder %s18, 0
        %s186 = scalar_select %p185, %s18, 0
        %s187 = sadd.s32 %s186, %s184
        %s188 = smul.addr %s182, 4
        %s189 = sadd.s32 %s187, %s188
        %s190 = smul.addr %s189, 2
        %s191 = scalar_lea.vmem %s0, %s190
        %s192 = smul.u32 %s17, 2
        %s193 = sadd.s32 %s192, %s19
      $region28: #{_lambda_.19} parent=23 // pred_fallthru
        _
    $region24: #{_lambda_.19} parent=5 // pred_fallthru
      _
    %p194 = scmp.le.s32.totalorder 1, %s9
    %p195 = scmp.lt.s32.totalorder %s9, 5
    %p196 = pnand %p194, %p195
    %p197 = pneg %p196
    // Predicated region
    $region29: #{_lambda_.19} parent=5 // pred_check
      _
    $region30: #{_lambda_.19} parent=5 // pred_check_branch
      %199 = sbr.rel (%p196) target = $region32
    $region31: #{_lambda_.19} parent=5 // pred_region
      %s200 = ssub.s32 %s9, 1
      %s201 = smul.u32 %s21, 2
      %s202 = sadd.s32 %s201, %s23
      %p203 = scmp.lt.s32.totalorder %s20, 1
      %s204 = scalar_select %p203, %s20, 1
      %p205 = scmp.lt.s32.totalorder %s202, 3
      %s206 = scalar_select %p205, %s202, 3
      %p207 = scmp.lt.s32.totalorder %s22, 0
      %s208 = scalar_select %p207, %s22, 0
      %s209 = sadd.s32 %s208, %s206
      %s210 = smul.addr %s204, 4
      %s211 = sadd.s32 %s209, %s210
      %s212 = smul.addr %s211, 2
      %s213 = scalar_lea.vmem %s0, %s212
      %p214 = pneg %p69
      %p215 = pneg %p66
      %p216 = scmp.lt.s32.totalorder %s23, 0
      %s217 = scalar_select %p216, %s23, 0
      %s218 = smul.addr %s217, 8
      %s219 = smul.addr %s218, 4
      %s220 = scalar_lea.vmem %s1, %s219
      %p221 = pneg %p95
      %p222 = pneg %p92
      %p223 = pneg %p116
      %p224 = pneg %p113
      %p225 = pneg %p146
      %p226 = pneg %p143
      %p227 = scmp.lt.s32.totalorder %s20, 1
      %s228 = scalar_select %p227, %s20, 1
      %p229 = scmp.lt.s32.totalorder %s21, 1
      %s230 = scalar_select %p229, %s21, 1
      %p231 = scmp.lt.s32.totalorder %s22, 0
      %s232 = scalar_select %p231, %s22, 0
      %s233 = sadd.s32 %s232, %s230
      %s234 = smul.addr %s228, 2
      %s235 = sadd.s32 %s233, %s234
      %s236 = smul.addr %s235, 2
      %s237 = scalar_lea.vmem %s3, %s236
      %s238 = smul.u32 %s21, 2
      %s239 = sadd.s32 %s238, %s23
      %p240 = scmp.lt.s32.totalorder %s20, 1
      %s241 = scalar_select %p240, %s20, 1
      %p242 = scmp.lt.s32.totalorder %s239, 3
      %s243 = scalar_select %p242, %s239, 3
      %p244 = scmp.lt.s32.totalorder %s22, 0
      %s245 = scalar_select %p244, %s22, 0
      %s246 = sadd.s32 %s245, %s243
      %s247 = smul.addr %s241, 4
      %s248 = sadd.s32 %s246, %s247
      %s249 = smul.addr %s248, 2
      %s250 = scalar_lea.vmem %s0, %s249
      %s251 = smul.u32 %s21, 2
      %s252 = sadd.s32 %s251, %s23
      %p253 = scmp.lt.s32.totalorder %s23, 0
      %s254 = scalar_select %p253, %s23, 0
      %s255 = smul.addr %s254, 8
      %s256 = smul.addr %s255, 4
      %s257 = scalar_lea.vmem %s1, %s256
      %p258 = scmp.lt.s32.totalorder %s20, 1
      %s259 = scalar_select %p258, %s20, 1
      %p260 = scmp.lt.s32.totalorder %s21, 1
      %s261 = scalar_select %p260, %s21, 1
      %p262 = scmp.lt.s32.totalorder %s22, 0
      %s263 = scalar_select %p262, %s22, 0
      %s264 = sadd.s32 %s263, %s261
      %s265 = smul.addr %s259, 2
      %s266 = sadd.s32 %s264, %s265
      %s267 = smul.addr %s266, 2
      %s268 = scalar_lea.vmem %s3, %s267
      %p270 = scmp.eq.s32.totalorder %s23, 0
      // Predicated region
      $region33: #{_lambda_.19} parent=31 // pred_check
        %p271 = pneg %p270
      $region34: #{_lambda_.19} parent=31 // pred_check_branch
        %273 = sbr.rel (%p271) target = $region36
      $region35: #{_lambda_.19} parent=31 // pred_region
        %274 = vst [vmem:[#allocation2] sm:$0xf] 0.0
      $region36: #{_lambda_.19} parent=31 // pred_fallthru
        _
      %v275 = vld [vmem:[#allocation2] sm:$0xf]
      %v276 = vld [vmem:[%s250] sm:$0x3]
      %v277 = vld [vmem:[%s257] sm:$0xf]
      %v278 = vld [vmem:[%s257 + $0x4] sm:$0xf]
      %v279 = vld [vmem:[%s257 + $0x8] sm:$0xf]
      %v280 = vld [vmem:[%s257 + $0xc] sm:$0xf]
      %v281 = vld [vmem:[%s257 + $0x10] sm:$0xf]
      %v282 = vld [vmem:[%s257 + $0x14] sm:$0xf]
      %v283 = vld [vmem:[%s257 + $0x18] sm:$0xf]
      %v284 = vld [vmem:[%s257 + $0x1c] sm:$0xf]
      %v293 = vunpack.c.l.b16 %v277
      %v294 = vunpack.c.l.b16 %v278
      %v295 = vunpack.c.l.b16 %v279
      %v296 = vunpack.c.l.b16 %v280
      %v297 = vunpack.c.l.b16 %v281
      %v298 = vunpack.c.l.b16 %v282
      %v299 = vunpack.c.l.b16 %v283
      %v300 = vunpack.c.l.b16 %v284
      %v301 = vpack.c.b16 %v294, %v293
      %v302 = vpack.c.b16 %v296, %v295
      %v303 = vpack.c.b16 %v298, %v297
      %v304 = vpack.c.b16 %v300, %v299
      %vm309 = vcmask 523264
      %v311 = vsel %vm309, %v276, 0
      %313 = vmatprep.subr.bf16.mxu0 0
      %314 = vmatpush1.bf16.msra.mxu0 %v301
      %315 = vmatprep.subr.bf16.mxu0 0
      %316 = vmatpush1.bf16.msra.mxu0 %v302
      %317 = vmatprep.subr.bf16.mxu0 0
      %318 = vmatpush1.bf16.msra.mxu0 %v303
      %319 = vmatprep.subr.bf16.mxu0 0
      %320 = vmatpush1.bf16.msra.mxu0 %v304
      %321 = vmatprep.subr.bf16.mxu0 0
      %322 = vmatpush1.bf16.msra.mxu0 0
      %323 = vmatprep.subr.bf16.mxu0 0
      %324 = vmatpush1.bf16.msra.mxu0 0
      %325 = vmatprep.subr.bf16.mxu0 0
      %326 = vmatpush1.bf16.msra.mxu0 0
      %327 = vmatprep.subr.bf16.mxu0 0
      %328 = vmatpush1.bf16.msra.mxu0 0
      %329 = vmatprep.subr.bf16.mxu0 0
      %330 = vmatpush1.bf16.msra.mxu0 0
      %331 = vmatprep.subr.bf16.mxu0 0
      %332 = vmatpush1.bf16.msra.mxu0 0
      %333 = vmatprep.subr.bf16.mxu0 0
      %334 = vmatpush1.bf16.msra.mxu0 0
      %335 = vmatprep.subr.bf16.mxu0 0
      %336 = vmatpush1.bf16.msra.mxu0 0
      %337 = vmatprep.subr.bf16.mxu0 0
      %338 = vmatpush1.bf16.msra.mxu0 0
      %339 = vmatprep.subr.bf16.mxu0 0
      %340 = vmatpush1.bf16.msra.mxu0 0
      %341 = vmatprep.subr.bf16.mxu0 0
      %342 = vmatpush1.bf16.msra.mxu0 0
      %343 = vmatprep.subr.bf16.mxu0 0
      %344 = vmatpush1.bf16.msra.mxu0 0
      %345 = vmatprep.mubr.bf16.mxu0 0
      %346 = vmatmul.mubr.bf16.gmra.mrb[0].mxu0 %v311
      %v347 = vpop.f32.mrb[0].mxu0
      %v348 = vadd.f32 0.0, %v347
      %v349 = vpop.f32.mrb[0].mxu0
      %v350 = vpop.f32.mrb[0].mxu0
      %v351 = vpop.f32.mrb[0].mxu0
      %352 = vdwg.mxu0
      %v353 = vadd.f32 %v275, %v348
      %354 = vst [vmem:[#allocation2] sm:$0xf] %v353
      // Predicated region
      $region37: #{_lambda_.19} parent=31 // pred_check
        %p355 = pneg %p270
      $region38: #{_lambda_.19} parent=31 // pred_check_branch
        %357 = sbr.rel (%p355) target = $region40
      $region39: #{_lambda_.19} parent=31 // pred_region
        %v358 = vld [vmem:[#allocation2] sm:$0xf]
        %v359 = vld [vmem:[%s2] sm:$0x1]
        %v361 = vlaneseq
        %v362 = vshrl.u32 %v361, 7
        %v363 = vsub.s32 0, %v362
        %v364 = vrot.slane %v359, %v363
        %v366 = vadd.f32 %v358, %v364
        %v367 = vpack.c.bf16 %v366, %v366
        %368 = vst [vmem:[%s268] sm:$0x3] %v367
      $region40: #{_lambda_.19} parent=31 // pred_fallthru
        _
      %p369 = scmp.lt.s32.totalorder %s20, 1
      %s370 = scalar_select %p369, %s20, 1
      %p371 = scmp.lt.s32.totalorder %s21, 1
      %s372 = scalar_select %p371, %s21, 1
      %p373 = scmp.lt.s32.totalorder %s22, 0
      %s374 = scalar_select %p373, %s22, 0
      %s375 = sadd.s32 %s374, %s372
      %s376 = smul.addr %s370, 2
      %s377 = sadd.s32 %s375, %s376
      %s378 = smul.addr %s377, 2
      %s379 = scalar_lea.vmem %s3, %s378
      // Predicated region
      $region41: #{_lambda_.19} parent=31 // pred_check
        %p380 = pneg %p143
      $region42: #{_lambda_.19} parent=31 // pred_check_branch
        %382 = sbr.rel (%p380) target = $region44
      $region43: #{_lambda_.19} parent=31 // pred_region
        _
      $region44: #{_lambda_.19} parent=31 // pred_fallthru
        _
    $region32: #{_lambda_.19} parent=5 // pred_fallthru
      _
    %p383 = scmp.le.s32.totalorder 2, %s9
    // Predicated region
    $region45: #{_lambda_.19} parent=5 // pred_check
      %p384 = pneg %p383
    $region46: #{_lambda_.19} parent=5 // pred_check_branch
      %386 = sbr.rel (%p384) target = $region48
    $region47: #{_lambda_.19} parent=5 // pred_region
      %s387 = ssub.s32 %s9, 2
      // Predicated region
      $region49: #{_lambda_.19} parent=47 // pred_check
        %p388 = pneg %p149
      $region50: #{_lambda_.19} parent=47 // pred_check_branch
        %390 = sbr.rel (%p388) target = $region52
      $region51: #{_lambda_.19} parent=47 // pred_region
        %p391 = scmp.lt.s32.totalorder %s24, 1
        %s392 = scalar_select %p391, %s24, 1
        %p393 = scmp.lt.s32.totalorder %s25, 1
        %s394 = scalar_select %p393, %s25, 1
        %p395 = scmp.lt.s32.totalorder %s26, 0
        %s396 = scalar_select %p395, %s26, 0
        %s397 = sadd.s32 %s396, %s394
        %s398 = smul.addr %s392, 2
        %s399 = sadd.s32 %s397, %s398
        %s400 = smul.addr %s399, 2
        %s401 = scalar_lea.vmem %s3, %s400
      $region52: #{_lambda_.19} parent=47 // pred_fallthru
        _
    $region48: #{_lambda_.19} parent=5 // pred_fallthru
      _
  $region6: #{_lambda_.19} parent=0 // loop_footer
    %s13 = sadd.s32 1, %s9
  $region7: #{_lambda_.19} parent=0 // loop_footer_branch
    %8 = sbr.rel target = $region3
  $region8: #{_lambda_.19} parent=0 // loop_exit
    _

// kernel: _lambda_.18
$region0: #{_lambda_.18}
  #allocation0 [shape = 'u32[]', space=smem, size = 0x4, offset = 0x4, fixed_abs, tag = 'smem constant byte address 0x4 - core index']
  #allocation1 [shape = 'u32[144,128]{1,0:T(1,128)}', space=vmem, size = 0x12000, scoped, tag = 'internal scratch']
  #allocation2 [shape = 'f32[4,128]{1,0:T(4,128)}', space=vmem, size = 0x800, scoped, tag = 'scratch operand']
  %s0 = inlined_call_operand.vmem [shape: bf16[2,6,4,576], index: 0, kind: input, shape index: {}]
  %s1 = inlined_call_operand.vmem [shape: bf16[3,576,128], index: 1, kind: input, shape index: {}]
  %s2 = inlined_call_operand.vmem [shape: f32[1,128], index: 2, kind: input, shape index: {}]
  %s3 = inlined_call_operand.vmem [shape: bf16[2,2,4,128], index: 3, kind: output, shape index: {}]
  %s4 = sld [smem:[#allocation0]]
  $region53: #{_lambda_.18} parent=0
    _
  %s6 = ssub.s32 1, %s4
  %s7 = scalar_select 0, %s6, %s4
  loop: start=0, step=1, limit=14
  $region2: #{_lambda_.18} parent=0 // loop_pre_header
    _
  $region3: #{_lambda_.18} parent=0 // loop_header
    %s9 = sphi 0, %s13
    %p10 = scmp.ge.s32.totalorder %s9, 14
    %s16 = sphi 0, %s42
    %s17 = sphi 0, %s38
    %s18 = sphi 0, %s34
    %s19 = sphi 0, %s30
    %s20 = sphi 0, %s16
    %s21 = sphi 0, %s17
    %s22 = sphi 0, %s18
    %s23 = sphi 0, %s19
    %s24 = sphi 0, %s20
    %s25 = sphi 0, %s21
    %s26 = sphi 0, %s22
    %s27 = sphi 0, %s23
    %s53 = sphi 0, %s55
    %s56 = sphi 0, %s53
    %s57 = sphi 0, %s56
    %s73 = sphi 0, %s57
    %s79 = sphi 0, %s81
    %s82 = sphi 0, %s79
    %s83 = sphi 0, %s82
    %s99 = sphi 0, %s83
    %s103 = sphi 0, %s103
    %s105 = sphi 0, %s103
    %s106 = sphi 0, %s105
    %s120 = sphi 0, %s106
    %s130 = sphi 0, %s132
    %s133 = sphi 0, %s130
    %s134 = sphi 0, %s133
    %s150 = sphi 0, %s134
  $region4: #{_lambda_.18} parent=0 // loop_header_branch
    %12 = sbr.rel (%p10) target = $region8
  $region5: #{_lambda_.18} parent=0 // loop_body
    %s14 = ssub.s32 %s9, 1
    %s15 = ssub.s32 %s9, 2
    %s28 = sadd.s32 1, %s19
    %p29 = scmp.ge.s32.totalorder %s28, 3
    %s30 = scalar_select %p29, 0, %s28
    %s31 = sadd.s32 1, %s18
    %s32 = scalar_select %p29, %s31, %s18
    %p33 = scmp.ge.s32.totalorder %s32, 1
    %s34 = scalar_select %p33, 0, %s32
    %s35 = sadd.s32 1, %s17
    %s36 = scalar_select %p33, %s35, %s17
    %p37 = scmp.ge.s32.totalorder %s36, 2
    %s38 = scalar_select %p37, 0, %s36
    %s39 = sadd.s32 1, %s16
    %s40 = scalar_select %p37, %s39, %s16
    %p41 = scmp.ge.s32.totalorder %s40, 2
    %s42 = scalar_select %p41, 0, %s40
    %s43 = smul.u32 %s17, 2
    %s44 = sadd.s32 %s43, %s19
    %s45 = smul.u32 %s38, 2
    %s46 = sadd.s32 %s45, %s30
    %s47 = ssub.s32 %s16, %s42
    %s48 = ssub.s32 %s44, %s46
    %s49 = sor.u32 %s47, %s48
    %s50 = ssub.s32 %s18, %s34
    %s51 = sor.u32 %s49, %s50
    %p52 = scmp.eq.s32.totalorder %s51, 0
    %s54 = sadd.s32 %s53, 1
    %s55 = scalar_select %p52, %s53, %s54
    %p58 = pneg %p52
    %p59 = scmp.eq.s32.totalorder %s9, 11
    %p60 = por %p58, %p59
    %p61 = scmp.ne.s32.totalorder %s53, %s56
    %p62 = scmp.eq.s32.totalorder %s9, 0
    %p63 = por %p61, %p62
    %p64 = scmp.ne.s32.totalorder %s53, %s56
    %p65 = scmp.eq.s32.totalorder %s14, 11
    %p66 = por %p64, %p65
    %p67 = scmp.ne.s32.totalorder %s56, %s57
    %p68 = scmp.eq.s32.totalorder %s14, 0
    %p69 = por %p67, %p68
    %p70 = scmp.ne.s32.totalorder %s56, %s57
    %p71 = scmp.eq.s32.totalorder %s15, 11
    %p72 = por %p70, %p71
    %p74 = scmp.ne.s32.totalorder %s57, %s73
    %p75 = scmp.eq.s32.totalorder %s15, 0
    %p76 = por %p74, %p75
    %s77 = ssub.s32 %s19, %s30
    %p78 = scmp.eq.s32.totalorder %s77, 0
    %s80 = sadd.s32 %s79, 1
    %s81 = scalar_select %p78, %s79, %s80
    %p84 = pneg %p78
    %p85 = scmp.eq.s32.totalorder %s9, 11
    %p86 = por %p84, %p85
    %p87 = scmp.ne.s32.totalorder %s79, %s82
    %p88 = scmp.eq.s32.totalorder %s9, 0
    %p89 = por %p87, %p88
    %p90 = scmp.ne.s32.totalorder %s79, %s82
    %p91 = scmp.eq.s32.totalorder %s14, 11
    %p92 = por %p90, %p91
    %p93 = scmp.ne.s32.totalorder %s82, %s83
    %p94 = scmp.eq.s32.totalorder %s14, 0
    %p95 = por %p93, %p94
    %p96 = scmp.ne.s32.totalorder %s82, %s83
    %p97 = scmp.eq.s32.totalorder %s15, 11
    %p98 = por %p96, %p97
    %p100 = scmp.ne.s32.totalorder %s83, %s99
    %p101 = scmp.eq.s32.totalorder %s15, 0
    %p102 = por %p100, %p101
    %s104 = sadd.s32 %s103, 1
    %p107 = scmp.eq.s32.totalorder %s9, 11
    %p108 = scmp.ne.s32.totalorder %s103, %s105
    %p109 = scmp.eq.s32.totalorder %s9, 0
    %p110 = por %p108, %p109
    %p111 = scmp.ne.s32.totalorder %s103, %s105
    %p112 = scmp.eq.s32.totalorder %s14, 11
    %p113 = por %p111, %p112
    %p114 = scmp.ne.s32.totalorder %s105, %s106
    %p115 = scmp.eq.s32.totalorder %s14, 0
    %p116 = por %p114, %p115
    %p117 = scmp.ne.s32.totalorder %s105, %s106
    %p118 = scmp.eq.s32.totalorder %s15, 11
    %p119 = por %p117, %p118
    %p121 = scmp.ne.s32.totalorder %s106, %s120
    %p122 = scmp.eq.s32.totalorder %s15, 0
    %p123 = por %p121, %p122
    %s124 = ssub.s32 %s16, %s42
    %s125 = ssub.s32 %s17, %s38
    %s126 = sor.u32 %s124, %s125
    %s127 = ssub.s32 %s18, %s34
    %s128 = sor.u32 %s126, %s127
    %p129 = scmp.eq.s32.totalorder %s128, 0
    %s131 = sadd.s32 %s130, 1
    %s132 = scalar_select %p129, %s130, %s131
    %p135 = pneg %p129
    %p136 = scmp.eq.s32.totalorder %s9, 11
    %p137 = por %p135, %p136
    %p138 = scmp.ne.s32.totalorder %s130, %s133
    %p139 = scmp.eq.s32.totalorder %s9, 0
    %p140 = por %p138, %p139
    %p141 = scmp.ne.s32.totalorder %s130, %s133
    %p142 = scmp.eq.s32.totalorder %s14, 11
    %p143 = por %p141, %p142
    %p144 = scmp.ne.s32.totalorder %s133, %s134
    %p145 = scmp.eq.s32.totalorder %s14, 0
    %p146 = por %p144, %p145
    %p147 = scmp.ne.s32.totalorder %s133, %s134
    %p148 = scmp.eq.s32.totalorder %s15, 11
    %p149 = por %p147, %p148
    %p151 = scmp.ne.s32.totalorder %s134, %s150
    %p152 = scmp.eq.s32.totalorder %s15, 0
    %p153 = por %p151, %p152
    %p154 = scmp.le.s32.totalorder 1, %s9
    %p155 = scmp.lt.s32.totalorder %s9, 13
    %p156 = pnand %p154, %p155
    %p157 = pneg %p156
    // Predicated region
    $region9: #{_lambda_.18} parent=5 // pred_check
      _
    $region10: #{_lambda_.18} parent=5 // pred_check_branch
      %159 = sbr.rel (%p156) target = $region12
    $region11: #{_lambda_.18} parent=5 // pred_region
      %s160 = ssub.s32 %s9, 1
      // Predicated region
      $region13: #{_lambda_.18} parent=11 // pred_check
        %p161 = pneg %p116
      $region14: #{_lambda_.18} parent=11 // pred_check_branch
        %163 = sbr.rel (%p161) target = $region16
      $region15: #{_lambda_.18} parent=11 // pred_region
        _
      $region16: #{_lambda_.18} parent=11 // pred_fallthru
        _
    $region12: #{_lambda_.18} parent=5 // pred_fallthru
      _
    %p164 = scmp.lt.s32.totalorder %s9, 12
    // Predicated region
    $region17: #{_lambda_.18} parent=5 // pred_check
      %p165 = pneg %p164
    $region18: #{_lambda_.18} parent=5 // pred_check_branch
      %167 = sbr.rel (%p165) target = $region20
    $region19: #{_lambda_.18} parent=5 // pred_region
      // Predicated region
      $region21: #{_lambda_.18} parent=19 // pred_check
        %p168 = pneg %p63
      $region22: #{_lambda_.18} parent=19 // pred_check_branch
        %170 = sbr.rel (%p168) target = $region24
      $region23: #{_lambda_.18} parent=19 // pred_region
        %s171 = smul.u32 %s17, 2
        %s172 = sadd.s32 %s171, %s19
        %p173 = scmp.lt.s32.totalorder %s16, 1
        %s174 = scalar_select %p173, %s16, 1
        %p175 = scmp.lt.s32.totalorder %s172, 5
        %s176 = scalar_select %p175, %s172, 5
        %p177 = scmp.lt.s32.totalorder %s18, 0
        %s178 = scalar_select %p177, %s18, 0
        %s179 = smul.addr %s178, 5
        %s180 = smul.addr %s176, 5
        %s181 = sadd.s32 %s179, %s180
        %s182 = smul.addr %s174, 30
        %s183 = sadd.s32 %s181, %s182
        %s184 = smul.addr %s183, 2
        %s185 = scalar_lea.vmem %s0, %s184
        %s186 = smul.u32 %s17, 2
        %s187 = sadd.s32 %s186, %s19
      $region24: #{_lambda_.18} parent=19 // pred_fallthru
        _
      // Predicated region
      $region25: #{_lambda_.18} parent=19 // pred_check
        %p188 = pneg %p89
      $region26: #{_lambda_.18} parent=19 // pred_check_branch
        %190 = sbr.rel (%p188) target = $region28
      $region27: #{_lambda_.18} parent=19 // pred_region
        %p191 = scmp.lt.s32.totalorder %s19, 2
        %s192 = scalar_select %p191, %s19, 2
        %s193 = smul.addr %s192, 72
        %s194 = smul.addr %s193, 4
        %s195 = scalar_lea.vmem %s1, %s194
      $region28: #{_lambda_.18} parent=19 // pred_fallthru
        _
    $region20: #{_lambda_.18} parent=5 // pred_fallthru
      _
    %p196 = scmp.le.s32.totalorder 1, %s9
    %p197 = scmp.lt.s32.totalorder %s9, 13
    %p198 = pnand %p196, %p197
    %p199 = pneg %p198
    // Predicated region
    $region29: #{_lambda_.18} parent=5 // pred_check
      _
    $region30: #{_lambda_.18} parent=5 // pred_check_branch
      %201 = sbr.rel (%p198) target = $region32
    $region31: #{_lambda_.18} parent=5 // pred_region
      %s202 = ssub.s32 %s9, 1
      %s203 = smul.u32 %s21, 2
      %s204 = sadd.s32 %s203, %s23
      %p205 = scmp.lt.s32.totalorder %s20, 1
      %s206 = scalar_select %p205, %s20, 1
      %p207 = scmp.lt.s32.totalorder %s204, 5
      %s208 = scalar_select %p207, %s204, 5
      %p209 = scmp.lt.s32.totalorder %s22, 0
      %s210 = scalar_select %p209, %s22, 0
      %s211 = smul.addr %s210, 5
      %s212 = smul.addr %s208, 5
      %s213 = sadd.s32 %s211, %s212
      %s214 = smul.addr %s206, 30
      %s215 = sadd.s32 %s213, %s214
      %s216 = smul.addr %s215, 2
      %s217 = scalar_lea.vmem %s0, %s216
      %p218 = pneg %p69
      %p219 = pneg %p66
      %p220 = scmp.lt.s32.totalorder %s23, 2
      %s221 = scalar_select %p220, %s23, 2
      %s222 = smul.addr %s221, 72
      %s223 = smul.addr %s222, 4
      %s224 = scalar_lea.vmem %s1, %s223
      %p225 = pneg %p95
      %p226 = pneg %p92
      %p227 = pneg %p116
      %p228 = pneg %p113
      %p229 = pneg %p146
      %p230 = pneg %p143
      %p231 = scmp.lt.s32.totalorder %s20, 1
      %s232 = scalar_select %p231, %s20, 1
      %p233 = scmp.lt.s32.totalorder %s21, 1
      %s234 = scalar_select %p233, %s21, 1
      %p235 = scmp.lt.s32.totalorder %s22, 0
      %s236 = scalar_select %p235, %s22, 0
      %s237 = sadd.s32 %s236, %s234
      %s238 = smul.addr %s232, 2
      %s239 = sadd.s32 %s237, %s238
      %s240 = smul.addr %s239, 2
      %s241 = scalar_lea.vmem %s3, %s240
      %s242 = smul.u32 %s21, 2
      %s243 = sadd.s32 %s242, %s23
      %p244 = scmp.lt.s32.totalorder %s20, 1
      %s245 = scalar_select %p244, %s20, 1
      %p246 = scmp.lt.s32.totalorder %s243, 5
      %s247 = scalar_select %p246, %s243, 5
      %p248 = scmp.lt.s32.totalorder %s22, 0
      %s249 = scalar_select %p248, %s22, 0
      %s250 = smul.addr %s249, 5
      %s251 = smul.addr %s247, 5
      %s252 = sadd.s32 %s250, %s251
      %s253 = smul.addr %s245, 30
      %s254 = sadd.s32 %s252, %s253
      %s255 = smul.addr %s254, 2
      %s256 = scalar_lea.vmem %s0, %s255
      %s257 = smul.u32 %s21, 2
      %s258 = sadd.s32 %s257, %s23
      %p259 = scmp.lt.s32.totalorder %s23, 2
      %s260 = scalar_select %p259, %s23, 2
      %s261 = smul.addr %s260, 72
      %s262 = smul.addr %s261, 4
      %s263 = scalar_lea.vmem %s1, %s262
      %p264 = scmp.lt.s32.totalorder %s20, 1
      %s265 = scalar_select %p264, %s20, 1
      %p266 = scmp.lt.s32.totalorder %s21, 1
      %s267 = scalar_select %p266, %s21, 1
      %p268 = scmp.lt.s32.totalorder %s22, 0
      %s269 = scalar_select %p268, %s22, 0
      %s270 = sadd.s32 %s269, %s267
      %s271 = smul.addr %s265, 2
      %s272 = sadd.s32 %s270, %s271
      %s273 = smul.addr %s272, 2
      %s274 = scalar_lea.vmem %s3, %s273
      %p276 = scmp.eq.s32.totalorder %s23, 0
      // Predicated region
      $region33: #{_lambda_.18} parent=31 // pred_check
        %p277 = pneg %p276
      $region34: #{_lambda_.18} parent=31 // pred_check_branch
        %279 = sbr.rel (%p277) target = $region36
      $region35: #{_lambda_.18} parent=31 // pred_region
        %280 = vst [vmem:[#allocation2] sm:$0xf] 0.0
      $region36: #{_lambda_.18} parent=31 // pred_fallthru
        _
      %v281 = vld [vmem:[#allocation2] sm:$0xf]
      %v282 = vld [vmem:[%s256] sm:$0xff]
      %v283 = vld [vmem:[%s256 + $0x8] sm:$0x3]
      %v284 = vld [vmem:[%s263] sm:$0xf]
      %v285 = vld [vmem:[%s263 + $0x4] sm:$0xf]
      %v286 = vld [vmem:[%s263 + $0x8] sm:$0xf]
      %v287 = vld [vmem:[%s263 + $0xc] sm:$0xf]
      %v288 = vld [vmem:[%s263 + $0x10] sm:$0xf]
      %v289 = vld [vmem:[%s263 + $0x14] sm:$0xf]
      %v290 = vld [vmem:[%s263 + $0x18] sm:$0xf]
      %v291 = vld [vmem:[%s263 + $0x1c] sm:$0xf]
      %v292 = vld [vmem:[%s263 + $0x20] sm:$0xf]
      %v293 = vld [vmem:[%s263 + $0x24] sm:$0xf]
      %v294 = vld [vmem:[%s263 + $0x28] sm:$0xf]
      %v295 = vld [vmem:[%s263 + $0x2c] sm:$0xf]
      %v296 = vld [vmem:[%s263 + $0x30] sm:$0xf]
      %v297 = vld [vmem:[%s263 + $0x34] sm:$0xf]
      %v298 = vld [vmem:[%s263 + $0x38] sm:$0xf]
      %v299 = vld [vmem:[%s263 + $0x3c] sm:$0xf]
      %v300 = vld [vmem:[%s263 + $0x40] sm:$0xf]
      %v301 = vld [vmem:[%s263 + $0x44] sm:$0xf]
      %v302 = vld [vmem:[%s263 + $0x48] sm:$0xf]
      %v303 = vld [vmem:[%s263 + $0x4c] sm:$0xf]
      %v304 = vld [vmem:[%s263 + $0x50] sm:$0xf]
      %v305 = vld [vmem:[%s263 + $0x54] sm:$0xf]
      %v306 = vld [vmem:[%s263 + $0x58] sm:$0xf]
      %v307 = vld [vmem:[%s263 + $0x5c] sm:$0xf]
      %v308 = vld [vmem:[%s263 + $0x60] sm:$0xf]
      %v309 = vld [vmem:[%s263 + $0x64] sm:$0xf]
      %v310 = vld [vmem:[%s263 + $0x68] sm:$0xf]
      %v311 = vld [vmem:[%s263 + $0x6c] sm:$0xf]
      %v312 = vld [vmem:[%s263 + $0x70] sm:$0xf]
      %v313 = vld [vmem:[%s263 + $0x74] sm:$0xf]
      %v314 = vld [vmem:[%s263 + $0x78] sm:$0xf]
      %v315 = vld [vmem:[%s263 + $0x7c] sm:$0xf]
      %v316 = vld [vmem:[%s263 + $0x80] sm:$0xf]
      %v317 = vld [vmem:[%s263 + $0x84] sm:$0xf]
      %v318 = vld [vmem:[%s263 + $0x88] sm:$0xf]
      %v319 = vld [vmem:[%s263 + $0x8c] sm:$0xf]
      %v320 = vld [vmem:[%s263 + $0x90] sm:$0xf]
      %v321 = vld [vmem:[%s263 + $0x94] sm:$0xf]
      %v322 = vld [vmem:[%s263 + $0x98] sm:$0xf]
      %v323 = vld [vmem:[%s263 + $0x9c] sm:$0xf]
      %v324 = vld [vmem:[%s263 + $0xa0] sm:$0xf]
      %v325 = vld [vmem:[%s263 + $0xa4] sm:$0xf]
      %v326 = vld [vmem:[%s263 + $0xa8] sm:$0xf]
      %v327 = vld [vmem:[%s263 + $0xac] sm:$0xf]
      %v328 = vld [vmem:[%s263 + $0xb0] sm:$0xf]
      %v329 = vld [vmem:[%s263 + $0xb4] sm:$0xf]
      %v330 = vld [vmem:[%s263 + $0xb8] sm:$0xf]
      %v331 = vld [vmem:[%s263 + $0xbc] sm:$0xf]
      %v332 = vld [vmem:[%s263 + $0xc0] sm:$0xf]
      %v333 = vld [vmem:[%s263 + $0xc4] sm:$0xf]
      %v334 = vld [vmem:[%s263 + $0xc8] sm:$0xf]
      %v335 = vld [vmem:[%s263 + $0xcc] sm:$0xf]
      %v336 = vld [vmem:[%s263 + $0xd0] sm:$0xf]
      %v337 = vld [vmem:[%s263 + $0xd4] sm:$0xf]
      %v338 = vld [vmem:[%s263 + $0xd8] sm:$0xf]
      %v339 = vld [vmem:[%s263 + $0xdc] sm:$0xf]
      %v340 = vld [vmem:[%s263 + $0xe0] sm:$0xf]
      %v341 = vld [vmem:[%s263 + $0xe4] sm:$0xf]
      %v342 = vld [vmem:[%s263 + $0xe8] sm:$0xf]
      %v343 = vld [vmem:[%s263 + $0xec] sm:$0xf]
      %v344 = vld [vmem:[%s263 + $0xf0] sm:$0xf]
      %v345 = vld [vmem:[%s263 + $0xf4] sm:$0xf]
      %v346 = vld [vmem:[%s263 + $0xf8] sm:$0xf]
      %v347 = vld [vmem:[%s263 + $0xfc] sm:$0xf]
      %v348 = vld [vmem:[%s263 + $0x100] sm:$0xf]
      %v349 = vld [vmem:[%s263 + $0x104] sm:$0xf]
      %v350 = vld [vmem:[%s263 + $0x108] sm:$0xf]
      %v351 = vld [vmem:[%s263 + $0x10c] sm:$0xf]
      %v352 = vld [vmem:[%s263 + $0x110] sm:$0xf]
      %v353 = vld [vmem:[%s263 + $0x114] sm:$0xf]
      %v354 = vld [vmem:[%s263 + $0x118] sm:$0xf]
      %v355 = vld [vmem:[%s263 + $0x11c] sm:$0xf]
      %v358 = vcombine.high %v282, %v282
      %v360 = vunpack.c.l.s4 1983009808
      %v361 = vunpack.c.0.s8 %v360
      %v362 = vlaneseq
      %v363 = vshrl.u32 %v362, 7
      %v364 = vsub.s32 %v361, %v363
      %v365 = vrot.slane %v282, %v364
      %v367 = vunpack.c.l.s4 1983009808
      %v368 = vunpack.c.0.s8 %v367
      %v369 = vlaneseq
      %v370 = vshrl.u32 %v369, 7
      %v371 = vsub.s32 %v368, %v370
      %v372 = vrot.slane %v358, %v371
      %v373 = vcombine.high %v365, %v365
      %v374 = vcombine.high %v372, %v372
      %v376 = vunpack.c.l.s4 1983009808
      %v377 = vunpack.c.0.s8 %v376
      %v378 = vlaneseq
      %v379 = vshrl.u32 %v378, 7
      %v380 = vsub.s32 %v377, %v379
      %v381 = vrot.slane %v283, %v380
      %v458 = vunpack.c.l.b16 %v284
      %v459 = vunpack.c.l.b16 %v285
      %v460 = vunpack.c.l.b16 %v286
      %v461 = vunpack.c.l.b16 %v287
      %v462 = vunpack.c.l.b16 %v288
      %v463 = vunpack.c.l.b16 %v289
      %v464 = vunpack.c.l.b16 %v290
      %v465 = vunpack.c.l.b16 %v291
      %v466 = vunpack.c.l.b16 %v292
      %v467 = vunpack.c.l.b16 %v293
      %v468 = vunpack.c.l.b16 %v294
      %v469 = vunpack.c.l.b16 %v295
      %v470 = vunpack.c.l.b16 %v296
      %v471 = vunpack.c.l.b16 %v297
      %v472 = vunpack.c.l.b16 %v298
      %v473 = vunpack.c.l.b16 %v299
      %v474 = vunpack.c.l.b16 %v300
      %v475 = vunpack.c.l.b16 %v301
      %v476 = vunpack.c.l.b16 %v302
      %v477 = vunpack.c.l.b16 %v303
      %v478 = vunpack.c.l.b16 %v304
      %v479 = vunpack.c.l.b16 %v305
      %v480 = vunpack.c.l.b16 %v306
      %v481 = vunpack.c.l.b16 %v307
      %v482 = vunpack.c.l.b16 %v308
      %v483 = vunpack.c.l.b16 %v309
      %v484 = vunpack.c.l.b16 %v310
      %v485 = vunpack.c.l.b16 %v311
      %v486 = vunpack.c.l.b16 %v312
      %v487 = vunpack.c.l.b16 %v313
      %v488 = vunpack.c.l.b16 %v314
      %v489 = vunpack.c.l.b16 %v315
      %v490 = vunpack.c.l.b16 %v316
      %v491 = vunpack.c.l.b16 %v317
      %v492 = vunpack.c.l.b16 %v318
      %v493 = vunpack.c.l.b16 %v319
      %v494 = vunpack.c.l.b16 %v320
      %v495 = vunpack.c.l.b16 %v321
      %v496 = vunpack.c.l.b16 %v322
      %v497 = vunpack.c.l.b16 %v323
      %v498 = vunpack.c.l.b16 %v324
      %v499 = vunpack.c.l.b16 %v325
      %v500 = vunpack.c.l.b16 %v326
      %v501 = vunpack.c.l.b16 %v327
      %v502 = vunpack.c.l.b16 %v328
      %v503 = vunpack.c.l.b16 %v329
      %v504 = vunpack.c.l.b16 %v330
      %v505 = vunpack.c.l.b16 %v331
      %v506 = vunpack.c.l.b16 %v332
      %v507 = vunpack.c.l.b16 %v333
      %v508 = vunpack.c.l.b16 %v334
      %v509 = vunpack.c.l.b16 %v335
      %v510 = vunpack.c.l.b16 %v336
      %v511 = vunpack.c.l.b16 %v337
      %v512 = vunpack.c.l.b16 %v338
      %v513 = vunpack.c.l.b16 %v339
      %v514 = vunpack.c.l.b16 %v340
      %v515 = vunpack.c.l.b16 %v341
      %v516 = vunpack.c.l.b16 %v342
      %v517 = vunpack.c.l.b16 %v343
      %v518 = vunpack.c.l.b16 %v344
      %v519 = vunpack.c.l.b16 %v345
      %v520 = vunpack.c.l.b16 %v346
      %v521 = vunpack.c.l.b16 %v347
      %v522 = vunpack.c.l.b16 %v348
      %v523 = vunpack.c.l.b16 %v349
      %v524 = vunpack.c.l.b16 %v350
      %v525 = vunpack.c.l.b16 %v351
      %v526 = vunpack.c.l.b16 %v352
      %v527 = vunpack.c.l.b16 %v353
      %v528 = vunpack.c.l.b16 %v354
      %v529 = vunpack.c.l.b16 %v355
      %v530 = vpack.c.b16 %v459, %v458
      %v531 = vpack.c.b16 %v461, %v460
      %v532 = vpack.c.b16 %v463, %v462
      %v533 = vpack.c.b16 %v465, %v464
      %v534 = vpack.c.b16 %v467, %v466
      %v535 = vpack.c.b16 %v469, %v468
      %v536 = vpack.c.b16 %v471, %v470
      %v537 = vpack.c.b16 %v473, %v472
      %v538 = vpack.c.b16 %v475, %v474
      %v539 = vpack.c.b16 %v477, %v476
      %v540 = vpack.c.b16 %v479, %v478
      %v541 = vpack.c.b16 %v481, %v480
      %v542 = vpack.c.b16 %v483, %v482
      %v543 = vpack.c.b16 %v485, %v484
      %v544 = vpack.c.b16 %v487, %v486
      %v545 = vpack.c.b16 %v489, %v488
      %v546 = vpack.c.b16 %v491, %v490
      %v547 = vpack.c.b16 %v493, %v492
      %v548 = vpack.c.b16 %v495, %v494
      %v549 = vpack.c.b16 %v497, %v496
      %v550 = vpack.c.b16 %v499, %v498
      %v551 = vpack.c.b16 %v501, %v500
      %v552 = vpack.c.b16 %v503, %v502
      %v553 = vpack.c.b16 %v505, %v504
      %v554 = vpack.c.b16 %v507, %v506
      %v555 = vpack.c.b16 %v509, %v508
      %v556 = vpack.c.b16 %v511, %v510
      %v557 = vpack.c.b16 %v513, %v512
      %v558 = vpack.c.b16 %v515, %v514
      %v559 = vpack.c.b16 %v517, %v516
      %v560 = vpack.c.b16 %v519, %v518
      %v561 = vpack.c.b16 %v521, %v520
      %v562 = vpack.c.b16 %v523, %v522
      %v563 = vpack.c.b16 %v525, %v524
      %v564 = vpack.c.b16 %v527, %v526
      %v565 = vpack.c.b16 %v529, %v528
      %vm602 = vcmask 523264
      %v604 = vsel %vm602, %v381, 0
      %606 = vmatprep.subr.bf16.mxu0 0
      %607 = vmatpush1.bf16.msra.mxu0 %v530
      %608 = vmatprep.subr.bf16.mxu0 0
      %609 = vmatpush1.bf16.msra.mxu0 %v531
      %610 = vmatprep.subr.bf16.mxu0 0
      %611 = vmatpush1.bf16.msra.mxu0 %v532
      %612 = vmatprep.subr.bf16.mxu0 0
      %613 = vmatpush1.bf16.msra.mxu0 %v533
      %614 = vmatprep.subr.bf16.mxu0 0
      %615 = vmatpush1.bf16.msra.mxu0 %v534
      %616 = vmatprep.subr.bf16.mxu0 0
      %617 = vmatpush1.bf16.msra.mxu0 %v535
      %618 = vmatprep.subr.bf16.mxu0 0
      %619 = vmatpush1.bf16.msra.mxu0 %v536
      %620 = vmatprep.subr.bf16.mxu0 0
      %621 = vmatpush1.bf16.msra.mxu0 %v537
      %622 = vmatprep.subr.bf16.mxu0 0
      %623 = vmatpush1.bf16.msra.mxu0 %v538
      %624 = vmatprep.subr.bf16.mxu0 0
      %625 = vmatpush1.bf16.msra.mxu0 %v539
      %626 = vmatprep.subr.bf16.mxu0 0
      %627 = vmatpush1.bf16.msra.mxu0 %v540
      %628 = vmatprep.subr.bf16.mxu0 0
      %629 = vmatpush1.bf16.msra.mxu0 %v541
      %630 = vmatprep.subr.bf16.mxu0 0
      %631 = vmatpush1.bf16.msra.mxu0 %v542
      %632 = vmatprep.subr.bf16.mxu0 0
      %633 = vmatpush1.bf16.msra.mxu0 %v543
      %634 = vmatprep.subr.bf16.mxu0 0
      %635 = vmatpush1.bf16.msra.mxu0 %v544
      %636 = vmatprep.subr.bf16.mxu0 0
      %637 = vmatpush1.bf16.msra.mxu0 %v545
      %638 = vmatprep.mubr.bf16.mxu0 %v373
      %639 = vmatmul.mubr.bf16.gmra.mrb[0].mxu0 %v365
      %v640 = vpop.f32.mrb[0].mxu0
      %v641 = vadd.f32 0.0, %v640
      %v642 = vpop.f32.mrb[0].mxu0
      %v643 = vpop.f32.mrb[0].mxu0
      %v644 = vpop.f32.mrb[0].mxu0
      %645 = vdwg.mxu0
      %646 = vmatprep.subr.bf16.mxu0 0
      %647 = vmatpush1.bf16.msra.mxu0 %v546
      %648 = vmatprep.subr.bf16.mxu0 0
      %649 = vmatpush1.bf16.msra.mxu0 %v547
      %650 = vmatprep.subr.bf16.mxu0 0
      %651 = vmatpush1.bf16.msra.mxu0 %v548
      %652 = vmatprep.subr.bf16.mxu0 0
      %653 = vmatpush1.bf16.msra.mxu0 %v549
      %654 = vmatprep.subr.bf16.mxu0 0
      %655 = vmatpush1.bf16.msra.mxu0 %v550
      %656 = vmatprep.subr.bf16.mxu0 0
      %657 = vmatpush1.bf16.msra.mxu0 %v551
      %658 = vmatprep.subr.bf16.mxu0 0
      %659 = vmatpush1.bf16.msra.mxu0 %v552
      %660 = vmatprep.subr.bf16.mxu0 0
      %661 = vmatpush1.bf16.msra.mxu0 %v553
      %662 = vmatprep.subr.bf16.mxu0 0
      %663 = vmatpush1.bf16.msra.mxu0 %v554
      %664 = vmatprep.subr.bf16.mxu0 0
      %665 = vmatpush1.bf16.msra.mxu0 %v555
      %666 = vmatprep.subr.bf16.mxu0 0
      %667 = vmatpush1.bf16.msra.mxu0 %v556
      %668 = vmatprep.subr.bf16.mxu0 0
      %669 = vmatpush1.bf16.msra.mxu0 %v557
      %670 = vmatprep.subr.bf16.mxu0 0
      %671 = vmatpush1.bf16.msra.mxu0 %v558
      %672 = vmatprep.subr.bf16.mxu0 0
      %673 = vmatpush1.bf16.msra.mxu0 %v559
      %674 = vmatprep.subr.bf16.mxu0 0
      %675 = vmatpush1.bf16.msra.mxu0 %v560
      %676 = vmatprep.subr.bf16.mxu0 0
      %677 = vmatpush1.bf16.msra.mxu0 %v561
      %678 = vmatprep.mubr.bf16.mxu0 %v374
      %679 = vmatmul.mubr.bf16.gmra.mrb[0].mxu0 %v372
      %v680 = vpop.f32.mrb[0].mxu0
      %v681 = vadd.f32 %v641, %v680
      %v682 = vpop.f32.mrb[0].mxu0
      %v683 = vpop.f32.mrb[0].mxu0
      %v684 = vpop.f32.mrb[0].mxu0
      %685 = vdwg.mxu0
      %686 = vmatprep.subr.bf16.mxu0 0
      %687 = vmatpush1.bf16.msra.mxu0 %v562
      %688 = vmatprep.subr.bf16.mxu0 0
      %689 = vmatpush1.bf16.msra.mxu0 %v563
      %690 = vmatprep.subr.bf16.mxu0 0
      %691 = vmatpush1.bf16.msra.mxu0 %v564
      %692 = vmatprep.subr.bf16.mxu0 0
      %693 = vmatpush1.bf16.msra.mxu0 %v565
      %694 = vmatprep.subr.bf16.mxu0 0
      %695 = vmatpush1.bf16.msra.mxu0 0
      %696 = vmatprep.subr.bf16.mxu0 0
      %697 = vmatpush1.bf16.msra.mxu0 0
      %698 = vmatprep.subr.bf16.mxu0 0
      %699 = vmatpush1.bf16.msra.mxu0 0
      %700 = vmatprep.subr.bf16.mxu0 0
      %701 = vmatpush1.bf16.msra.mxu0 0
      %702 = vmatprep.subr.bf16.mxu0 0
      %703 = vmatpush1.bf16.msra.mxu0 0
      %704 = vmatprep.subr.bf16.mxu0 0
      %705 = vmatpush1.bf16.msra.mxu0 0
      %706 = vmatprep.subr.bf16.mxu0 0
      %707 = vmatpush1.bf16.msra.mxu0 0
      %708 = vmatprep.subr.bf16.mxu0 0
      %709 = vmatpush1.bf16.msra.mxu0 0
      %710 = vmatprep.subr.bf16.mxu0 0
      %711 = vmatpush1.bf16.msra.mxu0 0
      %712 = vmatprep.subr.bf16.mxu0 0
      %713 = vmatpush1.bf16.msra.mxu0 0
      %714 = vmatprep.subr.bf16.mxu0 0
      %715 = vmatpush1.bf16.msra.mxu0 0
      %716 = vmatprep.subr.bf16.mxu0 0
      %717 = vmatpush1.bf16.msra.mxu0 0
      %718 = vmatprep.mubr.bf16.mxu0 0
      %719 = vmatmul.mubr.bf16.gmra.mrb[0].mxu0 %v604
      %v720 = vpop.f32.mrb[0].mxu0
      %v721 = vadd.f32 %v681, %v720
      %v722 = vpop.f32.mrb[0].mxu0
      %v723 = vpop.f32.mrb[0].mxu0
      %v724 = vpop.f32.mrb[0].mxu0
      %725 = vdwg.mxu0
      %v726 = vadd.f32 %v281, %v721
      %727 = vst [vmem:[#allocation2] sm:$0xf] %v726
      %p728 = scmp.eq.s32.totalorder %s23, 2
      // Predicated region
      $region37: #{_lambda_.18} parent=31 // pred_check
        %p729 = pneg %p728
      $region38: #{_lambda_.18} parent=31 // pred_check_branch
        %731 = sbr.rel (%p729) target = $region40
      $region39: #{_lambda_.18} parent=31 // pred_region
        %v732 = vld [vmem:[#allocation2] sm:$0xf]
        %v733 = vld [vmem:[%s2] sm:$0x1]
        %v735 = vlaneseq
        %v736 = vshrl.u32 %v735, 7
        %v737 = vsub.s32 0, %v736
        %v738 = vrot.slane %v733, %v737
        %v740 = vadd.f32 %v732, %v738
        %v741 = vmax.f32 %v740, 0.0
        %v742 = vpack.c.bf16 %v741, %v741
        %743 = vst [vmem:[%s274] sm:$0x3] %v742
      $region40: #{_lambda_.18} parent=31 // pred_fallthru
        _
      %p744 = scmp.lt.s32.totalorder %s20, 1
      %s745 = scalar_select %p744, %s20, 1
      %p746 = scmp.lt.s32.totalorder %s21, 1
      %s747 = scalar_select %p746, %s21, 1
      %p748 = scmp.lt.s32.totalorder %s22, 0
      %s749 = scalar_select %p748, %s22, 0
      %s750 = sadd.s32 %s749, %s747
      %s751 = smul.addr %s745, 2
      %s752 = sadd.s32 %s750, %s751
      %s753 = smul.addr %s752, 2
      %s754 = scalar_lea.vmem %s3, %s753
      // Predicated region
      $region41: #{_lambda_.18} parent=31 // pred_check
        %p755 = pneg %p143
      $region42: #{_lambda_.18} parent=31 // pred_check_branch
        %757 = sbr.rel (%p755) target = $region44
      $region43: #{_lambda_.18} parent=31 // pred_region
        _
      $region44: #{_lambda_.18} parent=31 // pred_fallthru
        _
    $region32: #{_lambda_.18} parent=5 // pred_fallthru
      _
    %p758 = scmp.le.s32.totalorder 2, %s9
    // Predicated region
    $region45: #{_lambda_.18} parent=5 // pred_check
      %p759 = pneg %p758
    $region46: #{_lambda_.18} parent=5 // pred_check_branch
      %761 = sbr.rel (%p759) target = $region48
    $region47: #{_lambda_.18} parent=5 // pred_region
      %s762 = ssub.s32 %s9, 2
      // Predicated region
      $region49: #{_lambda_.18} parent=47 // pred_check
        %p763 = pneg %p149
      $region50: #{_lambda_.18} parent=47 // pred_check_branch
        %765 = sbr.rel (%p763) target = $region52
      $region51: #{_lambda_.18} parent=47 // pred_region
        %p766 = scmp.lt.s32.totalorder %s24, 1
        %s767 = scalar_select %p766, %s24, 1
        %p768 = scmp.lt.s32.totalorder %s25, 1
        %s769 = scalar_select %p768, %s25, 1
        %p770 = scmp.lt.s32.totalorder %s26, 0
        %s771 = scalar_select %p770, %s26, 0
        %s772 = sadd.s32 %s771, %s769
        %s773 = smul.addr %s767, 2
        %s774 = sadd.s32 %s772, %s773
        %s775 = smul.addr %s774, 2
        %s776 = scalar_lea.vmem %s3, %s775
      $region52: #{_lambda_.18} parent=47 // pred_fallthru
        _
    $region48: #{_lambda_.18} parent=5 // pred_fallthru
      _
  $region6: #{_lambda_.18} parent=0 // loop_footer
    %s13 = sadd.s32 1, %s9
  $region7: #{_lambda_.18} parent=0 // loop_footer_branch
    %8 = sbr.rel target = $region3
  $region8: #{_lambda_.18} parent=0 // loop_exit
    _

// kernel: _lambda_.23
$region0: #{_lambda_.23}
  #allocation0 [shape = 'u32[]', space=smem, size = 0x4, offset = 0x4, fixed_abs, tag = 'smem constant byte address 0x4 - core index']
  #allocation1 [shape = 'u32[144,128]{1,0:T(1,128)}', space=vmem, size = 0x12000, scoped, tag = 'internal scratch']
  #allocation2 [shape = 'f32[2,128]{1,0:T(2,128)}', space=vmem, size = 0x400, scoped, tag = 'scratch operand']
  %s0 = inlined_call_operand.vmem [shape: bf16[2,8,128], index: 0, kind: input, shape index: {}]
  %s1 = inlined_call_operand.vmem [shape: f32[1,1,128], index: 1, kind: input, shape index: {}]
  %s2 = inlined_call_operand.vmem [shape: f32[1,1,128], index: 2, kind: input, shape index: {}]
  %s3 = inlined_call_operand.hbm [shape: f32[2,128], index: 3, kind: output, shape index: {}]
  %s4 = sld [smem:[#allocation0]]
  $region30: #{_lambda_.23} parent=0
    _
  %s6 = ssub.s32 1, %s4
  %s7 = scalar_select 0, %s6, %s4
  $region1: #{_lambda_.23} parent=0
    #allocation3 [shape = 'u8[1024]{0}', space=vmem, size = 0x400, scoped, tag = 'output window, operand 0, single buffered']
    #allocation4 [shape = 's32[1]{0}', space=sflag, size = 0x4, scoped, tag = 'scoped memory for _lambda_.23']
    %8 = vsyncpa [#allocation4], 0
    // Predicated region
    $region2: #{_lambda_.23} parent=1 // pred_check
      _
    $region3: #{_lambda_.23} parent=1 // pred_check_branch
      %10 = sbr.rel (0) target = $region5
    $region4: #{_lambda_.23} parent=1 // pred_region
      _
    $region5: #{_lambda_.23} parent=1 // pred_fallthru
      _
    // Predicated region
    $region6: #{_lambda_.23} parent=1 // pred_check
      _
    $region7: #{_lambda_.23} parent=1 // pred_check_branch
      %12 = sbr.rel (0) target = $region9
    $region8: #{_lambda_.23} parent=1 // pred_region
      _
    $region9: #{_lambda_.23} parent=1 // pred_fallthru
      _
    // Predicated region
    $region10: #{_lambda_.23} parent=1 // pred_check
      _
    $region11: #{_lambda_.23} parent=1 // pred_check_branch
      %14 = sbr.rel (0) target = $region13
    $region12: #{_lambda_.23} parent=1 // pred_region
      _
    $region13: #{_lambda_.23} parent=1 // pred_fallthru
      _
    %p15 = scmp.eq.s32.totalorder 0, 0
    // Predicated region
    $region14: #{_lambda_.23} parent=1 // pred_check
      %p16 = pneg %p15
    $region15: #{_lambda_.23} parent=1 // pred_check_branch
      %18 = sbr.rel (%p16) target = $region17
    $region16: #{_lambda_.23} parent=1 // pred_region
      %19 = vst [vmem:[#allocation2] sm:$0x3] 0.0
    $region17: #{_lambda_.23} parent=1 // pred_fallthru
      _
    %v20 = vld [vmem:[%s0] sm:$0xf]
    %v21 = vld [vmem:[%s0 + $0x4] sm:$0xf]
    %v22 = vunpack.c.l.bf16 %v20
    %v23 = vunpack.c.l.bf16 %v21
    %v24 = vld [vmem:[%s1] sm:$0x1]
    %v26 = vlaneseq
    %v27 = vshrl.u32 %v26, 7
    %v28 = vsub.s32 0, %v27
    %v29 = vrot.slane %v24, %v28
    %v31 = vmul.f32 %v22, %v29
    %v32 = vmul.f32 %v23, %v29
    %v33 = vld [vmem:[%s2] sm:$0x1]
    %v35 = vlaneseq
    %v36 = vshrl.u32 %v35, 7
    %v37 = vsub.s32 0, %v36
    %v38 = vrot.slane %v33, %v37
    %v40 = vadd.f32 %v31, %v38
    %v41 = vadd.f32 %v32, %v38
    %v42 = vmax.f32 %v40, 0.0
    %v43 = vmax.f32 %v41, 0.0
    %v44 = vlaneseq
    %v45 = vshrl.u32 %v44, 7
    %s46 = smul.u32 0, 8
    %v47 = vstv %s46
    %v48 = vadd.s32 %v45, %v47
    %vm49 = vcmp.lt.s32.totalorder %v48, 8
    %v50 = vsel %vm49, 1, 0
    %vm51 = vcmp.eq.s32.totalorder %v50, 1
    %v52 = vsel %vm51, %v42, 0.0
    %v53 = vsel %vm51, %v43, 0.0
    %v54 = vld [vmem:[#allocation2] sm:$0x3]
    %v55 = vrot.slane %v52, 4
    %v56 = vadd.f32 %v52, %v55
    %v57 = vrot.slane %v56, 2
    %v58 = vadd.f32 %v56, %v57
    %v59 = vrot.slane %v58, 1
    %v60 = vadd.f32 %v58, %v59
    %v61 = vrot.slane %v53, 4
    %v62 = vadd.f32 %v53, %v61
    %v63 = vrot.slane %v62, 2
    %v64 = vadd.f32 %v62, %v63
    %v65 = vrot.slane %v64, 1
    %v66 = vadd.f32 %v64, %v65
    %vm69 = vcmask 1041409
    %v70 = vsel %vm69, %v66, %v60
    %v72 = vadd.f32 %v54, %v70
    %73 = vst [vmem:[#allocation2] sm:$0x3] %v72
    // Predicated region
    $region18: #{_lambda_.23} parent=1 // pred_check
      %p74 = pneg %p15
    $region19: #{_lambda_.23} parent=1 // pred_check_branch
      %76 = sbr.rel (%p74) target = $region21
    $region20: #{_lambda_.23} parent=1 // pred_region
      %v77 = vld [vmem:[#allocation2] sm:$0x3]
      %v78 = vmul.f32 %v77, 0.125
      %79 = vst [vmem:[#allocation3] sm:$0x3] %v78
    $region21: #{_lambda_.23} parent=1 // pred_fallthru
      _
    // Predicated region
    $region22: #{_lambda_.23} parent=1 // pred_check
      _
    $region23: #{_lambda_.23} parent=1 // pred_check_branch
      %81 = sbr.rel (0) target = $region25
    $region24: #{_lambda_.23} parent=1 // pred_region
      %s83 = ssub.s32 32, 32
      %84 = vsyncadd [#allocation4], %s83
      %s86 = sshll.u32 [#allocation3], 4
      %s87 = int_to_ptr.vmem [resolvable:$true] %s86
      %89 = dma.vmem_to_hbm [thread:$0]  %s87, 32, %s3, [#allocation4]
    $region25: #{_lambda_.23} parent=1 // pred_fallthru
      _
    // Predicated region
    $region26: #{_lambda_.23} parent=1 // pred_check
      _
    $region27: #{_lambda_.23} parent=1 // pred_check_branch
      %91 = sbr.rel (0) target = $region29
    $region28: #{_lambda_.23} parent=1 // pred_region
      %92 = dma.done [#allocation4], 32
    $region29: #{_lambda_.23} parent=1 // pred_fallthru
      _
    %93 = vsyncpa [#allocation4], 1

// kernel: _lambda_.20
$region0: #{_lambda_.20}
  #allocation0 [shape = 'u32[]', space=smem, size = 0x4, offset = 0x4, fixed_abs, tag = 'smem constant byte address 0x4 - core index']
  #allocation1 [shape = 'u32[144,128]{1,0:T(1,128)}', space=vmem, size = 0x12000, scoped, tag = 'internal scratch']
  #allocation2 [shape = 'f32[4,128]{1,0:T(4,128)}', space=vmem, size = 0x800, scoped, tag = 'scratch operand']
  %s0 = inlined_call_operand.vmem [shape: bf16[2,4,4,1152], index: 0, kind: input, shape index: {}]
  %s1 = inlined_call_operand.vmem [shape: bf16[3,1152,128], index: 1, kind: input, shape index: {}]
  %s2 = inlined_call_operand.vmem [shape: f32[1,128], index: 2, kind: input, shape index: {}]
  %s3 = inlined_call_operand.vmem [shape: bf16[2,2,4,128], index: 3, kind: input, shape index: {}]
  %s4 = inlined_call_operand.vmem [shape: bf16[2,2,4,128], index: 4, kind: output, shape index: {}]
  %s5 = sld [smem:[#allocation0]]
  $region57: #{_lambda_.20} parent=0
    _
  %s7 = ssub.s32 1, %s5
  %s8 = scalar_select 0, %s7, %s5
  loop: start=0, step=1, limit=14
  $region2: #{_lambda_.20} parent=0 // loop_pre_header
    _
  $region3: #{_lambda_.20} parent=0 // loop_header
    %s10 = sphi 0, %s14
    %p11 = scmp.ge.s32.totalorder %s10, 14
    %s17 = sphi 0, %s43
    %s18 = sphi 0, %s39
    %s19 = sphi 0, %s35
    %s20 = sphi 0, %s31
    %s21 = sphi 0, %s17
    %s22 = sphi 0, %s18
    %s23 = sphi 0, %s19
    %s24 = sphi 0, %s20
    %s25 = sphi 0, %s21
    %s26 = sphi 0, %s22
    %s27 = sphi 0, %s23
    %s28 = sphi 0, %s24
    %s52 = sphi 0, %s54
    %s55 = sphi 0, %s52
    %s56 = sphi 0, %s55
    %s72 = sphi 0, %s56
    %s78 = sphi 0, %s80
    %s81 = sphi 0, %s78
    %s82 = sphi 0, %s81
    %s98 = sphi 0, %s82
    %s102 = sphi 0, %s102
    %s104 = sphi 0, %s102
    %s105 = sphi 0, %s104
    %s119 = sphi 0, %s105
    %s129 = sphi 0, %s131
    %s132 = sphi 0, %s129
    %s133 = sphi 0, %s132
    %s149 = sphi 0, %s133
    %s159 = sphi 0, %s161
    %s162 = sphi 0, %s159
    %s163 = sphi 0, %s162
    %s179 = sphi 0, %s163
  $region4: #{_lambda_.20} parent=0 // loop_header_branch
    %13 = sbr.rel (%p11) target = $region8
  $region5: #{_lambda_.20} parent=0 // loop_body
    %s15 = ssub.s32 %s10, 1
    %s16 = ssub.s32 %s10, 2
    %s29 = sadd.s32 1, %s20
    %p30 = scmp.ge.s32.totalorder %s29, 3
    %s31 = scalar_select %p30, 0, %s29
    %s32 = sadd.s32 1, %s19
    %s33 = scalar_select %p30, %s32, %s19
    %p34 = scmp.ge.s32.totalorder %s33, 1
    %s35 = scalar_select %p34, 0, %s33
    %s36 = sadd.s32 1, %s18
    %s37 = scalar_select %p34, %s36, %s18
    %p38 = scmp.ge.s32.totalorder %s37, 2
    %s39 = scalar_select %p38, 0, %s37
    %s40 = sadd.s32 1, %s17
    %s41 = scalar_select %p38, %s40, %s17
    %p42 = scmp.ge.s32.totalorder %s41, 2
    %s43 = scalar_select %p42, 0, %s41
    %s44 = sadd.s32 %s18, %s20
    %s45 = sadd.s32 %s39, %s31
    %s46 = ssub.s32 %s17, %s43
    %s47 = ssub.s32 %s44, %s45
    %s48 = sor.u32 %s46, %s47
    %s49 = ssub.s32 %s19, %s35
    %s50 = sor.u32 %s48, %s49
    %p51 = scmp.eq.s32.totalorder %s50, 0
    %s53 = sadd.s32 %s52, 1
    %s54 = scalar_select %p51, %s52, %s53
    %p57 = pneg %p51
    %p58 = scmp.eq.s32.totalorder %s10, 11
    %p59 = por %p57, %p58
    %p60 = scmp.ne.s32.totalorder %s52, %s55
    %p61 = scmp.eq.s32.totalorder %s10, 0
    %p62 = por %p60, %p61
    %p63 = scmp.ne.s32.totalorder %s52, %s55
    %p64 = scmp.eq.s32.totalorder %s15, 11
    %p65 = por %p63, %p64
    %p66 = scmp.ne.s32.totalorder %s55, %s56
    %p67 = scmp.eq.s32.totalorder %s15, 0
    %p68 = por %p66, %p67
    %p69 = scmp.ne.s32.totalorder %s55, %s56
    %p70 = scmp.eq.s32.totalorder %s16, 11
    %p71 = por %p69, %p70
    %p73 = scmp.ne.s32.totalorder %s56, %s72
    %p74 = scmp.eq.s32.totalorder %s16, 0
    %p75 = por %p73, %p74
    %s76 = ssub.s32 %s20, %s31
    %p77 = scmp.eq.s32.totalorder %s76, 0
    %s79 = sadd.s32 %s78, 1
    %s80 = scalar_select %p77, %s78, %s79
    %p83 = pneg %p77
    %p84 = scmp.eq.s32.totalorder %s10, 11
    %p85 = por %p83, %p84
    %p86 = scmp.ne.s32.totalorder %s78, %s81
    %p87 = scmp.eq.s32.totalorder %s10, 0
    %p88 = por %p86, %p87
    %p89 = scmp.ne.s32.totalorder %s78, %s81
    %p90 = scmp.eq.s32.totalorder %s15, 11
    %p91 = por %p89, %p90
    %p92 = scmp.ne.s32.totalorder %s81, %s82
    %p93 = scmp.eq.s32.totalorder %s15, 0
    %p94 = por %p92, %p93
    %p95 = scmp.ne.s32.totalorder %s81, %s82
    %p96 = scmp.eq.s32.totalorder %s16, 11
    %p97 = por %p95, %p96
    %p99 = scmp.ne.s32.totalorder %s82, %s98
    %p100 = scmp.eq.s32.totalorder %s16, 0
    %p101 = por %p99, %p100
    %s103 = sadd.s32 %s102, 1
    %p106 = scmp.eq.s32.totalorder %s10, 11
    %p107 = scmp.ne.s32.totalorder %s102, %s104
    %p108 = scmp.eq.s32.totalorder %s10, 0
    %p109 = por %p107, %p108
    %p110 = scmp.ne.s32.totalorder %s102, %s104
    %p111 = scmp.eq.s32.totalorder %s15, 11
    %p112 = por %p110, %p111
    %p113 = scmp.ne.s32.totalorder %s104, %s105
    %p114 = scmp.eq.s32.totalorder %s15, 0
    %p115 = por %p113, %p114
    %p116 = scmp.ne.s32.totalorder %s104, %s105
    %p117 = scmp.eq.s32.totalorder %s16, 11
    %p118 = por %p116, %p117
    %p120 = scmp.ne.s32.totalorder %s105, %s119
    %p121 = scmp.eq.s32.totalorder %s16, 0
    %p122 = por %p120, %p121
    %s123 = ssub.s32 %s17, %s43
    %s124 = ssub.s32 %s18, %s39
    %s125 = sor.u32 %s123, %s124
    %s126 = ssub.s32 %s19, %s35
    %s127 = sor.u32 %s125, %s126
    %p128 = scmp.eq.s32.totalorder %s127, 0
    %s130 = sadd.s32 %s129, 1
    %s131 = scalar_select %p128, %s129, %s130
    %p134 = pneg %p128
    %p135 = scmp.eq.s32.totalorder %s10, 11
    %p136 = por %p134, %p135
    %p137 = scmp.ne.s32.totalorder %s129, %s132
    %p138 = scmp.eq.s32.totalorder %s10, 0
    %p139 = por %p137, %p138
    %p140 = scmp.ne.s32.totalorder %s129, %s132
    %p141 = scmp.eq.s32.totalorder %s15, 11
    %p142 = por %p140, %p141
    %p143 = scmp.ne.s32.totalorder %s132, %s133
    %p144 = scmp.eq.s32.totalorder %s15, 0
    %p145 = por %p143, %p144
    %p146 = scmp.ne.s32.totalorder %s132, %s133
    %p147 = scmp.eq.s32.totalorder %s16, 11
    %p148 = por %p146, %p147
    %p150 = scmp.ne.s32.totalorder %s133, %s149
    %p151 = scmp.eq.s32.totalorder %s16, 0
    %p152 = por %p150, %p151
    %s153 = ssub.s32 %s17, %s43
    %s154 = ssub.s32 %s18, %s39
    %s155 = sor.u32 %s153, %s154
    %s156 = ssub.s32 %s19, %s35
    %s157 = sor.u32 %s155, %s156
    %p158 = scmp.eq.s32.totalorder %s157, 0
    %s160 = sadd.s32 %s159, 1
    %s161 = scalar_select %p158, %s159, %s160
    %p164 = pneg %p158
    %p165 = scmp.eq.s32.totalorder %s10, 11
    %p166 = por %p164, %p165
    %p167 = scmp.ne.s32.totalorder %s159, %s162
    %p168 = scmp.eq.s32.totalorder %s10, 0
    %p169 = por %p167, %p168
    %p170 = scmp.ne.s32.totalorder %s159, %s162
    %p171 = scmp.eq.s32.totalorder %s15, 11
    %p172 = por %p170, %p171
    %p173 = scmp.ne.s32.totalorder %s162, %s163
    %p174 = scmp.eq.s32.totalorder %s15, 0
    %p175 = por %p173, %p174
    %p176 = scmp.ne.s32.totalorder %s162, %s163
    %p177 = scmp.eq.s32.totalorder %s16, 11
    %p178 = por %p176, %p177
    %p180 = scmp.ne.s32.totalorder %s163, %s179
    %p181 = scmp.eq.s32.totalorder %s16, 0
    %p182 = por %p180, %p181
    %p183 = scmp.le.s32.totalorder 1, %s10
    %p184 = scmp.lt.s32.totalorder %s10, 13
    %p185 = pnand %p183, %p184
    %p186 = pneg %p185
    // Predicated region
    $region9: #{_lambda_.20} parent=5 // pred_check
      _
    $region10: #{_lambda_.20} parent=5 // pred_check_branch
      %188 = sbr.rel (%p185) target = $region12
    $region11: #{_lambda_.20} parent=5 // pred_region
      %s189 = ssub.s32 %s10, 1
      // Predicated region
      $region13: #{_lambda_.20} parent=11 // pred_check
        %p190 = pneg %p115
      $region14: #{_lambda_.20} parent=11 // pred_check_branch
        %192 = sbr.rel (%p190) target = $region16
      $region15: #{_lambda_.20} parent=11 // pred_region
        _
      $region16: #{_lambda_.20} parent=11 // pred_fallthru
        _
    $region12: #{_lambda_.20} parent=5 // pred_fallthru
      _
    %p193 = scmp.lt.s32.totalorder %s10, 12
    // Predicated region
    $region17: #{_lambda_.20} parent=5 // pred_check
      %p194 = pneg %p193
    $region18: #{_lambda_.20} parent=5 // pred_check_branch
      %196 = sbr.rel (%p194) target = $region20
    $region19: #{_lambda_.20} parent=5 // pred_region
      // Predicated region
      $region21: #{_lambda_.20} parent=19 // pred_check
        %p197 = pneg %p62
      $region22: #{_lambda_.20} parent=19 // pred_check_branch
        %199 = sbr.rel (%p197) target = $region24
      $region23: #{_lambda_.20} parent=19 // pred_region
        %s200 = sadd.s32 %s18, %s20
        %p201 = scmp.lt.s32.totalorder %s17, 1
        %s202 = scalar_select %p201, %s17, 1
        %p203 = scmp.lt.s32.totalorder %s200, 3
        %s204 = scalar_select %p203, %s200, 3
        %p205 = scmp.lt.s32.totalorder %s19, 0
        %s206 = scalar_select %p205, %s19, 0
        %s207 = smul.addr %s206, 9
        %s208 = smul.addr %s204, 9
        %s209 = sadd.s32 %s207, %s208
        %s210 = smul.addr %s202, 36
        %s211 = sadd.s32 %s209, %s210
        %s212 = smul.addr %s211, 2
        %s213 = scalar_lea.vmem %s0, %s212
        %s214 = sadd.s32 %s18, %s20
      $region24: #{_lambda_.20} parent=19 // pred_fallthru
        _
      // Predicated region
      $region25: #{_lambda_.20} parent=19 // pred_check
        %p215 = pneg %p88
      $region26: #{_lambda_.20} parent=19 // pred_check_branch
        %217 = sbr.rel (%p215) target = $region28
      $region27: #{_lambda_.20} parent=19 // pred_region
        %p218 = scmp.lt.s32.totalorder %s20, 2
        %s219 = scalar_select %p218, %s20, 2
        %s220 = smul.addr %s219, 144
        %s221 = smul.addr %s220, 4
        %s222 = scalar_lea.vmem %s1, %s221
      $region28: #{_lambda_.20} parent=19 // pred_fallthru
        _
      // Predicated region
      $region29: #{_lambda_.20} parent=19 // pred_check
        %p223 = pneg %p139
      $region30: #{_lambda_.20} parent=19 // pred_check_branch
        %225 = sbr.rel (%p223) target = $region32
      $region31: #{_lambda_.20} parent=19 // pred_region
        %p226 = scmp.lt.s32.totalorder %s17, 1
        %s227 = scalar_select %p226, %s17, 1
        %p228 = scmp.lt.s32.totalorder %s18, 1
        %s229 = scalar_select %p228, %s18, 1
        %p230 = scmp.lt.s32.totalorder %s19, 0
        %s231 = scalar_select %p230, %s19, 0
        %s232 = sadd.s32 %s231, %s229
        %s233 = smul.addr %s227, 2
        %s234 = sadd.s32 %s232, %s233
        %s235 = smul.addr %s234, 2
        %s236 = scalar_lea.vmem %s3, %s235
      $region32: #{_lambda_.20} parent=19 // pred_fallthru
        _
    $region20: #{_lambda_.20} parent=5 // pred_fallthru
      _
    %p237 = scmp.le.s32.totalorder 1, %s10
    %p238 = scmp.lt.s32.totalorder %s10, 13
    %p239 = pnand %p237, %p238
    %p240 = pneg %p239
    // Predicated region
    $region33: #{_lambda_.20} parent=5 // pred_check
      _
    $region34: #{_lambda_.20} parent=5 // pred_check_branch
      %242 = sbr.rel (%p239) target = $region36
    $region35: #{_lambda_.20} parent=5 // pred_region
      %s243 = ssub.s32 %s10, 1
      %s244 = sadd.s32 %s22, %s24
      %p245 = scmp.lt.s32.totalorder %s21, 1
      %s246 = scalar_select %p245, %s21, 1
      %p247 = scmp.lt.s32.totalorder %s244, 3
      %s248 = scalar_select %p247, %s244, 3
      %p249 = scmp.lt.s32.totalorder %s23, 0
      %s250 = scalar_select %p249, %s23, 0
      %s251 = smul.addr %s250, 9
      %s252 = smul.addr %s248, 9
      %s253 = sadd.s32 %s251, %s252
      %s254 = smul.addr %s246, 36
      %s255 = sadd.s32 %s253, %s254
      %s256 = smul.addr %s255, 2
      %s257 = scalar_lea.vmem %s0, %s256
      %p258 = pneg %p68
      %p259 = pneg %p65
      %p260 = scmp.lt.s32.totalorder %s24, 2
      %s261 = scalar_select %p260, %s24, 2
      %s262 = smul.addr %s261, 144
      %s263 = smul.addr %s262, 4
      %s264 = scalar_lea.vmem %s1, %s263
      %p265 = pneg %p94
      %p266 = pneg %p91
      %p267 = pneg %p115
      %p268 = pneg %p112
      %p269 = scmp.lt.s32.totalorder %s21, 1
      %s270 = scalar_select %p269, %s21, 1
      %p271 = scmp.lt.s32.totalorder %s22, 1
      %s272 = scalar_select %p271, %s22, 1
      %p273 = scmp.lt.s32.totalorder %s23, 0
      %s274 = scalar_select %p273, %s23, 0
      %s275 = sadd.s32 %s274, %s272
      %s276 = smul.addr %s270, 2
      %s277 = sadd.s32 %s275, %s276
      %s278 = smul.addr %s277, 2
      %s279 = scalar_lea.vmem %s3, %s278
      %p280 = pneg %p145
      %p281 = pneg %p142
      %p282 = pneg %p175
      %p283 = pneg %p172
      %p284 = scmp.lt.s32.totalorder %s21, 1
      %s285 = scalar_select %p284, %s21, 1
      %p286 = scmp.lt.s32.totalorder %s22, 1
      %s287 = scalar_select %p286, %s22, 1
      %p288 = scmp.lt.s32.totalorder %s23, 0
      %s289 = scalar_select %p288, %s23, 0
      %s290 = sadd.s32 %s289, %s287
      %s291 = smul.addr %s285, 2
      %s292 = sadd.s32 %s290, %s291
      %s293 = smul.addr %s292, 2
      %s294 = scalar_lea.vmem %s4, %s293
      %s295 = sadd.s32 %s22, %s24
      %p296 = scmp.lt.s32.totalorder %s21, 1
      %s297 = scalar_select %p296, %s21, 1
      %p298 = scmp.lt.s32.totalorder %s295, 3
      %s299 = scalar_select %p298, %s295, 3
      %p300 = scmp.lt.s32.totalorder %s23, 0
      %s301 = scalar_select %p300, %s23, 0
      %s302 = smul.addr %s301, 9
      %s303 = smul.addr %s299, 9
      %s304 = sadd.s32 %s302, %s303
      %s305 = smul.addr %s297, 36
      %s306 = sadd.s32 %s304, %s305
      %s307 = smul.addr %s306, 2
      %s308 = scalar_lea.vmem %s0, %s307
      %s309 = sadd.s32 %s22, %s24
      %p310 = scmp.lt.s32.totalorder %s24, 2
      %s311 = scalar_select %p310, %s24, 2
      %s312 = smul.addr %s311, 144
      %s313 = smul.addr %s312, 4
      %s314 = scalar_lea.vmem %s1, %s313
      %p315 = scmp.lt.s32.totalorder %s21, 1
      %s316 = scalar_select %p315, %s21, 1
      %p317 = scmp.lt.s32.totalorder %s22, 1
      %s318 = scalar_select %p317, %s22, 1
      %p319 = scmp.lt.s32.totalorder %s23, 0
      %s320 = scalar_select %p319, %s23, 0
      %s321 = sadd.s32 %s320, %s318
      %s322 = smul.addr %s316, 2
      %s323 = sadd.s32 %s321, %s322
      %s324 = smul.addr %s323, 2
      %s325 = scalar_lea.vmem %s3, %s324
      %p326 = scmp.lt.s32.totalorder %s21, 1
      %s327 = scalar_select %p326, %s21, 1
      %p328 = scmp.lt.s32.totalorder %s22, 1
      %s329 = scalar_select %p328, %s22, 1
      %p330 = scmp.lt.s32.totalorder %s23, 0
      %s331 = scalar_select %p330, %s23, 0
      %s332 = sadd.s32 %s331, %s329
      %s333 = smul.addr %s327, 2
      %s334 = sadd.s32 %s332, %s333
      %s335 = smul.addr %s334, 2
      %s336 = scalar_lea.vmem %s4, %s335
      %p338 = scmp.eq.s32.totalorder %s24, 0
      // Predicated region
      $region37: #{_lambda_.20} parent=35 // pred_check
        %p339 = pneg %p338
      $region38: #{_lambda_.20} parent=35 // pred_check_branch
        %341 = sbr.rel (%p339) target = $region40
      $region39: #{_lambda_.20} parent=35 // pred_region
        %342 = vst [vmem:[#allocation2] sm:$0xf] 0.0
      $region40: #{_lambda_.20} parent=35 // pred_fallthru
        _
      %v343 = vld [vmem:[#allocation2] sm:$0xf]
      %v344 = vld [vmem:[%s308] sm:$0xff]
      %v345 = vld [vmem:[%s308 + $0x8] sm:$0xff]
      %v346 = vld [vmem:[%s308 + $0x10] sm:$0x3]
      %v347 = vld [vmem:[%s314] sm:$0xf]
      %v348 = vld [vmem:[%s314 + $0x4] sm:$0xf]
      %v349 = vld [vmem:[%s314 + $0x8] sm:$0xf]
      %v350 = vld [vmem:[%s314 + $0xc] sm:$0xf]
      %v351 = vld [vmem:[%s314 + $0x10] sm:$0xf]
      %v352 = vld [vmem:[%s314 + $0x14] sm:$0xf]
      %v353 = vld [vmem:[%s314 + $0x18] sm:$0xf]
      %v354 = vld [vmem:[%s314 + $0x1c] sm:$0xf]
      %v355 = vld [vmem:[%s314 + $0x20] sm:$0xf]
      %v356 = vld [vmem:[%s314 + $0x24] sm:$0xf]
      %v357 = vld [vmem:[%s314 + $0x28] sm:$0xf]
      %v358 = vld [vmem:[%s314 + $0x2c] sm:$0xf]
      %v359 = vld [vmem:[%s314 + $0x30] sm:$0xf]
      %v360 = vld [vmem:[%s314 + $0x34] sm:$0xf]
      %v361 = vld [vmem:[%s314 + $0x38] sm:$0xf]
      %v362 = vld [vmem:[%s314 + $0x3c] sm:$0xf]
      %v363 = vld [vmem:[%s314 + $0x40] sm:$0xf]
      %v364 = vld [vmem:[%s314 + $0x44] sm:$0xf]
      %v365 = vld [vmem:[%s314 + $0x48] sm:$0xf]
      %v366 = vld [vmem:[%s314 + $0x4c] sm:$0xf]
      %v367 = vld [vmem:[%s314 + $0x50] sm:$0xf]
      %v368 = vld [vmem:[%s314 + $0x54] sm:$0xf]
      %v369 = vld [vmem:[%s314 + $0x58] sm:$0xf]
      %v370 = vld [vmem:[%s314 + $0x5c] sm:$0xf]
      %v371 = vld [vmem:[%s314 + $0x60] sm:$0xf]
      %v372 = vld [vmem:[%s314 + $0x64] sm:$0xf]
      %v373 = vld [vmem:[%s314 + $0x68] sm:$0xf]
      %v374 = vld [vmem:[%s314 + $0x6c] sm:$0xf]
      %v375 = vld [vmem:[%s314 + $0x70] sm:$0xf]
      %v376 = vld [vmem:[%s314 + $0x74] sm:$0xf]
      %v377 = vld [vmem:[%s314 + $0x78] sm:$0xf]
      %v378 = vld [vmem:[%s314 + $0x7c] sm:$0xf]
      %v379 = vld [vmem:[%s314 + $0x80] sm:$0xf]
      %v380 = vld [vmem:[%s314 + $0x84] sm:$0xf]
      %v381 = vld [vmem:[%s314 + $0x88] sm:$0xf]
      %v382 = vld [vmem:[%s314 + $0x8c] sm:$0xf]
      %v383 = vld [vmem:[%s314 + $0x90] sm:$0xf]
      %v384 = vld [vmem:[%s314 + $0x94] sm:$0xf]
      %v385 = vld [vmem:[%s314 + $0x98] sm:$0xf]
      %v386 = vld [vmem:[%s314 + $0x9c] sm:$0xf]
      %v387 = vld [vmem:[%s314 + $0xa0] sm:$0xf]
      %v388 = vld [vmem:[%s314 + $0xa4] sm:$0xf]
      %v389 = vld [vmem:[%s314 + $0xa8] sm:$0xf]
      %v390 = vld [vmem:[%s314 + $0xac] sm:$0xf]
      %v391 = vld [vmem:[%s314 + $0xb0] sm:$0xf]
      %v392 = vld [vmem:[%s314 + $0xb4] sm:$0xf]
      %v393 = vld [vmem:[%s314 + $0xb8] sm:$0xf]
      %v394 = vld [vmem:[%s314 + $0xbc] sm:$0xf]
      %v395 = vld [vmem:[%s314 + $0xc0] sm:$0xf]
      %v396 = vld [vmem:[%s314 + $0xc4] sm:$0xf]
      %v397 = vld [vmem:[%s314 + $0xc8] sm:$0xf]
      %v398 = vld [vmem:[%s314 + $0xcc] sm:$0xf]
      %v399 = vld [vmem:[%s314 + $0xd0] sm:$0xf]
      %v400 = vld [vmem:[%s314 + $0xd4] sm:$0xf]
      %v401 = vld [vmem:[%s314 + $0xd8] sm:$0xf]
      %v402 = vld [vmem:[%s314 + $0xdc] sm:$0xf]
      %v403 = vld [vmem:[%s314 + $0xe0] sm:$0xf]
      %v404 = vld [vmem:[%s314 + $0xe4] sm:$0xf]
      %v405 = vld [vmem:[%s314 + $0xe8] sm:$0xf]
      %v406 = vld [vmem:[%s314 + $0xec] sm:$0xf]
      %v407 = vld [vmem:[%s314 + $0xf0] sm:$0xf]
      %v408 = vld [vmem:[%s314 + $0xf4] sm:$0xf]
      %v409 = vld [vmem:[%s314 + $0xf8] sm:$0xf]
      %v410 = vld [vmem:[%s314 + $0xfc] sm:$0xf]
      %v411 = vld [vmem:[%s314 + $0x100] sm:$0xf]
      %v412 = vld [vmem:[%s314 + $0x104] sm:$0xf]
      %v413 = vld [vmem:[%s314 + $0x108] sm:$0xf]
      %v414 = vld [vmem:[%s314 + $0x10c] sm:$0xf]
      %v415 = vld [vmem:[%s314 + $0x110] sm:$0xf]
      %v416 = vld [vmem:[%s314 + $0x114] sm:$0xf]
      %v417 = vld [vmem:[%s314 + $0x118] sm:$0xf]
      %v418 = vld [vmem:[%s314 + $0x11c] sm:$0xf]
      %v419 = vld [vmem:[%s314 + $0x120] sm:$0xf]
      %v420 = vld [vmem:[%s314 + $0x124] sm:$0xf]
      %v421 = vld [vmem:[%s314 + $0x128] sm:$0xf]
      %v422 = vld [vmem:[%s314 + $0x12c] sm:$0xf]
      %v423 = vld [vmem:[%s314 + $0x130] sm:$0xf]
      %v424 = vld [vmem:[%s314 + $0x134] sm:$0xf]
      %v425 = vld [vmem:[%s314 + $0x138] sm:$0xf]
      %v426 = vld [vmem:[%s314 + $0x13c] sm:$0xf]
      %v427 = vld [vmem:[%s314 + $0x140] sm:$0xf]
      %v428 = vld [vmem:[%s314 + $0x144] sm:$0xf]
      %v429 = vld [vmem:[%s314 + $0x148] sm:$0xf]
      %v430 = vld [vmem:[%s314 + $0x14c] sm:$0xf]
      %v431 = vld [vmem:[%s314 + $0x150] sm:$0xf]
      %v432 = vld [vmem:[%s314 + $0x154] sm:$0xf]
      %v433 = vld [vmem:[%s314 + $0x158] sm:$0xf]
      %v434 = vld [vmem:[%s314 + $0x15c] sm:$0xf]
      %v435 = vld [vmem:[%s314 + $0x160] sm:$0xf]
      %v436 = vld [vmem:[%s314 + $0x164] sm:$0xf]
      %v437 = vld [vmem:[%s314 + $0x168] sm:$0xf]
      %v438 = vld [vmem:[%s314 + $0x16c] sm:$0xf]
      %v439 = vld [vmem:[%s314 + $0x170] sm:$0xf]
      %v440 = vld [vmem:[%s314 + $0x174] sm:$0xf]
      %v441 = vld [vmem:[%s314 + $0x178] sm:$0xf]
      %v442 = vld [vmem:[%s314 + $0x17c] sm:$0xf]
      %v443 = vld [vmem:[%s314 + $0x180] sm:$0xf]
      %v444 = vld [vmem:[%s314 + $0x184] sm:$0xf]
      %v445 = vld [vmem:[%s314 + $0x188] sm:$0xf]
      %v446 = vld [vmem:[%s314 + $0x18c] sm:$0xf]
      %v447 = vld [vmem:[%s314 + $0x190] sm:$0xf]
      %v448 = vld [vmem:[%s314 + $0x194] sm:$0xf]
      %v449 = vld [vmem:[%s314 + $0x198] sm:$0xf]
      %v450 = vld [vmem:[%s314 + $0x19c] sm:$0xf]
      %v451 = vld [vmem:[%s314 + $0x1a0] sm:$0xf]
      %v452 = vld [vmem:[%s314 + $0x1a4] sm:$0xf]
      %v453 = vld [vmem:[%s314 + $0x1a8] sm:$0xf]
      %v454 = vld [vmem:[%s314 + $0x1ac] sm:$0xf]
      %v455 = vld [vmem:[%s314 + $0x1b0] sm:$0xf]
      %v456 = vld [vmem:[%s314 + $0x1b4] sm:$0xf]
      %v457 = vld [vmem:[%s314 + $0x1b8] sm:$0xf]
      %v458 = vld [vmem:[%s314 + $0x1bc] sm:$0xf]
      %v459 = vld [vmem:[%s314 + $0x1c0] sm:$0xf]
      %v460 = vld [vmem:[%s314 + $0x1c4] sm:$0xf]
      %v461 = vld [vmem:[%s314 + $0x1c8] sm:$0xf]
      %v462 = vld [vmem:[%s314 + $0x1cc] sm:$0xf]
      %v463 = vld [vmem:[%s314 + $0x1d0] sm:$0xf]
      %v464 = vld [vmem:[%s314 + $0x1d4] sm:$0xf]
      %v465 = vld [vmem:[%s314 + $0x1d8] sm:$0xf]
      %v466 = vld [vmem:[%s314 + $0x1dc] sm:$0xf]
      %v467 = vld [vmem:[%s314 + $0x1e0] sm:$0xf]
      %v468 = vld [vmem:[%s314 + $0x1e4] sm:$0xf]
      %v469 = vld [vmem:[%s314 + $0x1e8] sm:$0xf]
      %v470 = vld [vmem:[%s314 + $0x1ec] sm:$0xf]
      %v471 = vld [vmem:[%s314 + $0x1f0] sm:$0xf]
      %v472 = vld [vmem:[%s314 + $0x1f4] sm:$0xf]
      %v473 = vld [vmem:[%s314 + $0x1f8] sm:$0xf]
      %v474 = vld [vmem:[%s314 + $0x1fc] sm:$0xf]
      %v475 = vld [vmem:[%s314 + $0x200] sm:$0xf]
      %v476 = vld [vmem:[%s314 + $0x204] sm:$0xf]
      %v477 = vld [vmem:[%s314 + $0x208] sm:$0xf]
      %v478 = vld [vmem:[%s314 + $0x20c] sm:$0xf]
      %v479 = vld [vmem:[%s314 + $0x210] sm:$0xf]
      %v480 = vld [vmem:[%s314 + $0x214] sm:$0xf]
      %v481 = vld [vmem:[%s314 + $0x218] sm:$0xf]
      %v482 = vld [vmem:[%s314 + $0x21c] sm:$0xf]
      %v483 = vld [vmem:[%s314 + $0x220] sm:$0xf]
      %v484 = vld [vmem:[%s314 + $0x224] sm:$0xf]
      %v485 = vld [vmem:[%s314 + $0x228] sm:$0xf]
      %v486 = vld [vmem:[%s314 + $0x22c] sm:$0xf]
      %v487 = vld [vmem:[%s314 + $0x230] sm:$0xf]
      %v488 = vld [vmem:[%s314 + $0x234] sm:$0xf]
      %v489 = vld [vmem:[%s314 + $0x238] sm:$0xf]
      %v490 = vld [vmem:[%s314 + $0x23c] sm:$0xf]
      %v494 = vcombine.high %v344, %v344
      %v496 = vunpack.c.l.s4 1983009808
      %v497 = vunpack.c.0.s8 %v496
      %v498 = vlaneseq
      %v499 = vshrl.u32 %v498, 7
      %v500 = vsub.s32 %v497, %v499
      %v501 = vrot.slane %v344, %v500
      %v503 = vunpack.c.l.s4 1983009808
      %v504 = vunpack.c.0.s8 %v503
      %v505 = vlaneseq
      %v506 = vshrl.u32 %v505, 7
      %v507 = vsub.s32 %v504, %v506
      %v508 = vrot.slane %v494, %v507
      %v509 = vcombine.high %v501, %v501
      %v510 = vcombine.high %v508, %v508
      %v511 = vcombine.high %v345, %v345
      %v513 = vunpack.c.l.s4 1983009808
      %v514 = vunpack.c.0.s8 %v513
      %v515 = vlaneseq
      %v516 = vshrl.u32 %v515, 7
      %v517 = vsub.s32 %v514, %v516
      %v518 = vrot.slane %v345, %v517
      %v520 = vunpack.c.l.s4 1983009808
      %v521 = vunpack.c.0.s8 %v520
      %v522 = vlaneseq
      %v523 = vshrl.u32 %v522, 7
      %v524 = vsub.s32 %v521, %v523
      %v525 = vrot.slane %v511, %v524
      %v526 = vcombine.high %v518, %v518
      %v527 = vcombine.high %v525, %v525
      %v529 = vunpack.c.l.s4 1983009808
      %v530 = vunpack.c.0.s8 %v529
      %v531 = vlaneseq
      %v532 = vshrl.u32 %v531, 7
      %v533 = vsub.s32 %v530, %v532
      %v534 = vrot.slane %v346, %v533
      %v688 = vunpack.c.l.b16 %v347
      %v689 = vunpack.c.l.b16 %v348
      %v690 = vunpack.c.l.b16 %v349
      %v691 = vunpack.c.l.b16 %v350
      %v692 = vunpack.c.l.b16 %v351
      %v693 = vunpack.c.l.b16 %v352
      %v694 = vunpack.c.l.b16 %v353
      %v695 = vunpack.c.l.b16 %v354
      %v696 = vunpack.c.l.b16 %v355
      %v697 = vunpack.c.l.b16 %v356
      %v698 = vunpack.c.l.b16 %v357
      %v699 = vunpack.c.l.b16 %v358
      %v700 = vunpack.c.l.b16 %v359
      %v701 = vunpack.c.l.b16 %v360
      %v702 = vunpack.c.l.b16 %v361
      %v703 = vunpack.c.l.b16 %v362
      %v704 = vunpack.c.l.b16 %v363
      %v705 = vunpack.c.l.b16 %v364
      %v706 = vunpack.c.l.b16 %v365
      %v707 = vunpack.c.l.b16 %v366
      %v708 = vunpack.c.l.b16 %v367
      %v709 = vunpack.c.l.b16 %v368
      %v710 = vunpack.c.l.b16 %v369
      %v711 = vunpack.c.l.b16 %v370
      %v712 = vunpack.c.l.b16 %v371
      %v713 = vunpack.c.l.b16 %v372
      %v714 = vunpack.c.l.b16 %v373
      %v715 = vunpack.c.l.b16 %v374
      %v716 = vunpack.c.l.b16 %v375
      %v717 = vunpack.c.l.b16 %v376
      %v718 = vunpack.c.l.b16 %v377
      %v719 = vunpack.c.l.b16 %v378
      %v720 = vunpack.c.l.b16 %v379
      %v721 = vunpack.c.l.b16 %v380
      %v722 = vunpack.c.l.b16 %v381
      %v723 = vunpack.c.l.b16 %v382
      %v724 = vunpack.c.l.b16 %v383
      %v725 = vunpack.c.l.b16 %v384
      %v726 = vunpack.c.l.b16 %v385
      %v727 = vunpack.c.l.b16 %v386
      %v728 = vunpack.c.l.b16 %v387
      %v729 = vunpack.c.l.b16 %v388
      %v730 = vunpack.c.l.b16 %v389
      %v731 = vunpack.c.l.b16 %v390
      %v732 = vunpack.c.l.b16 %v391
      %v733 = vunpack.c.l.b16 %v392
      %v734 = vunpack.c.l.b16 %v393
      %v735 = vunpack.c.l.b16 %v394
      %v736 = vunpack.c.l.b16 %v395
      %v737 = vunpack.c.l.b16 %v396
      %v738 = vunpack.c.l.b16 %v397
      %v739 = vunpack.c.l.b16 %v398
      %v740 = vunpack.c.l.b16 %v399
      %v741 = vunpack.c.l.b16 %v400
      %v742 = vunpack.c.l.b16 %v401
      %v743 = vunpack.c.l.b16 %v402
      %v744 = vunpack.c.l.b16 %v403
      %v745 = vunpack.c.l.b16 %v404
      %v746 = vunpack.c.l.b16 %v405
      %v747 = vunpack.c.l.b16 %v406
      %v748 = vunpack.c.l.b16 %v407
      %v749 = vunpack.c.l.b16 %v408
      %v750 = vunpack.c.l.b16 %v409
      %v751 = vunpack.c.l.b16 %v410
      %v752 = vunpack.c.l.b16 %v411
      %v753 = vunpack.c.l.b16 %v412
      %v754 = vunpack.c.l.b16 %v413
      %v755 = vunpack.c.l.b16 %v414
      %v756 = vunpack.c.l.b16 %v415
      %v757 = vunpack.c.l.b16 %v416
      %v758 = vunpack.c.l.b16 %v417
      %v759 = vunpack.c.l.b16 %v418
      %v760 = vunpack.c.l.b16 %v419
      %v761 = vunpack.c.l.b16 %v420
      %v762 = vunpack.c.l.b16 %v421
      %v763 = vunpack.c.l.b16 %v422
      %v764 = vunpack.c.l.b16 %v423
      %v765 = vunpack.c.l.b16 %v424
      %v766 = vunpack.c.l.b16 %v425
      %v767 = vunpack.c.l.b16 %v426
      %v768 = vunpack.c.l.b16 %v427
      %v769 = vunpack.c.l.b16 %v428
      %v770 = vunpack.c.l.b16 %v429
      %v771 = vunpack.c.l.b16 %v430
      %v772 = vunpack.c.l.b16 %v431
      %v773 = vunpack.c.l.b16 %v432
      %v774 = vunpack.c.l.b16 %v433
      %v775 = vunpack.c.l.b16 %v434
      %v776 = vunpack.c.l.b16 %v435
      %v777 = vunpack.c.l.b16 %v436
      %v778 = vunpack.c.l.b16 %v437
      %v779 = vunpack.c.l.b16 %v438
      %v780 = vunpack.c.l.b16 %v439
      %v781 = vunpack.c.l.b16 %v440
      %v782 = vunpack.c.l.b16 %v441
      %v783 = vunpack.c.l.b16 %v442
      %v784 = vunpack.c.l.b16 %v443
      %v785 = vunpack.c.l.b16 %v444
      %v786 = vunpack.c.l.b16 %v445
      %v787 = vunpack.c.l.b16 %v446
      %v788 = vunpack.c.l.b16 %v447
      %v789 = vunpack.c.l.b16 %v448
      %v790 = vunpack.c.l.b16 %v449
      %v791 = vunpack.c.l.b16 %v450
      %v792 = vunpack.c.l.b16 %v451
      %v793 = vunpack.c.l.b16 %v452
      %v794 = vunpack.c.l.b16 %v453
      %v795 = vunpack.c.l.b16 %v454
      %v796 = vunpack.c.l.b16 %v455
      %v797 = vunpack.c.l.b16 %v456
      %v798 = vunpack.c.l.b16 %v457
      %v799 = vunpack.c.l.b16 %v458
      %v800 = vunpack.c.l.b16 %v459
      %v801 = vunpack.c.l.b16 %v460
      %v802 = vunpack.c.l.b16 %v461
      %v803 = vunpack.c.l.b16 %v462
      %v804 = vunpack.c.l.b16 %v463
      %v805 = vunpack.c.l.b16 %v464
      %v806 = vunpack.c.l.b16 %v465
      %v807 = vunpack.c.l.b16 %v466
      %v808 = vunpack.c.l.b16 %v467
      %v809 = vunpack.c.l.b16 %v468
      %v810 = vunpack.c.l.b16 %v469
      %v811 = vunpack.c.l.b16 %v470
      %v812 = vunpack.c.l.b16 %v471
      %v813 = vunpack.c.l.b16 %v472
      %v814 = vunpack.c.l.b16 %v473
      %v815 = vunpack.c.l.b16 %v474
      %v816 = vunpack.c.l.b16 %v475
      %v817 = vunpack.c.l.b16 %v476
      %v818 = vunpack.c.l.b16 %v477
      %v819 = vunpack.c.l.b16 %v478
      %v820 = vunpack.c.l.b16 %v479
      %v821 = vunpack.c.l.b16 %v480
      %v822 = vunpack.c.l.b16 %v481
      %v823 = vunpack.c.l.b16 %v482
      %v824 = vunpack.c.l.b16 %v483
      %v825 = vunpack.c.l.b16 %v484
      %v826 = vunpack.c.l.b16 %v485
      %v827 = vunpack.c.l.b16 %v486
      %v828 = vunpack.c.l.b16 %v487
      %v829 = vunpack.c.l.b16 %v488
      %v830 = vunpack.c.l.b16 %v489
      %v831 = vunpack.c.l.b16 %v490
      %v832 = vpack.c.b16 %v689, %v688
      %v833 = vpack.c.b16 %v691, %v690
      %v834 = vpack.c.b16 %v693, %v692
      %v835 = vpack.c.b16 %v695, %v694
      %v836 = vpack.c.b16 %v697, %v696
      %v837 = vpack.c.b16 %v699, %v698
      %v838 = vpack.c.b16 %v701, %v700
      %v839 = vpack.c.b16 %v703, %v702
      %v840 = vpack.c.b16 %v705, %v704
      %v841 = vpack.c.b16 %v707, %v706
      %v842 = vpack.c.b16 %v709, %v708
      %v843 = vpack.c.b16 %v711, %v710
      %v844 = vpack.c.b16 %v713, %v712
      %v845 = vpack.c.b16 %v715, %v714
      %v846 = vpack.c.b16 %v717, %v716
      %v847 = vpack.c.b16 %v719, %v718
      %v848 = vpack.c.b16 %v721, %v720
      %v849 = vpack.c.b16 %v723, %v722
      %v850 = vpack.c.b16 %v725, %v724
      %v851 = vpack.c.b16 %v727, %v726
      %v852 = vpack.c.b16 %v729, %v728
      %v853 = vpack.c.b16 %v731, %v730
      %v854 = vpack.c.b16 %v733, %v732
      %v855 = vpack.c.b16 %v735, %v734
      %v856 = vpack.c.b16 %v737, %v736
      %v857 = vpack.c.b16 %v739, %v738
      %v858 = vpack.c.b16 %v741, %v740
      %v859 = vpack.c.b16 %v743, %v742
      %v860 = vpack.c.b16 %v745, %v744
      %v861 = vpack.c.b16 %v747, %v746
      %v862 = vpack.c.b16 %v749, %v748
      %v863 = vpack.c.b16 %v751, %v750
      %v864 = vpack.c.b16 %v753, %v752
      %v865 = vpack.c.b16 %v755, %v754
      %v866 = vpack.c.b16 %v757, %v756
      %v867 = vpack.c.b16 %v759, %v758
      %v868 = vpack.c.b16 %v761, %v760
      %v869 = vpack.c.b16 %v763, %v762
      %v870 = vpack.c.b16 %v765, %v764
      %v871 = vpack.c.b16 %v767, %v766
      %v872 = vpack.c.b16 %v769, %v768
      %v873 = vpack.c.b16 %v771, %v770
      %v874 = vpack.c.b16 %v773, %v772
      %v875 = vpack.c.b16 %v775, %v774
      %v876 = vpack.c.b16 %v777, %v776
      %v877 = vpack.c.b16 %v779, %v778
      %v878 = vpack.c.b16 %v781, %v780
      %v879 = vpack.c.b16 %v783, %v782
      %v880 = vpack.c.b16 %v785, %v784
      %v881 = vpack.c.b16 %v787, %v786
      %v882 = vpack.c.b16 %v789, %v788
      %v883 = vpack.c.b16 %v791, %v790
      %v884 = vpack.c.b16 %v793, %v792
      %v885 = vpack.c.b16 %v795, %v794
      %v886 = vpack.c.b16 %v797, %v796
      %v887 = vpack.c.b16 %v799, %v798
      %v888 = vpack.c.b16 %v801, %v800
      %v889 = vpack.c.b16 %v803, %v802
      %v890 = vpack.c.b16 %v805, %v804
      %v891 = vpack.c.b16 %v807, %v806
      %v892 = vpack.c.b16 %v809, %v808
      %v893 = vpack.c.b16 %v811, %v810
      %v894 = vpack.c.b16 %v813, %v812
      %v895 = vpack.c.b16 %v815, %v814
      %v896 = vpack.c.b16 %v817, %v816
      %v897 = vpack.c.b16 %v819, %v818
      %v898 = vpack.c.b16 %v821, %v820
      %v899 = vpack.c.b16 %v823, %v822
      %v900 = vpack.c.b16 %v825, %v824
      %v901 = vpack.c.b16 %v827, %v826
      %v902 = vpack.c.b16 %v829, %v828
      %v903 = vpack.c.b16 %v831, %v830
      %976 = vmatprep.subr.bf16.mxu0 0
      %977 = vmatpush1.bf16.msra.mxu0 %v832
      %978 = vmatprep.subr.bf16.mxu0 0
      %979 = vmatpush1.bf16.msra.mxu0 %v833
      %980 = vmatprep.subr.bf16.mxu0 0
      %981 = vmatpush1.bf16.msra.mxu0 %v834
      %982 = vmatprep.subr.bf16.mxu0 0
      %983 = vmatpush1.bf16.msra.mxu0 %v835
      %984 = vmatprep.subr.bf16.mxu0 0
      %985 = vmatpush1.bf16.msra.mxu0 %v836
      %986 = vmatprep.subr.bf16.mxu0 0
      %987 = vmatpush1.bf16.msra.mxu0 %v837
      %988 = vmatprep.subr.bf16.mxu0 0
      %989 = vmatpush1.bf16.msra.mxu0 %v838
      %990 = vmatprep.subr.bf16.mxu0 0
      %991 = vmatpush1.bf16.msra.mxu0 %v839
      %992 = vmatprep.subr.bf16.mxu0 0
      %993 = vmatpush1.bf16.msra.mxu0 %v840
      %994 = vmatprep.subr.bf16.mxu0 0
      %995 = vmatpush1.bf16.msra.mxu0 %v841
      %996 = vmatprep.subr.bf16.mxu0 0
      %997 = vmatpush1.bf16.msra.mxu0 %v842
      %998 = vmatprep.subr.bf16.mxu0 0
      %999 = vmatpush1.bf16.msra.mxu0 %v843
      %1000 = vmatprep.subr.bf16.mxu0 0
      %1001 = vmatpush1.bf16.msra.mxu0 %v844
      %1002 = vmatprep.subr.bf16.mxu0 0
      %1003 = vmatpush1.bf16.msra.mxu0 %v845
      %1004 = vmatprep.subr.bf16.mxu0 0
      %1005 = vmatpush1.bf16.msra.mxu0 %v846
      %1006 = vmatprep.subr.bf16.mxu0 0
      %1007 = vmatpush1.bf16.msra.mxu0 %v847
      %1008 = vmatprep.mubr.bf16.mxu0 %v509
      %1009 = vmatmul.mubr.bf16.gmra.mrb[0].mxu0 %v501
      %v1010 = vpop.f32.mrb[0].mxu0
      %v1011 = vadd.f32 0.0, %v1010
      %v1012 = vpop.f32.mrb[0].mxu0
      %v1013 = vpop.f32.mrb[0].mxu0
      %v1014 = vpop.f32.mrb[0].mxu0
      %1015 = vdwg.mxu0
      %1016 = vmatprep.subr.bf16.mxu0 0
      %1017 = vmatpush1.bf16.msra.mxu0 %v848
      %1018 = vmatprep.subr.bf16.mxu0 0
      %1019 = vmatpush1.bf16.msra.mxu0 %v849
      %1020 = vmatprep.subr.bf16.mxu0 0
      %1021 = vmatpush1.bf16.msra.mxu0 %v850
      %1022 = vmatprep.subr.bf16.mxu0 0
      %1023 = vmatpush1.bf16.msra.mxu0 %v851
      %1024 = vmatprep.subr.bf16.mxu0 0
      %1025 = vmatpush1.bf16.msra.mxu0 %v852
      %1026 = vmatprep.subr.bf16.mxu0 0
      %1027 = vmatpush1.bf16.msra.mxu0 %v853
      %1028 = vmatprep.subr.bf16.mxu0 0
      %1029 = vmatpush1.bf16.msra.mxu0 %v854
      %1030 = vmatprep.subr.bf16.mxu0 0
      %1031 = vmatpush1.bf16.msra.mxu0 %v855
      %1032 = vmatprep.subr.bf16.mxu0 0
      %1033 = vmatpush1.bf16.msra.mxu0 %v856
      %1034 = vmatprep.subr.bf16.mxu0 0
      %1035 = vmatpush1.bf16.msra.mxu0 %v857
      %1036 = vmatprep.subr.bf16.mxu0 0
      %1037 = vmatpush1.bf16.msra.mxu0 %v858
      %1038 = vmatprep.subr.bf16.mxu0 0
      %1039 = vmatpush1.bf16.msra.mxu0 %v859
      %1040 = vmatprep.subr.bf16.mxu0 0
      %1041 = vmatpush1.bf16.msra.mxu0 %v860
      %1042 = vmatprep.subr.bf16.mxu0 0
      %1043 = vmatpush1.bf16.msra.mxu0 %v861
      %1044 = vmatprep.subr.bf16.mxu0 0
      %1045 = vmatpush1.bf16.msra.mxu0 %v862
      %1046 = vmatprep.subr.bf16.mxu0 0
      %1047 = vmatpush1.bf16.msra.mxu0 %v863
      %1048 = vmatprep.mubr.bf16.mxu0 %v510
      %1049 = vmatmul.mubr.bf16.gmra.mrb[0].mxu0 %v508
      %v1050 = vpop.f32.mrb[0].mxu0
      %v1051 = vadd.f32 %v1011, %v1050
      %v1052 = vpop.f32.mrb[0].mxu0
      %v1053 = vpop.f32.mrb[0].mxu0
      %v1054 = vpop.f32.mrb[0].mxu0
      %1055 = vdwg.mxu0
      %1056 = vmatprep.subr.bf16.mxu0 0
      %1057 = vmatpush1.bf16.msra.mxu0 %v864
      %1058 = vmatprep.subr.bf16.mxu0 0
      %1059 = vmatpush1.bf16.msra.mxu0 %v865
      %1060 = vmatprep.subr.bf16.mxu0 0
      %1061 = vmatpush1.bf16.msra.mxu0 %v866
      %1062 = vmatprep.subr.bf16.mxu0 0
      %1063 = vmatpush1.bf16.msra.mxu0 %v867
      %1064 = vmatprep.subr.bf16.mxu0 0
      %1065 = vmatpush1.bf16.msra.mxu0 %v868
      %1066 = vmatprep.subr.bf16.mxu0 0
      %1067 = vmatpush1.bf16.msra.mxu0 %v869
      %1068 = vmatprep.subr.bf16.mxu0 0
      %1069 = vmatpush1.bf16.msra.mxu0 %v870
      %1070 = vmatprep.subr.bf16.mxu0 0
      %1071 = vmatpush1.bf16.msra.mxu0 %v871
      %1072 = vmatprep.subr.bf16.mxu0 0
      %1073 = vmatpush1.bf16.msra.mxu0 %v872
      %1074 = vmatprep.subr.bf16.mxu0 0
      %1075 = vmatpush1.bf16.msra.mxu0 %v873
      %1076 = vmatprep.subr.bf16.mxu0 0
      %1077 = vmatpush1.bf16.msra.mxu0 %v874
      %1078 = vmatprep.subr.bf16.mxu0 0
      %1079 = vmatpush1.bf16.msra.mxu0 %v875
      %1080 = vmatprep.subr.bf16.mxu0 0
      %1081 = vmatpush1.bf16.msra.mxu0 %v876
      %1082 = vmatprep.subr.bf16.mxu0 0
      %1083 = vmatpush1.bf16.msra.mxu0 %v877
      %1084 = vmatprep.subr.bf16.mxu0 0
      %1085 = vmatpush1.bf16.msra.mxu0 %v878
      %1086 = vmatprep.subr.bf16.mxu0 0
      %1087 = vmatpush1.bf16.msra.mxu0 %v879
      %1088 = vmatprep.mubr.bf16.mxu0 %v526
      %1089 = vmatmul.mubr.bf16.gmra.mrb[0].mxu0 %v518
      %v1090 = vpop.f32.mrb[0].mxu0
      %v1091 = vadd.f32 %v1051, %v1090
      %v1092 = vpop.f32.mrb[0].mxu0
      %v1093 = vpop.f32.mrb[0].mxu0
      %v1094 = vpop.f32.mrb[0].mxu0
      %1095 = vdwg.mxu0
      %1096 = vmatprep.subr.bf16.mxu0 0
      %1097 = vmatpush1.bf16.msra.mxu0 %v880
      %1098 = vmatprep.subr.bf16.mxu0 0
      %1099 = vmatpush1.bf16.msra.mxu0 %v881
      %1100 = vmatprep.subr.bf16.mxu0 0
      %1101 = vmatpush1.bf16.msra.mxu0 %v882
      %1102 = vmatprep.subr.bf16.mxu0 0
      %1103 = vmatpush1.bf16.msra.mxu0 %v883
      %1104 = vmatprep.subr.bf16.mxu0 0
      %1105 = vmatpush1.bf16.msra.mxu0 %v884
      %1106 = vmatprep.subr.bf16.mxu0 0
      %1107 = vmatpush1.bf16.msra.mxu0 %v885
      %1108 = vmatprep.subr.bf16.mxu0 0
      %1109 = vmatpush1.bf16.msra.mxu0 %v886
      %1110 = vmatprep.subr.bf16.mxu0 0
      %1111 = vmatpush1.bf16.msra.mxu0 %v887
      %1112 = vmatprep.subr.bf16.mxu0 0
      %1113 = vmatpush1.bf16.msra.mxu0 %v888
      %1114 = vmatprep.subr.bf16.mxu0 0
      %1115 = vmatpush1.bf16.msra.mxu0 %v889
      %1116 = vmatprep.subr.bf16.mxu0 0
      %1117 = vmatpush1.bf16.msra.mxu0 %v890
      %1118 = vmatprep.subr.bf16.mxu0 0
      %1119 = vmatpush1.bf16.msra.mxu0 %v891
      %1120 = vmatprep.subr.bf16.mxu0 0
      %1121 = vmatpush1.bf16.msra.mxu0 %v892
      %1122 = vmatprep.subr.bf16.mxu0 0
      %1123 = vmatpush1.bf16.msra.mxu0 %v893
      %1124 = vmatprep.subr.bf16.mxu0 0
      %1125 = vmatpush1.bf16.msra.mxu0 %v894
      %1126 = vmatprep.subr.bf16.mxu0 0
      %1127 = vmatpush1.bf16.msra.mxu0 %v895
      %1128 = vmatprep.mubr.bf16.mxu0 %v527
      %1129 = vmatmul.mubr.bf16.gmra.mrb[0].mxu0 %v525
      %v1130 = vpop.f32.mrb[0].mxu0
      %v1131 = vadd.f32 %v1091, %v1130
      %v1132 = vpop.f32.mrb[0].mxu0
      %v1133 = vpop.f32.mrb[0].mxu0
      %v1134 = vpop.f32.mrb[0].mxu0
      %1135 = vdwg.mxu0
      %1136 = vmatprep.subr.bf16.mxu0 0
      %1137 = vmatpush1.bf16.msra.mxu0 %v896
      %1138 = vmatprep.subr.bf16.mxu0 0
      %1139 = vmatpush1.bf16.msra.mxu0 %v897
      %1140 = vmatprep.subr.bf16.mxu0 0
      %1141 = vmatpush1.bf16.msra.mxu0 %v898
      %1142 = vmatprep.subr.bf16.mxu0 0
      %1143 = vmatpush1.bf16.msra.mxu0 %v899
      %1144 = vmatprep.subr.bf16.mxu0 0
      %1145 = vmatpush1.bf16.msra.mxu0 %v900
      %1146 = vmatprep.subr.bf16.mxu0 0
      %1147 = vmatpush1.bf16.msra.mxu0 %v901
      %1148 = vmatprep.subr.bf16.mxu0 0
      %1149 = vmatpush1.bf16.msra.mxu0 %v902
      %1150 = vmatprep.subr.bf16.mxu0 0
      %1151 = vmatpush1.bf16.msra.mxu0 %v903
      %1152 = vmatprep.subr.bf16.mxu0 0
      %1153 = vmatpush1.bf16.msra.mxu0 0
      %1154 = vmatprep.subr.bf16.mxu0 0
      %1155 = vmatpush1.bf16.msra.mxu0 0
      %1156 = vmatprep.subr.bf16.mxu0 0
      %1157 = vmatpush1.bf16.msra.mxu0 0
      %1158 = vmatprep.subr.bf16.mxu0 0
      %1159 = vmatpush1.bf16.msra.mxu0 0
      %1160 = vmatprep.subr.bf16.mxu0 0
      %1161 = vmatpush1.bf16.msra.mxu0 0
      %1162 = vmatprep.subr.bf16.mxu0 0
      %1163 = vmatpush1.bf16.msra.mxu0 0
      %1164 = vmatprep.subr.bf16.mxu0 0
      %1165 = vmatpush1.bf16.msra.mxu0 0
      %1166 = vmatprep.subr.bf16.mxu0 0
      %1167 = vmatpush1.bf16.msra.mxu0 0
      %1168 = vmatprep.mubr.bf16.mxu0 0
      %1169 = vmatmul.mubr.bf16.gmra.mrb[0].mxu0 %v534
      %v1170 = vpop.f32.mrb[0].mxu0
      %v1171 = vadd.f32 %v1131, %v1170
      %v1172 = vpop.f32.mrb[0].mxu0
      %v1173 = vpop.f32.mrb[0].mxu0
      %v1174 = vpop.f32.mrb[0].mxu0
      %1175 = vdwg.mxu0
      %v1176 = vadd.f32 %v343, %v1171
      %1177 = vst [vmem:[#allocation2] sm:$0xf] %v1176
      %p1178 = scmp.eq.s32.totalorder %s24, 2
      // Predicated region
      $region41: #{_lambda_.20} parent=35 // pred_check
        %p1179 = pneg %p1178
      $region42: #{_lambda_.20} parent=35 // pred_check_branch
        %1181 = sbr.rel (%p1179) target = $region44
      $region43: #{_lambda_.20} parent=35 // pred_region
        %v1182 = vld [vmem:[#allocation2] sm:$0xf]
        %v1183 = vld [vmem:[%s2] sm:$0x1]
        %v1185 = vlaneseq
        %v1186 = vshrl.u32 %v1185, 7
        %v1187 = vsub.s32 0, %v1186
        %v1188 = vrot.slane %v1183, %v1187
        %v1190 = vadd.f32 %v1182, %v1188
        %v1191 = vld [vmem:[%s325] sm:$0x3]
        %v1192 = vunpack.c.l.bf16 %v1191
        %v1193 = vadd.f32 %v1190, %v1192
        %v1194 = vmax.f32 %v1193, 0.0
        %v1195 = vpack.c.bf16 %v1194, %v1194
        %1196 = vst [vmem:[%s336] sm:$0x3] %v1195
      $region44: #{_lambda_.20} parent=35 // pred_fallthru
        _
      %p1197 = scmp.lt.s32.totalorder %s21, 1
      %s1198 = scalar_select %p1197, %s21, 1
      %p1199 = scmp.lt.s32.totalorder %s22, 1
      %s1200 = scalar_select %p1199, %s22, 1
      %p1201 = scmp.lt.s32.totalorder %s23, 0
      %s1202 = scalar_select %p1201, %s23, 0
      %s1203 = sadd.s32 %s1202, %s1200
      %s1204 = smul.addr %s1198, 2
      %s1205 = sadd.s32 %s1203, %s1204
      %s1206 = smul.addr %s1205, 2
      %s1207 = scalar_lea.vmem %s4, %s1206
      // Predicated region
      $region45: #{_lambda_.20} parent=35 // pred_check
        %p1208 = pneg %p172
      $region46: #{_lambda_.20} parent=35 // pred_check_branch
        %1210 = sbr.rel (%p1208) target = $region48
      $region47: #{_lambda_.20} parent=35 // pred_region
        _
      $region48: #{_lambda_.20} parent=35 // pred_fallthru
        _
    $region36: #{_lambda_.20} parent=5 // pred_fallthru
      _
    %p1211 = scmp.le.s32.totalorder 2, %s10
    // Predicated region
    $region49: #{_lambda_.20} parent=5 // pred_check
      %p1212 = pneg %p1211
    $region50: #{_lambda_.20} parent=5 // pred_check_branch
      %1214 = sbr.rel (%p1212) target = $region52
    $region51: #{_lambda_.20} parent=5 // pred_region
      %s1215 = ssub.s32 %s10, 2
      // Predicated region
      $region53: #{_lambda_.20} parent=51 // pred_check
        %p1216 = pneg %p178
      $region54: #{_lambda_.20} parent=51 // pred_check_branch
        %1218 = sbr.rel (%p1216) target = $region56
      $region55: #{_lambda_.20} parent=51 // pred_region
        %p1219 = scmp.lt.s32.totalorder %s25, 1
        %s1220 = scalar_select %p1219, %s25, 1
        %p1221 = scmp.lt.s32.totalorder %s26, 1
        %s1222 = scalar_select %p1221, %s26, 1
        %p1223 = scmp.lt.s32.totalorder %s27, 0
        %s1224 = scalar_select %p1223, %s27, 0
        %s1225 = sadd.s32 %s1224, %s1222
        %s1226 = smul.addr %s1220, 2
        %s1227 = sadd.s32 %s1225, %s1226
        %s1228 = smul.addr %s1227, 2
        %s1229 = scalar_lea.vmem %s4, %s1228
      $region56: #{_lambda_.20} parent=51 // pred_fallthru
        _
    $region52: #{_lambda_.20} parent=5 // pred_fallthru
      _
  $region6: #{_lambda_.20} parent=0 // loop_footer
    %s14 = sadd.s32 1, %s10
  $region7: #{_lambda_.20} parent=0 // loop_footer_branch
    %9 = sbr.rel target = $region3
  $region8: #{_lambda_.20} parent=0 // loop_exit
    _

// kernel: _lambda_.21
$region0: #{_lambda_.21}
  #allocation0 [shape = 'u32[]', space=smem, size = 0x4, offset = 0x4, fixed_abs, tag = 'smem constant byte address 0x4 - core index']
  #allocation1 [shape = 'u32[144,128]{1,0:T(1,128)}', space=vmem, size = 0x12000, scoped, tag = 'internal scratch']
  #allocation2 [shape = 'f32[4,128]{1,0:T(4,128)}', space=vmem, size = 0x800, scoped, tag = 'scratch operand']
  %s0 = inlined_call_operand.vmem [shape: bf16[2,4,4,1152], index: 0, kind: input, shape index: {}]
  %s1 = inlined_call_operand.vmem [shape: bf16[3,1152,128], index: 1, kind: input, shape index: {}]
  %s2 = inlined_call_operand.vmem [shape: f32[1,128], index: 2, kind: input, shape index: {}]
  %s3 = inlined_call_operand.vmem [shape: bf16[2,2,4,128], index: 3, kind: output, shape index: {}]
  %s4 = sld [smem:[#allocation0]]
  $region53: #{_lambda_.21} parent=0
    _
  %s6 = ssub.s32 1, %s4
  %s7 = scalar_select 0, %s6, %s4
  loop: start=0, step=1, limit=14
  $region2: #{_lambda_.21} parent=0 // loop_pre_header
    _
  $region3: #{_lambda_.21} parent=0 // loop_header
    %s9 = sphi 0, %s13
    %p10 = scmp.ge.s32.totalorder %s9, 14
    %s16 = sphi 0, %s42
    %s17 = sphi 0, %s38
    %s18 = sphi 0, %s34
    %s19 = sphi 0, %s30
    %s20 = sphi 0, %s16
    %s21 = sphi 0, %s17
    %s22 = sphi 0, %s18
    %s23 = sphi 0, %s19
    %s24 = sphi 0, %s20
    %s25 = sphi 0, %s21
    %s26 = sphi 0, %s22
    %s27 = sphi 0, %s23
    %s51 = sphi 0, %s53
    %s54 = sphi 0, %s51
    %s55 = sphi 0, %s54
    %s71 = sphi 0, %s55
    %s77 = sphi 0, %s79
    %s80 = sphi 0, %s77
    %s81 = sphi 0, %s80
    %s97 = sphi 0, %s81
    %s101 = sphi 0, %s101
    %s103 = sphi 0, %s101
    %s104 = sphi 0, %s103
    %s118 = sphi 0, %s104
    %s128 = sphi 0, %s130
    %s131 = sphi 0, %s128
    %s132 = sphi 0, %s131
    %s148 = sphi 0, %s132
  $region4: #{_lambda_.21} parent=0 // loop_header_branch
    %12 = sbr.rel (%p10) target = $region8
  $region5: #{_lambda_.21} parent=0 // loop_body
    %s14 = ssub.s32 %s9, 1
    %s15 = ssub.s32 %s9, 2
    %s28 = sadd.s32 1, %s19
    %p29 = scmp.ge.s32.totalorder %s28, 3
    %s30 = scalar_select %p29, 0, %s28
    %s31 = sadd.s32 1, %s18
    %s32 = scalar_select %p29, %s31, %s18
    %p33 = scmp.ge.s32.totalorder %s32, 1
    %s34 = scalar_select %p33, 0, %s32
    %s35 = sadd.s32 1, %s17
    %s36 = scalar_select %p33, %s35, %s17
    %p37 = scmp.ge.s32.totalorder %s36, 2
    %s38 = scalar_select %p37, 0, %s36
    %s39 = sadd.s32 1, %s16
    %s40 = scalar_select %p37, %s39, %s16
    %p41 = scmp.ge.s32.totalorder %s40, 2
    %s42 = scalar_select %p41, 0, %s40
    %s43 = sadd.s32 %s17, %s19
    %s44 = sadd.s32 %s38, %s30
    %s45 = ssub.s32 %s16, %s42
    %s46 = ssub.s32 %s43, %s44
    %s47 = sor.u32 %s45, %s46
    %s48 = ssub.s32 %s18, %s34
    %s49 = sor.u32 %s47, %s48
    %p50 = scmp.eq.s32.totalorder %s49, 0
    %s52 = sadd.s32 %s51, 1
    %s53 = scalar_select %p50, %s51, %s52
    %p56 = pneg %p50
    %p57 = scmp.eq.s32.totalorder %s9, 11
    %p58 = por %p56, %p57
    %p59 = scmp.ne.s32.totalorder %s51, %s54
    %p60 = scmp.eq.s32.totalorder %s9, 0
    %p61 = por %p59, %p60
    %p62 = scmp.ne.s32.totalorder %s51, %s54
    %p63 = scmp.eq.s32.totalorder %s14, 11
    %p64 = por %p62, %p63
    %p65 = scmp.ne.s32.totalorder %s54, %s55
    %p66 = scmp.eq.s32.totalorder %s14, 0
    %p67 = por %p65, %p66
    %p68 = scmp.ne.s32.totalorder %s54, %s55
    %p69 = scmp.eq.s32.totalorder %s15, 11
    %p70 = por %p68, %p69
    %p72 = scmp.ne.s32.totalorder %s55, %s71
    %p73 = scmp.eq.s32.totalorder %s15, 0
    %p74 = por %p72, %p73
    %s75 = ssub.s32 %s19, %s30
    %p76 = scmp.eq.s32.totalorder %s75, 0
    %s78 = sadd.s32 %s77, 1
    %s79 = scalar_select %p76, %s77, %s78
    %p82 = pneg %p76
    %p83 = scmp.eq.s32.totalorder %s9, 11
    %p84 = por %p82, %p83
    %p85 = scmp.ne.s32.totalorder %s77, %s80
    %p86 = scmp.eq.s32.totalorder %s9, 0
    %p87 = por %p85, %p86
    %p88 = scmp.ne.s32.totalorder %s77, %s80
    %p89 = scmp.eq.s32.totalorder %s14, 11
    %p90 = por %p88, %p89
    %p91 = scmp.ne.s32.totalorder %s80, %s81
    %p92 = scmp.eq.s32.totalorder %s14, 0
    %p93 = por %p91, %p92
    %p94 = scmp.ne.s32.totalorder %s80, %s81
    %p95 = scmp.eq.s32.totalorder %s15, 11
    %p96 = por %p94, %p95
    %p98 = scmp.ne.s32.totalorder %s81, %s97
    %p99 = scmp.eq.s32.totalorder %s15, 0
    %p100 = por %p98, %p99
    %s102 = sadd.s32 %s101, 1
    %p105 = scmp.eq.s32.totalorder %s9, 11
    %p106 = scmp.ne.s32.totalorder %s101, %s103
    %p107 = scmp.eq.s32.totalorder %s9, 0
    %p108 = por %p106, %p107
    %p109 = scmp.ne.s32.totalorder %s101, %s103
    %p110 = scmp.eq.s32.totalorder %s14, 11
    %p111 = por %p109, %p110
    %p112 = scmp.ne.s32.totalorder %s103, %s104
    %p113 = scmp.eq.s32.totalorder %s14, 0
    %p114 = por %p112, %p113
    %p115 = scmp.ne.s32.totalorder %s103, %s104
    %p116 = scmp.eq.s32.totalorder %s15, 11
    %p117 = por %p115, %p116
    %p119 = scmp.ne.s32.totalorder %s104, %s118
    %p120 = scmp.eq.s32.totalorder %s15, 0
    %p121 = por %p119, %p120
    %s122 = ssub.s32 %s16, %s42
    %s123 = ssub.s32 %s17, %s38
    %s124 = sor.u32 %s122, %s123
    %s125 = ssub.s32 %s18, %s34
    %s126 = sor.u32 %s124, %s125
    %p127 = scmp.eq.s32.totalorder %s126, 0
    %s129 = sadd.s32 %s128, 1
    %s130 = scalar_select %p127, %s128, %s129
    %p133 = pneg %p127
    %p134 = scmp.eq.s32.totalorder %s9, 11
    %p135 = por %p133, %p134
    %p136 = scmp.ne.s32.totalorder %s128, %s131
    %p137 = scmp.eq.s32.totalorder %s9, 0
    %p138 = por %p136, %p137
    %p139 = scmp.ne.s32.totalorder %s128, %s131
    %p140 = scmp.eq.s32.totalorder %s14, 11
    %p141 = por %p139, %p140
    %p142 = scmp.ne.s32.totalorder %s131, %s132
    %p143 = scmp.eq.s32.totalorder %s14, 0
    %p144 = por %p142, %p143
    %p145 = scmp.ne.s32.totalorder %s131, %s132
    %p146 = scmp.eq.s32.totalorder %s15, 11
    %p147 = por %p145, %p146
    %p149 = scmp.ne.s32.totalorder %s132, %s148
    %p150 = scmp.eq.s32.totalorder %s15, 0
    %p151 = por %p149, %p150
    %p152 = scmp.le.s32.totalorder 1, %s9
    %p153 = scmp.lt.s32.totalorder %s9, 13
    %p154 = pnand %p152, %p153
    %p155 = pneg %p154
    // Predicated region
    $region9: #{_lambda_.21} parent=5 // pred_check
      _
    $region10: #{_lambda_.21} parent=5 // pred_check_branch
      %157 = sbr.rel (%p154) target = $region12
    $region11: #{_lambda_.21} parent=5 // pred_region
      %s158 = ssub.s32 %s9, 1
      // Predicated region
      $region13: #{_lambda_.21} parent=11 // pred_check
        %p159 = pneg %p114
      $region14: #{_lambda_.21} parent=11 // pred_check_branch
        %161 = sbr.rel (%p159) target = $region16
      $region15: #{_lambda_.21} parent=11 // pred_region
        _
      $region16: #{_lambda_.21} parent=11 // pred_fallthru
        _
    $region12: #{_lambda_.21} parent=5 // pred_fallthru
      _
    %p162 = scmp.lt.s32.totalorder %s9, 12
    // Predicated region
    $region17: #{_lambda_.21} parent=5 // pred_check
      %p163 = pneg %p162
    $region18: #{_lambda_.21} parent=5 // pred_check_branch
      %165 = sbr.rel (%p163) target = $region20
    $region19: #{_lambda_.21} parent=5 // pred_region
      // Predicated region
      $region21: #{_lambda_.21} parent=19 // pred_check
        %p166 = pneg %p61
      $region22: #{_lambda_.21} parent=19 // pred_check_branch
        %168 = sbr.rel (%p166) target = $region24
      $region23: #{_lambda_.21} parent=19 // pred_region
        %s169 = sadd.s32 %s17, %s19
        %p170 = scmp.lt.s32.totalorder %s16, 1
        %s171 = scalar_select %p170, %s16, 1
        %p172 = scmp.lt.s32.totalorder %s169, 3
        %s173 = scalar_select %p172, %s169, 3
        %p174 = scmp.lt.s32.totalorder %s18, 0
        %s175 = scalar_select %p174, %s18, 0
        %s176 = smul.addr %s175, 9
        %s177 = smul.addr %s173, 9
        %s178 = sadd.s32 %s176, %s177
        %s179 = smul.addr %s171, 36
        %s180 = sadd.s32 %s178, %s179
        %s181 = smul.addr %s180, 2
        %s182 = scalar_lea.vmem %s0, %s181
        %s183 = sadd.s32 %s17, %s19
      $region24: #{_lambda_.21} parent=19 // pred_fallthru
        _
      // Predicated region
      $region25: #{_lambda_.21} parent=19 // pred_check
        %p184 = pneg %p87
      $region26: #{_lambda_.21} parent=19 // pred_check_branch
        %186 = sbr.rel (%p184) target = $region28
      $region27: #{_lambda_.21} parent=19 // pred_region
        %p187 = scmp.lt.s32.totalorder %s19, 2
        %s188 = scalar_select %p187, %s19, 2
        %s189 = smul.addr %s188, 144
        %s190 = smul.addr %s189, 4
        %s191 = scalar_lea.vmem %s1, %s190
      $region28: #{_lambda_.21} parent=19 // pred_fallthru
        _
    $region20: #{_lambda_.21} parent=5 // pred_fallthru
      _
    %p192 = scmp.le.s32.totalorder 1, %s9
    %p193 = scmp.lt.s32.totalorder %s9, 13
    %p194 = pnand %p192, %p193
    %p195 = pneg %p194
    // Predicated region
    $region29: #{_lambda_.21} parent=5 // pred_check
      _
    $region30: #{_lambda_.21} parent=5 // pred_check_branch
      %197 = sbr.rel (%p194) target = $region32
    $region31: #{_lambda_.21} parent=5 // pred_region
      %s198 = ssub.s32 %s9, 1
      %s199 = sadd.s32 %s21, %s23
      %p200 = scmp.lt.s32.totalorder %s20, 1
      %s201 = scalar_select %p200, %s20, 1
      %p202 = scmp.lt.s32.totalorder %s199, 3
      %s203 = scalar_select %p202, %s199, 3
      %p204 = scmp.lt.s32.totalorder %s22, 0
      %s205 = scalar_select %p204, %s22, 0
      %s206 = smul.addr %s205, 9
      %s207 = smul.addr %s203, 9
      %s208 = sadd.s32 %s206, %s207
      %s209 = smul.addr %s201, 36
      %s210 = sadd.s32 %s208, %s209
      %s211 = smul.addr %s210, 2
      %s212 = scalar_lea.vmem %s0, %s211
      %p213 = pneg %p67
      %p214 = pneg %p64
      %p215 = scmp.lt.s32.totalorder %s23, 2
      %s216 = scalar_select %p215, %s23, 2
      %s217 = smul.addr %s216, 144
      %s218 = smul.addr %s217, 4
      %s219 = scalar_lea.vmem %s1, %s218
      %p220 = pneg %p93
      %p221 = pneg %p90
      %p222 = pneg %p114
      %p223 = pneg %p111
      %p224 = pneg %p144
      %p225 = pneg %p141
      %p226 = scmp.lt.s32.totalorder %s20, 1
      %s227 = scalar_select %p226, %s20, 1
      %p228 = scmp.lt.s32.totalorder %s21, 1
      %s229 = scalar_select %p228, %s21, 1
      %p230 = scmp.lt.s32.totalorder %s22, 0
      %s231 = scalar_select %p230, %s22, 0
      %s232 = sadd.s32 %s231, %s229
      %s233 = smul.addr %s227, 2
      %s234 = sadd.s32 %s232, %s233
      %s235 = smul.addr %s234, 2
      %s236 = scalar_lea.vmem %s3, %s235
      %s237 = sadd.s32 %s21, %s23
      %p238 = scmp.lt.s32.totalorder %s20, 1
      %s239 = scalar_select %p238, %s20, 1
      %p240 = scmp.lt.s32.totalorder %s237, 3
      %s241 = scalar_select %p240, %s237, 3
      %p242 = scmp.lt.s32.totalorder %s22, 0
      %s243 = scalar_select %p242, %s22, 0
      %s244 = smul.addr %s243, 9
      %s245 = smul.addr %s241, 9
      %s246 = sadd.s32 %s244, %s245
      %s247 = smul.addr %s239, 36
      %s248 = sadd.s32 %s246, %s247
      %s249 = smul.addr %s248, 2
      %s250 = scalar_lea.vmem %s0, %s249
      %s251 = sadd.s32 %s21, %s23
      %p252 = scmp.lt.s32.totalorder %s23, 2
      %s253 = scalar_select %p252, %s23, 2
      %s254 = smul.addr %s253, 144
      %s255 = smul.addr %s254, 4
      %s256 = scalar_lea.vmem %s1, %s255
      %p257 = scmp.lt.s32.totalorder %s20, 1
      %s258 = scalar_select %p257, %s20, 1
      %p259 = scmp.lt.s32.totalorder %s21, 1
      %s260 = scalar_select %p259, %s21, 1
      %p261 = scmp.lt.s32.totalorder %s22, 0
      %s262 = scalar_select %p261, %s22, 0
      %s263 = sadd.s32 %s262, %s260
      %s264 = smul.addr %s258, 2
      %s265 = sadd.s32 %s263, %s264
      %s266 = smul.addr %s265, 2
      %s267 = scalar_lea.vmem %s3, %s266
      %p269 = scmp.eq.s32.totalorder %s23, 0
      // Predicated region
      $region33: #{_lambda_.21} parent=31 // pred_check
        %p270 = pneg %p269
      $region34: #{_lambda_.21} parent=31 // pred_check_branch
        %272 = sbr.rel (%p270) target = $region36
      $region35: #{_lambda_.21} parent=31 // pred_region
        %273 = vst [vmem:[#allocation2] sm:$0xf] 0.0
      $region36: #{_lambda_.21} parent=31 // pred_fallthru
        _
      %v274 = vld [vmem:[#allocation2] sm:$0xf]
      %v275 = vld [vmem:[%s250] sm:$0xff]
      %v276 = vld [vmem:[%s250 + $0x8] sm:$0xff]
      %v277 = vld [vmem:[%s250 + $0x10] sm:$0x3]
      %v278 = vld [vmem:[%s256] sm:$0xf]
      %v279 = vld [vmem:[%s256 + $0x4] sm:$0xf]
      %v280 = vld [vmem:[%s256 + $0x8] sm:$0xf]
      %v281 = vld [vmem:[%s256 + $0xc] sm:$0xf]
      %v282 = vld [vmem:[%s256 + $0x10] sm:$0xf]
      %v283 = vld [vmem:[%s256 + $0x14] sm:$0xf]
      %v284 = vld [vmem:[%s256 + $0x18] sm:$0xf]
      %v285 = vld [vmem:[%s256 + $0x1c] sm:$0xf]
      %v286 = vld [vmem:[%s256 + $0x20] sm:$0xf]
      %v287 = vld [vmem:[%s256 + $0x24] sm:$0xf]
      %v288 = vld [vmem:[%s256 + $0x28] sm:$0xf]
      %v289 = vld [vmem:[%s256 + $0x2c] sm:$0xf]
      %v290 = vld [vmem:[%s256 + $0x30] sm:$0xf]
      %v291 = vld [vmem:[%s256 + $0x34] sm:$0xf]
      %v292 = vld [vmem:[%s256 + $0x38] sm:$0xf]
      %v293 = vld [vmem:[%s256 + $0x3c] sm:$0xf]
      %v294 = vld [vmem:[%s256 + $0x40] sm:$0xf]
      %v295 = vld [vmem:[%s256 + $0x44] sm:$0xf]
      %v296 = vld [vmem:[%s256 + $0x48] sm:$0xf]
      %v297 = vld [vmem:[%s256 + $0x4c] sm:$0xf]
      %v298 = vld [vmem:[%s256 + $0x50] sm:$0xf]
      %v299 = vld [vmem:[%s256 + $0x54] sm:$0xf]
      %v300 = vld [vmem:[%s256 + $0x58] sm:$0xf]
      %v301 = vld [vmem:[%s256 + $0x5c] sm:$0xf]
      %v302 = vld [vmem:[%s256 + $0x60] sm:$0xf]
      %v303 = vld [vmem:[%s256 + $0x64] sm:$0xf]
      %v304 = vld [vmem:[%s256 + $0x68] sm:$0xf]
      %v305 = vld [vmem:[%s256 + $0x6c] sm:$0xf]
      %v306 = vld [vmem:[%s256 + $0x70] sm:$0xf]
      %v307 = vld [vmem:[%s256 + $0x74] sm:$0xf]
      %v308 = vld [vmem:[%s256 + $0x78] sm:$0xf]
      %v309 = vld [vmem:[%s256 + $0x7c] sm:$0xf]
      %v310 = vld [vmem:[%s256 + $0x80] sm:$0xf]
      %v311 = vld [vmem:[%s256 + $0x84] sm:$0xf]
      %v312 = vld [vmem:[%s256 + $0x88] sm:$0xf]
      %v313 = vld [vmem:[%s256 + $0x8c] sm:$0xf]
      %v314 = vld [vmem:[%s256 + $0x90] sm:$0xf]
      %v315 = vld [vmem:[%s256 + $0x94] sm:$0xf]
      %v316 = vld [vmem:[%s256 + $0x98] sm:$0xf]
      %v317 = vld [vmem:[%s256 + $0x9c] sm:$0xf]
      %v318 = vld [vmem:[%s256 + $0xa0] sm:$0xf]
      %v319 = vld [vmem:[%s256 + $0xa4] sm:$0xf]
      %v320 = vld [vmem:[%s256 + $0xa8] sm:$0xf]
      %v321 = vld [vmem:[%s256 + $0xac] sm:$0xf]
      %v322 = vld [vmem:[%s256 + $0xb0] sm:$0xf]
      %v323 = vld [vmem:[%s256 + $0xb4] sm:$0xf]
      %v324 = vld [vmem:[%s256 + $0xb8] sm:$0xf]
      %v325 = vld [vmem:[%s256 + $0xbc] sm:$0xf]
      %v326 = vld [vmem:[%s256 + $0xc0] sm:$0xf]
      %v327 = vld [vmem:[%s256 + $0xc4] sm:$0xf]
      %v328 = vld [vmem:[%s256 + $0xc8] sm:$0xf]
      %v329 = vld [vmem:[%s256 + $0xcc] sm:$0xf]
      %v330 = vld [vmem:[%s256 + $0xd0] sm:$0xf]
      %v331 = vld [vmem:[%s256 + $0xd4] sm:$0xf]
      %v332 = vld [vmem:[%s256 + $0xd8] sm:$0xf]
      %v333 = vld [vmem:[%s256 + $0xdc] sm:$0xf]
      %v334 = vld [vmem:[%s256 + $0xe0] sm:$0xf]
      %v335 = vld [vmem:[%s256 + $0xe4] sm:$0xf]
      %v336 = vld [vmem:[%s256 + $0xe8] sm:$0xf]
      %v337 = vld [vmem:[%s256 + $0xec] sm:$0xf]
      %v338 = vld [vmem:[%s256 + $0xf0] sm:$0xf]
      %v339 = vld [vmem:[%s256 + $0xf4] sm:$0xf]
      %v340 = vld [vmem:[%s256 + $0xf8] sm:$0xf]
      %v341 = vld [vmem:[%s256 + $0xfc] sm:$0xf]
      %v342 = vld [vmem:[%s256 + $0x100] sm:$0xf]
      %v343 = vld [vmem:[%s256 + $0x104] sm:$0xf]
      %v344 = vld [vmem:[%s256 + $0x108] sm:$0xf]
      %v345 = vld [vmem:[%s256 + $0x10c] sm:$0xf]
      %v346 = vld [vmem:[%s256 + $0x110] sm:$0xf]
      %v347 = vld [vmem:[%s256 + $0x114] sm:$0xf]
      %v348 = vld [vmem:[%s256 + $0x118] sm:$0xf]
      %v349 = vld [vmem:[%s256 + $0x11c] sm:$0xf]
      %v350 = vld [vmem:[%s256 + $0x120] sm:$0xf]
      %v351 = vld [vmem:[%s256 + $0x124] sm:$0xf]
      %v352 = vld [vmem:[%s256 + $0x128] sm:$0xf]
      %v353 = vld [vmem:[%s256 + $0x12c] sm:$0xf]
      %v354 = vld [vmem:[%s256 + $0x130] sm:$0xf]
      %v355 = vld [vmem:[%s256 + $0x134] sm:$0xf]
      %v356 = vld [vmem:[%s256 + $0x138] sm:$0xf]
      %v357 = vld [vmem:[%s256 + $0x13c] sm:$0xf]
      %v358 = vld [vmem:[%s256 + $0x140] sm:$0xf]
      %v359 = vld [vmem:[%s256 + $0x144] sm:$0xf]
      %v360 = vld [vmem:[%s256 + $0x148] sm:$0xf]
      %v361 = vld [vmem:[%s256 + $0x14c] sm:$0xf]
      %v362 = vld [vmem:[%s256 + $0x150] sm:$0xf]
      %v363 = vld [vmem:[%s256 + $0x154] sm:$0xf]
      %v364 = vld [vmem:[%s256 + $0x158] sm:$0xf]
      %v365 = vld [vmem:[%s256 + $0x15c] sm:$0xf]
      %v366 = vld [vmem:[%s256 + $0x160] sm:$0xf]
      %v367 = vld [vmem:[%s256 + $0x164] sm:$0xf]
      %v368 = vld [vmem:[%s256 + $0x168] sm:$0xf]
      %v369 = vld [vmem:[%s256 + $0x16c] sm:$0xf]
      %v370 = vld [vmem:[%s256 + $0x170] sm:$0xf]
      %v371 = vld [vmem:[%s256 + $0x174] sm:$0xf]
      %v372 = vld [vmem:[%s256 + $0x178] sm:$0xf]
      %v373 = vld [vmem:[%s256 + $0x17c] sm:$0xf]
      %v374 = vld [vmem:[%s256 + $0x180] sm:$0xf]
      %v375 = vld [vmem:[%s256 + $0x184] sm:$0xf]
      %v376 = vld [vmem:[%s256 + $0x188] sm:$0xf]
      %v377 = vld [vmem:[%s256 + $0x18c] sm:$0xf]
      %v378 = vld [vmem:[%s256 + $0x190] sm:$0xf]
      %v379 = vld [vmem:[%s256 + $0x194] sm:$0xf]
      %v380 = vld [vmem:[%s256 + $0x198] sm:$0xf]
      %v381 = vld [vmem:[%s256 + $0x19c] sm:$0xf]
      %v382 = vld [vmem:[%s256 + $0x1a0] sm:$0xf]
      %v383 = vld [vmem:[%s256 + $0x1a4] sm:$0xf]
      %v384 = vld [vmem:[%s256 + $0x1a8] sm:$0xf]
      %v385 = vld [vmem:[%s256 + $0x1ac] sm:$0xf]
      %v386 = vld [vmem:[%s256 + $0x1b0] sm:$0xf]
      %v387 = vld [vmem:[%s256 + $0x1b4] sm:$0xf]
      %v388 = vld [vmem:[%s256 + $0x1b8] sm:$0xf]
      %v389 = vld [vmem:[%s256 + $0x1bc] sm:$0xf]
      %v390 = vld [vmem:[%s256 + $0x1c0] sm:$0xf]
      %v391 = vld [vmem:[%s256 + $0x1c4] sm:$0xf]
      %v392 = vld [vmem:[%s256 + $0x1c8] sm:$0xf]
      %v393 = vld [vmem:[%s256 + $0x1cc] sm:$0xf]
      %v394 = vld [vmem:[%s256 + $0x1d0] sm:$0xf]
      %v395 = vld [vmem:[%s256 + $0x1d4] sm:$0xf]
      %v396 = vld [vmem:[%s256 + $0x1d8] sm:$0xf]
      %v397 = vld [vmem:[%s256 + $0x1dc] sm:$0xf]
      %v398 = vld [vmem:[%s256 + $0x1e0] sm:$0xf]
      %v399 = vld [vmem:[%s256 + $0x1e4] sm:$0xf]
      %v400 = vld [vmem:[%s256 + $0x1e8] sm:$0xf]
      %v401 = vld [vmem:[%s256 + $0x1ec] sm:$0xf]
      %v402 = vld [vmem:[%s256 + $0x1f0] sm:$0xf]
      %v403 = vld [vmem:[%s256 + $0x1f4] sm:$0xf]
      %v404 = vld [vmem:[%s256 + $0x1f8] sm:$0xf]
      %v405 = vld [vmem:[%s256 + $0x1fc] sm:$0xf]
      %v406 = vld [vmem:[%s256 + $0x200] sm:$0xf]
      %v407 = vld [vmem:[%s256 + $0x204] sm:$0xf]
      %v408 = vld [vmem:[%s256 + $0x208] sm:$0xf]
      %v409 = vld [vmem:[%s256 + $0x20c] sm:$0xf]
      %v410 = vld [vmem:[%s256 + $0x210] sm:$0xf]
      %v411 = vld [vmem:[%s256 + $0x214] sm:$0xf]
      %v412 = vld [vmem:[%s256 + $0x218] sm:$0xf]
      %v413 = vld [vmem:[%s256 + $0x21c] sm:$0xf]
      %v414 = vld [vmem:[%s256 + $0x220] sm:$0xf]
      %v415 = vld [vmem:[%s256 + $0x224] sm:$0xf]
      %v416 = vld [vmem:[%s256 + $0x228] sm:$0xf]
      %v417 = vld [vmem:[%s256 + $0x22c] sm:$0xf]
      %v418 = vld [vmem:[%s256 + $0x230] sm:$0xf]
      %v419 = vld [vmem:[%s256 + $0x234] sm:$0xf]
      %v420 = vld [vmem:[%s256 + $0x238] sm:$0xf]
      %v421 = vld [vmem:[%s256 + $0x23c] sm:$0xf]
      %v425 = vcombine.high %v275, %v275
      %v427 = vunpack.c.l.s4 1983009808
      %v428 = vunpack.c.0.s8 %v427
      %v429 = vlaneseq
      %v430 = vshrl.u32 %v429, 7
      %v431 = vsub.s32 %v428, %v430
      %v432 = vrot.slane %v275, %v431
      %v434 = vunpack.c.l.s4 1983009808
      %v435 = vunpack.c.0.s8 %v434
      %v436 = vlaneseq
      %v437 = vshrl.u32 %v436, 7
      %v438 = vsub.s32 %v435, %v437
      %v439 = vrot.slane %v425, %v438
      %v440 = vcombine.high %v432, %v432
      %v441 = vcombine.high %v439, %v439
      %v442 = vcombine.high %v276, %v276
      %v444 = vunpack.c.l.s4 1983009808
      %v445 = vunpack.c.0.s8 %v444
      %v446 = vlaneseq
      %v447 = vshrl.u32 %v446, 7
      %v448 = vsub.s32 %v445, %v447
      %v449 = vrot.slane %v276, %v448
      %v451 = vunpack.c.l.s4 1983009808
      %v452 = vunpack.c.0.s8 %v451
      %v453 = vlaneseq
      %v454 = vshrl.u32 %v453, 7
      %v455 = vsub.s32 %v452, %v454
      %v456 = vrot.slane %v442, %v455
      %v457 = vcombine.high %v449, %v449
      %v458 = vcombine.high %v456, %v456
      %v460 = vunpack.c.l.s4 1983009808
      %v461 = vunpack.c.0.s8 %v460
      %v462 = vlaneseq
      %v463 = vshrl.u32 %v462, 7
      %v464 = vsub.s32 %v461, %v463
      %v465 = vrot.slane %v277, %v464
      %v619 = vunpack.c.l.b16 %v278
      %v620 = vunpack.c.l.b16 %v279
      %v621 = vunpack.c.l.b16 %v280
      %v622 = vunpack.c.l.b16 %v281
      %v623 = vunpack.c.l.b16 %v282
      %v624 = vunpack.c.l.b16 %v283
      %v625 = vunpack.c.l.b16 %v284
      %v626 = vunpack.c.l.b16 %v285
      %v627 = vunpack.c.l.b16 %v286
      %v628 = vunpack.c.l.b16 %v287
      %v629 = vunpack.c.l.b16 %v288
      %v630 = vunpack.c.l.b16 %v289
      %v631 = vunpack.c.l.b16 %v290
      %v632 = vunpack.c.l.b16 %v291
      %v633 = vunpack.c.l.b16 %v292
      %v634 = vunpack.c.l.b16 %v293
      %v635 = vunpack.c.l.b16 %v294
      %v636 = vunpack.c.l.b16 %v295
      %v637 = vunpack.c.l.b16 %v296
      %v638 = vunpack.c.l.b16 %v297
      %v639 = vunpack.c.l.b16 %v298
      %v640 = vunpack.c.l.b16 %v299
      %v641 = vunpack.c.l.b16 %v300
      %v642 = vunpack.c.l.b16 %v301
      %v643 = vunpack.c.l.b16 %v302
      %v644 = vunpack.c.l.b16 %v303
      %v645 = vunpack.c.l.b16 %v304
      %v646 = vunpack.c.l.b16 %v305
      %v647 = vunpack.c.l.b16 %v306
      %v648 = vunpack.c.l.b16 %v307
      %v649 = vunpack.c.l.b16 %v308
      %v650 = vunpack.c.l.b16 %v309
      %v651 = vunpack.c.l.b16 %v310
      %v652 = vunpack.c.l.b16 %v311
      %v653 = vunpack.c.l.b16 %v312
      %v654 = vunpack.c.l.b16 %v313
      %v655 = vunpack.c.l.b16 %v314
      %v656 = vunpack.c.l.b16 %v315
      %v657 = vunpack.c.l.b16 %v316
      %v658 = vunpack.c.l.b16 %v317
      %v659 = vunpack.c.l.b16 %v318
      %v660 = vunpack.c.l.b16 %v319
      %v661 = vunpack.c.l.b16 %v320
      %v662 = vunpack.c.l.b16 %v321
      %v663 = vunpack.c.l.b16 %v322
      %v664 = vunpack.c.l.b16 %v323
      %v665 = vunpack.c.l.b16 %v324
      %v666 = vunpack.c.l.b16 %v325
      %v667 = vunpack.c.l.b16 %v326
      %v668 = vunpack.c.l.b16 %v327
      %v669 = vunpack.c.l.b16 %v328
      %v670 = vunpack.c.l.b16 %v329
      %v671 = vunpack.c.l.b16 %v330
      %v672 = vunpack.c.l.b16 %v331
      %v673 = vunpack.c.l.b16 %v332
      %v674 = vunpack.c.l.b16 %v333
      %v675 = vunpack.c.l.b16 %v334
      %v676 = vunpack.c.l.b16 %v335
      %v677 = vunpack.c.l.b16 %v336
      %v678 = vunpack.c.l.b16 %v337
      %v679 = vunpack.c.l.b16 %v338
      %v680 = vunpack.c.l.b16 %v339
      %v681 = vunpack.c.l.b16 %v340
      %v682 = vunpack.c.l.b16 %v341
      %v683 = vunpack.c.l.b16 %v342
      %v684 = vunpack.c.l.b16 %v343
      %v685 = vunpack.c.l.b16 %v344
      %v686 = vunpack.c.l.b16 %v345
      %v687 = vunpack.c.l.b16 %v346
      %v688 = vunpack.c.l.b16 %v347
      %v689 = vunpack.c.l.b16 %v348
      %v690 = vunpack.c.l.b16 %v349
      %v691 = vunpack.c.l.b16 %v350
      %v692 = vunpack.c.l.b16 %v351
      %v693 = vunpack.c.l.b16 %v352
      %v694 = vunpack.c.l.b16 %v353
      %v695 = vunpack.c.l.b16 %v354
      %v696 = vunpack.c.l.b16 %v355
      %v697 = vunpack.c.l.b16 %v356
      %v698 = vunpack.c.l.b16 %v357
      %v699 = vunpack.c.l.b16 %v358
      %v700 = vunpack.c.l.b16 %v359
      %v701 = vunpack.c.l.b16 %v360
      %v702 = vunpack.c.l.b16 %v361
      %v703 = vunpack.c.l.b16 %v362
      %v704 = vunpack.c.l.b16 %v363
      %v705 = vunpack.c.l.b16 %v364
      %v706 = vunpack.c.l.b16 %v365
      %v707 = vunpack.c.l.b16 %v366
      %v708 = vunpack.c.l.b16 %v367
      %v709 = vunpack.c.l.b16 %v368
      %v710 = vunpack.c.l.b16 %v369
      %v711 = vunpack.c.l.b16 %v370
      %v712 = vunpack.c.l.b16 %v371
      %v713 = vunpack.c.l.b16 %v372
      %v714 = vunpack.c.l.b16 %v373
      %v715 = vunpack.c.l.b16 %v374
      %v716 = vunpack.c.l.b16 %v375
      %v717 = vunpack.c.l.b16 %v376
      %v718 = vunpack.c.l.b16 %v377
      %v719 = vunpack.c.l.b16 %v378
      %v720 = vunpack.c.l.b16 %v379
      %v721 = vunpack.c.l.b16 %v380
      %v722 = vunpack.c.l.b16 %v381
      %v723 = vunpack.c.l.b16 %v382
      %v724 = vunpack.c.l.b16 %v383
      %v725 = vunpack.c.l.b16 %v384
      %v726 = vunpack.c.l.b16 %v385
      %v727 = vunpack.c.l.b16 %v386
      %v728 = vunpack.c.l.b16 %v387
      %v729 = vunpack.c.l.b16 %v388
      %v730 = vunpack.c.l.b16 %v389
      %v731 = vunpack.c.l.b16 %v390
      %v732 = vunpack.c.l.b16 %v391
      %v733 = vunpack.c.l.b16 %v392
      %v734 = vunpack.c.l.b16 %v393
      %v735 = vunpack.c.l.b16 %v394
      %v736 = vunpack.c.l.b16 %v395
      %v737 = vunpack.c.l.b16 %v396
      %v738 = vunpack.c.l.b16 %v397
      %v739 = vunpack.c.l.b16 %v398
      %v740 = vunpack.c.l.b16 %v399
      %v741 = vunpack.c.l.b16 %v400
      %v742 = vunpack.c.l.b16 %v401
      %v743 = vunpack.c.l.b16 %v402
      %v744 = vunpack.c.l.b16 %v403
      %v745 = vunpack.c.l.b16 %v404
      %v746 = vunpack.c.l.b16 %v405
      %v747 = vunpack.c.l.b16 %v406
      %v748 = vunpack.c.l.b16 %v407
      %v749 = vunpack.c.l.b16 %v408
      %v750 = vunpack.c.l.b16 %v409
      %v751 = vunpack.c.l.b16 %v410
      %v752 = vunpack.c.l.b16 %v411
      %v753 = vunpack.c.l.b16 %v412
      %v754 = vunpack.c.l.b16 %v413
      %v755 = vunpack.c.l.b16 %v414
      %v756 = vunpack.c.l.b16 %v415
      %v757 = vunpack.c.l.b16 %v416
      %v758 = vunpack.c.l.b16 %v417
      %v759 = vunpack.c.l.b16 %v418
      %v760 = vunpack.c.l.b16 %v419
      %v761 = vunpack.c.l.b16 %v420
      %v762 = vunpack.c.l.b16 %v421
      %v763 = vpack.c.b16 %v620, %v619
      %v764 = vpack.c.b16 %v622, %v621
      %v765 = vpack.c.b16 %v624, %v623
      %v766 = vpack.c.b16 %v626, %v625
      %v767 = vpack.c.b16 %v628, %v627
      %v768 = vpack.c.b16 %v630, %v629
      %v769 = vpack.c.b16 %v632, %v631
      %v770 = vpack.c.b16 %v634, %v633
      %v771 = vpack.c.b16 %v636, %v635
      %v772 = vpack.c.b16 %v638, %v637
      %v773 = vpack.c.b16 %v640, %v639
      %v774 = vpack.c.b16 %v642, %v641
      %v775 = vpack.c.b16 %v644, %v643
      %v776 = vpack.c.b16 %v646, %v645
      %v777 = vpack.c.b16 %v648, %v647
      %v778 = vpack.c.b16 %v650, %v649
      %v779 = vpack.c.b16 %v652, %v651
      %v780 = vpack.c.b16 %v654, %v653
      %v781 = vpack.c.b16 %v656, %v655
      %v782 = vpack.c.b16 %v658, %v657
      %v783 = vpack.c.b16 %v660, %v659
      %v784 = vpack.c.b16 %v662, %v661
      %v785 = vpack.c.b16 %v664, %v663
      %v786 = vpack.c.b16 %v666, %v665
      %v787 = vpack.c.b16 %v668, %v667
      %v788 = vpack.c.b16 %v670, %v669
      %v789 = vpack.c.b16 %v672, %v671
      %v790 = vpack.c.b16 %v674, %v673
      %v791 = vpack.c.b16 %v676, %v675
      %v792 = vpack.c.b16 %v678, %v677
      %v793 = vpack.c.b16 %v680, %v679
      %v794 = vpack.c.b16 %v682, %v681
      %v795 = vpack.c.b16 %v684, %v683
      %v796 = vpack.c.b16 %v686, %v685
      %v797 = vpack.c.b16 %v688, %v687
      %v798 = vpack.c.b16 %v690, %v689
      %v799 = vpack.c.b16 %v692, %v691
      %v800 = vpack.c.b16 %v694, %v693
      %v801 = vpack.c.b16 %v696, %v695
      %v802 = vpack.c.b16 %v698, %v697
      %v803 = vpack.c.b16 %v700, %v699
      %v804 = vpack.c.b16 %v702, %v701
      %v805 = vpack.c.b16 %v704, %v703
      %v806 = vpack.c.b16 %v706, %v705
      %v807 = vpack.c.b16 %v708, %v707
      %v808 = vpack.c.b16 %v710, %v709
      %v809 = vpack.c.b16 %v712, %v711
      %v810 = vpack.c.b16 %v714, %v713
      %v811 = vpack.c.b16 %v716, %v715
      %v812 = vpack.c.b16 %v718, %v717
      %v813 = vpack.c.b16 %v720, %v719
      %v814 = vpack.c.b16 %v722, %v721
      %v815 = vpack.c.b16 %v724, %v723
      %v816 = vpack.c.b16 %v726, %v725
      %v817 = vpack.c.b16 %v728, %v727
      %v818 = vpack.c.b16 %v730, %v729
      %v819 = vpack.c.b16 %v732, %v731
      %v820 = vpack.c.b16 %v734, %v733
      %v821 = vpack.c.b16 %v736, %v735
      %v822 = vpack.c.b16 %v738, %v737
      %v823 = vpack.c.b16 %v740, %v739
      %v824 = vpack.c.b16 %v742, %v741
      %v825 = vpack.c.b16 %v744, %v743
      %v826 = vpack.c.b16 %v746, %v745
      %v827 = vpack.c.b16 %v748, %v747
      %v828 = vpack.c.b16 %v750, %v749
      %v829 = vpack.c.b16 %v752, %v751
      %v830 = vpack.c.b16 %v754, %v753
      %v831 = vpack.c.b16 %v756, %v755
      %v832 = vpack.c.b16 %v758, %v757
      %v833 = vpack.c.b16 %v760, %v759
      %v834 = vpack.c.b16 %v762, %v761
      %907 = vmatprep.subr.bf16.mxu0 0
      %908 = vmatpush1.bf16.msra.mxu0 %v763
      %909 = vmatprep.subr.bf16.mxu0 0
      %910 = vmatpush1.bf16.msra.mxu0 %v764
      %911 = vmatprep.subr.bf16.mxu0 0
      %912 = vmatpush1.bf16.msra.mxu0 %v765
      %913 = vmatprep.subr.bf16.mxu0 0
      %914 = vmatpush1.bf16.msra.mxu0 %v766
      %915 = vmatprep.subr.bf16.mxu0 0
      %916 = vmatpush1.bf16.msra.mxu0 %v767
      %917 = vmatprep.subr.bf16.mxu0 0
      %918 = vmatpush1.bf16.msra.mxu0 %v768
      %919 = vmatprep.subr.bf16.mxu0 0
      %920 = vmatpush1.bf16.msra.mxu0 %v769
      %921 = vmatprep.subr.bf16.mxu0 0
      %922 = vmatpush1.bf16.msra.mxu0 %v770
      %923 = vmatprep.subr.bf16.mxu0 0
      %924 = vmatpush1.bf16.msra.mxu0 %v771
      %925 = vmatprep.subr.bf16.mxu0 0
      %926 = vmatpush1.bf16.msra.mxu0 %v772
      %927 = vmatprep.subr.bf16.mxu0 0
      %928 = vmatpush1.bf16.msra.mxu0 %v773
      %929 = vmatprep.subr.bf16.mxu0 0
      %930 = vmatpush1.bf16.msra.mxu0 %v774
      %931 = vmatprep.subr.bf16.mxu0 0
      %932 = vmatpush1.bf16.msra.mxu0 %v775
      %933 = vmatprep.subr.bf16.mxu0 0
      %934 = vmatpush1.bf16.msra.mxu0 %v776
      %935 = vmatprep.subr.bf16.mxu0 0
      %936 = vmatpush1.bf16.msra.mxu0 %v777
      %937 = vmatprep.subr.bf16.mxu0 0
      %938 = vmatpush1.bf16.msra.mxu0 %v778
      %939 = vmatprep.mubr.bf16.mxu0 %v440
      %940 = vmatmul.mubr.bf16.gmra.mrb[0].mxu0 %v432
      %v941 = vpop.f32.mrb[0].mxu0
      %v942 = vadd.f32 0.0, %v941
      %v943 = vpop.f32.mrb[0].mxu0
      %v944 = vpop.f32.mrb[0].mxu0
      %v945 = vpop.f32.mrb[0].mxu0
      %946 = vdwg.mxu0
      %947 = vmatprep.subr.bf16.mxu0 0
      %948 = vmatpush1.bf16.msra.mxu0 %v779
      %949 = vmatprep.subr.bf16.mxu0 0
      %950 = vmatpush1.bf16.msra.mxu0 %v780
      %951 = vmatprep.subr.bf16.mxu0 0
      %952 = vmatpush1.bf16.msra.mxu0 %v781
      %953 = vmatprep.subr.bf16.mxu0 0
      %954 = vmatpush1.bf16.msra.mxu0 %v782
      %955 = vmatprep.subr.bf16.mxu0 0
      %956 = vmatpush1.bf16.msra.mxu0 %v783
      %957 = vmatprep.subr.bf16.mxu0 0
      %958 = vmatpush1.bf16.msra.mxu0 %v784
      %959 = vmatprep.subr.bf16.mxu0 0
      %960 = vmatpush1.bf16.msra.mxu0 %v785
      %961 = vmatprep.subr.bf16.mxu0 0
      %962 = vmatpush1.bf16.msra.mxu0 %v786
      %963 = vmatprep.subr.bf16.mxu0 0
      %964 = vmatpush1.bf16.msra.mxu0 %v787
      %965 = vmatprep.subr.bf16.mxu0 0
      %966 = vmatpush1.bf16.msra.mxu0 %v788
      %967 = vmatprep.subr.bf16.mxu0 0
      %968 = vmatpush1.bf16.msra.mxu0 %v789
      %969 = vmatprep.subr.bf16.mxu0 0
      %970 = vmatpush1.bf16.msra.mxu0 %v790
      %971 = vmatprep.subr.bf16.mxu0 0
      %972 = vmatpush1.bf16.msra.mxu0 %v791
      %973 = vmatprep.subr.bf16.mxu0 0
      %974 = vmatpush1.bf16.msra.mxu0 %v792
      %975 = vmatprep.subr.bf16.mxu0 0
      %976 = vmatpush1.bf16.msra.mxu0 %v793
      %977 = vmatprep.subr.bf16.mxu0 0
      %978 = vmatpush1.bf16.msra.mxu0 %v794
      %979 = vmatprep.mubr.bf16.mxu0 %v441
      %980 = vmatmul.mubr.bf16.gmra.mrb[0].mxu0 %v439
      %v981 = vpop.f32.mrb[0].mxu0
      %v982 = vadd.f32 %v942, %v981
      %v983 = vpop.f32.mrb[0].mxu0
      %v984 = vpop.f32.mrb[0].mxu0
      %v985 = vpop.f32.mrb[0].mxu0
      %986 = vdwg.mxu0
      %987 = vmatprep.subr.bf16.mxu0 0
      %988 = vmatpush1.bf16.msra.mxu0 %v795
      %989 = vmatprep.subr.bf16.mxu0 0
      %990 = vmatpush1.bf16.msra.mxu0 %v796
      %991 = vmatprep.subr.bf16.mxu0 0
      %992 = vmatpush1.bf16.msra.mxu0 %v797
      %993 = vmatprep.subr.bf16.mxu0 0
      %994 = vmatpush1.bf16.msra.mxu0 %v798
      %995 = vmatprep.subr.bf16.mxu0 0
      %996 = vmatpush1.bf16.msra.mxu0 %v799
      %997 = vmatprep.subr.bf16.mxu0 0
      %998 = vmatpush1.bf16.msra.mxu0 %v800
      %999 = vmatprep.subr.bf16.mxu0 0
      %1000 = vmatpush1.bf16.msra.mxu0 %v801
      %1001 = vmatprep.subr.bf16.mxu0 0
      %1002 = vmatpush1.bf16.msra.mxu0 %v802
      %1003 = vmatprep.subr.bf16.mxu0 0
      %1004 = vmatpush1.bf16.msra.mxu0 %v803
      %1005 = vmatprep.subr.bf16.mxu0 0
      %1006 = vmatpush1.bf16.msra.mxu0 %v804
      %1007 = vmatprep.subr.bf16.mxu0 0
      %1008 = vmatpush1.bf16.msra.mxu0 %v805
      %1009 = vmatprep.subr.bf16.mxu0 0
      %1010 = vmatpush1.bf16.msra.mxu0 %v806
      %1011 = vmatprep.subr.bf16.mxu0 0
      %1012 = vmatpush1.bf16.msra.mxu0 %v807
      %1013 = vmatprep.subr.bf16.mxu0 0
      %1014 = vmatpush1.bf16.msra.mxu0 %v808
      %1015 = vmatprep.subr.bf16.mxu0 0
      %1016 = vmatpush1.bf16.msra.mxu0 %v809
      %1017 = vmatprep.subr.bf16.mxu0 0
      %1018 = vmatpush1.bf16.msra.mxu0 %v810
      %1019 = vmatprep.mubr.bf16.mxu0 %v457
      %1020 = vmatmul.mubr.bf16.gmra.mrb[0].mxu0 %v449
      %v1021 = vpop.f32.mrb[0].mxu0
      %v1022 = vadd.f32 %v982, %v1021
      %v1023 = vpop.f32.mrb[0].mxu0
      %v1024 = vpop.f32.mrb[0].mxu0
      %v1025 = vpop.f32.mrb[0].mxu0
      %1026 = vdwg.mxu0
      %1027 = vmatprep.subr.bf16.mxu0 0
      %1028 = vmatpush1.bf16.msra.mxu0 %v811
      %1029 = vmatprep.subr.bf16.mxu0 0
      %1030 = vmatpush1.bf16.msra.mxu0 %v812
      %1031 = vmatprep.subr.bf16.mxu0 0
      %1032 = vmatpush1.bf16.msra.mxu0 %v813
      %1033 = vmatprep.subr.bf16.mxu0 0
      %1034 = vmatpush1.bf16.msra.mxu0 %v814
      %1035 = vmatprep.subr.bf16.mxu0 0
      %1036 = vmatpush1.bf16.msra.mxu0 %v815
      %1037 = vmatprep.subr.bf16.mxu0 0
      %1038 = vmatpush1.bf16.msra.mxu0 %v816
      %1039 = vmatprep.subr.bf16.mxu0 0
      %1040 = vmatpush1.bf16.msra.mxu0 %v817
      %1041 = vmatprep.subr.bf16.mxu0 0
      %1042 = vmatpush1.bf16.msra.mxu0 %v818
      %1043 = vmatprep.subr.bf16.mxu0 0
      %1044 = vmatpush1.bf16.msra.mxu0 %v819
      %1045 = vmatprep.subr.bf16.mxu0 0
      %1046 = vmatpush1.bf16.msra.mxu0 %v820
      %1047 = vmatprep.subr.bf16.mxu0 0
      %1048 = vmatpush1.bf16.msra.mxu0 %v821
      %1049 = vmatprep.subr.bf16.mxu0 0
      %1050 = vmatpush1.bf16.msra.mxu0 %v822
      %1051 = vmatprep.subr.bf16.mxu0 0
      %1052 = vmatpush1.bf16.msra.mxu0 %v823
      %1053 = vmatprep.subr.bf16.mxu0 0
      %1054 = vmatpush1.bf16.msra.mxu0 %v824
      %1055 = vmatprep.subr.bf16.mxu0 0
      %1056 = vmatpush1.bf16.msra.mxu0 %v825
      %1057 = vmatprep.subr.bf16.mxu0 0
      %1058 = vmatpush1.bf16.msra.mxu0 %v826
      %1059 = vmatprep.mubr.bf16.mxu0 %v458
      %1060 = vmatmul.mubr.bf16.gmra.mrb[0].mxu0 %v456
      %v1061 = vpop.f32.mrb[0].mxu0
      %v1062 = vadd.f32 %v1022, %v1061
      %v1063 = vpop.f32.mrb[0].mxu0
      %v1064 = vpop.f32.mrb[0].mxu0
      %v1065 = vpop.f32.mrb[0].mxu0
      %1066 = vdwg.mxu0
      %1067 = vmatprep.subr.bf16.mxu0 0
      %1068 = vmatpush1.bf16.msra.mxu0 %v827
      %1069 = vmatprep.subr.bf16.mxu0 0
      %1070 = vmatpush1.bf16.msra.mxu0 %v828
      %1071 = vmatprep.subr.bf16.mxu0 0
      %1072 = vmatpush1.bf16.msra.mxu0 %v829
      %1073 = vmatprep.subr.bf16.mxu0 0
      %1074 = vmatpush1.bf16.msra.mxu0 %v830
      %1075 = vmatprep.subr.bf16.mxu0 0
      %1076 = vmatpush1.bf16.msra.mxu0 %v831
      %1077 = vmatprep.subr.bf16.mxu0 0
      %1078 = vmatpush1.bf16.msra.mxu0 %v832
      %1079 = vmatprep.subr.bf16.mxu0 0
      %1080 = vmatpush1.bf16.msra.mxu0 %v833
      %1081 = vmatprep.subr.bf16.mxu0 0
      %1082 = vmatpush1.bf16.msra.mxu0 %v834
      %1083 = vmatprep.subr.bf16.mxu0 0
      %1084 = vmatpush1.bf16.msra.mxu0 0
      %1085 = vmatprep.subr.bf16.mxu0 0
      %1086 = vmatpush1.bf16.msra.mxu0 0
      %1087 = vmatprep.subr.bf16.mxu0 0
      %1088 = vmatpush1.bf16.msra.mxu0 0
      %1089 = vmatprep.subr.bf16.mxu0 0
      %1090 = vmatpush1.bf16.msra.mxu0 0
      %1091 = vmatprep.subr.bf16.mxu0 0
      %1092 = vmatpush1.bf16.msra.mxu0 0
      %1093 = vmatprep.subr.bf16.mxu0 0
      %1094 = vmatpush1.bf16.msra.mxu0 0
      %1095 = vmatprep.subr.bf16.mxu0 0
      %1096 = vmatpush1.bf16.msra.mxu0 0
      %1097 = vmatprep.subr.bf16.mxu0 0
      %1098 = vmatpush1.bf16.msra.mxu0 0
      %1099 = vmatprep.mubr.bf16.mxu0 0
      %1100 = vmatmul.mubr.bf16.gmra.mrb[0].mxu0 %v465
      %v1101 = vpop.f32.mrb[0].mxu0
      %v1102 = vadd.f32 %v1062, %v1101
      %v1103 = vpop.f32.mrb[0].mxu0
      %v1104 = vpop.f32.mrb[0].mxu0
      %v1105 = vpop.f32.mrb[0].mxu0
      %1106 = vdwg.mxu0
      %v1107 = vadd.f32 %v274, %v1102
      %1108 = vst [vmem:[#allocation2] sm:$0xf] %v1107
      %p1109 = scmp.eq.s32.totalorder %s23, 2
      // Predicated region
      $region37: #{_lambda_.21} parent=31 // pred_check
        %p1110 = pneg %p1109
      $region38: #{_lambda_.21} parent=31 // pred_check_branch
        %1112 = sbr.rel (%p1110) target = $region40
      $region39: #{_lambda_.21} parent=31 // pred_region
        %v1113 = vld [vmem:[#allocation2] sm:$0xf]
        %v1114 = vld [vmem:[%s2] sm:$0x1]
        %v1116 = vlaneseq
        %v1117 = vshrl.u32 %v1116, 7
        %v1118 = vsub.s32 0, %v1117
        %v1119 = vrot.slane %v1114, %v1118
        %v1121 = vadd.f32 %v1113, %v1119
        %v1122 = vmax.f32 %v1121, 0.0
        %v1123 = vpack.c.bf16 %v1122, %v1122
        %1124 = vst [vmem:[%s267] sm:$0x3] %v1123
      $region40: #{_lambda_.21} parent=31 // pred_fallthru
        _
      %p1125 = scmp.lt.s32.totalorder %s20, 1
      %s1126 = scalar_select %p1125, %s20, 1
      %p1127 = scmp.lt.s32.totalorder %s21, 1
      %s1128 = scalar_select %p1127, %s21, 1
      %p1129 = scmp.lt.s32.totalorder %s22, 0
      %s1130 = scalar_select %p1129, %s22, 0
      %s1131 = sadd.s32 %s1130, %s1128
      %s1132 = smul.addr %s1126, 2
      %s1133 = sadd.s32 %s1131, %s1132
      %s1134 = smul.addr %s1133, 2
      %s1135 = scalar_lea.vmem %s3, %s1134
      // Predicated region
      $region41: #{_lambda_.21} parent=31 // pred_check
        %p1136 = pneg %p141
      $region42: #{_lambda_.21} parent=31 // pred_check_branch
        %1138 = sbr.rel (%p1136) target = $region44
      $region43: #{_lambda_.21} parent=31 // pred_region
        _
      $region44: #{_lambda_.21} parent=31 // pred_fallthru
        _
    $region32: #{_lambda_.21} parent=5 // pred_fallthru
      _
    %p1139 = scmp.le.s32.totalorder 2, %s9
    // Predicated region
    $region45: #{_lambda_.21} parent=5 // pred_check
      %p1140 = pneg %p1139
    $region46: #{_lambda_.21} parent=5 // pred_check_branch
      %1142 = sbr.rel (%p1140) target = $region48
    $region47: #{_lambda_.21} parent=5 // pred_region
      %s1143 = ssub.s32 %s9, 2
      // Predicated region
      $region49: #{_lambda_.21} parent=47 // pred_check
        %p1144 = pneg %p147
      $region50: #{_lambda_.21} parent=47 // pred_check_branch
        %1146 = sbr.rel (%p1144) target = $region52
      $region51: #{_lambda_.21} parent=47 // pred_region
        %p1147 = scmp.lt.s32.totalorder %s24, 1
        %s1148 = scalar_select %p1147, %s24, 1
        %p1149 = scmp.lt.s32.totalorder %s25, 1
        %s1150 = scalar_select %p1149, %s25, 1
        %p1151 = scmp.lt.s32.totalorder %s26, 0
        %s1152 = scalar_select %p1151, %s26, 0
        %s1153 = sadd.s32 %s1152, %s1150
        %s1154 = smul.addr %s1148, 2
        %s1155 = sadd.s32 %s1153, %s1154
        %s1156 = smul.addr %s1155, 2
        %s1157 = scalar_lea.vmem %s3, %s1156
      $region52: #{_lambda_.21} parent=47 // pred_fallthru
        _
    $region48: #{_lambda_.21} parent=5 // pred_fallthru
      _
  $region6: #{_lambda_.21} parent=0 // loop_footer
    %s13 = sadd.s32 1, %s9
  $region7: #{_lambda_.21} parent=0 // loop_footer_branch
    %8 = sbr.rel target = $region3
  $region8: #{_lambda_.21} parent=0 // loop_exit
    _

</llo_original>
